<compile_context>
chip_gen: v7x
topology: tpu7x:2x2x1
jax: 0.10.0
libtpu: 0.0.40
codegen_flags: <defaults>
</compile_context>

<pallas_src>
import functools
import math

import jax
import jax.numpy as jnp
from jax.experimental import pallas as pl
from jax.experimental.pallas import tpu as pltpu


# ----------------------------- dense kernels ---------------------------------
def _dense_kernel(x_ref, w_ref, b_ref, o_ref):
    acc = jnp.dot(x_ref[...], w_ref[...], preferred_element_type=jnp.float32)
    o_ref[...] = (acc + b_ref[...]).astype(o_ref.dtype)


def _dense2_kernel(x1_ref, x2_ref, w1_ref, w2_ref, b_ref, o_ref):
    acc = jnp.dot(x1_ref[...], w1_ref[...], preferred_element_type=jnp.float32)
    acc = acc + jnp.dot(x2_ref[...], w2_ref[...], preferred_element_type=jnp.float32)
    o_ref[...] = (acc + b_ref[...]).astype(o_ref.dtype)


def _pick_tm(M, cap=512):
    if M <= 16:
        return M
    # at least 2 M-tiles when possible so the "parallel" M axis feeds both v7x cores
    half = ((M + 1) // 2 + 7) // 8 * 8
    return max(8, min(cap, half))


_DENSE_PARAMS = pltpu.CompilerParams(
    dimension_semantics=("parallel",), vmem_limit_bytes=32 * 1024 * 1024)


def dense(x, w, b, *, out_dtype=jnp.bfloat16):
    """o = x @ w + b   (bf16 operands, f32 accumulation, M-tiled parallel grid)."""
    M, K = x.shape
    K2, N = w.shape
    assert K == K2
    tm = _pick_tm(M)
    return pl.pallas_call(
        _dense_kernel,
        out_shape=jax.ShapeDtypeStruct((M, N), out_dtype),
        grid=(pl.cdiv(M, tm),),
        in_specs=[
            pl.BlockSpec((tm, K), lambda i: (i, 0)),
            pl.BlockSpec((K, N), lambda i: (0, 0)),     # weight resident across M tiles
            pl.BlockSpec((1, N), lambda i: (0, 0)),
        ],
        out_specs=pl.BlockSpec((tm, N), lambda i: (i, 0)),
        compiler_params=_DENSE_PARAMS,
    )(x, w, b.reshape(1, N).astype(jnp.float32))


def dense2(x1, x2, w1, w2, b, *, out_dtype=jnp.bfloat16):
    """o = x1 @ w1 + x2 @ w2 + b  -- lets us consume the two LSTM direction outputs
    without ever concatenating them in HBM."""
    M, K1 = x1.shape
    M2, K2 = x2.shape
    assert M == M2
    N = w1.shape[1]
    tm = _pick_tm(M)
    return pl.pallas_call(
        _dense2_kernel,
        out_shape=jax.ShapeDtypeStruct((M, N), out_dtype),
        grid=(pl.cdiv(M, tm),),
        in_specs=[
            pl.BlockSpec((tm, K1), lambda i: (i, 0)),
            pl.BlockSpec((tm, K2), lambda i: (i, 0)),
            pl.BlockSpec((K1, N), lambda i: (0, 0)),
            pl.BlockSpec((K2, N), lambda i: (0, 0)),
            pl.BlockSpec((1, N), lambda i: (0, 0)),
        ],
        out_specs=pl.BlockSpec((tm, N), lambda i: (i, 0)),
        compiler_params=_DENSE_PARAMS,
    )(x1, x2, w1, w2, b.reshape(1, N).astype(jnp.float32))


# --------------------------- fused bi-LSTM recurrence -------------------------
def _lstm_chunk_kernel(*refs, hidden, chunk, valid_T, num_dirs):
    """One grid step = `chunk` time steps of BOTH directions.

    Forward direction walks time-chunk t (local k ascending); backward direction walks
    time-chunk nT-1-t (local k descending).  Both recurrent contributions come from one
    block-diagonal bf16 dot per step.  h/c live in registers for the whole chunk.
    """
    if num_dirs == 2:
        xg_f_ref, xg_b_ref, whh_ref, out_f_ref, out_b_ref, h_scr, c_scr = refs
    else:
        xg_f_ref, whh_ref, out_f_ref, h_scr, c_scr = refs
        xg_b_ref = out_b_ref = None

    t = pl.program_id(0)
    nT = pl.num_programs(0)

    @pl.when(t == 0)
    def _():
        h_scr[...] = jnp.zeros_like(h_scr)
        c_scr[...] = jnp.zeros_like(c_scr)

    whh = whh_ref[...]                       # [nd*H, nd*4H] block-diagonal, bf16, resident

    # ---- load state once per chunk (static direction indices) ----
    h_f = h_scr[0]
    c_f = c_scr[0]
    if num_dirs == 2:
        h_b = h_scr[1]
        c_b = c_scr[1]

    guard = (valid_T % chunk) != 0           # static: only emit validity selects if ragged

    def gates(g, xg, c_prev):
        g = xg.astype(jnp.float32) + g
        i = jax.nn.sigmoid(g[:, 0 * hidden:1 * hidden])
        f = jax.nn.sigmoid(g[:, 1 * hidden:2 * hidden])
        u = jnp.tanh(g[:, 2 * hidden:3 * hidden])
        o = jax.nn.sigmoid(g[:, 3 * hidden:4 * hidden])
        c = f * c_prev + i * u
        h = o * jnp.tanh(c)
        return h, c

    for k in range(chunk):                   # static unroll
        kb = chunk - 1 - k                   # backward local index (time descending)

        if num_dirs == 2:
            h_cat = jnp.concatenate(
                [h_f.astype(jnp.bfloat16), h_b.astype(jnp.bfloat16)], axis=-1)
        else:
            h_cat = h_f.astype(jnp.bfloat16)
        g = jnp.dot(h_cat, whh, preferred_element_type=jnp.float32)   # [Bp, nd*4H]

        # forward direction
        h_new, c_new = gates(g[:, :4 * hidden], xg_f_ref[k], c_f)
        if guard:
            vf = (t * chunk + k) < valid_T
            h_f = jnp.where(vf, h_new, h_f)
            c_f = jnp.where(vf, c_new, c_f)
        else:
            h_f, c_f = h_new, c_new
        out_f_ref[k] = h_f.astype(out_f_ref.dtype)

        # backward direction
        if num_dirs == 2:
            hb_new, cb_new = gates(g[:, 4 * hidden:8 * hidden], xg_b_ref[kb], c_b)
            if guard:
                vb = ((nT - 1 - t) * chunk + kb) < valid_T
                h_b = jnp.where(vb, hb_new, h_b)
                c_b = jnp.where(vb, cb_new, c_b)
            else:
                h_b, c_b = hb_new, cb_new
            out_b_ref[kb] = h_b.astype(out_b_ref.dtype)

    # ---- write state back once per chunk ----
    h_scr[0] = h_f
    c_scr[0] = c_f
    if num_dirs == 2:
        h_scr[1] = h_b
        c_scr[1] = c_b


def _pick_chunk(T, Bp, hidden, num_dirs, max_chunk=32, vmem_budget=24 * 1024 * 1024):
    """Chunk of time steps per grid iteration, capped by a VMEM budget (v7x-safe):
    double-buffered bf16 xg (4H) + out (H) blocks per direction."""
    per_step = 2 * num_dirs * Bp * (4 * hidden + hidden) * 2
    return int(max(1, min(max_chunk, T, vmem_budget // per_step)))


def lstm_layer(xg, w_hh_bd, hidden, num_dirs, *, valid_T, chunk):
    """Run one (bi)LSTM layer over time-major, padded inputs.

    xg:       [Tp, Bp, nd*4H] bf16   input-gate contributions (+ biases), time-major.
    w_hh_bd:  [nd*H, nd*4H]   bf16   block-diagonal recurrent weights.
    Returns a tuple of nd arrays [Tp, Bp, H] bf16 (forward, backward), original time order.
    """
    Tp, Bp, G = xg.shape
    assert G == num_dirs * 4 * hidden and Tp % chunk == 0
    nT = Tp // chunk
    kernel = functools.partial(_lstm_chunk_kernel, hidden=hidden, chunk=chunk,
                               valid_T=valid_T, num_dirs=num_dirs)

    in_specs = [pl.BlockSpec((chunk, Bp, 4 * hidden), lambda t: (t, 0, 0))]
    out_specs = [pl.BlockSpec((chunk, Bp, hidden), lambda t: (t, 0, 0))]
    out_shape = [jax.ShapeDtypeStruct((Tp, Bp, hidden), jnp.bfloat16)]
    if num_dirs == 2:
        in_specs.append(
            pl.BlockSpec((chunk, Bp, 4 * hidden), lambda t: (nT - 1 - t, 0, 1)))
        out_specs.append(
            pl.BlockSpec((chunk, Bp, hidden), lambda t: (nT - 1 - t, 0, 0)))
        out_shape.append(jax.ShapeDtypeStruct((Tp, Bp, hidden), jnp.bfloat16))
    in_specs.append(pl.BlockSpec(w_hh_bd.shape, lambda t: (0, 0)))  # weights VMEM-resident

    args = (xg, xg, w_hh_bd) if num_dirs == 2 else (xg, w_hh_bd)
    outs = pl.pallas_call(
        kernel,
        out_shape=out_shape if num_dirs == 2 else out_shape[0],
        grid=(nT,),
        in_specs=in_specs,
        out_specs=out_specs if num_dirs == 2 else out_specs[0],
        scratch_shapes=[
            pltpu.VMEM((num_dirs, Bp, hidden), jnp.float32),   # h state (per direction)
            pltpu.VMEM((num_dirs, Bp, hidden), jnp.float32),   # c state (per direction)
        ],
        compiler_params=pltpu.CompilerParams(
            dimension_semantics=("arbitrary",),                # sequential recurrence
            vmem_limit_bytes=32 * 1024 * 1024),
    )(*args)
    return outs if num_dirs == 2 else (outs,)


# ------------------------------ full forward ---------------------------------
def lstm_feature_extractor(params, x, *, hidden, num_layers, bidirectional):
    """x: [B, T, input_dim] f32 -> [B, T, output_dim] f32.  Eval-mode forward."""
    B, T, Din = x.shape
    nd = 2 if bidirectional else 1
    assert hidden % 128 == 0, "hidden must be a multiple of 128 for lane-aligned gates"
    Bp = ((B + 7) // 8) * 8
    chunk = _pick_chunk(T, Bp, hidden, nd)
    Tp = ((T + chunk - 1) // chunk) * chunk

    # one-time layout change: batch-first [B,T,D] -> padded time-major [Tp,Bp,D] bf16
    xt = jnp.transpose(x, (1, 0, 2)).astype(jnp.bfloat16)
    xt = jnp.pad(xt, ((0, Tp - T), (0, Bp - B), (0, 0)))

    # layer 0: representation Linear folded into W_ih (no nonlinearity between them)
    xg = dense(xt.reshape(Tp * Bp, Din), params["w0"], params["b0"])       # [Tp*Bp, nd*4H]
    outs = lstm_layer(xg.reshape(Tp, Bp, nd * 4 * hidden), params["lstm"][0]["w_hh_bd"],
                      hidden, nd, valid_T=T, chunk=chunk)

    for layer in range(1, num_layers):
        p = params["lstm"][layer]
        if nd == 2:
            xg = dense2(outs[0].reshape(Tp * Bp, hidden), outs[1].reshape(Tp * Bp, hidden),
                        p["w_ih_f"], p["w_ih_b"], p["b"])
        else:
            xg = dense(outs[0].reshape(Tp * Bp, hidden), p["w_ih_f"], p["b"])
        outs = lstm_layer(xg.reshape(Tp, Bp, nd * 4 * hidden), p["w_hh_bd"],
                          hidden, nd, valid_T=T, chunk=chunk)
        # TODO(synk): inter-layer dropout (p=0.1) applies only in train mode; eval semantics here.

    if nd == 2:
        out = dense2(outs[0].reshape(Tp * Bp, hidden), outs[1].reshape(Tp * Bp, hidden),
                     params["proj_w_f"], params["proj_w_b"], params["proj_b"],
                     out_dtype=jnp.float32)
    else:
        out = dense(outs[0].reshape(Tp * Bp, hidden), params["proj_w_f"], params["proj_b"],
                    out_dtype=jnp.float32)
    out = out.reshape(Tp, Bp, -1)[:T, :B]
    return jnp.transpose(out, (1, 0, 2))                                    # [B, T, out]


# ----------------------------- parameters -------------------------------------
def _uniform(key, shape, bound):
    return jax.random.uniform(key, shape, jnp.float32, -bound, bound)


def init_params(key, input_dim, output_dim, rep_dim, hidden, num_layers, bidirectional):
    """f32 master weights with PyTorch-style init, stored as [in, out]."""
    nd = 2 if bidirectional else 1
    keys = iter(jax.random.split(key, 4 + num_layers * nd * 4))
    rb = 1.0 / math.sqrt(input_dim)
    master = {"rep_w": _uniform(next(keys), (input_dim, rep_dim), rb),
              "rep_b": _uniform(next(keys), (rep_dim,), rb)}
    lb = 1.0 / math.sqrt(hidden)
    lstm = []
    for layer in range(num_layers):
        in_l = rep_dim if layer == 0 else hidden * nd
        w_ih_dirs, w_hh_dirs, b_dirs = [], [], []
        for _ in range(nd):
            w_ih_dirs.append(_uniform(next(keys), (in_l, 4 * hidden), lb))
            w_hh_dirs.append(_uniform(next(keys), (hidden, 4 * hidden), lb))
            b_ih = _uniform(next(keys), (4 * hidden,), lb)
            b_hh = _uniform(next(keys), (4 * hidden,), lb)
            b_dirs.append(b_ih + b_hh)
        lstm.append({"w_ih": jnp.concatenate(w_ih_dirs, axis=1),   # [in_l, nd*4H]
                     "w_hh": w_hh_dirs,                            # nd x [H, 4H]
                     "b": jnp.concatenate(b_dirs, axis=0)})        # [nd*4H]
    master["lstm"] = lstm
    pb = 1.0 / math.sqrt(hidden * nd)
    master["proj_w"] = _uniform(next(keys), (hidden * nd, output_dim), pb)
    master["proj_b"] = _uniform(next(keys), (output_dim,), pb)
    return master


def prepare_params(master, hidden, num_layers, bidirectional):
    """Kernel-ready params: rep Linear folded into layer-0 W_ih, bf16 matmul operands,
    block-diagonal recurrent weights, per-direction row splits of W_ih / projection."""
    nd = 2 if bidirectional else 1
    w_ih0 = master["lstm"][0]["w_ih"]                              # [rep_dim, nd*4H]
    p = {"w0": jnp.dot(master["rep_w"], w_ih0).astype(jnp.bfloat16),
         "b0": jnp.dot(master["rep_b"], w_ih0) + master["lstm"][0]["b"]}
    layers = []
    for layer in range(num_layers):
        m = master["lstm"][layer]
        if nd == 2:
            z = jnp.zeros((hidden, 4 * hidden), jnp.float32)
            wbd = jnp.concatenate(
                [jnp.concatenate([m["w_hh"][0], z], axis=1),
                 jnp.concatenate([z, m["w_hh"][1]], axis=1)], axis=0)   # [2H, 8H]
        else:
            wbd = m["w_hh"][0]
        entry = {"w_hh_bd": wbd.astype(jnp.bfloat16)}
        if layer > 0:
            wih = m["w_ih"]                                        # [nd*H, nd*4H]
            entry["w_ih_f"] = wih[:hidden].astype(jnp.bfloat16)
            if nd == 2:
                entry["w_ih_b"] = wih[hidden:].astype(jnp.bfloat16)
            entry["b"] = m["b"]
        layers.append(entry)
    p["lstm"] = layers
    pw = master["proj_w"]
    p["proj_w_f"] = pw[:hidden].astype(jnp.bfloat16)
    if nd == 2:
        p["proj_w_b"] = pw[hidden:].astype(jnp.bfloat16)
    p["proj_b"] = master["proj_b"]
    return p


# ------------------------------ pure-JAX reference ----------------------------
def _mm(a, b):
    return jnp.dot(a, b, precision=jax.lax.Precision.HIGHEST)


def _ref_scan(xg_btd, whh, hidden):
    B = xg_btd.shape[0]

    def step(carry, xt):
        h, c = carry
        g = xt + _mm(h, whh)
        i = jax.nn.sigmoid(g[:, :hidden])
        f = jax.nn.sigmoid(g[:, hidden:2 * hidden])
        u = jnp.tanh(g[:, 2 * hidden:3 * hidden])
        o = jax.nn.sigmoid(g[:, 3 * hidden:])
        c = f * c + i * u
        h = o * jnp.tanh(c)
        return (h, c), h

    init = (jnp.zeros((B, hidden), jnp.float32), jnp.zeros((B, hidden), jnp.float32))
    _, hs = jax.lax.scan(step, init, jnp.transpose(xg_btd, (1, 0, 2)))
    return jnp.transpose(hs, (1, 0, 2))


def reference_forward(master, x, *, hidden, num_layers, bidirectional):
    B, T, Din = x.shape
    nd = 2 if bidirectional else 1
    h = _mm(x.reshape(B * T, Din), master["rep_w"]) + master["rep_b"]
    h = h.reshape(B, T, -1)
    for layer in range(num_layers):
        m = master["lstm"][layer]
        xg = (_mm(h.reshape(B * T, -1), m["w_ih"]) + m["b"]).reshape(B, T, -1)
        outs = []
        for d in range(nd):
            xg_d = xg[..., d * 4 * hidden:(d + 1) * 4 * hidden]
            if d == 1:
                xg_d = xg_d[:, ::-1]
            hs = _ref_scan(xg_d, m["w_hh"][d], hidden)
            if d == 1:
                hs = hs[:, ::-1]
            outs.append(hs)
        h = jnp.concatenate(outs, axis=-1) if nd == 2 else outs[0]
    out = _mm(h.reshape(B * T, -1), master["proj_w"]) + master["proj_b"]
    return out.reshape(B, T, -1)


# ------------------------------------ main ------------------------------------
if __name__ == "__main__":
    B, T = 2, 8
    input_dim, output_dim = 16, 16
    rep_dim, hidden, num_layers, bidirectional = 8, 128, 2, True   # module defaults

    key = jax.random.PRNGKey(0)
    kp, kx = jax.random.split(key)
    master = init_params(kp, input_dim, output_dim, rep_dim, hidden,
                         num_layers, bidirectional)
    params = prepare_params(master, hidden, num_layers, bidirectional)
    x = jax.random.normal(kx, (B, T, input_dim), jnp.float32)

    fwd = jax.jit(functools.partial(lstm_feature_extractor, hidden=hidden,
                                    num_layers=num_layers,
                                    bidirectional=bidirectional))
    out = jax.block_until_ready(fwd(params, x))

    ref = reference_forward(master, x, hidden=hidden, num_layers=num_layers,
                            bidirectional=bidirectional)
    assert out.shape == (B, T, output_dim)
    max_err = float(jnp.max(jnp.abs(out - ref)))
    assert max_err < 2e-2, f"max abs err {max_err}"

    print("KERNEL_OK")
</pallas_src>

<mosaic_0001>
module attributes {stable_mosaic.version = 11 : i64} {
  func.func @_dense_kernel(%arg0: i32, %arg1: memref<32x16xbf16, #tpu.memory_space<vmem>>, %arg2: memref<16x1024xbf16, #tpu.memory_space<vmem>>, %arg3: memref<1x1024xf32, #tpu.memory_space<vmem>>, %arg4: memref<32x1024xbf16, #tpu.memory_space<vmem>>) attributes {dimension_semantics = [#tpu.dimension_semantics<parallel>], iteration_bounds = array<i64: 2>, scalar_prefetch = 0 : i64, scratch_operands = 0 : i64, tpu.core_type = #tpu.core_type<tc>, window_params = [{transform_indices = @transform_0, window_bounds = array<i64: 32, 16>}, {pipeline_mode = #tpu.pipeline_mode<synchronous>, transform_indices = @transform_1, window_bounds = array<i64: 16, 1024>}, {pipeline_mode = #tpu.pipeline_mode<synchronous>, transform_indices = @transform_2, window_bounds = array<i64: 1, 1024>}, {transform_indices = @transform_3, window_bounds = array<i64: 32, 1024>}]} {
    %c0 = arith.constant 0 : index
    %c0_0 = arith.constant 0 : index
    %0 = vector.load %arg1[%c0, %c0_0] : memref<32x16xbf16, #tpu.memory_space<vmem>>, vector<32x16xbf16>
    %c0_1 = arith.constant 0 : index
    %c0_2 = arith.constant 0 : index
    %1 = vector.load %arg2[%c0_1, %c0_2] : memref<16x1024xbf16, #tpu.memory_space<vmem>>, vector<16x1024xbf16>
    %cst = arith.constant dense<0.000000e+00> : vector<32x1024xf32>
    %2 = tpu.matmul %0, %1, %cst {dimension_numbers = #tpu.dot_dimension_numbers<[1], [0], [0], [1], [0, 0, 1, 1], [], []>} : vector<32x16xbf16>, vector<16x1024xbf16>, vector<32x1024xf32> -> vector<32x1024xf32>
    %c0_3 = arith.constant 0 : index
    %c0_4 = arith.constant 0 : index
    %3 = vector.load %arg3[%c0_3, %c0_4] : memref<1x1024xf32, #tpu.memory_space<vmem>>, vector<1x1024xf32>
    %4 = vector.broadcast %3 : vector<1x1024xf32> to vector<32x1024xf32>
    %5 = arith.addf %2, %4 : vector<32x1024xf32>
    %6 = arith.truncf %5 : vector<32x1024xf32> to vector<32x1024xbf16>
    %c0_5 = arith.constant 0 : index
    %c0_6 = arith.constant 0 : index
    %7 = vector.load %arg4[%c0_5, %c0_6] : memref<32x1024xbf16, #tpu.memory_space<vmem>>, vector<32x1024xbf16>
    tpu.vector_store %arg4[%c0_5, %c0_6], %6 {strides = array<i32>} : memref<32x1024xbf16, #tpu.memory_space<vmem>>, vector<32x1024xbf16>,
    return
  }
  func.func @transform_0(%arg0: i32) -> (i32, i32) {
    %c0_i32 = arith.constant 0 : i32
    %c0_i32_0 = arith.constant 0 : i32
    return %arg0, %c0_i32 : i32, i32
  }
  func.func @transform_1(%arg0: i32) -> (i32, i32) {
    %c0_i32 = arith.constant 0 : i32
    %c0_i32_0 = arith.constant 0 : i32
    %c0_i32_1 = arith.constant 0 : i32
    return %c0_i32, %c0_i32_0 : i32, i32
  }
  func.func @transform_2(%arg0: i32) -> (i32, i32) {
    %c0_i32 = arith.constant 0 : i32
    %c0_i32_0 = arith.constant 0 : i32
    %c0_i32_1 = arith.constant 0 : i32
    return %c0_i32, %c0_i32_0 : i32, i32
  }
  func.func @transform_3(%arg0: i32) -> (i32, i32) {
    %c0_i32 = arith.constant 0 : i32
    %c0_i32_0 = arith.constant 0 : i32
    return %arg0, %c0_i32 : i32, i32
  }
}

module attributes {stable_mosaic.version = 11 : i64} {
  func.func @_dense2_kernel(%arg0: i32, %arg1: memref<32x128xbf16, #tpu.memory_space<vmem>>, %arg2: memref<32x128xbf16, #tpu.memory_space<vmem>>, %arg3: memref<128x1024xbf16, #tpu.memory_space<vmem>>, %arg4: memref<128x1024xbf16, #tpu.memory_space<vmem>>, %arg5: memref<1x1024xf32, #tpu.memory_space<vmem>>, %arg6: memref<32x1024xbf16, #tpu.memory_space<vmem>>) attributes {dimension_semantics = [#tpu.dimension_semantics<parallel>], iteration_bounds = array<i64: 2>, scalar_prefetch = 0 : i64, scratch_operands = 0 : i64, tpu.core_type = #tpu.core_type<tc>, window_params = [{transform_indices = @transform_0, window_bounds = array<i64: 32, 128>}, {transform_indices = @transform_1, window_bounds = array<i64: 32, 128>}, {pipeline_mode = #tpu.pipeline_mode<synchronous>, transform_indices = @transform_2, window_bounds = array<i64: 128, 1024>}, {pipeline_mode = #tpu.pipeline_mode<synchronous>, transform_indices = @transform_3, window_bounds = array<i64: 128, 1024>}, {pipeline_mode = #tpu.pipeline_mode<synchronous>, transform_indices = @transform_4, window_bounds = array<i64: 1, 1024>}, {transform_indices = @transform_5, window_bounds = array<i64: 32, 1024>}]} {
    %c0 = arith.constant 0 : index
    %c0_0 = arith.constant 0 : index
    %0 = vector.load %arg1[%c0, %c0_0] : memref<32x128xbf16, #tpu.memory_space<vmem>>, vector<32x128xbf16>
    %c0_1 = arith.constant 0 : index
    %c0_2 = arith.constant 0 : index
    %1 = vector.load %arg3[%c0_1, %c0_2] : memref<128x1024xbf16, #tpu.memory_space<vmem>>, vector<128x1024xbf16>
    %cst = arith.constant dense<0.000000e+00> : vector<32x1024xf32>
    %2 = tpu.matmul %0, %1, %cst {dimension_numbers = #tpu.dot_dimension_numbers<[1], [0], [0], [1], [0, 0, 1, 1], [], []>} : vector<32x128xbf16>, vector<128x1024xbf16>, vector<32x1024xf32> -> vector<32x1024xf32>
    %c0_3 = arith.constant 0 : index
    %c0_4 = arith.constant 0 : index
    %3 = vector.load %arg2[%c0_3, %c0_4] : memref<32x128xbf16, #tpu.memory_space<vmem>>, vector<32x128xbf16>
    %c0_5 = arith.constant 0 : index
    %c0_6 = arith.constant 0 : index
    %4 = vector.load %arg4[%c0_5, %c0_6] : memref<128x1024xbf16, #tpu.memory_space<vmem>>, vector<128x1024xbf16>
    %cst_7 = arith.constant dense<0.000000e+00> : vector<32x1024xf32>
    %5 = tpu.matmul %3, %4, %cst_7 {dimension_numbers = #tpu.dot_dimension_numbers<[1], [0], [0], [1], [0, 0, 1, 1], [], []>} : vector<32x128xbf16>, vector<128x1024xbf16>, vector<32x1024xf32> -> vector<32x1024xf32>
    %6 = arith.addf %2, %5 : vector<32x1024xf32>
    %c0_8 = arith.constant 0 : index
    %c0_9 = arith.constant 0 : index
    %7 = vector.load %arg5[%c0_8, %c0_9] : memref<1x1024xf32, #tpu.memory_space<vmem>>, vector<1x1024xf32>
    %8 = vector.broadcast %7 : vector<1x1024xf32> to vector<32x1024xf32>
    %9 = arith.addf %6, %8 : vector<32x1024xf32>
    %10 = arith.truncf %9 : vector<32x1024xf32> to vector<32x1024xbf16>
    %c0_10 = arith.constant 0 : index
    %c0_11 = arith.constant 0 : index
    %11 = vector.load %arg6[%c0_10, %c0_11] : memref<32x1024xbf16, #tpu.memory_space<vmem>>, vector<32x1024xbf16>
    tpu.vector_store %arg6[%c0_10, %c0_11], %10 {strides = array<i32>} : memref<32x1024xbf16, #tpu.memory_space<vmem>>, vector<32x1024xbf16>,
    return
  }
  func.func @transform_0(%arg0: i32) -> (i32, i32) {
    %c0_i32 = arith.constant 0 : i32
    %c0_i32_0 = arith.constant 0 : i32
    return %arg0, %c0_i32 : i32, i32
  }
  func.func @transform_1(%arg0: i32) -> (i32, i32) {
    %c0_i32 = arith.constant 0 : i32
    %c0_i32_0 = arith.constant 0 : i32
    return %arg0, %c0_i32 : i32, i32
  }
  func.func @transform_2(%arg0: i32) -> (i32, i32) {
    %c0_i32 = arith.constant 0 : i32
    %c0_i32_0 = arith.constant 0 : i32
    %c0_i32_1 = arith.constant 0 : i32
    return %c0_i32, %c0_i32_0 : i32, i32
  }
  func.func @transform_3(%arg0: i32) -> (i32, i32) {
    %c0_i32 = arith.constant 0 : i32
    %c0_i32_0 = arith.constant 0 : i32
    %c0_i32_1 = arith.constant 0 : i32
    return %c0_i32, %c0_i32_0 : i32, i32
  }
  func.func @transform_4(%arg0: i32) -> (i32, i32) {
    %c0_i32 = arith.constant 0 : i32
    %c0_i32_0 = arith.constant 0 : i32
    %c0_i32_1 = arith.constant 0 : i32
    return %c0_i32, %c0_i32_0 : i32, i32
  }
  func.func @transform_5(%arg0: i32) -> (i32, i32) {
    %c0_i32 = arith.constant 0 : i32
    %c0_i32_0 = arith.constant 0 : i32
    return %arg0, %c0_i32 : i32, i32
  }
}

module attributes {stable_mosaic.version = 11 : i64} {
  func.func @_lstm_chunk_kernel(%arg0: i32, %arg1: memref<8x8x512xbf16, #tpu.memory_space<vmem>>, %arg2: memref<8x8x512xbf16, #tpu.memory_space<vmem>>, %arg3: memref<256x1024xbf16, #tpu.memory_space<vmem>>, %arg4: memref<8x8x128xbf16, #tpu.memory_space<vmem>>, %arg5: memref<8x8x128xbf16, #tpu.memory_space<vmem>>, %arg6: memref<2x8x128xf32, #tpu.memory_space<vmem>>, %arg7: memref<2x8x128xf32, #tpu.memory_space<vmem>>) attributes {dimension_semantics = [#tpu.dimension_semantics<arbitrary>], iteration_bounds = array<i64: 1>, scalar_prefetch = 0 : i64, scratch_operands = 2 : i64, tpu.core_type = #tpu.core_type<tc>, window_params = [{transform_indices = @transform_0, window_bounds = array<i64: 8, 8, 512>}, {transform_indices = @transform_1, window_bounds = array<i64: 8, 8, 512>}, {pipeline_mode = #tpu.pipeline_mode<synchronous>, transform_indices = @transform_2, window_bounds = array<i64: 256, 1024>}, {transform_indices = @transform_3, window_bounds = array<i64: 8, 8, 128>}, {transform_indices = @transform_4, window_bounds = array<i64: 8, 8, 128>}]} {
    %c0_i32 = arith.constant 0 : i32
    %0 = arith.cmpi eq, %arg0, %c0_i32 : i32
    %1 = arith.extui %0 : i1 to i32
    %c0_i32_0 = arith.constant 0 : i32
    %2 = arith.cmpi ne, %1, %c0_i32_0 : i32
    scf.if %2 {
      %cst_170 = arith.constant 0.000000e+00 : f32
      %600 = vector.broadcast %cst_170 : f32 to vector<2x8x128xf32>
      %c0_171 = arith.constant 0 : index
      %c0_172 = arith.constant 0 : index
      %c0_173 = arith.constant 0 : index
      %601 = vector.load %arg6[%c0_171, %c0_172, %c0_173] : memref<2x8x128xf32, #tpu.memory_space<vmem>>, vector<2x8x128xf32>
      tpu.vector_store %arg6[%c0_171, %c0_172, %c0_173], %600 {strides = array<i32>} : memref<2x8x128xf32, #tpu.memory_space<vmem>>, vector<2x8x128xf32>,
      %cst_174 = arith.constant 0.000000e+00 : f32
      %602 = vector.broadcast %cst_174 : f32 to vector<2x8x128xf32>
      %c0_175 = arith.constant 0 : index
      %c0_176 = arith.constant 0 : index
      %c0_177 = arith.constant 0 : index
      %603 = vector.load %arg7[%c0_175, %c0_176, %c0_177] : memref<2x8x128xf32, #tpu.memory_space<vmem>>, vector<2x8x128xf32>
      tpu.vector_store %arg7[%c0_175, %c0_176, %c0_177], %602 {strides = array<i32>} : memref<2x8x128xf32, #tpu.memory_space<vmem>>, vector<2x8x128xf32>,
    } else {
    }
    %c0 = arith.constant 0 : index
    %c0_1 = arith.constant 0 : index
    %3 = vector.load %arg3[%c0, %c0_1] : memref<256x1024xbf16, #tpu.memory_space<vmem>>, vector<256x1024xbf16>
    %c0_2 = arith.constant 0 : index
    %c0_3 = arith.constant 0 : index
    %c0_4 = arith.constant 0 : index
    %4 = vector.load %arg6[%c0_2, %c0_3, %c0_4] : memref<2x8x128xf32, #tpu.memory_space<vmem>>, vector<1x8x128xf32>
    %5 = vector.shape_cast %4 : vector<1x8x128xf32> to vector<8x128xf32>
    %c0_5 = arith.constant 0 : index
    %c0_6 = arith.constant 0 : index
    %c0_7 = arith.constant 0 : index
    %6 = vector.load %arg7[%c0_5, %c0_6, %c0_7] : memref<2x8x128xf32, #tpu.memory_space<vmem>>, vector<1x8x128xf32>
    %7 = vector.shape_cast %6 : vector<1x8x128xf32> to vector<8x128xf32>
    %c1 = arith.constant 1 : index
    %c0_8 = arith.constant 0 : index
    %c0_9 = arith.constant 0 : index
    %8 = vector.load %arg6[%c1, %c0_8, %c0_9] : memref<2x8x128xf32, #tpu.memory_space<vmem>>, vector<1x8x128xf32>
    %9 = vector.shape_cast %8 : vector<1x8x128xf32> to vector<8x128xf32>
    %c1_10 = arith.constant 1 : index
    %c0_11 = arith.constant 0 : index
    %c0_12 = arith.constant 0 : index
    %10 = vector.load %arg7[%c1_10, %c0_11, %c0_12] : memref<2x8x128xf32, #tpu.memory_space<vmem>>, vector<1x8x128xf32>
    %11 = vector.shape_cast %10 : vector<1x8x128xf32> to vector<8x128xf32>
    %12 = arith.truncf %5 : vector<8x128xf32> to vector<8x128xbf16>
    %13 = arith.truncf %9 : vector<8x128xf32> to vector<8x128xbf16>
    %14 = tpu.concatenate %12, %13 in 1 : vector<8x128xbf16>, vector<8x128xbf16> -> vector<8x256xbf16>
    %cst = arith.constant dense<0.000000e+00> : vector<8x1024xf32>
    %15 = tpu.matmul %14, %3, %cst {dimension_numbers = #tpu.dot_dimension_numbers<[1], [0], [0], [1], [0, 0, 1, 1], [], []>} : vector<8x256xbf16>, vector<256x1024xbf16>, vector<8x1024xf32> -> vector<8x1024xf32>
    %16 = vector.extract_strided_slice %15 {offsets = [0, 0], sizes = [8, 512], strides = [1, 1]} : vector<8x1024xf32> to vector<8x512xf32>
    %c0_13 = arith.constant 0 : index
    %c0_14 = arith.constant 0 : index
    %c0_15 = arith.constant 0 : index
    %17 = vector.load %arg1[%c0_13, %c0_14, %c0_15] : memref<8x8x512xbf16, #tpu.memory_space<vmem>>, vector<1x8x512xbf16>
    %18 = vector.shape_cast %17 : vector<1x8x512xbf16> to vector<8x512xbf16>
    %19 = arith.extf %18 : vector<8x512xbf16> to vector<8x512xf32>
    %20 = arith.addf %19, %16 : vector<8x512xf32>
    %21 = vector.extract_strided_slice %20 {offsets = [0, 0], sizes = [8, 128], strides = [1, 1]} : vector<8x512xf32> to vector<8x128xf32>
    %22 = arith.negf %21 : vector<8x128xf32>
    %23 = math.exp %22 : vector<8x128xf32>
    %cst_16 = arith.constant 1.000000e+00 : f32
    %24 = vector.broadcast %cst_16 : f32 to vector<8x128xf32>
    %25 = arith.addf %24, %23 : vector<8x128xf32>
    %26 = arith.divf %24, %25 : vector<8x128xf32>
    %27 = vector.extract_strided_slice %20 {offsets = [0, 128], sizes = [8, 128], strides = [1, 1]} : vector<8x512xf32> to vector<8x128xf32>
    %28 = arith.negf %27 : vector<8x128xf32>
    %29 = math.exp %28 : vector<8x128xf32>
    %cst_17 = arith.constant 1.000000e+00 : f32
    %30 = vector.broadcast %cst_17 : f32 to vector<8x128xf32>
    %31 = arith.addf %30, %29 : vector<8x128xf32>
    %32 = arith.divf %30, %31 : vector<8x128xf32>
    %33 = vector.extract_strided_slice %20 {offsets = [0, 256], sizes = [8, 128], strides = [1, 1]} : vector<8x512xf32> to vector<8x128xf32>
    %34 = math.tanh %33 : vector<8x128xf32>
    %35 = vector.extract_strided_slice %20 {offsets = [0, 384], sizes = [8, 128], strides = [1, 1]} : vector<8x512xf32> to vector<8x128xf32>
    %36 = arith.negf %35 : vector<8x128xf32>
    %37 = math.exp %36 : vector<8x128xf32>
    %cst_18 = arith.constant 1.000000e+00 : f32
    %38 = vector.broadcast %cst_18 : f32 to vector<8x128xf32>
    %39 = arith.addf %38, %37 : vector<8x128xf32>
    %40 = arith.divf %38, %39 : vector<8x128xf32>
    %41 = arith.mulf %32, %7 : vector<8x128xf32>
    %42 = arith.mulf %26, %34 : vector<8x128xf32>
    %43 = arith.addf %41, %42 : vector<8x128xf32>
    %44 = math.tanh %43 : vector<8x128xf32>
    %45 = arith.mulf %40, %44 : vector<8x128xf32>
    %46 = arith.truncf %45 : vector<8x128xf32> to vector<8x128xbf16>
    %c0_19 = arith.constant 0 : index
    %c0_20 = arith.constant 0 : index
    %c0_21 = arith.constant 0 : index
    %47 = vector.load %arg4[%c0_19, %c0_20, %c0_21] : memref<8x8x128xbf16, #tpu.memory_space<vmem>>, vector<1x8x128xbf16>
    %48 = vector.shape_cast %47 : vector<1x8x128xbf16> to vector<8x128xbf16>
    %49 = vector.shape_cast %46 : vector<8x128xbf16> to vector<1x8x128xbf16>
    tpu.vector_store %arg4[%c0_19, %c0_20, %c0_21], %49 {strides = array<i32>} : memref<8x8x128xbf16, #tpu.memory_space<vmem>>, vector<1x8x128xbf16>,
    %50 = vector.extract_strided_slice %15 {offsets = [0, 512], sizes = [8, 512], strides = [1, 1]} : vector<8x1024xf32> to vector<8x512xf32>
    %c7 = arith.constant 7 : index
    %c0_22 = arith.constant 0 : index
    %c0_23 = arith.constant 0 : index
    %51 = vector.load %arg2[%c7, %c0_22, %c0_23] : memref<8x8x512xbf16, #tpu.memory_space<vmem>>, vector<1x8x512xbf16>
    %52 = vector.shape_cast %51 : vector<1x8x512xbf16> to vector<8x512xbf16>
    %53 = arith.extf %52 : vector<8x512xbf16> to vector<8x512xf32>
    %54 = arith.addf %53, %50 : vector<8x512xf32>
    %55 = vector.extract_strided_slice %54 {offsets = [0, 0], sizes = [8, 128], strides = [1, 1]} : vector<8x512xf32> to vector<8x128xf32>
    %56 = arith.negf %55 : vector<8x128xf32>
    %57 = math.exp %56 : vector<8x128xf32>
    %cst_24 = arith.constant 1.000000e+00 : f32
    %58 = vector.broadcast %cst_24 : f32 to vector<8x128xf32>
    %59 = arith.addf %58, %57 : vector<8x128xf32>
    %60 = arith.divf %58, %59 : vector<8x128xf32>
    %61 = vector.extract_strided_slice %54 {offsets = [0, 128], sizes = [8, 128], strides = [1, 1]} : vector<8x512xf32> to vector<8x128xf32>
    %62 = arith.negf %61 : vector<8x128xf32>
    %63 = math.exp %62 : vector<8x128xf32>
    %cst_25 = arith.constant 1.000000e+00 : f32
    %64 = vector.broadcast %cst_25 : f32 to vector<8x128xf32>
    %65 = arith.addf %64, %63 : vector<8x128xf32>
    %66 = arith.divf %64, %65 : vector<8x128xf32>
    %67 = vector.extract_strided_slice %54 {offsets = [0, 256], sizes = [8, 128], strides = [1, 1]} : vector<8x512xf32> to vector<8x128xf32>
    %68 = math.tanh %67 : vector<8x128xf32>
    %69 = vector.extract_strided_slice %54 {offsets = [0, 384], sizes = [8, 128], strides = [1, 1]} : vector<8x512xf32> to vector<8x128xf32>
    %70 = arith.negf %69 : vector<8x128xf32>
    %71 = math.exp %70 : vector<8x128xf32>
    %cst_26 = arith.constant 1.000000e+00 : f32
    %72 = vector.broadcast %cst_26 : f32 to vector<8x128xf32>
    %73 = arith.addf %72, %71 : vector<8x128xf32>
    %74 = arith.divf %72, %73 : vector<8x128xf32>
    %75 = arith.mulf %66, %11 : vector<8x128xf32>
    %76 = arith.mulf %60, %68 : vector<8x128xf32>
    %77 = arith.addf %75, %76 : vector<8x128xf32>
    %78 = math.tanh %77 : vector<8x128xf32>
    %79 = arith.mulf %74, %78 : vector<8x128xf32>
    %80 = arith.truncf %79 : vector<8x128xf32> to vector<8x128xbf16>
    %c7_27 = arith.constant 7 : index
    %c0_28 = arith.constant 0 : index
    %c0_29 = arith.constant 0 : index
    %81 = vector.load %arg5[%c7_27, %c0_28, %c0_29] : memref<8x8x128xbf16, #tpu.memory_space<vmem>>, vector<1x8x128xbf16>
    %82 = vector.shape_cast %81 : vector<1x8x128xbf16> to vector<8x128xbf16>
    %83 = vector.shape_cast %80 : vector<8x128xbf16> to vector<1x8x128xbf16>
    tpu.vector_store %arg5[%c7_27, %c0_28, %c0_29], %83 {strides = array<i32>} : memref<8x8x128xbf16, #tpu.memory_space<vmem>>, vector<1x8x128xbf16>,
    %84 = arith.truncf %45 : vector<8x128xf32> to vector<8x128xbf16>
    %85 = arith.truncf %79 : vector<8x128xf32> to vector<8x128xbf16>
    %86 = tpu.concatenate %84, %85 in 1 : vector<8x128xbf16>, vector<8x128xbf16> -> vector<8x256xbf16>
    %cst_30 = arith.constant dense<0.000000e+00> : vector<8x1024xf32>
    %87 = tpu.matmul %86, %3, %cst_30 {dimension_numbers = #tpu.dot_dimension_numbers<[1], [0], [0], [1], [0, 0, 1, 1], [], []>} : vector<8x256xbf16>, vector<256x1024xbf16>, vector<8x1024xf32> -> vector<8x1024xf32>
    %88 = vector.extract_strided_slice %87 {offsets = [0, 0], sizes = [8, 512], strides = [1, 1]} : vector<8x1024xf32> to vector<8x512xf32>
    %c1_31 = arith.constant 1 : index
    %c0_32 = arith.constant 0 : index
    %c0_33 = arith.constant 0 : index
    %89 = vector.load %arg1[%c1_31, %c0_32, %c0_33] : memref<8x8x512xbf16, #tpu.memory_space<vmem>>, vector<1x8x512xbf16>
    %90 = vector.shape_cast %89 : vector<1x8x512xbf16> to vector<8x512xbf16>
    %91 = arith.extf %90 : vector<8x512xbf16> to vector<8x512xf32>
    %92 = arith.addf %91, %88 : vector<8x512xf32>
    %93 = vector.extract_strided_slice %92 {offsets = [0, 0], sizes = [8, 128], strides = [1, 1]} : vector<8x512xf32> to vector<8x128xf32>
    %94 = arith.negf %93 : vector<8x128xf32>
    %95 = math.exp %94 : vector<8x128xf32>
    %cst_34 = arith.constant 1.000000e+00 : f32
    %96 = vector.broadcast %cst_34 : f32 to vector<8x128xf32>
    %97 = arith.addf %96, %95 : vector<8x128xf32>
    %98 = arith.divf %96, %97 : vector<8x128xf32>
    %99 = vector.extract_strided_slice %92 {offsets = [0, 128], sizes = [8, 128], strides = [1, 1]} : vector<8x512xf32> to vector<8x128xf32>
    %100 = arith.negf %99 : vector<8x128xf32>
    %101 = math.exp %100 : vector<8x128xf32>
    %cst_35 = arith.constant 1.000000e+00 : f32
    %102 = vector.broadcast %cst_35 : f32 to vector<8x128xf32>
    %103 = arith.addf %102, %101 : vector<8x128xf32>
    %104 = arith.divf %102, %103 : vector<8x128xf32>
    %105 = vector.extract_strided_slice %92 {offsets = [0, 256], sizes = [8, 128], strides = [1, 1]} : vector<8x512xf32> to vector<8x128xf32>
    %106 = math.tanh %105 : vector<8x128xf32>
    %107 = vector.extract_strided_slice %92 {offsets = [0, 384], sizes = [8, 128], strides = [1, 1]} : vector<8x512xf32> to vector<8x128xf32>
    %108 = arith.negf %107 : vector<8x128xf32>
    %109 = math.exp %108 : vector<8x128xf32>
    %cst_36 = arith.constant 1.000000e+00 : f32
    %110 = vector.broadcast %cst_36 : f32 to vector<8x128xf32>
    %111 = arith.addf %110, %109 : vector<8x128xf32>
    %112 = arith.divf %110, %111 : vector<8x128xf32>
    %113 = arith.mulf %104, %43 : vector<8x128xf32>
    %114 = arith.mulf %98, %106 : vector<8x128xf32>
    %115 = arith.addf %113, %114 : vector<8x128xf32>
    %116 = math.tanh %115 : vector<8x128xf32>
    %117 = arith.mulf %112, %116 : vector<8x128xf32>
    %118 = arith.truncf %117 : vector<8x128xf32> to vector<8x128xbf16>
    %c1_37 = arith.constant 1 : index
    %c0_38 = arith.constant 0 : index
    %c0_39 = arith.constant 0 : index
    %119 = vector.load %arg4[%c1_37, %c0_38, %c0_39] : memref<8x8x128xbf16, #tpu.memory_space<vmem>>, vector<1x8x128xbf16>
    %120 = vector.shape_cast %119 : vector<1x8x128xbf16> to vector<8x128xbf16>
    %121 = vector.shape_cast %118 : vector<8x128xbf16> to vector<1x8x128xbf16>
    tpu.vector_store %arg4[%c1_37, %c0_38, %c0_39], %121 {strides = array<i32>} : memref<8x8x128xbf16, #tpu.memory_space<vmem>>, vector<1x8x128xbf16>,
    %122 = vector.extract_strided_slice %87 {offsets = [0, 512], sizes = [8, 512], strides = [1, 1]} : vector<8x1024xf32> to vector<8x512xf32>
    %c6 = arith.constant 6 : index
    %c0_40 = arith.constant 0 : index
    %c0_41 = arith.constant 0 : index
    %123 = vector.load %arg2[%c6, %c0_40, %c0_41] : memref<8x8x512xbf16, #tpu.memory_space<vmem>>, vector<1x8x512xbf16>
    %124 = vector.shape_cast %123 : vector<1x8x512xbf16> to vector<8x512xbf16>
    %125 = arith.extf %124 : vector<8x512xbf16> to vector<8x512xf32>
    %126 = arith.addf %125, %122 : vector<8x512xf32>
    %127 = vector.extract_strided_slice %126 {offsets = [0, 0], sizes = [8, 128], strides = [1, 1]} : vector<8x512xf32> to vector<8x128xf32>
    %128 = arith.negf %127 : vector<8x128xf32>
    %129 = math.exp %128 : vector<8x128xf32>
    %cst_42 = arith.constant 1.000000e+00 : f32
    %130 = vector.broadcast %cst_42 : f32 to vector<8x128xf32>
    %131 = arith.addf %130, %129 : vector<8x128xf32>
    %132 = arith.divf %130, %131 : vector<8x128xf32>
    %133 = vector.extract_strided_slice %126 {offsets = [0, 128], sizes = [8, 128], strides = [1, 1]} : vector<8x512xf32> to vector<8x128xf32>
    %134 = arith.negf %133 : vector<8x128xf32>
    %135 = math.exp %134 : vector<8x128xf32>
    %cst_43 = arith.constant 1.000000e+00 : f32
    %136 = vector.broadcast %cst_43 : f32 to vector<8x128xf32>
    %137 = arith.addf %136, %135 : vector<8x128xf32>
    %138 = arith.divf %136, %137 : vector<8x128xf32>
    %139 = vector.extract_strided_slice %126 {offsets = [0, 256], sizes = [8, 128], strides = [1, 1]} : vector<8x512xf32> to vector<8x128xf32>
    %140 = math.tanh %139 : vector<8x128xf32>
    %141 = vector.extract_strided_slice %126 {offsets = [0, 384], sizes = [8, 128], strides = [1, 1]} : vector<8x512xf32> to vector<8x128xf32>
    %142 = arith.negf %141 : vector<8x128xf32>
    %143 = math.exp %142 : vector<8x128xf32>
    %cst_44 = arith.constant 1.000000e+00 : f32
    %144 = vector.broadcast %cst_44 : f32 to vector<8x128xf32>
    %145 = arith.addf %144, %143 : vector<8x128xf32>
    %146 = arith.divf %144, %145 : vector<8x128xf32>
    %147 = arith.mulf %138, %77 : vector<8x128xf32>
    %148 = arith.mulf %132, %140 : vector<8x128xf32>
    %149 = arith.addf %147, %148 : vector<8x128xf32>
    %150 = math.tanh %149 : vector<8x128xf32>
    %151 = arith.mulf %146, %150 : vector<8x128xf32>
    %152 = arith.truncf %151 : vector<8x128xf32> to vector<8x128xbf16>
    %c6_45 = arith.constant 6 : index
    %c0_46 = arith.constant 0 : index
    %c0_47 = arith.constant 0 : index
    %153 = vector.load %arg5[%c6_45, %c0_46, %c0_47] : memref<8x8x128xbf16, #tpu.memory_space<vmem>>, vector<1x8x128xbf16>
    %154 = vector.shape_cast %153 : vector<1x8x128xbf16> to vector<8x128xbf16>
    %155 = vector.shape_cast %152 : vector<8x128xbf16> to vector<1x8x128xbf16>
    tpu.vector_store %arg5[%c6_45, %c0_46, %c0_47], %155 {strides = array<i32>} : memref<8x8x128xbf16, #tpu.memory_space<vmem>>, vector<1x8x128xbf16>,
    %156 = arith.truncf %117 : vector<8x128xf32> to vector<8x128xbf16>
    %157 = arith.truncf %151 : vector<8x128xf32> to vector<8x128xbf16>
    %158 = tpu.concatenate %156, %157 in 1 : vector<8x128xbf16>, vector<8x128xbf16> -> vector<8x256xbf16>
    %cst_48 = arith.constant dense<0.000000e+00> : vector<8x1024xf32>
    %159 = tpu.matmul %158, %3, %cst_48 {dimension_numbers = #tpu.dot_dimension_numbers<[1], [0], [0], [1], [0, 0, 1, 1], [], []>} : vector<8x256xbf16>, vector<256x1024xbf16>, vector<8x1024xf32> -> vector<8x1024xf32>
    %160 = vector.extract_strided_slice %159 {offsets = [0, 0], sizes = [8, 512], strides = [1, 1]} : vector<8x1024xf32> to vector<8x512xf32>
    %c2 = arith.constant 2 : index
    %c0_49 = arith.constant 0 : index
    %c0_50 = arith.constant 0 : index
    %161 = vector.load %arg1[%c2, %c0_49, %c0_50] : memref<8x8x512xbf16, #tpu.memory_space<vmem>>, vector<1x8x512xbf16>
    %162 = vector.shape_cast %161 : vector<1x8x512xbf16> to vector<8x512xbf16>
    %163 = arith.extf %162 : vector<8x512xbf16> to vector<8x512xf32>
    %164 = arith.addf %163, %160 : vector<8x512xf32>
    %165 = vector.extract_strided_slice %164 {offsets = [0, 0], sizes = [8, 128], strides = [1, 1]} : vector<8x512xf32> to vector<8x128xf32>
    %166 = arith.negf %165 : vector<8x128xf32>
    %167 = math.exp %166 : vector<8x128xf32>
    %cst_51 = arith.constant 1.000000e+00 : f32
    %168 = vector.broadcast %cst_51 : f32 to vector<8x128xf32>
    %169 = arith.addf %168, %167 : vector<8x128xf32>
    %170 = arith.divf %168, %169 : vector<8x128xf32>
    %171 = vector.extract_strided_slice %164 {offsets = [0, 128], sizes = [8, 128], strides = [1, 1]} : vector<8x512xf32> to vector<8x128xf32>
    %172 = arith.negf %171 : vector<8x128xf32>
    %173 = math.exp %172 : vector<8x128xf32>
    %cst_52 = arith.constant 1.000000e+00 : f32
    %174 = vector.broadcast %cst_52 : f32 to vector<8x128xf32>
    %175 = arith.addf %174, %173 : vector<8x128xf32>
    %176 = arith.divf %174, %175 : vector<8x128xf32>
    %177 = vector.extract_strided_slice %164 {offsets = [0, 256], sizes = [8, 128], strides = [1, 1]} : vector<8x512xf32> to vector<8x128xf32>
    %178 = math.tanh %177 : vector<8x128xf32>
    %179 = vector.extract_strided_slice %164 {offsets = [0, 384], sizes = [8, 128], strides = [1, 1]} : vector<8x512xf32> to vector<8x128xf32>
    %180 = arith.negf %179 : vector<8x128xf32>
    %181 = math.exp %180 : vector<8x128xf32>
    %cst_53 = arith.constant 1.000000e+00 : f32
    %182 = vector.broadcast %cst_53 : f32 to vector<8x128xf32>
    %183 = arith.addf %182, %181 : vector<8x128xf32>
    %184 = arith.divf %182, %183 : vector<8x128xf32>
    %185 = arith.mulf %176, %115 : vector<8x128xf32>
    %186 = arith.mulf %170, %178 : vector<8x128xf32>
    %187 = arith.addf %185, %186 : vector<8x128xf32>
    %188 = math.tanh %187 : vector<8x128xf32>
    %189 = arith.mulf %184, %188 : vector<8x128xf32>
    %190 = arith.truncf %189 : vector<8x128xf32> to vector<8x128xbf16>
    %c2_54 = arith.constant 2 : index
    %c0_55 = arith.constant 0 : index
    %c0_56 = arith.constant 0 : index
    %191 = vector.load %arg4[%c2_54, %c0_55, %c0_56] : memref<8x8x128xbf16, #tpu.memory_space<vmem>>, vector<1x8x128xbf16>
    %192 = vector.shape_cast %191 : vector<1x8x128xbf16> to vector<8x128xbf16>
    %193 = vector.shape_cast %190 : vector<8x128xbf16> to vector<1x8x128xbf16>
    tpu.vector_store %arg4[%c2_54, %c0_55, %c0_56], %193 {strides = array<i32>} : memref<8x8x128xbf16, #tpu.memory_space<vmem>>, vector<1x8x128xbf16>,
    %194 = vector.extract_strided_slice %159 {offsets = [0, 512], sizes = [8, 512], strides = [1, 1]} : vector<8x1024xf32> to vector<8x512xf32>
    %c5 = arith.constant 5 : index
    %c0_57 = arith.constant 0 : index
    %c0_58 = arith.constant 0 : index
    %195 = vector.load %arg2[%c5, %c0_57, %c0_58] : memref<8x8x512xbf16, #tpu.memory_space<vmem>>, vector<1x8x512xbf16>
    %196 = vector.shape_cast %195 : vector<1x8x512xbf16> to vector<8x512xbf16>
    %197 = arith.extf %196 : vector<8x512xbf16> to vector<8x512xf32>
    %198 = arith.addf %197, %194 : vector<8x512xf32>
    %199 = vector.extract_strided_slice %198 {offsets = [0, 0], sizes = [8, 128], strides = [1, 1]} : vector<8x512xf32> to vector<8x128xf32>
    %200 = arith.negf %199 : vector<8x128xf32>
    %201 = math.exp %200 : vector<8x128xf32>
    %cst_59 = arith.constant 1.000000e+00 : f32
    %202 = vector.broadcast %cst_59 : f32 to vector<8x128xf32>
    %203 = arith.addf %202, %201 : vector<8x128xf32>
    %204 = arith.divf %202, %203 : vector<8x128xf32>
    %205 = vector.extract_strided_slice %198 {offsets = [0, 128], sizes = [8, 128], strides = [1, 1]} : vector<8x512xf32> to vector<8x128xf32>
    %206 = arith.negf %205 : vector<8x128xf32>
    %207 = math.exp %206 : vector<8x128xf32>
    %cst_60 = arith.constant 1.000000e+00 : f32
    %208 = vector.broadcast %cst_60 : f32 to vector<8x128xf32>
    %209 = arith.addf %208, %207 : vector<8x128xf32>
    %210 = arith.divf %208, %209 : vector<8x128xf32>
    %211 = vector.extract_strided_slice %198 {offsets = [0, 256], sizes = [8, 128], strides = [1, 1]} : vector<8x512xf32> to vector<8x128xf32>
    %212 = math.tanh %211 : vector<8x128xf32>
    %213 = vector.extract_strided_slice %198 {offsets = [0, 384], sizes = [8, 128], strides = [1, 1]} : vector<8x512xf32> to vector<8x128xf32>
    %214 = arith.negf %213 : vector<8x128xf32>
    %215 = math.exp %214 : vector<8x128xf32>
    %cst_61 = arith.constant 1.000000e+00 : f32
    %216 = vector.broadcast %cst_61 : f32 to vector<8x128xf32>
    %217 = arith.addf %216, %215 : vector<8x128xf32>
    %218 = arith.divf %216, %217 : vector<8x128xf32>
    %219 = arith.mulf %210, %149 : vector<8x128xf32>
    %220 = arith.mulf %204, %212 : vector<8x128xf32>
    %221 = arith.addf %219, %220 : vector<8x128xf32>
    %222 = math.tanh %221 : vector<8x128xf32>
    %223 = arith.mulf %218, %222 : vector<8x128xf32>
    %224 = arith.truncf %223 : vector<8x128xf32> to vector<8x128xbf16>
    %c5_62 = arith.constant 5 : index
    %c0_63 = arith.constant 0 : index
    %c0_64 = arith.constant 0 : index
    %225 = vector.load %arg5[%c5_62, %c0_63, %c0_64] : memref<8x8x128xbf16, #tpu.memory_space<vmem>>, vector<1x8x128xbf16>
    %226 = vector.shape_cast %225 : vector<1x8x128xbf16> to vector<8x128xbf16>
    %227 = vector.shape_cast %224 : vector<8x128xbf16> to vector<1x8x128xbf16>
    tpu.vector_store %arg5[%c5_62, %c0_63, %c0_64], %227 {strides = array<i32>} : memref<8x8x128xbf16, #tpu.memory_space<vmem>>, vector<1x8x128xbf16>,
    %228 = arith.truncf %189 : vector<8x128xf32> to vector<8x128xbf16>
    %229 = arith.truncf %223 : vector<8x128xf32> to vector<8x128xbf16>
    %230 = tpu.concatenate %228, %229 in 1 : vector<8x128xbf16>, vector<8x128xbf16> -> vector<8x256xbf16>
    %cst_65 = arith.constant dense<0.000000e+00> : vector<8x1024xf32>
    %231 = tpu.matmul %230, %3, %cst_65 {dimension_numbers = #tpu.dot_dimension_numbers<[1], [0], [0], [1], [0, 0, 1, 1], [], []>} : vector<8x256xbf16>, vector<256x1024xbf16>, vector<8x1024xf32> -> vector<8x1024xf32>
    %232 = vector.extract_strided_slice %231 {offsets = [0, 0], sizes = [8, 512], strides = [1, 1]} : vector<8x1024xf32> to vector<8x512xf32>
    %c3 = arith.constant 3 : index
    %c0_66 = arith.constant 0 : index
    %c0_67 = arith.constant 0 : index
    %233 = vector.load %arg1[%c3, %c0_66, %c0_67] : memref<8x8x512xbf16, #tpu.memory_space<vmem>>, vector<1x8x512xbf16>
    %234 = vector.shape_cast %233 : vector<1x8x512xbf16> to vector<8x512xbf16>
    %235 = arith.extf %234 : vector<8x512xbf16> to vector<8x512xf32>
    %236 = arith.addf %235, %232 : vector<8x512xf32>
    %237 = vector.extract_strided_slice %236 {offsets = [0, 0], sizes = [8, 128], strides = [1, 1]} : vector<8x512xf32> to vector<8x128xf32>
    %238 = arith.negf %237 : vector<8x128xf32>
    %239 = math.exp %238 : vector<8x128xf32>
    %cst_68 = arith.constant 1.000000e+00 : f32
    %240 = vector.broadcast %cst_68 : f32 to vector<8x128xf32>
    %241 = arith.addf %240, %239 : vector<8x128xf32>
    %242 = arith.divf %240, %241 : vector<8x128xf32>
    %243 = vector.extract_strided_slice %236 {offsets = [0, 128], sizes = [8, 128], strides = [1, 1]} : vector<8x512xf32> to vector<8x128xf32>
    %244 = arith.negf %243 : vector<8x128xf32>
    %245 = math.exp %244 : vector<8x128xf32>
    %cst_69 = arith.constant 1.000000e+00 : f32
    %246 = vector.broadcast %cst_69 : f32 to vector<8x128xf32>
    %247 = arith.addf %246, %245 : vector<8x128xf32>
    %248 = arith.divf %246, %247 : vector<8x128xf32>
    %249 = vector.extract_strided_slice %236 {offsets = [0, 256], sizes = [8, 128], strides = [1, 1]} : vector<8x512xf32> to vector<8x128xf32>
    %250 = math.tanh %249 : vector<8x128xf32>
    %251 = vector.extract_strided_slice %236 {offsets = [0, 384], sizes = [8, 128], strides = [1, 1]} : vector<8x512xf32> to vector<8x128xf32>
    %252 = arith.negf %251 : vector<8x128xf32>
    %253 = math.exp %252 : vector<8x128xf32>
    %cst_70 = arith.constant 1.000000e+00 : f32
    %254 = vector.broadcast %cst_70 : f32 to vector<8x128xf32>
    %255 = arith.addf %254, %253 : vector<8x128xf32>
    %256 = arith.divf %254, %255 : vector<8x128xf32>
    %257 = arith.mulf %248, %187 : vector<8x128xf32>
    %258 = arith.mulf %242, %250 : vector<8x128xf32>
    %259 = arith.addf %257, %258 : vector<8x128xf32>
    %260 = math.tanh %259 : vector<8x128xf32>
    %261 = arith.mulf %256, %260 : vector<8x128xf32>
    %262 = arith.truncf %261 : vector<8x128xf32> to vector<8x128xbf16>
    %c3_71 = arith.constant 3 : index
    %c0_72 = arith.constant 0 : index
    %c0_73 = arith.constant 0 : index
    %263 = vector.load %arg4[%c3_71, %c0_72, %c0_73] : memref<8x8x128xbf16, #tpu.memory_space<vmem>>, vector<1x8x128xbf16>
    %264 = vector.shape_cast %263 : vector<1x8x128xbf16> to vector<8x128xbf16>
    %265 = vector.shape_cast %262 : vector<8x128xbf16> to vector<1x8x128xbf16>
    tpu.vector_store %arg4[%c3_71, %c0_72, %c0_73], %265 {strides = array<i32>} : memref<8x8x128xbf16, #tpu.memory_space<vmem>>, vector<1x8x128xbf16>,
    %266 = vector.extract_strided_slice %231 {offsets = [0, 512], sizes = [8, 512], strides = [1, 1]} : vector<8x1024xf32> to vector<8x512xf32>
    %c4 = arith.constant 4 : index
    %c0_74 = arith.constant 0 : index
    %c0_75 = arith.constant 0 : index
    %267 = vector.load %arg2[%c4, %c0_74, %c0_75] : memref<8x8x512xbf16, #tpu.memory_space<vmem>>, vector<1x8x512xbf16>
    %268 = vector.shape_cast %267 : vector<1x8x512xbf16> to vector<8x512xbf16>
    %269 = arith.extf %268 : vector<8x512xbf16> to vector<8x512xf32>
    %270 = arith.addf %269, %266 : vector<8x512xf32>
    %271 = vector.extract_strided_slice %270 {offsets = [0, 0], sizes = [8, 128], strides = [1, 1]} : vector<8x512xf32> to vector<8x128xf32>
    %272 = arith.negf %271 : vector<8x128xf32>
    %273 = math.exp %272 : vector<8x128xf32>
    %cst_76 = arith.constant 1.000000e+00 : f32
    %274 = vector.broadcast %cst_76 : f32 to vector<8x128xf32>
    %275 = arith.addf %274, %273 : vector<8x128xf32>
    %276 = arith.divf %274, %275 : vector<8x128xf32>
    %277 = vector.extract_strided_slice %270 {offsets = [0, 128], sizes = [8, 128], strides = [1, 1]} : vector<8x512xf32> to vector<8x128xf32>
    %278 = arith.negf %277 : vector<8x128xf32>
    %279 = math.exp %278 : vector<8x128xf32>
    %cst_77 = arith.constant 1.000000e+00 : f32
    %280 = vector.broadcast %cst_77 : f32 to vector<8x128xf32>
    %281 = arith.addf %280, %279 : vector<8x128xf32>
    %282 = arith.divf %280, %281 : vector<8x128xf32>
    %283 = vector.extract_strided_slice %270 {offsets = [0, 256], sizes = [8, 128], strides = [1, 1]} : vector<8x512xf32> to vector<8x128xf32>
    %284 = math.tanh %283 : vector<8x128xf32>
    %285 = vector.extract_strided_slice %270 {offsets = [0, 384], sizes = [8, 128], strides = [1, 1]} : vector<8x512xf32> to vector<8x128xf32>
    %286 = arith.negf %285 : vector<8x128xf32>
    %287 = math.exp %286 : vector<8x128xf32>
    %cst_78 = arith.constant 1.000000e+00 : f32
    %288 = vector.broadcast %cst_78 : f32 to vector<8x128xf32>
    %289 = arith.addf %288, %287 : vector<8x128xf32>
    %290 = arith.divf %288, %289 : vector<8x128xf32>
    %291 = arith.mulf %282, %221 : vector<8x128xf32>
    %292 = arith.mulf %276, %284 : vector<8x128xf32>
    %293 = arith.addf %291, %292 : vector<8x128xf32>
    %294 = math.tanh %293 : vector<8x128xf32>
    %295 = arith.mulf %290, %294 : vector<8x128xf32>
    %296 = arith.truncf %295 : vector<8x128xf32> to vector<8x128xbf16>
    %c4_79 = arith.constant 4 : index
    %c0_80 = arith.constant 0 : index
    %c0_81 = arith.constant 0 : index
    %297 = vector.load %arg5[%c4_79, %c0_80, %c0_81] : memref<8x8x128xbf16, #tpu.memory_space<vmem>>, vector<1x8x128xbf16>
    %298 = vector.shape_cast %297 : vector<1x8x128xbf16> to vector<8x128xbf16>
    %299 = vector.shape_cast %296 : vector<8x128xbf16> to vector<1x8x128xbf16>
    tpu.vector_store %arg5[%c4_79, %c0_80, %c0_81], %299 {strides = array<i32>} : memref<8x8x128xbf16, #tpu.memory_space<vmem>>, vector<1x8x128xbf16>,
    %300 = arith.truncf %261 : vector<8x128xf32> to vector<8x128xbf16>
    %301 = arith.truncf %295 : vector<8x128xf32> to vector<8x128xbf16>
    %302 = tpu.concatenate %300, %301 in 1 : vector<8x128xbf16>, vector<8x128xbf16> -> vector<8x256xbf16>
    %cst_82 = arith.constant dense<0.000000e+00> : vector<8x1024xf32>
    %303 = tpu.matmul %302, %3, %cst_82 {dimension_numbers = #tpu.dot_dimension_numbers<[1], [0], [0], [1], [0, 0, 1, 1], [], []>} : vector<8x256xbf16>, vector<256x1024xbf16>, vector<8x1024xf32> -> vector<8x1024xf32>
    %304 = vector.extract_strided_slice %303 {offsets = [0, 0], sizes = [8, 512], strides = [1, 1]} : vector<8x1024xf32> to vector<8x512xf32>
    %c4_83 = arith.constant 4 : index
    %c0_84 = arith.constant 0 : index
    %c0_85 = arith.constant 0 : index
    %305 = vector.load %arg1[%c4_83, %c0_84, %c0_85] : memref<8x8x512xbf16, #tpu.memory_space<vmem>>, vector<1x8x512xbf16>
    %306 = vector.shape_cast %305 : vector<1x8x512xbf16> to vector<8x512xbf16>
    %307 = arith.extf %306 : vector<8x512xbf16> to vector<8x512xf32>
    %308 = arith.addf %307, %304 : vector<8x512xf32>
    %309 = vector.extract_strided_slice %308 {offsets = [0, 0], sizes = [8, 128], strides = [1, 1]} : vector<8x512xf32> to vector<8x128xf32>
    %310 = arith.negf %309 : vector<8x128xf32>
    %311 = math.exp %310 : vector<8x128xf32>
    %cst_86 = arith.constant 1.000000e+00 : f32
    %312 = vector.broadcast %cst_86 : f32 to vector<8x128xf32>
    %313 = arith.addf %312, %311 : vector<8x128xf32>
    %314 = arith.divf %312, %313 : vector<8x128xf32>
    %315 = vector.extract_strided_slice %308 {offsets = [0, 128], sizes = [8, 128], strides = [1, 1]} : vector<8x512xf32> to vector<8x128xf32>
    %316 = arith.negf %315 : vector<8x128xf32>
    %317 = math.exp %316 : vector<8x128xf32>
    %cst_87 = arith.constant 1.000000e+00 : f32
    %318 = vector.broadcast %cst_87 : f32 to vector<8x128xf32>
    %319 = arith.addf %318, %317 : vector<8x128xf32>
    %320 = arith.divf %318, %319 : vector<8x128xf32>
    %321 = vector.extract_strided_slice %308 {offsets = [0, 256], sizes = [8, 128], strides = [1, 1]} : vector<8x512xf32> to vector<8x128xf32>
    %322 = math.tanh %321 : vector<8x128xf32>
    %323 = vector.extract_strided_slice %308 {offsets = [0, 384], sizes = [8, 128], strides = [1, 1]} : vector<8x512xf32> to vector<8x128xf32>
    %324 = arith.negf %323 : vector<8x128xf32>
    %325 = math.exp %324 : vector<8x128xf32>
    %cst_88 = arith.constant 1.000000e+00 : f32
    %326 = vector.broadcast %cst_88 : f32 to vector<8x128xf32>
    %327 = arith.addf %326, %325 : vector<8x128xf32>
    %328 = arith.divf %326, %327 : vector<8x128xf32>
    %329 = arith.mulf %320, %259 : vector<8x128xf32>
    %330 = arith.mulf %314, %322 : vector<8x128xf32>
    %331 = arith.addf %329, %330 : vector<8x128xf32>
    %332 = math.tanh %331 : vector<8x128xf32>
    %333 = arith.mulf %328, %332 : vector<8x128xf32>
    %334 = arith.truncf %333 : vector<8x128xf32> to vector<8x128xbf16>
    %c4_89 = arith.constant 4 : index
    %c0_90 = arith.constant 0 : index
    %c0_91 = arith.constant 0 : index
    %335 = vector.load %arg4[%c4_89, %c0_90, %c0_91] : memref<8x8x128xbf16, #tpu.memory_space<vmem>>, vector<1x8x128xbf16>
    %336 = vector.shape_cast %335 : vector<1x8x128xbf16> to vector<8x128xbf16>
    %337 = vector.shape_cast %334 : vector<8x128xbf16> to vector<1x8x128xbf16>
    tpu.vector_store %arg4[%c4_89, %c0_90, %c0_91], %337 {strides = array<i32>} : memref<8x8x128xbf16, #tpu.memory_space<vmem>>, vector<1x8x128xbf16>,
    %338 = vector.extract_strided_slice %303 {offsets = [0, 512], sizes = [8, 512], strides = [1, 1]} : vector<8x1024xf32> to vector<8x512xf32>
    %c3_92 = arith.constant 3 : index
    %c0_93 = arith.constant 0 : index
    %c0_94 = arith.constant 0 : index
    %339 = vector.load %arg2[%c3_92, %c0_93, %c0_94] : memref<8x8x512xbf16, #tpu.memory_space<vmem>>, vector<1x8x512xbf16>
    %340 = vector.shape_cast %339 : vector<1x8x512xbf16> to vector<8x512xbf16>
    %341 = arith.extf %340 : vector<8x512xbf16> to vector<8x512xf32>
    %342 = arith.addf %341, %338 : vector<8x512xf32>
    %343 = vector.extract_strided_slice %342 {offsets = [0, 0], sizes = [8, 128], strides = [1, 1]} : vector<8x512xf32> to vector<8x128xf32>
    %344 = arith.negf %343 : vector<8x128xf32>
    %345 = math.exp %344 : vector<8x128xf32>
    %cst_95 = arith.constant 1.000000e+00 : f32
    %346 = vector.broadcast %cst_95 : f32 to vector<8x128xf32>
    %347 = arith.addf %346, %345 : vector<8x128xf32>
    %348 = arith.divf %346, %347 : vector<8x128xf32>
    %349 = vector.extract_strided_slice %342 {offsets = [0, 128], sizes = [8, 128], strides = [1, 1]} : vector<8x512xf32> to vector<8x128xf32>
    %350 = arith.negf %349 : vector<8x128xf32>
    %351 = math.exp %350 : vector<8x128xf32>
    %cst_96 = arith.constant 1.000000e+00 : f32
    %352 = vector.broadcast %cst_96 : f32 to vector<8x128xf32>
    %353 = arith.addf %352, %351 : vector<8x128xf32>
    %354 = arith.divf %352, %353 : vector<8x128xf32>
    %355 = vector.extract_strided_slice %342 {offsets = [0, 256], sizes = [8, 128], strides = [1, 1]} : vector<8x512xf32> to vector<8x128xf32>
    %356 = math.tanh %355 : vector<8x128xf32>
    %357 = vector.extract_strided_slice %342 {offsets = [0, 384], sizes = [8, 128], strides = [1, 1]} : vector<8x512xf32> to vector<8x128xf32>
    %358 = arith.negf %357 : vector<8x128xf32>
    %359 = math.exp %358 : vector<8x128xf32>
    %cst_97 = arith.constant 1.000000e+00 : f32
    %360 = vector.broadcast %cst_97 : f32 to vector<8x128xf32>
    %361 = arith.addf %360, %359 : vector<8x128xf32>
    %362 = arith.divf %360, %361 : vector<8x128xf32>
    %363 = arith.mulf %354, %293 : vector<8x128xf32>
    %364 = arith.mulf %348, %356 : vector<8x128xf32>
    %365 = arith.addf %363, %364 : vector<8x128xf32>
    %366 = math.tanh %365 : vector<8x128xf32>
    %367 = arith.mulf %362, %366 : vector<8x128xf32>
    %368 = arith.truncf %367 : vector<8x128xf32> to vector<8x128xbf16>
    %c3_98 = arith.constant 3 : index
    %c0_99 = arith.constant 0 : index
    %c0_100 = arith.constant 0 : index
    %369 = vector.load %arg5[%c3_98, %c0_99, %c0_100] : memref<8x8x128xbf16, #tpu.memory_space<vmem>>, vector<1x8x128xbf16>
    %370 = vector.shape_cast %369 : vector<1x8x128xbf16> to vector<8x128xbf16>
    %371 = vector.shape_cast %368 : vector<8x128xbf16> to vector<1x8x128xbf16>
    tpu.vector_store %arg5[%c3_98, %c0_99, %c0_100], %371 {strides = array<i32>} : memref<8x8x128xbf16, #tpu.memory_space<vmem>>, vector<1x8x128xbf16>,
    %372 = arith.truncf %333 : vector<8x128xf32> to vector<8x128xbf16>
    %373 = arith.truncf %367 : vector<8x128xf32> to vector<8x128xbf16>
    %374 = tpu.concatenate %372, %373 in 1 : vector<8x128xbf16>, vector<8x128xbf16> -> vector<8x256xbf16>
    %cst_101 = arith.constant dense<0.000000e+00> : vector<8x1024xf32>
    %375 = tpu.matmul %374, %3, %cst_101 {dimension_numbers = #tpu.dot_dimension_numbers<[1], [0], [0], [1], [0, 0, 1, 1], [], []>} : vector<8x256xbf16>, vector<256x1024xbf16>, vector<8x1024xf32> -> vector<8x1024xf32>
    %376 = vector.extract_strided_slice %375 {offsets = [0, 0], sizes = [8, 512], strides = [1, 1]} : vector<8x1024xf32> to vector<8x512xf32>
    %c5_102 = arith.constant 5 : index
    %c0_103 = arith.constant 0 : index
    %c0_104 = arith.constant 0 : index
    %377 = vector.load %arg1[%c5_102, %c0_103, %c0_104] : memref<8x8x512xbf16, #tpu.memory_space<vmem>>, vector<1x8x512xbf16>
    %378 = vector.shape_cast %377 : vector<1x8x512xbf16> to vector<8x512xbf16>
    %379 = arith.extf %378 : vector<8x512xbf16> to vector<8x512xf32>
    %380 = arith.addf %379, %376 : vector<8x512xf32>
    %381 = vector.extract_strided_slice %380 {offsets = [0, 0], sizes = [8, 128], strides = [1, 1]} : vector<8x512xf32> to vector<8x128xf32>
    %382 = arith.negf %381 : vector<8x128xf32>
    %383 = math.exp %382 : vector<8x128xf32>
    %cst_105 = arith.constant 1.000000e+00 : f32
    %384 = vector.broadcast %cst_105 : f32 to vector<8x128xf32>
    %385 = arith.addf %384, %383 : vector<8x128xf32>
    %386 = arith.divf %384, %385 : vector<8x128xf32>
    %387 = vector.extract_strided_slice %380 {offsets = [0, 128], sizes = [8, 128], strides = [1, 1]} : vector<8x512xf32> to vector<8x128xf32>
    %388 = arith.negf %387 : vector<8x128xf32>
    %389 = math.exp %388 : vector<8x128xf32>
    %cst_106 = arith.constant 1.000000e+00 : f32
    %390 = vector.broadcast %cst_106 : f32 to vector<8x128xf32>
    %391 = arith.addf %390, %389 : vector<8x128xf32>
    %392 = arith.divf %390, %391 : vector<8x128xf32>
    %393 = vector.extract_strided_slice %380 {offsets = [0, 256], sizes = [8, 128], strides = [1, 1]} : vector<8x512xf32> to vector<8x128xf32>
    %394 = math.tanh %393 : vector<8x128xf32>
    %395 = vector.extract_strided_slice %380 {offsets = [0, 384], sizes = [8, 128], strides = [1, 1]} : vector<8x512xf32> to vector<8x128xf32>
    %396 = arith.negf %395 : vector<8x128xf32>
    %397 = math.exp %396 : vector<8x128xf32>
    %cst_107 = arith.constant 1.000000e+00 : f32
    %398 = vector.broadcast %cst_107 : f32 to vector<8x128xf32>
    %399 = arith.addf %398, %397 : vector<8x128xf32>
    %400 = arith.divf %398, %399 : vector<8x128xf32>
    %401 = arith.mulf %392, %331 : vector<8x128xf32>
    %402 = arith.mulf %386, %394 : vector<8x128xf32>
    %403 = arith.addf %401, %402 : vector<8x128xf32>
    %404 = math.tanh %403 : vector<8x128xf32>
    %405 = arith.mulf %400, %404 : vector<8x128xf32>
    %406 = arith.truncf %405 : vector<8x128xf32> to vector<8x128xbf16>
    %c5_108 = arith.constant 5 : index
    %c0_109 = arith.constant 0 : index
    %c0_110 = arith.constant 0 : index
    %407 = vector.load %arg4[%c5_108, %c0_109, %c0_110] : memref<8x8x128xbf16, #tpu.memory_space<vmem>>, vector<1x8x128xbf16>
    %408 = vector.shape_cast %407 : vector<1x8x128xbf16> to vector<8x128xbf16>
    %409 = vector.shape_cast %406 : vector<8x128xbf16> to vector<1x8x128xbf16>
    tpu.vector_store %arg4[%c5_108, %c0_109, %c0_110], %409 {strides = array<i32>} : memref<8x8x128xbf16, #tpu.memory_space<vmem>>, vector<1x8x128xbf16>,
    %410 = vector.extract_strided_slice %375 {offsets = [0, 512], sizes = [8, 512], strides = [1, 1]} : vector<8x1024xf32> to vector<8x512xf32>
    %c2_111 = arith.constant 2 : index
    %c0_112 = arith.constant 0 : index
    %c0_113 = arith.constant 0 : index
    %411 = vector.load %arg2[%c2_111, %c0_112, %c0_113] : memref<8x8x512xbf16, #tpu.memory_space<vmem>>, vector<1x8x512xbf16>
    %412 = vector.shape_cast %411 : vector<1x8x512xbf16> to vector<8x512xbf16>
    %413 = arith.extf %412 : vector<8x512xbf16> to vector<8x512xf32>
    %414 = arith.addf %413, %410 : vector<8x512xf32>
    %415 = vector.extract_strided_slice %414 {offsets = [0, 0], sizes = [8, 128], strides = [1, 1]} : vector<8x512xf32> to vector<8x128xf32>
    %416 = arith.negf %415 : vector<8x128xf32>
    %417 = math.exp %416 : vector<8x128xf32>
    %cst_114 = arith.constant 1.000000e+00 : f32
    %418 = vector.broadcast %cst_114 : f32 to vector<8x128xf32>
    %419 = arith.addf %418, %417 : vector<8x128xf32>
    %420 = arith.divf %418, %419 : vector<8x128xf32>
    %421 = vector.extract_strided_slice %414 {offsets = [0, 128], sizes = [8, 128], strides = [1, 1]} : vector<8x512xf32> to vector<8x128xf32>
    %422 = arith.negf %421 : vector<8x128xf32>
    %423 = math.exp %422 : vector<8x128xf32>
    %cst_115 = arith.constant 1.000000e+00 : f32
    %424 = vector.broadcast %cst_115 : f32 to vector<8x128xf32>
    %425 = arith.addf %424, %423 : vector<8x128xf32>
    %426 = arith.divf %424, %425 : vector<8x128xf32>
    %427 = vector.extract_strided_slice %414 {offsets = [0, 256], sizes = [8, 128], strides = [1, 1]} : vector<8x512xf32> to vector<8x128xf32>
    %428 = math.tanh %427 : vector<8x128xf32>
    %429 = vector.extract_strided_slice %414 {offsets = [0, 384], sizes = [8, 128], strides = [1, 1]} : vector<8x512xf32> to vector<8x128xf32>
    %430 = arith.negf %429 : vector<8x128xf32>
    %431 = math.exp %430 : vector<8x128xf32>
    %cst_116 = arith.constant 1.000000e+00 : f32
    %432 = vector.broadcast %cst_116 : f32 to vector<8x128xf32>
    %433 = arith.addf %432, %431 : vector<8x128xf32>
    %434 = arith.divf %432, %433 : vector<8x128xf32>
    %435 = arith.mulf %426, %365 : vector<8x128xf32>
    %436 = arith.mulf %420, %428 : vector<8x128xf32>
    %437 = arith.addf %435, %436 : vector<8x128xf32>
    %438 = math.tanh %437 : vector<8x128xf32>
    %439 = arith.mulf %434, %438 : vector<8x128xf32>
    %440 = arith.truncf %439 : vector<8x128xf32> to vector<8x128xbf16>
    %c2_117 = arith.constant 2 : index
    %c0_118 = arith.constant 0 : index
    %c0_119 = arith.constant 0 : index
    %441 = vector.load %arg5[%c2_117, %c0_118, %c0_119] : memref<8x8x128xbf16, #tpu.memory_space<vmem>>, vector<1x8x128xbf16>
    %442 = vector.shape_cast %441 : vector<1x8x128xbf16> to vector<8x128xbf16>
    %443 = vector.shape_cast %440 : vector<8x128xbf16> to vector<1x8x128xbf16>
    tpu.vector_store %arg5[%c2_117, %c0_118, %c0_119], %443 {strides = array<i32>} : memref<8x8x128xbf16, #tpu.memory_space<vmem>>, vector<1x8x128xbf16>,
    %444 = arith.truncf %405 : vector<8x128xf32> to vector<8x128xbf16>
    %445 = arith.truncf %439 : vector<8x128xf32> to vector<8x128xbf16>
    %446 = tpu.concatenate %444, %445 in 1 : vector<8x128xbf16>, vector<8x128xbf16> -> vector<8x256xbf16>
    %cst_120 = arith.constant dense<0.000000e+00> : vector<8x1024xf32>
    %447 = tpu.matmul %446, %3, %cst_120 {dimension_numbers = #tpu.dot_dimension_numbers<[1], [0], [0], [1], [0, 0, 1, 1], [], []>} : vector<8x256xbf16>, vector<256x1024xbf16>, vector<8x1024xf32> -> vector<8x1024xf32>
    %448 = vector.extract_strided_slice %447 {offsets = [0, 0], sizes = [8, 512], strides = [1, 1]} : vector<8x1024xf32> to vector<8x512xf32>
    %c6_121 = arith.constant 6 : index
    %c0_122 = arith.constant 0 : index
    %c0_123 = arith.constant 0 : index
    %449 = vector.load %arg1[%c6_121, %c0_122, %c0_123] : memref<8x8x512xbf16, #tpu.memory_space<vmem>>, vector<1x8x512xbf16>
    %450 = vector.shape_cast %449 : vector<1x8x512xbf16> to vector<8x512xbf16>
    %451 = arith.extf %450 : vector<8x512xbf16> to vector<8x512xf32>
    %452 = arith.addf %451, %448 : vector<8x512xf32>
    %453 = vector.extract_strided_slice %452 {offsets = [0, 0], sizes = [8, 128], strides = [1, 1]} : vector<8x512xf32> to vector<8x128xf32>
    %454 = arith.negf %453 : vector<8x128xf32>
    %455 = math.exp %454 : vector<8x128xf32>
    %cst_124 = arith.constant 1.000000e+00 : f32
    %456 = vector.broadcast %cst_124 : f32 to vector<8x128xf32>
    %457 = arith.addf %456, %455 : vector<8x128xf32>
    %458 = arith.divf %456, %457 : vector<8x128xf32>
    %459 = vector.extract_strided_slice %452 {offsets = [0, 128], sizes = [8, 128], strides = [1, 1]} : vector<8x512xf32> to vector<8x128xf32>
    %460 = arith.negf %459 : vector<8x128xf32>
    %461 = math.exp %460 : vector<8x128xf32>
    %cst_125 = arith.constant 1.000000e+00 : f32
    %462 = vector.broadcast %cst_125 : f32 to vector<8x128xf32>
    %463 = arith.addf %462, %461 : vector<8x128xf32>
    %464 = arith.divf %462, %463 : vector<8x128xf32>
    %465 = vector.extract_strided_slice %452 {offsets = [0, 256], sizes = [8, 128], strides = [1, 1]} : vector<8x512xf32> to vector<8x128xf32>
    %466 = math.tanh %465 : vector<8x128xf32>
    %467 = vector.extract_strided_slice %452 {offsets = [0, 384], sizes = [8, 128], strides = [1, 1]} : vector<8x512xf32> to vector<8x128xf32>
    %468 = arith.negf %467 : vector<8x128xf32>
    %469 = math.exp %468 : vector<8x128xf32>
    %cst_126 = arith.constant 1.000000e+00 : f32
    %470 = vector.broadcast %cst_126 : f32 to vector<8x128xf32>
    %471 = arith.addf %470, %469 : vector<8x128xf32>
    %472 = arith.divf %470, %471 : vector<8x128xf32>
    %473 = arith.mulf %464, %403 : vector<8x128xf32>
    %474 = arith.mulf %458, %466 : vector<8x128xf32>
    %475 = arith.addf %473, %474 : vector<8x128xf32>
    %476 = math.tanh %475 : vector<8x128xf32>
    %477 = arith.mulf %472, %476 : vector<8x128xf32>
    %478 = arith.truncf %477 : vector<8x128xf32> to vector<8x128xbf16>
    %c6_127 = arith.constant 6 : index
    %c0_128 = arith.constant 0 : index
    %c0_129 = arith.constant 0 : index
    %479 = vector.load %arg4[%c6_127, %c0_128, %c0_129] : memref<8x8x128xbf16, #tpu.memory_space<vmem>>, vector<1x8x128xbf16>
    %480 = vector.shape_cast %479 : vector<1x8x128xbf16> to vector<8x128xbf16>
    %481 = vector.shape_cast %478 : vector<8x128xbf16> to vector<1x8x128xbf16>
    tpu.vector_store %arg4[%c6_127, %c0_128, %c0_129], %481 {strides = array<i32>} : memref<8x8x128xbf16, #tpu.memory_space<vmem>>, vector<1x8x128xbf16>,
    %482 = vector.extract_strided_slice %447 {offsets = [0, 512], sizes = [8, 512], strides = [1, 1]} : vector<8x1024xf32> to vector<8x512xf32>
    %c1_130 = arith.constant 1 : index
    %c0_131 = arith.constant 0 : index
    %c0_132 = arith.constant 0 : index
    %483 = vector.load %arg2[%c1_130, %c0_131, %c0_132] : memref<8x8x512xbf16, #tpu.memory_space<vmem>>, vector<1x8x512xbf16>
    %484 = vector.shape_cast %483 : vector<1x8x512xbf16> to vector<8x512xbf16>
    %485 = arith.extf %484 : vector<8x512xbf16> to vector<8x512xf32>
    %486 = arith.addf %485, %482 : vector<8x512xf32>
    %487 = vector.extract_strided_slice %486 {offsets = [0, 0], sizes = [8, 128], strides = [1, 1]} : vector<8x512xf32> to vector<8x128xf32>
    %488 = arith.negf %487 : vector<8x128xf32>
    %489 = math.exp %488 : vector<8x128xf32>
    %cst_133 = arith.constant 1.000000e+00 : f32
    %490 = vector.broadcast %cst_133 : f32 to vector<8x128xf32>
    %491 = arith.addf %490, %489 : vector<8x128xf32>
    %492 = arith.divf %490, %491 : vector<8x128xf32>
    %493 = vector.extract_strided_slice %486 {offsets = [0, 128], sizes = [8, 128], strides = [1, 1]} : vector<8x512xf32> to vector<8x128xf32>
    %494 = arith.negf %493 : vector<8x128xf32>
    %495 = math.exp %494 : vector<8x128xf32>
    %cst_134 = arith.constant 1.000000e+00 : f32
    %496 = vector.broadcast %cst_134 : f32 to vector<8x128xf32>
    %497 = arith.addf %496, %495 : vector<8x128xf32>
    %498 = arith.divf %496, %497 : vector<8x128xf32>
    %499 = vector.extract_strided_slice %486 {offsets = [0, 256], sizes = [8, 128], strides = [1, 1]} : vector<8x512xf32> to vector<8x128xf32>
    %500 = math.tanh %499 : vector<8x128xf32>
    %501 = vector.extract_strided_slice %486 {offsets = [0, 384], sizes = [8, 128], strides = [1, 1]} : vector<8x512xf32> to vector<8x128xf32>
    %502 = arith.negf %501 : vector<8x128xf32>
    %503 = math.exp %502 : vector<8x128xf32>
    %cst_135 = arith.constant 1.000000e+00 : f32
    %504 = vector.broadcast %cst_135 : f32 to vector<8x128xf32>
    %505 = arith.addf %504, %503 : vector<8x128xf32>
    %506 = arith.divf %504, %505 : vector<8x128xf32>
    %507 = arith.mulf %498, %437 : vector<8x128xf32>
    %508 = arith.mulf %492, %500 : vector<8x128xf32>
    %509 = arith.addf %507, %508 : vector<8x128xf32>
    %510 = math.tanh %509 : vector<8x128xf32>
    %511 = arith.mulf %506, %510 : vector<8x128xf32>
    %512 = arith.truncf %511 : vector<8x128xf32> to vector<8x128xbf16>
    %c1_136 = arith.constant 1 : index
    %c0_137 = arith.constant 0 : index
    %c0_138 = arith.constant 0 : index
    %513 = vector.load %arg5[%c1_136, %c0_137, %c0_138] : memref<8x8x128xbf16, #tpu.memory_space<vmem>>, vector<1x8x128xbf16>
    %514 = vector.shape_cast %513 : vector<1x8x128xbf16> to vector<8x128xbf16>
    %515 = vector.shape_cast %512 : vector<8x128xbf16> to vector<1x8x128xbf16>
    tpu.vector_store %arg5[%c1_136, %c0_137, %c0_138], %515 {strides = array<i32>} : memref<8x8x128xbf16, #tpu.memory_space<vmem>>, vector<1x8x128xbf16>,
    %516 = arith.truncf %477 : vector<8x128xf32> to vector<8x128xbf16>
    %517 = arith.truncf %511 : vector<8x128xf32> to vector<8x128xbf16>
    %518 = tpu.concatenate %516, %517 in 1 : vector<8x128xbf16>, vector<8x128xbf16> -> vector<8x256xbf16>
    %cst_139 = arith.constant dense<0.000000e+00> : vector<8x1024xf32>
    %519 = tpu.matmul %518, %3, %cst_139 {dimension_numbers = #tpu.dot_dimension_numbers<[1], [0], [0], [1], [0, 0, 1, 1], [], []>} : vector<8x256xbf16>, vector<256x1024xbf16>, vector<8x1024xf32> -> vector<8x1024xf32>
    %520 = vector.extract_strided_slice %519 {offsets = [0, 0], sizes = [8, 512], strides = [1, 1]} : vector<8x1024xf32> to vector<8x512xf32>
    %c7_140 = arith.constant 7 : index
    %c0_141 = arith.constant 0 : index
    %c0_142 = arith.constant 0 : index
    %521 = vector.load %arg1[%c7_140, %c0_141, %c0_142] : memref<8x8x512xbf16, #tpu.memory_space<vmem>>, vector<1x8x512xbf16>
    %522 = vector.shape_cast %521 : vector<1x8x512xbf16> to vector<8x512xbf16>
    %523 = arith.extf %522 : vector<8x512xbf16> to vector<8x512xf32>
    %524 = arith.addf %523, %520 : vector<8x512xf32>
    %525 = vector.extract_strided_slice %524 {offsets = [0, 0], sizes = [8, 128], strides = [1, 1]} : vector<8x512xf32> to vector<8x128xf32>
    %526 = arith.negf %525 : vector<8x128xf32>
    %527 = math.exp %526 : vector<8x128xf32>
    %cst_143 = arith.constant 1.000000e+00 : f32
    %528 = vector.broadcast %cst_143 : f32 to vector<8x128xf32>
    %529 = arith.addf %528, %527 : vector<8x128xf32>
    %530 = arith.divf %528, %529 : vector<8x128xf32>
    %531 = vector.extract_strided_slice %524 {offsets = [0, 128], sizes = [8, 128], strides = [1, 1]} : vector<8x512xf32> to vector<8x128xf32>
    %532 = arith.negf %531 : vector<8x128xf32>
    %533 = math.exp %532 : vector<8x128xf32>
    %cst_144 = arith.constant 1.000000e+00 : f32
    %534 = vector.broadcast %cst_144 : f32 to vector<8x128xf32>
    %535 = arith.addf %534, %533 : vector<8x128xf32>
    %536 = arith.divf %534, %535 : vector<8x128xf32>
    %537 = vector.extract_strided_slice %524 {offsets = [0, 256], sizes = [8, 128], strides = [1, 1]} : vector<8x512xf32> to vector<8x128xf32>
    %538 = math.tanh %537 : vector<8x128xf32>
    %539 = vector.extract_strided_slice %524 {offsets = [0, 384], sizes = [8, 128], strides = [1, 1]} : vector<8x512xf32> to vector<8x128xf32>
    %540 = arith.negf %539 : vector<8x128xf32>
    %541 = math.exp %540 : vector<8x128xf32>
    %cst_145 = arith.constant 1.000000e+00 : f32
    %542 = vector.broadcast %cst_145 : f32 to vector<8x128xf32>
    %543 = arith.addf %542, %541 : vector<8x128xf32>
    %544 = arith.divf %542, %543 : vector<8x128xf32>
    %545 = arith.mulf %536, %475 : vector<8x128xf32>
    %546 = arith.mulf %530, %538 : vector<8x128xf32>
    %547 = arith.addf %545, %546 : vector<8x128xf32>
    %548 = math.tanh %547 : vector<8x128xf32>
    %549 = arith.mulf %544, %548 : vector<8x128xf32>
    %550 = arith.truncf %549 : vector<8x128xf32> to vector<8x128xbf16>
    %c7_146 = arith.constant 7 : index
    %c0_147 = arith.constant 0 : index
    %c0_148 = arith.constant 0 : index
    %551 = vector.load %arg4[%c7_146, %c0_147, %c0_148] : memref<8x8x128xbf16, #tpu.memory_space<vmem>>, vector<1x8x128xbf16>
    %552 = vector.shape_cast %551 : vector<1x8x128xbf16> to vector<8x128xbf16>
    %553 = vector.shape_cast %550 : vector<8x128xbf16> to vector<1x8x128xbf16>
    tpu.vector_store %arg4[%c7_146, %c0_147, %c0_148], %553 {strides = array<i32>} : memref<8x8x128xbf16, #tpu.memory_space<vmem>>, vector<1x8x128xbf16>,
    %554 = vector.extract_strided_slice %519 {offsets = [0, 512], sizes = [8, 512], strides = [1, 1]} : vector<8x1024xf32> to vector<8x512xf32>
    %c0_149 = arith.constant 0 : index
    %c0_150 = arith.constant 0 : index
    %c0_151 = arith.constant 0 : index
    %555 = vector.load %arg2[%c0_149, %c0_150, %c0_151] : memref<8x8x512xbf16, #tpu.memory_space<vmem>>, vector<1x8x512xbf16>
    %556 = vector.shape_cast %555 : vector<1x8x512xbf16> to vector<8x512xbf16>
    %557 = arith.extf %556 : vector<8x512xbf16> to vector<8x512xf32>
    %558 = arith.addf %557, %554 : vector<8x512xf32>
    %559 = vector.extract_strided_slice %558 {offsets = [0, 0], sizes = [8, 128], strides = [1, 1]} : vector<8x512xf32> to vector<8x128xf32>
    %560 = arith.negf %559 : vector<8x128xf32>
    %561 = math.exp %560 : vector<8x128xf32>
    %cst_152 = arith.constant 1.000000e+00 : f32
    %562 = vector.broadcast %cst_152 : f32 to vector<8x128xf32>
    %563 = arith.addf %562, %561 : vector<8x128xf32>
    %564 = arith.divf %562, %563 : vector<8x128xf32>
    %565 = vector.extract_strided_slice %558 {offsets = [0, 128], sizes = [8, 128], strides = [1, 1]} : vector<8x512xf32> to vector<8x128xf32>
    %566 = arith.negf %565 : vector<8x128xf32>
    %567 = math.exp %566 : vector<8x128xf32>
    %cst_153 = arith.constant 1.000000e+00 : f32
    %568 = vector.broadcast %cst_153 : f32 to vector<8x128xf32>
    %569 = arith.addf %568, %567 : vector<8x128xf32>
    %570 = arith.divf %568, %569 : vector<8x128xf32>
    %571 = vector.extract_strided_slice %558 {offsets = [0, 256], sizes = [8, 128], strides = [1, 1]} : vector<8x512xf32> to vector<8x128xf32>
    %572 = math.tanh %571 : vector<8x128xf32>
    %573 = vector.extract_strided_slice %558 {offsets = [0, 384], sizes = [8, 128], strides = [1, 1]} : vector<8x512xf32> to vector<8x128xf32>
    %574 = arith.negf %573 : vector<8x128xf32>
    %575 = math.exp %574 : vector<8x128xf32>
    %cst_154 = arith.constant 1.000000e+00 : f32
    %576 = vector.broadcast %cst_154 : f32 to vector<8x128xf32>
    %577 = arith.addf %576, %575 : vector<8x128xf32>
    %578 = arith.divf %576, %577 : vector<8x128xf32>
    %579 = arith.mulf %570, %509 : vector<8x128xf32>
    %580 = arith.mulf %564, %572 : vector<8x128xf32>
    %581 = arith.addf %579, %580 : vector<8x128xf32>
    %582 = math.tanh %581 : vector<8x128xf32>
    %583 = arith.mulf %578, %582 : vector<8x128xf32>
    %584 = arith.truncf %583 : vector<8x128xf32> to vector<8x128xbf16>
    %c0_155 = arith.constant 0 : index
    %c0_156 = arith.constant 0 : index
    %c0_157 = arith.constant 0 : index
    %585 = vector.load %arg5[%c0_155, %c0_156, %c0_157] : memref<8x8x128xbf16, #tpu.memory_space<vmem>>, vector<1x8x128xbf16>
    %586 = vector.shape_cast %585 : vector<1x8x128xbf16> to vector<8x128xbf16>
    %587 = vector.shape_cast %584 : vector<8x128xbf16> to vector<1x8x128xbf16>
    tpu.vector_store %arg5[%c0_155, %c0_156, %c0_157], %587 {strides = array<i32>} : memref<8x8x128xbf16, #tpu.memory_space<vmem>>, vector<1x8x128xbf16>,
    %c0_158 = arith.constant 0 : index
    %c0_159 = arith.constant 0 : index
    %c0_160 = arith.constant 0 : index
    %588 = vector.load %arg6[%c0_158, %c0_159, %c0_160] : memref<2x8x128xf32, #tpu.memory_space<vmem>>, vector<1x8x128xf32>
    %589 = vector.shape_cast %588 : vector<1x8x128xf32> to vector<8x128xf32>
    %590 = vector.shape_cast %549 : vector<8x128xf32> to vector<1x8x128xf32>
    tpu.vector_store %arg6[%c0_158, %c0_159, %c0_160], %590 {strides = array<i32>} : memref<2x8x128xf32, #tpu.memory_space<vmem>>, vector<1x8x128xf32>,
    %c0_161 = arith.constant 0 : index
    %c0_162 = arith.constant 0 : index
    %c0_163 = arith.constant 0 : index
    %591 = vector.load %arg7[%c0_161, %c0_162, %c0_163] : memref<2x8x128xf32, #tpu.memory_space<vmem>>, vector<1x8x128xf32>
    %592 = vector.shape_cast %591 : vector<1x8x128xf32> to vector<8x128xf32>
    %593 = vector.shape_cast %547 : vector<8x128xf32> to vector<1x8x128xf32>
    tpu.vector_store %arg7[%c0_161, %c0_162, %c0_163], %593 {strides = array<i32>} : memref<2x8x128xf32, #tpu.memory_space<vmem>>, vector<1x8x128xf32>,
    %c1_164 = arith.constant 1 : index
    %c0_165 = arith.constant 0 : index
    %c0_166 = arith.constant 0 : index
    %594 = vector.load %arg6[%c1_164, %c0_165, %c0_166] : memref<2x8x128xf32, #tpu.memory_space<vmem>>, vector<1x8x128xf32>
    %595 = vector.shape_cast %594 : vector<1x8x128xf32> to vector<8x128xf32>
    %596 = vector.shape_cast %583 : vector<8x128xf32> to vector<1x8x128xf32>
    tpu.vector_store %arg6[%c1_164, %c0_165, %c0_166], %596 {strides = array<i32>} : memref<2x8x128xf32, #tpu.memory_space<vmem>>, vector<1x8x128xf32>,
    %c1_167 = arith.constant 1 : index
    %c0_168 = arith.constant 0 : index
    %c0_169 = arith.constant 0 : index
    %597 = vector.load %arg7[%c1_167, %c0_168, %c0_169] : memref<2x8x128xf32, #tpu.memory_space<vmem>>, vector<1x8x128xf32>
    %598 = vector.shape_cast %597 : vector<1x8x128xf32> to vector<8x128xf32>
    %599 = vector.shape_cast %581 : vector<8x128xf32> to vector<1x8x128xf32>
    tpu.vector_store %arg7[%c1_167, %c0_168, %c0_169], %599 {strides = array<i32>} : memref<2x8x128xf32, #tpu.memory_space<vmem>>, vector<1x8x128xf32>,
    return
  }
  func.func @transform_0(%arg0: i32) -> (i32, i32, i32) {
    %c0_i32 = arith.constant 0 : i32
    %c0_i32_0 = arith.constant 0 : i32
    %c0_i32_1 = arith.constant 0 : i32
    return %arg0, %c0_i32, %c0_i32_0 : i32, i32, i32
  }
  func.func @transform_1(%arg0: i32) -> (i32, i32, i32) {
    %c0_i32 = arith.constant 0 : i32
    %0 = arith.subi %c0_i32, %arg0 : i32
    %c0_i32_0 = arith.constant 0 : i32
    %c1_i32 = arith.constant 1 : i32
    %c0_i32_1 = arith.constant 0 : i32
    return %0, %c0_i32_0, %c1_i32 : i32, i32, i32
  }
  func.func @transform_2(%arg0: i32) -> (i32, i32) {
    %c0_i32 = arith.constant 0 : i32
    %c0_i32_0 = arith.constant 0 : i32
    %c0_i32_1 = arith.constant 0 : i32
    return %c0_i32, %c0_i32_0 : i32, i32
  }
  func.func @transform_3(%arg0: i32) -> (i32, i32, i32) {
    %c0_i32 = arith.constant 0 : i32
    %c0_i32_0 = arith.constant 0 : i32
    %c0_i32_1 = arith.constant 0 : i32
    return %arg0, %c0_i32, %c0_i32_0 : i32, i32, i32
  }
  func.func @transform_4(%arg0: i32) -> (i32, i32, i32) {
    %c0_i32 = arith.constant 0 : i32
    %0 = arith.subi %c0_i32, %arg0 : i32
    %c0_i32_0 = arith.constant 0 : i32
    %c0_i32_1 = arith.constant 0 : i32
    %c0_i32_2 = arith.constant 0 : i32
    return %0, %c0_i32_0, %c0_i32_1 : i32, i32, i32
  }
}

module attributes {stable_mosaic.version = 11 : i64} {
  func.func @_lstm_chunk_kernel(%arg0: i32, %arg1: memref<8x8x512xbf16, #tpu.memory_space<vmem>>, %arg2: memref<8x8x512xbf16, #tpu.memory_space<vmem>>, %arg3: memref<256x1024xbf16, #tpu.memory_space<vmem>>, %arg4: memref<8x8x128xbf16, #tpu.memory_space<vmem>>, %arg5: memref<8x8x128xbf16, #tpu.memory_space<vmem>>, %arg6: memref<2x8x128xf32, #tpu.memory_space<vmem>>, %arg7: memref<2x8x128xf32, #tpu.memory_space<vmem>>) attributes {dimension_semantics = [#tpu.dimension_semantics<arbitrary>], iteration_bounds = array<i64: 1>, scalar_prefetch = 0 : i64, scratch_operands = 2 : i64, tpu.core_type = #tpu.core_type<tc>, window_params = [{transform_indices = @transform_0, window_bounds = array<i64: 8, 8, 512>}, {transform_indices = @transform_1, window_bounds = array<i64: 8, 8, 512>}, {pipeline_mode = #tpu.pipeline_mode<synchronous>, transform_indices = @transform_2, window_bounds = array<i64: 256, 1024>}, {transform_indices = @transform_3, window_bounds = array<i64: 8, 8, 128>}, {transform_indices = @transform_4, window_bounds = array<i64: 8, 8, 128>}]} {
    %c0_i32 = arith.constant 0 : i32
    %0 = arith.cmpi eq, %arg0, %c0_i32 : i32
    %1 = arith.extui %0 : i1 to i32
    %c0_i32_0 = arith.constant 0 : i32
    %2 = arith.cmpi ne, %1, %c0_i32_0 : i32
    scf.if %2 {
      %cst_170 = arith.constant 0.000000e+00 : f32
      %600 = vector.broadcast %cst_170 : f32 to vector<2x8x128xf32>
      %c0_171 = arith.constant 0 : index
      %c0_172 = arith.constant 0 : index
      %c0_173 = arith.constant 0 : index
      %601 = vector.load %arg6[%c0_171, %c0_172, %c0_173] : memref<2x8x128xf32, #tpu.memory_space<vmem>>, vector<2x8x128xf32>
      tpu.vector_store %arg6[%c0_171, %c0_172, %c0_173], %600 {strides = array<i32>} : memref<2x8x128xf32, #tpu.memory_space<vmem>>, vector<2x8x128xf32>,
      %cst_174 = arith.constant 0.000000e+00 : f32
      %602 = vector.broadcast %cst_174 : f32 to vector<2x8x128xf32>
      %c0_175 = arith.constant 0 : index
      %c0_176 = arith.constant 0 : index
      %c0_177 = arith.constant 0 : index
      %603 = vector.load %arg7[%c0_175, %c0_176, %c0_177] : memref<2x8x128xf32, #tpu.memory_space<vmem>>, vector<2x8x128xf32>
      tpu.vector_store %arg7[%c0_175, %c0_176, %c0_177], %602 {strides = array<i32>} : memref<2x8x128xf32, #tpu.memory_space<vmem>>, vector<2x8x128xf32>,
    } else {
    }
    %c0 = arith.constant 0 : index
    %c0_1 = arith.constant 0 : index
    %3 = vector.load %arg3[%c0, %c0_1] : memref<256x1024xbf16, #tpu.memory_space<vmem>>, vector<256x1024xbf16>
    %c0_2 = arith.constant 0 : index
    %c0_3 = arith.constant 0 : index
    %c0_4 = arith.constant 0 : index
    %4 = vector.load %arg6[%c0_2, %c0_3, %c0_4] : memref<2x8x128xf32, #tpu.memory_space<vmem>>, vector<1x8x128xf32>
    %5 = vector.shape_cast %4 : vector<1x8x128xf32> to vector<8x128xf32>
    %c0_5 = arith.constant 0 : index
    %c0_6 = arith.constant 0 : index
    %c0_7 = arith.constant 0 : index
    %6 = vector.load %arg7[%c0_5, %c0_6, %c0_7] : memref<2x8x128xf32, #tpu.memory_space<vmem>>, vector<1x8x128xf32>
    %7 = vector.shape_cast %6 : vector<1x8x128xf32> to vector<8x128xf32>
    %c1 = arith.constant 1 : index
    %c0_8 = arith.constant 0 : index
    %c0_9 = arith.constant 0 : index
    %8 = vector.load %arg6[%c1, %c0_8, %c0_9] : memref<2x8x128xf32, #tpu.memory_space<vmem>>, vector<1x8x128xf32>
    %9 = vector.shape_cast %8 : vector<1x8x128xf32> to vector<8x128xf32>
    %c1_10 = arith.constant 1 : index
    %c0_11 = arith.constant 0 : index
    %c0_12 = arith.constant 0 : index
    %10 = vector.load %arg7[%c1_10, %c0_11, %c0_12] : memref<2x8x128xf32, #tpu.memory_space<vmem>>, vector<1x8x128xf32>
    %11 = vector.shape_cast %10 : vector<1x8x128xf32> to vector<8x128xf32>
    %12 = arith.truncf %5 : vector<8x128xf32> to vector<8x128xbf16>
    %13 = arith.truncf %9 : vector<8x128xf32> to vector<8x128xbf16>
    %14 = tpu.concatenate %12, %13 in 1 : vector<8x128xbf16>, vector<8x128xbf16> -> vector<8x256xbf16>
    %cst = arith.constant dense<0.000000e+00> : vector<8x1024xf32>
    %15 = tpu.matmul %14, %3, %cst {dimension_numbers = #tpu.dot_dimension_numbers<[1], [0], [0], [1], [0, 0, 1, 1], [], []>} : vector<8x256xbf16>, vector<256x1024xbf16>, vector<8x1024xf32> -> vector<8x1024xf32>
    %16 = vector.extract_strided_slice %15 {offsets = [0, 0], sizes = [8, 512], strides = [1, 1]} : vector<8x1024xf32> to vector<8x512xf32>
    %c0_13 = arith.constant 0 : index
    %c0_14 = arith.constant 0 : index
    %c0_15 = arith.constant 0 : index
    %17 = vector.load %arg1[%c0_13, %c0_14, %c0_15] : memref<8x8x512xbf16, #tpu.memory_space<vmem>>, vector<1x8x512xbf16>
    %18 = vector.shape_cast %17 : vector<1x8x512xbf16> to vector<8x512xbf16>
    %19 = arith.extf %18 : vector<8x512xbf16> to vector<8x512xf32>
    %20 = arith.addf %19, %16 : vector<8x512xf32>
    %21 = vector.extract_strided_slice %20 {offsets = [0, 0], sizes = [8, 128], strides = [1, 1]} : vector<8x512xf32> to vector<8x128xf32>
    %22 = arith.negf %21 : vector<8x128xf32>
    %23 = math.exp %22 : vector<8x128xf32>
    %cst_16 = arith.constant 1.000000e+00 : f32
    %24 = vector.broadcast %cst_16 : f32 to vector<8x128xf32>
    %25 = arith.addf %24, %23 : vector<8x128xf32>
    %26 = arith.divf %24, %25 : vector<8x128xf32>
    %27 = vector.extract_strided_slice %20 {offsets = [0, 128], sizes = [8, 128], strides = [1, 1]} : vector<8x512xf32> to vector<8x128xf32>
    %28 = arith.negf %27 : vector<8x128xf32>
    %29 = math.exp %28 : vector<8x128xf32>
    %cst_17 = arith.constant 1.000000e+00 : f32
    %30 = vector.broadcast %cst_17 : f32 to vector<8x128xf32>
    %31 = arith.addf %30, %29 : vector<8x128xf32>
    %32 = arith.divf %30, %31 : vector<8x128xf32>
    %33 = vector.extract_strided_slice %20 {offsets = [0, 256], sizes = [8, 128], strides = [1, 1]} : vector<8x512xf32> to vector<8x128xf32>
    %34 = math.tanh %33 : vector<8x128xf32>
    %35 = vector.extract_strided_slice %20 {offsets = [0, 384], sizes = [8, 128], strides = [1, 1]} : vector<8x512xf32> to vector<8x128xf32>
    %36 = arith.negf %35 : vector<8x128xf32>
    %37 = math.exp %36 : vector<8x128xf32>
    %cst_18 = arith.constant 1.000000e+00 : f32
    %38 = vector.broadcast %cst_18 : f32 to vector<8x128xf32>
    %39 = arith.addf %38, %37 : vector<8x128xf32>
    %40 = arith.divf %38, %39 : vector<8x128xf32>
    %41 = arith.mulf %32, %7 : vector<8x128xf32>
    %42 = arith.mulf %26, %34 : vector<8x128xf32>
    %43 = arith.addf %41, %42 : vector<8x128xf32>
    %44 = math.tanh %43 : vector<8x128xf32>
    %45 = arith.mulf %40, %44 : vector<8x128xf32>
    %46 = arith.truncf %45 : vector<8x128xf32> to vector<8x128xbf16>
    %c0_19 = arith.constant 0 : index
    %c0_20 = arith.constant 0 : index
    %c0_21 = arith.constant 0 : index
    %47 = vector.load %arg4[%c0_19, %c0_20, %c0_21] : memref<8x8x128xbf16, #tpu.memory_space<vmem>>, vector<1x8x128xbf16>
    %48 = vector.shape_cast %47 : vector<1x8x128xbf16> to vector<8x128xbf16>
    %49 = vector.shape_cast %46 : vector<8x128xbf16> to vector<1x8x128xbf16>
    tpu.vector_store %arg4[%c0_19, %c0_20, %c0_21], %49 {strides = array<i32>} : memref<8x8x128xbf16, #tpu.memory_space<vmem>>, vector<1x8x128xbf16>,
    %50 = vector.extract_strided_slice %15 {offsets = [0, 512], sizes = [8, 512], strides = [1, 1]} : vector<8x1024xf32> to vector<8x512xf32>
    %c7 = arith.constant 7 : index
    %c0_22 = arith.constant 0 : index
    %c0_23 = arith.constant 0 : index
    %51 = vector.load %arg2[%c7, %c0_22, %c0_23] : memref<8x8x512xbf16, #tpu.memory_space<vmem>>, vector<1x8x512xbf16>
    %52 = vector.shape_cast %51 : vector<1x8x512xbf16> to vector<8x512xbf16>
    %53 = arith.extf %52 : vector<8x512xbf16> to vector<8x512xf32>
    %54 = arith.addf %53, %50 : vector<8x512xf32>
    %55 = vector.extract_strided_slice %54 {offsets = [0, 0], sizes = [8, 128], strides = [1, 1]} : vector<8x512xf32> to vector<8x128xf32>
    %56 = arith.negf %55 : vector<8x128xf32>
    %57 = math.exp %56 : vector<8x128xf32>
    %cst_24 = arith.constant 1.000000e+00 : f32
    %58 = vector.broadcast %cst_24 : f32 to vector<8x128xf32>
    %59 = arith.addf %58, %57 : vector<8x128xf32>
    %60 = arith.divf %58, %59 : vector<8x128xf32>
    %61 = vector.extract_strided_slice %54 {offsets = [0, 128], sizes = [8, 128], strides = [1, 1]} : vector<8x512xf32> to vector<8x128xf32>
    %62 = arith.negf %61 : vector<8x128xf32>
    %63 = math.exp %62 : vector<8x128xf32>
    %cst_25 = arith.constant 1.000000e+00 : f32
    %64 = vector.broadcast %cst_25 : f32 to vector<8x128xf32>
    %65 = arith.addf %64, %63 : vector<8x128xf32>
    %66 = arith.divf %64, %65 : vector<8x128xf32>
    %67 = vector.extract_strided_slice %54 {offsets = [0, 256], sizes = [8, 128], strides = [1, 1]} : vector<8x512xf32> to vector<8x128xf32>
    %68 = math.tanh %67 : vector<8x128xf32>
    %69 = vector.extract_strided_slice %54 {offsets = [0, 384], sizes = [8, 128], strides = [1, 1]} : vector<8x512xf32> to vector<8x128xf32>
    %70 = arith.negf %69 : vector<8x128xf32>
    %71 = math.exp %70 : vector<8x128xf32>
    %cst_26 = arith.constant 1.000000e+00 : f32
    %72 = vector.broadcast %cst_26 : f32 to vector<8x128xf32>
    %73 = arith.addf %72, %71 : vector<8x128xf32>
    %74 = arith.divf %72, %73 : vector<8x128xf32>
    %75 = arith.mulf %66, %11 : vector<8x128xf32>
    %76 = arith.mulf %60, %68 : vector<8x128xf32>
    %77 = arith.addf %75, %76 : vector<8x128xf32>
    %78 = math.tanh %77 : vector<8x128xf32>
    %79 = arith.mulf %74, %78 : vector<8x128xf32>
    %80 = arith.truncf %79 : vector<8x128xf32> to vector<8x128xbf16>
    %c7_27 = arith.constant 7 : index
    %c0_28 = arith.constant 0 : index
    %c0_29 = arith.constant 0 : index
    %81 = vector.load %arg5[%c7_27, %c0_28, %c0_29] : memref<8x8x128xbf16, #tpu.memory_space<vmem>>, vector<1x8x128xbf16>
    %82 = vector.shape_cast %81 : vector<1x8x128xbf16> to vector<8x128xbf16>
    %83 = vector.shape_cast %80 : vector<8x128xbf16> to vector<1x8x128xbf16>
    tpu.vector_store %arg5[%c7_27, %c0_28, %c0_29], %83 {strides = array<i32>} : memref<8x8x128xbf16, #tpu.memory_space<vmem>>, vector<1x8x128xbf16>,
    %84 = arith.truncf %45 : vector<8x128xf32> to vector<8x128xbf16>
    %85 = arith.truncf %79 : vector<8x128xf32> to vector<8x128xbf16>
    %86 = tpu.concatenate %84, %85 in 1 : vector<8x128xbf16>, vector<8x128xbf16> -> vector<8x256xbf16>
    %cst_30 = arith.constant dense<0.000000e+00> : vector<8x1024xf32>
    %87 = tpu.matmul %86, %3, %cst_30 {dimension_numbers = #tpu.dot_dimension_numbers<[1], [0], [0], [1], [0, 0, 1, 1], [], []>} : vector<8x256xbf16>, vector<256x1024xbf16>, vector<8x1024xf32> -> vector<8x1024xf32>
    %88 = vector.extract_strided_slice %87 {offsets = [0, 0], sizes = [8, 512], strides = [1, 1]} : vector<8x1024xf32> to vector<8x512xf32>
    %c1_31 = arith.constant 1 : index
    %c0_32 = arith.constant 0 : index
    %c0_33 = arith.constant 0 : index
    %89 = vector.load %arg1[%c1_31, %c0_32, %c0_33] : memref<8x8x512xbf16, #tpu.memory_space<vmem>>, vector<1x8x512xbf16>
    %90 = vector.shape_cast %89 : vector<1x8x512xbf16> to vector<8x512xbf16>
    %91 = arith.extf %90 : vector<8x512xbf16> to vector<8x512xf32>
    %92 = arith.addf %91, %88 : vector<8x512xf32>
    %93 = vector.extract_strided_slice %92 {offsets = [0, 0], sizes = [8, 128], strides = [1, 1]} : vector<8x512xf32> to vector<8x128xf32>
    %94 = arith.negf %93 : vector<8x128xf32>
    %95 = math.exp %94 : vector<8x128xf32>
    %cst_34 = arith.constant 1.000000e+00 : f32
    %96 = vector.broadcast %cst_34 : f32 to vector<8x128xf32>
    %97 = arith.addf %96, %95 : vector<8x128xf32>
    %98 = arith.divf %96, %97 : vector<8x128xf32>
    %99 = vector.extract_strided_slice %92 {offsets = [0, 128], sizes = [8, 128], strides = [1, 1]} : vector<8x512xf32> to vector<8x128xf32>
    %100 = arith.negf %99 : vector<8x128xf32>
    %101 = math.exp %100 : vector<8x128xf32>
    %cst_35 = arith.constant 1.000000e+00 : f32
    %102 = vector.broadcast %cst_35 : f32 to vector<8x128xf32>
    %103 = arith.addf %102, %101 : vector<8x128xf32>
    %104 = arith.divf %102, %103 : vector<8x128xf32>
    %105 = vector.extract_strided_slice %92 {offsets = [0, 256], sizes = [8, 128], strides = [1, 1]} : vector<8x512xf32> to vector<8x128xf32>
    %106 = math.tanh %105 : vector<8x128xf32>
    %107 = vector.extract_strided_slice %92 {offsets = [0, 384], sizes = [8, 128], strides = [1, 1]} : vector<8x512xf32> to vector<8x128xf32>
    %108 = arith.negf %107 : vector<8x128xf32>
    %109 = math.exp %108 : vector<8x128xf32>
    %cst_36 = arith.constant 1.000000e+00 : f32
    %110 = vector.broadcast %cst_36 : f32 to vector<8x128xf32>
    %111 = arith.addf %110, %109 : vector<8x128xf32>
    %112 = arith.divf %110, %111 : vector<8x128xf32>
    %113 = arith.mulf %104, %43 : vector<8x128xf32>
    %114 = arith.mulf %98, %106 : vector<8x128xf32>
    %115 = arith.addf %113, %114 : vector<8x128xf32>
    %116 = math.tanh %115 : vector<8x128xf32>
    %117 = arith.mulf %112, %116 : vector<8x128xf32>
    %118 = arith.truncf %117 : vector<8x128xf32> to vector<8x128xbf16>
    %c1_37 = arith.constant 1 : index
    %c0_38 = arith.constant 0 : index
    %c0_39 = arith.constant 0 : index
    %119 = vector.load %arg4[%c1_37, %c0_38, %c0_39] : memref<8x8x128xbf16, #tpu.memory_space<vmem>>, vector<1x8x128xbf16>
    %120 = vector.shape_cast %119 : vector<1x8x128xbf16> to vector<8x128xbf16>
    %121 = vector.shape_cast %118 : vector<8x128xbf16> to vector<1x8x128xbf16>
    tpu.vector_store %arg4[%c1_37, %c0_38, %c0_39], %121 {strides = array<i32>} : memref<8x8x128xbf16, #tpu.memory_space<vmem>>, vector<1x8x128xbf16>,
    %122 = vector.extract_strided_slice %87 {offsets = [0, 512], sizes = [8, 512], strides = [1, 1]} : vector<8x1024xf32> to vector<8x512xf32>
    %c6 = arith.constant 6 : index
    %c0_40 = arith.constant 0 : index
    %c0_41 = arith.constant 0 : index
    %123 = vector.load %arg2[%c6, %c0_40, %c0_41] : memref<8x8x512xbf16, #tpu.memory_space<vmem>>, vector<1x8x512xbf16>
    %124 = vector.shape_cast %123 : vector<1x8x512xbf16> to vector<8x512xbf16>
    %125 = arith.extf %124 : vector<8x512xbf16> to vector<8x512xf32>
    %126 = arith.addf %125, %122 : vector<8x512xf32>
    %127 = vector.extract_strided_slice %126 {offsets = [0, 0], sizes = [8, 128], strides = [1, 1]} : vector<8x512xf32> to vector<8x128xf32>
    %128 = arith.negf %127 : vector<8x128xf32>
    %129 = math.exp %128 : vector<8x128xf32>
    %cst_42 = arith.constant 1.000000e+00 : f32
    %130 = vector.broadcast %cst_42 : f32 to vector<8x128xf32>
    %131 = arith.addf %130, %129 : vector<8x128xf32>
    %132 = arith.divf %130, %131 : vector<8x128xf32>
    %133 = vector.extract_strided_slice %126 {offsets = [0, 128], sizes = [8, 128], strides = [1, 1]} : vector<8x512xf32> to vector<8x128xf32>
    %134 = arith.negf %133 : vector<8x128xf32>
    %135 = math.exp %134 : vector<8x128xf32>
    %cst_43 = arith.constant 1.000000e+00 : f32
    %136 = vector.broadcast %cst_43 : f32 to vector<8x128xf32>
    %137 = arith.addf %136, %135 : vector<8x128xf32>
    %138 = arith.divf %136, %137 : vector<8x128xf32>
    %139 = vector.extract_strided_slice %126 {offsets = [0, 256], sizes = [8, 128], strides = [1, 1]} : vector<8x512xf32> to vector<8x128xf32>
    %140 = math.tanh %139 : vector<8x128xf32>
    %141 = vector.extract_strided_slice %126 {offsets = [0, 384], sizes = [8, 128], strides = [1, 1]} : vector<8x512xf32> to vector<8x128xf32>
    %142 = arith.negf %141 : vector<8x128xf32>
    %143 = math.exp %142 : vector<8x128xf32>
    %cst_44 = arith.constant 1.000000e+00 : f32
    %144 = vector.broadcast %cst_44 : f32 to vector<8x128xf32>
    %145 = arith.addf %144, %143 : vector<8x128xf32>
    %146 = arith.divf %144, %145 : vector<8x128xf32>
    %147 = arith.mulf %138, %77 : vector<8x128xf32>
    %148 = arith.mulf %132, %140 : vector<8x128xf32>
    %149 = arith.addf %147, %148 : vector<8x128xf32>
    %150 = math.tanh %149 : vector<8x128xf32>
    %151 = arith.mulf %146, %150 : vector<8x128xf32>
    %152 = arith.truncf %151 : vector<8x128xf32> to vector<8x128xbf16>
    %c6_45 = arith.constant 6 : index
    %c0_46 = arith.constant 0 : index
    %c0_47 = arith.constant 0 : index
    %153 = vector.load %arg5[%c6_45, %c0_46, %c0_47] : memref<8x8x128xbf16, #tpu.memory_space<vmem>>, vector<1x8x128xbf16>
    %154 = vector.shape_cast %153 : vector<1x8x128xbf16> to vector<8x128xbf16>
    %155 = vector.shape_cast %152 : vector<8x128xbf16> to vector<1x8x128xbf16>
    tpu.vector_store %arg5[%c6_45, %c0_46, %c0_47], %155 {strides = array<i32>} : memref<8x8x128xbf16, #tpu.memory_space<vmem>>, vector<1x8x128xbf16>,
    %156 = arith.truncf %117 : vector<8x128xf32> to vector<8x128xbf16>
    %157 = arith.truncf %151 : vector<8x128xf32> to vector<8x128xbf16>
    %158 = tpu.concatenate %156, %157 in 1 : vector<8x128xbf16>, vector<8x128xbf16> -> vector<8x256xbf16>
    %cst_48 = arith.constant dense<0.000000e+00> : vector<8x1024xf32>
    %159 = tpu.matmul %158, %3, %cst_48 {dimension_numbers = #tpu.dot_dimension_numbers<[1], [0], [0], [1], [0, 0, 1, 1], [], []>} : vector<8x256xbf16>, vector<256x1024xbf16>, vector<8x1024xf32> -> vector<8x1024xf32>
    %160 = vector.extract_strided_slice %159 {offsets = [0, 0], sizes = [8, 512], strides = [1, 1]} : vector<8x1024xf32> to vector<8x512xf32>
    %c2 = arith.constant 2 : index
    %c0_49 = arith.constant 0 : index
    %c0_50 = arith.constant 0 : index
    %161 = vector.load %arg1[%c2, %c0_49, %c0_50] : memref<8x8x512xbf16, #tpu.memory_space<vmem>>, vector<1x8x512xbf16>
    %162 = vector.shape_cast %161 : vector<1x8x512xbf16> to vector<8x512xbf16>
    %163 = arith.extf %162 : vector<8x512xbf16> to vector<8x512xf32>
    %164 = arith.addf %163, %160 : vector<8x512xf32>
    %165 = vector.extract_strided_slice %164 {offsets = [0, 0], sizes = [8, 128], strides = [1, 1]} : vector<8x512xf32> to vector<8x128xf32>
    %166 = arith.negf %165 : vector<8x128xf32>
    %167 = math.exp %166 : vector<8x128xf32>
    %cst_51 = arith.constant 1.000000e+00 : f32
    %168 = vector.broadcast %cst_51 : f32 to vector<8x128xf32>
    %169 = arith.addf %168, %167 : vector<8x128xf32>
    %170 = arith.divf %168, %169 : vector<8x128xf32>
    %171 = vector.extract_strided_slice %164 {offsets = [0, 128], sizes = [8, 128], strides = [1, 1]} : vector<8x512xf32> to vector<8x128xf32>
    %172 = arith.negf %171 : vector<8x128xf32>
    %173 = math.exp %172 : vector<8x128xf32>
    %cst_52 = arith.constant 1.000000e+00 : f32
    %174 = vector.broadcast %cst_52 : f32 to vector<8x128xf32>
    %175 = arith.addf %174, %173 : vector<8x128xf32>
    %176 = arith.divf %174, %175 : vector<8x128xf32>
    %177 = vector.extract_strided_slice %164 {offsets = [0, 256], sizes = [8, 128], strides = [1, 1]} : vector<8x512xf32> to vector<8x128xf32>
    %178 = math.tanh %177 : vector<8x128xf32>
    %179 = vector.extract_strided_slice %164 {offsets = [0, 384], sizes = [8, 128], strides = [1, 1]} : vector<8x512xf32> to vector<8x128xf32>
    %180 = arith.negf %179 : vector<8x128xf32>
    %181 = math.exp %180 : vector<8x128xf32>
    %cst_53 = arith.constant 1.000000e+00 : f32
    %182 = vector.broadcast %cst_53 : f32 to vector<8x128xf32>
    %183 = arith.addf %182, %181 : vector<8x128xf32>
    %184 = arith.divf %182, %183 : vector<8x128xf32>
    %185 = arith.mulf %176, %115 : vector<8x128xf32>
    %186 = arith.mulf %170, %178 : vector<8x128xf32>
    %187 = arith.addf %185, %186 : vector<8x128xf32>
    %188 = math.tanh %187 : vector<8x128xf32>
    %189 = arith.mulf %184, %188 : vector<8x128xf32>
    %190 = arith.truncf %189 : vector<8x128xf32> to vector<8x128xbf16>
    %c2_54 = arith.constant 2 : index
    %c0_55 = arith.constant 0 : index
    %c0_56 = arith.constant 0 : index
    %191 = vector.load %arg4[%c2_54, %c0_55, %c0_56] : memref<8x8x128xbf16, #tpu.memory_space<vmem>>, vector<1x8x128xbf16>
    %192 = vector.shape_cast %191 : vector<1x8x128xbf16> to vector<8x128xbf16>
    %193 = vector.shape_cast %190 : vector<8x128xbf16> to vector<1x8x128xbf16>
    tpu.vector_store %arg4[%c2_54, %c0_55, %c0_56], %193 {strides = array<i32>} : memref<8x8x128xbf16, #tpu.memory_space<vmem>>, vector<1x8x128xbf16>,
    %194 = vector.extract_strided_slice %159 {offsets = [0, 512], sizes = [8, 512], strides = [1, 1]} : vector<8x1024xf32> to vector<8x512xf32>
    %c5 = arith.constant 5 : index
    %c0_57 = arith.constant 0 : index
    %c0_58 = arith.constant 0 : index
    %195 = vector.load %arg2[%c5, %c0_57, %c0_58] : memref<8x8x512xbf16, #tpu.memory_space<vmem>>, vector<1x8x512xbf16>
    %196 = vector.shape_cast %195 : vector<1x8x512xbf16> to vector<8x512xbf16>
    %197 = arith.extf %196 : vector<8x512xbf16> to vector<8x512xf32>
    %198 = arith.addf %197, %194 : vector<8x512xf32>
    %199 = vector.extract_strided_slice %198 {offsets = [0, 0], sizes = [8, 128], strides = [1, 1]} : vector<8x512xf32> to vector<8x128xf32>
    %200 = arith.negf %199 : vector<8x128xf32>
    %201 = math.exp %200 : vector<8x128xf32>
    %cst_59 = arith.constant 1.000000e+00 : f32
    %202 = vector.broadcast %cst_59 : f32 to vector<8x128xf32>
    %203 = arith.addf %202, %201 : vector<8x128xf32>
    %204 = arith.divf %202, %203 : vector<8x128xf32>
    %205 = vector.extract_strided_slice %198 {offsets = [0, 128], sizes = [8, 128], strides = [1, 1]} : vector<8x512xf32> to vector<8x128xf32>
    %206 = arith.negf %205 : vector<8x128xf32>
    %207 = math.exp %206 : vector<8x128xf32>
    %cst_60 = arith.constant 1.000000e+00 : f32
    %208 = vector.broadcast %cst_60 : f32 to vector<8x128xf32>
    %209 = arith.addf %208, %207 : vector<8x128xf32>
    %210 = arith.divf %208, %209 : vector<8x128xf32>
    %211 = vector.extract_strided_slice %198 {offsets = [0, 256], sizes = [8, 128], strides = [1, 1]} : vector<8x512xf32> to vector<8x128xf32>
    %212 = math.tanh %211 : vector<8x128xf32>
    %213 = vector.extract_strided_slice %198 {offsets = [0, 384], sizes = [8, 128], strides = [1, 1]} : vector<8x512xf32> to vector<8x128xf32>
    %214 = arith.negf %213 : vector<8x128xf32>
    %215 = math.exp %214 : vector<8x128xf32>
    %cst_61 = arith.constant 1.000000e+00 : f32
    %216 = vector.broadcast %cst_61 : f32 to vector<8x128xf32>
    %217 = arith.addf %216, %215 : vector<8x128xf32>
    %218 = arith.divf %216, %217 : vector<8x128xf32>
    %219 = arith.mulf %210, %149 : vector<8x128xf32>
    %220 = arith.mulf %204, %212 : vector<8x128xf32>
    %221 = arith.addf %219, %220 : vector<8x128xf32>
    %222 = math.tanh %221 : vector<8x128xf32>
    %223 = arith.mulf %218, %222 : vector<8x128xf32>
    %224 = arith.truncf %223 : vector<8x128xf32> to vector<8x128xbf16>
    %c5_62 = arith.constant 5 : index
    %c0_63 = arith.constant 0 : index
    %c0_64 = arith.constant 0 : index
    %225 = vector.load %arg5[%c5_62, %c0_63, %c0_64] : memref<8x8x128xbf16, #tpu.memory_space<vmem>>, vector<1x8x128xbf16>
    %226 = vector.shape_cast %225 : vector<1x8x128xbf16> to vector<8x128xbf16>
    %227 = vector.shape_cast %224 : vector<8x128xbf16> to vector<1x8x128xbf16>
    tpu.vector_store %arg5[%c5_62, %c0_63, %c0_64], %227 {strides = array<i32>} : memref<8x8x128xbf16, #tpu.memory_space<vmem>>, vector<1x8x128xbf16>,
    %228 = arith.truncf %189 : vector<8x128xf32> to vector<8x128xbf16>
    %229 = arith.truncf %223 : vector<8x128xf32> to vector<8x128xbf16>
    %230 = tpu.concatenate %228, %229 in 1 : vector<8x128xbf16>, vector<8x128xbf16> -> vector<8x256xbf16>
    %cst_65 = arith.constant dense<0.000000e+00> : vector<8x1024xf32>
    %231 = tpu.matmul %230, %3, %cst_65 {dimension_numbers = #tpu.dot_dimension_numbers<[1], [0], [0], [1], [0, 0, 1, 1], [], []>} : vector<8x256xbf16>, vector<256x1024xbf16>, vector<8x1024xf32> -> vector<8x1024xf32>
    %232 = vector.extract_strided_slice %231 {offsets = [0, 0], sizes = [8, 512], strides = [1, 1]} : vector<8x1024xf32> to vector<8x512xf32>
    %c3 = arith.constant 3 : index
    %c0_66 = arith.constant 0 : index
    %c0_67 = arith.constant 0 : index
    %233 = vector.load %arg1[%c3, %c0_66, %c0_67] : memref<8x8x512xbf16, #tpu.memory_space<vmem>>, vector<1x8x512xbf16>
    %234 = vector.shape_cast %233 : vector<1x8x512xbf16> to vector<8x512xbf16>
    %235 = arith.extf %234 : vector<8x512xbf16> to vector<8x512xf32>
    %236 = arith.addf %235, %232 : vector<8x512xf32>
    %237 = vector.extract_strided_slice %236 {offsets = [0, 0], sizes = [8, 128], strides = [1, 1]} : vector<8x512xf32> to vector<8x128xf32>
    %238 = arith.negf %237 : vector<8x128xf32>
    %239 = math.exp %238 : vector<8x128xf32>
    %cst_68 = arith.constant 1.000000e+00 : f32
    %240 = vector.broadcast %cst_68 : f32 to vector<8x128xf32>
    %241 = arith.addf %240, %239 : vector<8x128xf32>
    %242 = arith.divf %240, %241 : vector<8x128xf32>
    %243 = vector.extract_strided_slice %236 {offsets = [0, 128], sizes = [8, 128], strides = [1, 1]} : vector<8x512xf32> to vector<8x128xf32>
    %244 = arith.negf %243 : vector<8x128xf32>
    %245 = math.exp %244 : vector<8x128xf32>
    %cst_69 = arith.constant 1.000000e+00 : f32
    %246 = vector.broadcast %cst_69 : f32 to vector<8x128xf32>
    %247 = arith.addf %246, %245 : vector<8x128xf32>
    %248 = arith.divf %246, %247 : vector<8x128xf32>
    %249 = vector.extract_strided_slice %236 {offsets = [0, 256], sizes = [8, 128], strides = [1, 1]} : vector<8x512xf32> to vector<8x128xf32>
    %250 = math.tanh %249 : vector<8x128xf32>
    %251 = vector.extract_strided_slice %236 {offsets = [0, 384], sizes = [8, 128], strides = [1, 1]} : vector<8x512xf32> to vector<8x128xf32>
    %252 = arith.negf %251 : vector<8x128xf32>
    %253 = math.exp %252 : vector<8x128xf32>
    %cst_70 = arith.constant 1.000000e+00 : f32
    %254 = vector.broadcast %cst_70 : f32 to vector<8x128xf32>
    %255 = arith.addf %254, %253 : vector<8x128xf32>
    %256 = arith.divf %254, %255 : vector<8x128xf32>
    %257 = arith.mulf %248, %187 : vector<8x128xf32>
    %258 = arith.mulf %242, %250 : vector<8x128xf32>
    %259 = arith.addf %257, %258 : vector<8x128xf32>
    %260 = math.tanh %259 : vector<8x128xf32>
    %261 = arith.mulf %256, %260 : vector<8x128xf32>
    %262 = arith.truncf %261 : vector<8x128xf32> to vector<8x128xbf16>
    %c3_71 = arith.constant 3 : index
    %c0_72 = arith.constant 0 : index
    %c0_73 = arith.constant 0 : index
    %263 = vector.load %arg4[%c3_71, %c0_72, %c0_73] : memref<8x8x128xbf16, #tpu.memory_space<vmem>>, vector<1x8x128xbf16>
    %264 = vector.shape_cast %263 : vector<1x8x128xbf16> to vector<8x128xbf16>
    %265 = vector.shape_cast %262 : vector<8x128xbf16> to vector<1x8x128xbf16>
    tpu.vector_store %arg4[%c3_71, %c0_72, %c0_73], %265 {strides = array<i32>} : memref<8x8x128xbf16, #tpu.memory_space<vmem>>, vector<1x8x128xbf16>,
    %266 = vector.extract_strided_slice %231 {offsets = [0, 512], sizes = [8, 512], strides = [1, 1]} : vector<8x1024xf32> to vector<8x512xf32>
    %c4 = arith.constant 4 : index
    %c0_74 = arith.constant 0 : index
    %c0_75 = arith.constant 0 : index
    %267 = vector.load %arg2[%c4, %c0_74, %c0_75] : memref<8x8x512xbf16, #tpu.memory_space<vmem>>, vector<1x8x512xbf16>
    %268 = vector.shape_cast %267 : vector<1x8x512xbf16> to vector<8x512xbf16>
    %269 = arith.extf %268 : vector<8x512xbf16> to vector<8x512xf32>
    %270 = arith.addf %269, %266 : vector<8x512xf32>
    %271 = vector.extract_strided_slice %270 {offsets = [0, 0], sizes = [8, 128], strides = [1, 1]} : vector<8x512xf32> to vector<8x128xf32>
    %272 = arith.negf %271 : vector<8x128xf32>
    %273 = math.exp %272 : vector<8x128xf32>
    %cst_76 = arith.constant 1.000000e+00 : f32
    %274 = vector.broadcast %cst_76 : f32 to vector<8x128xf32>
    %275 = arith.addf %274, %273 : vector<8x128xf32>
    %276 = arith.divf %274, %275 : vector<8x128xf32>
    %277 = vector.extract_strided_slice %270 {offsets = [0, 128], sizes = [8, 128], strides = [1, 1]} : vector<8x512xf32> to vector<8x128xf32>
    %278 = arith.negf %277 : vector<8x128xf32>
    %279 = math.exp %278 : vector<8x128xf32>
    %cst_77 = arith.constant 1.000000e+00 : f32
    %280 = vector.broadcast %cst_77 : f32 to vector<8x128xf32>
    %281 = arith.addf %280, %279 : vector<8x128xf32>
    %282 = arith.divf %280, %281 : vector<8x128xf32>
    %283 = vector.extract_strided_slice %270 {offsets = [0, 256], sizes = [8, 128], strides = [1, 1]} : vector<8x512xf32> to vector<8x128xf32>
    %284 = math.tanh %283 : vector<8x128xf32>
    %285 = vector.extract_strided_slice %270 {offsets = [0, 384], sizes = [8, 128], strides = [1, 1]} : vector<8x512xf32> to vector<8x128xf32>
    %286 = arith.negf %285 : vector<8x128xf32>
    %287 = math.exp %286 : vector<8x128xf32>
    %cst_78 = arith.constant 1.000000e+00 : f32
    %288 = vector.broadcast %cst_78 : f32 to vector<8x128xf32>
    %289 = arith.addf %288, %287 : vector<8x128xf32>
    %290 = arith.divf %288, %289 : vector<8x128xf32>
    %291 = arith.mulf %282, %221 : vector<8x128xf32>
    %292 = arith.mulf %276, %284 : vector<8x128xf32>
    %293 = arith.addf %291, %292 : vector<8x128xf32>
    %294 = math.tanh %293 : vector<8x128xf32>
    %295 = arith.mulf %290, %294 : vector<8x128xf32>
    %296 = arith.truncf %295 : vector<8x128xf32> to vector<8x128xbf16>
    %c4_79 = arith.constant 4 : index
    %c0_80 = arith.constant 0 : index
    %c0_81 = arith.constant 0 : index
    %297 = vector.load %arg5[%c4_79, %c0_80, %c0_81] : memref<8x8x128xbf16, #tpu.memory_space<vmem>>, vector<1x8x128xbf16>
    %298 = vector.shape_cast %297 : vector<1x8x128xbf16> to vector<8x128xbf16>
    %299 = vector.shape_cast %296 : vector<8x128xbf16> to vector<1x8x128xbf16>
    tpu.vector_store %arg5[%c4_79, %c0_80, %c0_81], %299 {strides = array<i32>} : memref<8x8x128xbf16, #tpu.memory_space<vmem>>, vector<1x8x128xbf16>,
    %300 = arith.truncf %261 : vector<8x128xf32> to vector<8x128xbf16>
    %301 = arith.truncf %295 : vector<8x128xf32> to vector<8x128xbf16>
    %302 = tpu.concatenate %300, %301 in 1 : vector<8x128xbf16>, vector<8x128xbf16> -> vector<8x256xbf16>
    %cst_82 = arith.constant dense<0.000000e+00> : vector<8x1024xf32>
    %303 = tpu.matmul %302, %3, %cst_82 {dimension_numbers = #tpu.dot_dimension_numbers<[1], [0], [0], [1], [0, 0, 1, 1], [], []>} : vector<8x256xbf16>, vector<256x1024xbf16>, vector<8x1024xf32> -> vector<8x1024xf32>
    %304 = vector.extract_strided_slice %303 {offsets = [0, 0], sizes = [8, 512], strides = [1, 1]} : vector<8x1024xf32> to vector<8x512xf32>
    %c4_83 = arith.constant 4 : index
    %c0_84 = arith.constant 0 : index
    %c0_85 = arith.constant 0 : index
    %305 = vector.load %arg1[%c4_83, %c0_84, %c0_85] : memref<8x8x512xbf16, #tpu.memory_space<vmem>>, vector<1x8x512xbf16>
    %306 = vector.shape_cast %305 : vector<1x8x512xbf16> to vector<8x512xbf16>
    %307 = arith.extf %306 : vector<8x512xbf16> to vector<8x512xf32>
    %308 = arith.addf %307, %304 : vector<8x512xf32>
    %309 = vector.extract_strided_slice %308 {offsets = [0, 0], sizes = [8, 128], strides = [1, 1]} : vector<8x512xf32> to vector<8x128xf32>
    %310 = arith.negf %309 : vector<8x128xf32>
    %311 = math.exp %310 : vector<8x128xf32>
    %cst_86 = arith.constant 1.000000e+00 : f32
    %312 = vector.broadcast %cst_86 : f32 to vector<8x128xf32>
    %313 = arith.addf %312, %311 : vector<8x128xf32>
    %314 = arith.divf %312, %313 : vector<8x128xf32>
    %315 = vector.extract_strided_slice %308 {offsets = [0, 128], sizes = [8, 128], strides = [1, 1]} : vector<8x512xf32> to vector<8x128xf32>
    %316 = arith.negf %315 : vector<8x128xf32>
    %317 = math.exp %316 : vector<8x128xf32>
    %cst_87 = arith.constant 1.000000e+00 : f32
    %318 = vector.broadcast %cst_87 : f32 to vector<8x128xf32>
    %319 = arith.addf %318, %317 : vector<8x128xf32>
    %320 = arith.divf %318, %319 : vector<8x128xf32>
    %321 = vector.extract_strided_slice %308 {offsets = [0, 256], sizes = [8, 128], strides = [1, 1]} : vector<8x512xf32> to vector<8x128xf32>
    %322 = math.tanh %321 : vector<8x128xf32>
    %323 = vector.extract_strided_slice %308 {offsets = [0, 384], sizes = [8, 128], strides = [1, 1]} : vector<8x512xf32> to vector<8x128xf32>
    %324 = arith.negf %323 : vector<8x128xf32>
    %325 = math.exp %324 : vector<8x128xf32>
    %cst_88 = arith.constant 1.000000e+00 : f32
    %326 = vector.broadcast %cst_88 : f32 to vector<8x128xf32>
    %327 = arith.addf %326, %325 : vector<8x128xf32>
    %328 = arith.divf %326, %327 : vector<8x128xf32>
    %329 = arith.mulf %320, %259 : vector<8x128xf32>
    %330 = arith.mulf %314, %322 : vector<8x128xf32>
    %331 = arith.addf %329, %330 : vector<8x128xf32>
    %332 = math.tanh %331 : vector<8x128xf32>
    %333 = arith.mulf %328, %332 : vector<8x128xf32>
    %334 = arith.truncf %333 : vector<8x128xf32> to vector<8x128xbf16>
    %c4_89 = arith.constant 4 : index
    %c0_90 = arith.constant 0 : index
    %c0_91 = arith.constant 0 : index
    %335 = vector.load %arg4[%c4_89, %c0_90, %c0_91] : memref<8x8x128xbf16, #tpu.memory_space<vmem>>, vector<1x8x128xbf16>
    %336 = vector.shape_cast %335 : vector<1x8x128xbf16> to vector<8x128xbf16>
    %337 = vector.shape_cast %334 : vector<8x128xbf16> to vector<1x8x128xbf16>
    tpu.vector_store %arg4[%c4_89, %c0_90, %c0_91], %337 {strides = array<i32>} : memref<8x8x128xbf16, #tpu.memory_space<vmem>>, vector<1x8x128xbf16>,
    %338 = vector.extract_strided_slice %303 {offsets = [0, 512], sizes = [8, 512], strides = [1, 1]} : vector<8x1024xf32> to vector<8x512xf32>
    %c3_92 = arith.constant 3 : index
    %c0_93 = arith.constant 0 : index
    %c0_94 = arith.constant 0 : index
    %339 = vector.load %arg2[%c3_92, %c0_93, %c0_94] : memref<8x8x512xbf16, #tpu.memory_space<vmem>>, vector<1x8x512xbf16>
    %340 = vector.shape_cast %339 : vector<1x8x512xbf16> to vector<8x512xbf16>
    %341 = arith.extf %340 : vector<8x512xbf16> to vector<8x512xf32>
    %342 = arith.addf %341, %338 : vector<8x512xf32>
    %343 = vector.extract_strided_slice %342 {offsets = [0, 0], sizes = [8, 128], strides = [1, 1]} : vector<8x512xf32> to vector<8x128xf32>
    %344 = arith.negf %343 : vector<8x128xf32>
    %345 = math.exp %344 : vector<8x128xf32>
    %cst_95 = arith.constant 1.000000e+00 : f32
    %346 = vector.broadcast %cst_95 : f32 to vector<8x128xf32>
    %347 = arith.addf %346, %345 : vector<8x128xf32>
    %348 = arith.divf %346, %347 : vector<8x128xf32>
    %349 = vector.extract_strided_slice %342 {offsets = [0, 128], sizes = [8, 128], strides = [1, 1]} : vector<8x512xf32> to vector<8x128xf32>
    %350 = arith.negf %349 : vector<8x128xf32>
    %351 = math.exp %350 : vector<8x128xf32>
    %cst_96 = arith.constant 1.000000e+00 : f32
    %352 = vector.broadcast %cst_96 : f32 to vector<8x128xf32>
    %353 = arith.addf %352, %351 : vector<8x128xf32>
    %354 = arith.divf %352, %353 : vector<8x128xf32>
    %355 = vector.extract_strided_slice %342 {offsets = [0, 256], sizes = [8, 128], strides = [1, 1]} : vector<8x512xf32> to vector<8x128xf32>
    %356 = math.tanh %355 : vector<8x128xf32>
    %357 = vector.extract_strided_slice %342 {offsets = [0, 384], sizes = [8, 128], strides = [1, 1]} : vector<8x512xf32> to vector<8x128xf32>
    %358 = arith.negf %357 : vector<8x128xf32>
    %359 = math.exp %358 : vector<8x128xf32>
    %cst_97 = arith.constant 1.000000e+00 : f32
    %360 = vector.broadcast %cst_97 : f32 to vector<8x128xf32>
    %361 = arith.addf %360, %359 : vector<8x128xf32>
    %362 = arith.divf %360, %361 : vector<8x128xf32>
    %363 = arith.mulf %354, %293 : vector<8x128xf32>
    %364 = arith.mulf %348, %356 : vector<8x128xf32>
    %365 = arith.addf %363, %364 : vector<8x128xf32>
    %366 = math.tanh %365 : vector<8x128xf32>
    %367 = arith.mulf %362, %366 : vector<8x128xf32>
    %368 = arith.truncf %367 : vector<8x128xf32> to vector<8x128xbf16>
    %c3_98 = arith.constant 3 : index
    %c0_99 = arith.constant 0 : index
    %c0_100 = arith.constant 0 : index
    %369 = vector.load %arg5[%c3_98, %c0_99, %c0_100] : memref<8x8x128xbf16, #tpu.memory_space<vmem>>, vector<1x8x128xbf16>
    %370 = vector.shape_cast %369 : vector<1x8x128xbf16> to vector<8x128xbf16>
    %371 = vector.shape_cast %368 : vector<8x128xbf16> to vector<1x8x128xbf16>
    tpu.vector_store %arg5[%c3_98, %c0_99, %c0_100], %371 {strides = array<i32>} : memref<8x8x128xbf16, #tpu.memory_space<vmem>>, vector<1x8x128xbf16>,
    %372 = arith.truncf %333 : vector<8x128xf32> to vector<8x128xbf16>
    %373 = arith.truncf %367 : vector<8x128xf32> to vector<8x128xbf16>
    %374 = tpu.concatenate %372, %373 in 1 : vector<8x128xbf16>, vector<8x128xbf16> -> vector<8x256xbf16>
    %cst_101 = arith.constant dense<0.000000e+00> : vector<8x1024xf32>
    %375 = tpu.matmul %374, %3, %cst_101 {dimension_numbers = #tpu.dot_dimension_numbers<[1], [0], [0], [1], [0, 0, 1, 1], [], []>} : vector<8x256xbf16>, vector<256x1024xbf16>, vector<8x1024xf32> -> vector<8x1024xf32>
    %376 = vector.extract_strided_slice %375 {offsets = [0, 0], sizes = [8, 512], strides = [1, 1]} : vector<8x1024xf32> to vector<8x512xf32>
    %c5_102 = arith.constant 5 : index
    %c0_103 = arith.constant 0 : index
    %c0_104 = arith.constant 0 : index
    %377 = vector.load %arg1[%c5_102, %c0_103, %c0_104] : memref<8x8x512xbf16, #tpu.memory_space<vmem>>, vector<1x8x512xbf16>
    %378 = vector.shape_cast %377 : vector<1x8x512xbf16> to vector<8x512xbf16>
    %379 = arith.extf %378 : vector<8x512xbf16> to vector<8x512xf32>
    %380 = arith.addf %379, %376 : vector<8x512xf32>
    %381 = vector.extract_strided_slice %380 {offsets = [0, 0], sizes = [8, 128], strides = [1, 1]} : vector<8x512xf32> to vector<8x128xf32>
    %382 = arith.negf %381 : vector<8x128xf32>
    %383 = math.exp %382 : vector<8x128xf32>
    %cst_105 = arith.constant 1.000000e+00 : f32
    %384 = vector.broadcast %cst_105 : f32 to vector<8x128xf32>
    %385 = arith.addf %384, %383 : vector<8x128xf32>
    %386 = arith.divf %384, %385 : vector<8x128xf32>
    %387 = vector.extract_strided_slice %380 {offsets = [0, 128], sizes = [8, 128], strides = [1, 1]} : vector<8x512xf32> to vector<8x128xf32>
    %388 = arith.negf %387 : vector<8x128xf32>
    %389 = math.exp %388 : vector<8x128xf32>
    %cst_106 = arith.constant 1.000000e+00 : f32
    %390 = vector.broadcast %cst_106 : f32 to vector<8x128xf32>
    %391 = arith.addf %390, %389 : vector<8x128xf32>
    %392 = arith.divf %390, %391 : vector<8x128xf32>
    %393 = vector.extract_strided_slice %380 {offsets = [0, 256], sizes = [8, 128], strides = [1, 1]} : vector<8x512xf32> to vector<8x128xf32>
    %394 = math.tanh %393 : vector<8x128xf32>
    %395 = vector.extract_strided_slice %380 {offsets = [0, 384], sizes = [8, 128], strides = [1, 1]} : vector<8x512xf32> to vector<8x128xf32>
    %396 = arith.negf %395 : vector<8x128xf32>
    %397 = math.exp %396 : vector<8x128xf32>
    %cst_107 = arith.constant 1.000000e+00 : f32
    %398 = vector.broadcast %cst_107 : f32 to vector<8x128xf32>
    %399 = arith.addf %398, %397 : vector<8x128xf32>
    %400 = arith.divf %398, %399 : vector<8x128xf32>
    %401 = arith.mulf %392, %331 : vector<8x128xf32>
    %402 = arith.mulf %386, %394 : vector<8x128xf32>
    %403 = arith.addf %401, %402 : vector<8x128xf32>
    %404 = math.tanh %403 : vector<8x128xf32>
    %405 = arith.mulf %400, %404 : vector<8x128xf32>
    %406 = arith.truncf %405 : vector<8x128xf32> to vector<8x128xbf16>
    %c5_108 = arith.constant 5 : index
    %c0_109 = arith.constant 0 : index
    %c0_110 = arith.constant 0 : index
    %407 = vector.load %arg4[%c5_108, %c0_109, %c0_110] : memref<8x8x128xbf16, #tpu.memory_space<vmem>>, vector<1x8x128xbf16>
    %408 = vector.shape_cast %407 : vector<1x8x128xbf16> to vector<8x128xbf16>
    %409 = vector.shape_cast %406 : vector<8x128xbf16> to vector<1x8x128xbf16>
    tpu.vector_store %arg4[%c5_108, %c0_109, %c0_110], %409 {strides = array<i32>} : memref<8x8x128xbf16, #tpu.memory_space<vmem>>, vector<1x8x128xbf16>,
    %410 = vector.extract_strided_slice %375 {offsets = [0, 512], sizes = [8, 512], strides = [1, 1]} : vector<8x1024xf32> to vector<8x512xf32>
    %c2_111 = arith.constant 2 : index
    %c0_112 = arith.constant 0 : index
    %c0_113 = arith.constant 0 : index
    %411 = vector.load %arg2[%c2_111, %c0_112, %c0_113] : memref<8x8x512xbf16, #tpu.memory_space<vmem>>, vector<1x8x512xbf16>
    %412 = vector.shape_cast %411 : vector<1x8x512xbf16> to vector<8x512xbf16>
    %413 = arith.extf %412 : vector<8x512xbf16> to vector<8x512xf32>
    %414 = arith.addf %413, %410 : vector<8x512xf32>
    %415 = vector.extract_strided_slice %414 {offsets = [0, 0], sizes = [8, 128], strides = [1, 1]} : vector<8x512xf32> to vector<8x128xf32>
    %416 = arith.negf %415 : vector<8x128xf32>
    %417 = math.exp %416 : vector<8x128xf32>
    %cst_114 = arith.constant 1.000000e+00 : f32
    %418 = vector.broadcast %cst_114 : f32 to vector<8x128xf32>
    %419 = arith.addf %418, %417 : vector<8x128xf32>
    %420 = arith.divf %418, %419 : vector<8x128xf32>
    %421 = vector.extract_strided_slice %414 {offsets = [0, 128], sizes = [8, 128], strides = [1, 1]} : vector<8x512xf32> to vector<8x128xf32>
    %422 = arith.negf %421 : vector<8x128xf32>
    %423 = math.exp %422 : vector<8x128xf32>
    %cst_115 = arith.constant 1.000000e+00 : f32
    %424 = vector.broadcast %cst_115 : f32 to vector<8x128xf32>
    %425 = arith.addf %424, %423 : vector<8x128xf32>
    %426 = arith.divf %424, %425 : vector<8x128xf32>
    %427 = vector.extract_strided_slice %414 {offsets = [0, 256], sizes = [8, 128], strides = [1, 1]} : vector<8x512xf32> to vector<8x128xf32>
    %428 = math.tanh %427 : vector<8x128xf32>
    %429 = vector.extract_strided_slice %414 {offsets = [0, 384], sizes = [8, 128], strides = [1, 1]} : vector<8x512xf32> to vector<8x128xf32>
    %430 = arith.negf %429 : vector<8x128xf32>
    %431 = math.exp %430 : vector<8x128xf32>
    %cst_116 = arith.constant 1.000000e+00 : f32
    %432 = vector.broadcast %cst_116 : f32 to vector<8x128xf32>
    %433 = arith.addf %432, %431 : vector<8x128xf32>
    %434 = arith.divf %432, %433 : vector<8x128xf32>
    %435 = arith.mulf %426, %365 : vector<8x128xf32>
    %436 = arith.mulf %420, %428 : vector<8x128xf32>
    %437 = arith.addf %435, %436 : vector<8x128xf32>
    %438 = math.tanh %437 : vector<8x128xf32>
    %439 = arith.mulf %434, %438 : vector<8x128xf32>
    %440 = arith.truncf %439 : vector<8x128xf32> to vector<8x128xbf16>
    %c2_117 = arith.constant 2 : index
    %c0_118 = arith.constant 0 : index
    %c0_119 = arith.constant 0 : index
    %441 = vector.load %arg5[%c2_117, %c0_118, %c0_119] : memref<8x8x128xbf16, #tpu.memory_space<vmem>>, vector<1x8x128xbf16>
    %442 = vector.shape_cast %441 : vector<1x8x128xbf16> to vector<8x128xbf16>
    %443 = vector.shape_cast %440 : vector<8x128xbf16> to vector<1x8x128xbf16>
    tpu.vector_store %arg5[%c2_117, %c0_118, %c0_119], %443 {strides = array<i32>} : memref<8x8x128xbf16, #tpu.memory_space<vmem>>, vector<1x8x128xbf16>,
    %444 = arith.truncf %405 : vector<8x128xf32> to vector<8x128xbf16>
    %445 = arith.truncf %439 : vector<8x128xf32> to vector<8x128xbf16>
    %446 = tpu.concatenate %444, %445 in 1 : vector<8x128xbf16>, vector<8x128xbf16> -> vector<8x256xbf16>
    %cst_120 = arith.constant dense<0.000000e+00> : vector<8x1024xf32>
    %447 = tpu.matmul %446, %3, %cst_120 {dimension_numbers = #tpu.dot_dimension_numbers<[1], [0], [0], [1], [0, 0, 1, 1], [], []>} : vector<8x256xbf16>, vector<256x1024xbf16>, vector<8x1024xf32> -> vector<8x1024xf32>
    %448 = vector.extract_strided_slice %447 {offsets = [0, 0], sizes = [8, 512], strides = [1, 1]} : vector<8x1024xf32> to vector<8x512xf32>
    %c6_121 = arith.constant 6 : index
    %c0_122 = arith.constant 0 : index
    %c0_123 = arith.constant 0 : index
    %449 = vector.load %arg1[%c6_121, %c0_122, %c0_123] : memref<8x8x512xbf16, #tpu.memory_space<vmem>>, vector<1x8x512xbf16>
    %450 = vector.shape_cast %449 : vector<1x8x512xbf16> to vector<8x512xbf16>
    %451 = arith.extf %450 : vector<8x512xbf16> to vector<8x512xf32>
    %452 = arith.addf %451, %448 : vector<8x512xf32>
    %453 = vector.extract_strided_slice %452 {offsets = [0, 0], sizes = [8, 128], strides = [1, 1]} : vector<8x512xf32> to vector<8x128xf32>
    %454 = arith.negf %453 : vector<8x128xf32>
    %455 = math.exp %454 : vector<8x128xf32>
    %cst_124 = arith.constant 1.000000e+00 : f32
    %456 = vector.broadcast %cst_124 : f32 to vector<8x128xf32>
    %457 = arith.addf %456, %455 : vector<8x128xf32>
    %458 = arith.divf %456, %457 : vector<8x128xf32>
    %459 = vector.extract_strided_slice %452 {offsets = [0, 128], sizes = [8, 128], strides = [1, 1]} : vector<8x512xf32> to vector<8x128xf32>
    %460 = arith.negf %459 : vector<8x128xf32>
    %461 = math.exp %460 : vector<8x128xf32>
    %cst_125 = arith.constant 1.000000e+00 : f32
    %462 = vector.broadcast %cst_125 : f32 to vector<8x128xf32>
    %463 = arith.addf %462, %461 : vector<8x128xf32>
    %464 = arith.divf %462, %463 : vector<8x128xf32>
    %465 = vector.extract_strided_slice %452 {offsets = [0, 256], sizes = [8, 128], strides = [1, 1]} : vector<8x512xf32> to vector<8x128xf32>
    %466 = math.tanh %465 : vector<8x128xf32>
    %467 = vector.extract_strided_slice %452 {offsets = [0, 384], sizes = [8, 128], strides = [1, 1]} : vector<8x512xf32> to vector<8x128xf32>
    %468 = arith.negf %467 : vector<8x128xf32>
    %469 = math.exp %468 : vector<8x128xf32>
    %cst_126 = arith.constant 1.000000e+00 : f32
    %470 = vector.broadcast %cst_126 : f32 to vector<8x128xf32>
    %471 = arith.addf %470, %469 : vector<8x128xf32>
    %472 = arith.divf %470, %471 : vector<8x128xf32>
    %473 = arith.mulf %464, %403 : vector<8x128xf32>
    %474 = arith.mulf %458, %466 : vector<8x128xf32>
    %475 = arith.addf %473, %474 : vector<8x128xf32>
    %476 = math.tanh %475 : vector<8x128xf32>
    %477 = arith.mulf %472, %476 : vector<8x128xf32>
    %478 = arith.truncf %477 : vector<8x128xf32> to vector<8x128xbf16>
    %c6_127 = arith.constant 6 : index
    %c0_128 = arith.constant 0 : index
    %c0_129 = arith.constant 0 : index
    %479 = vector.load %arg4[%c6_127, %c0_128, %c0_129] : memref<8x8x128xbf16, #tpu.memory_space<vmem>>, vector<1x8x128xbf16>
    %480 = vector.shape_cast %479 : vector<1x8x128xbf16> to vector<8x128xbf16>
    %481 = vector.shape_cast %478 : vector<8x128xbf16> to vector<1x8x128xbf16>
    tpu.vector_store %arg4[%c6_127, %c0_128, %c0_129], %481 {strides = array<i32>} : memref<8x8x128xbf16, #tpu.memory_space<vmem>>, vector<1x8x128xbf16>,
    %482 = vector.extract_strided_slice %447 {offsets = [0, 512], sizes = [8, 512], strides = [1, 1]} : vector<8x1024xf32> to vector<8x512xf32>
    %c1_130 = arith.constant 1 : index
    %c0_131 = arith.constant 0 : index
    %c0_132 = arith.constant 0 : index
    %483 = vector.load %arg2[%c1_130, %c0_131, %c0_132] : memref<8x8x512xbf16, #tpu.memory_space<vmem>>, vector<1x8x512xbf16>
    %484 = vector.shape_cast %483 : vector<1x8x512xbf16> to vector<8x512xbf16>
    %485 = arith.extf %484 : vector<8x512xbf16> to vector<8x512xf32>
    %486 = arith.addf %485, %482 : vector<8x512xf32>
    %487 = vector.extract_strided_slice %486 {offsets = [0, 0], sizes = [8, 128], strides = [1, 1]} : vector<8x512xf32> to vector<8x128xf32>
    %488 = arith.negf %487 : vector<8x128xf32>
    %489 = math.exp %488 : vector<8x128xf32>
    %cst_133 = arith.constant 1.000000e+00 : f32
    %490 = vector.broadcast %cst_133 : f32 to vector<8x128xf32>
    %491 = arith.addf %490, %489 : vector<8x128xf32>
    %492 = arith.divf %490, %491 : vector<8x128xf32>
    %493 = vector.extract_strided_slice %486 {offsets = [0, 128], sizes = [8, 128], strides = [1, 1]} : vector<8x512xf32> to vector<8x128xf32>
    %494 = arith.negf %493 : vector<8x128xf32>
    %495 = math.exp %494 : vector<8x128xf32>
    %cst_134 = arith.constant 1.000000e+00 : f32
    %496 = vector.broadcast %cst_134 : f32 to vector<8x128xf32>
    %497 = arith.addf %496, %495 : vector<8x128xf32>
    %498 = arith.divf %496, %497 : vector<8x128xf32>
    %499 = vector.extract_strided_slice %486 {offsets = [0, 256], sizes = [8, 128], strides = [1, 1]} : vector<8x512xf32> to vector<8x128xf32>
    %500 = math.tanh %499 : vector<8x128xf32>
    %501 = vector.extract_strided_slice %486 {offsets = [0, 384], sizes = [8, 128], strides = [1, 1]} : vector<8x512xf32> to vector<8x128xf32>
    %502 = arith.negf %501 : vector<8x128xf32>
    %503 = math.exp %502 : vector<8x128xf32>
    %cst_135 = arith.constant 1.000000e+00 : f32
    %504 = vector.broadcast %cst_135 : f32 to vector<8x128xf32>
    %505 = arith.addf %504, %503 : vector<8x128xf32>
    %506 = arith.divf %504, %505 : vector<8x128xf32>
    %507 = arith.mulf %498, %437 : vector<8x128xf32>
    %508 = arith.mulf %492, %500 : vector<8x128xf32>
    %509 = arith.addf %507, %508 : vector<8x128xf32>
    %510 = math.tanh %509 : vector<8x128xf32>
    %511 = arith.mulf %506, %510 : vector<8x128xf32>
    %512 = arith.truncf %511 : vector<8x128xf32> to vector<8x128xbf16>
    %c1_136 = arith.constant 1 : index
    %c0_137 = arith.constant 0 : index
    %c0_138 = arith.constant 0 : index
    %513 = vector.load %arg5[%c1_136, %c0_137, %c0_138] : memref<8x8x128xbf16, #tpu.memory_space<vmem>>, vector<1x8x128xbf16>
    %514 = vector.shape_cast %513 : vector<1x8x128xbf16> to vector<8x128xbf16>
    %515 = vector.shape_cast %512 : vector<8x128xbf16> to vector<1x8x128xbf16>
    tpu.vector_store %arg5[%c1_136, %c0_137, %c0_138], %515 {strides = array<i32>} : memref<8x8x128xbf16, #tpu.memory_space<vmem>>, vector<1x8x128xbf16>,
    %516 = arith.truncf %477 : vector<8x128xf32> to vector<8x128xbf16>
    %517 = arith.truncf %511 : vector<8x128xf32> to vector<8x128xbf16>
    %518 = tpu.concatenate %516, %517 in 1 : vector<8x128xbf16>, vector<8x128xbf16> -> vector<8x256xbf16>
    %cst_139 = arith.constant dense<0.000000e+00> : vector<8x1024xf32>
    %519 = tpu.matmul %518, %3, %cst_139 {dimension_numbers = #tpu.dot_dimension_numbers<[1], [0], [0], [1], [0, 0, 1, 1], [], []>} : vector<8x256xbf16>, vector<256x1024xbf16>, vector<8x1024xf32> -> vector<8x1024xf32>
    %520 = vector.extract_strided_slice %519 {offsets = [0, 0], sizes = [8, 512], strides = [1, 1]} : vector<8x1024xf32> to vector<8x512xf32>
    %c7_140 = arith.constant 7 : index
    %c0_141 = arith.constant 0 : index
    %c0_142 = arith.constant 0 : index
    %521 = vector.load %arg1[%c7_140, %c0_141, %c0_142] : memref<8x8x512xbf16, #tpu.memory_space<vmem>>, vector<1x8x512xbf16>
    %522 = vector.shape_cast %521 : vector<1x8x512xbf16> to vector<8x512xbf16>
    %523 = arith.extf %522 : vector<8x512xbf16> to vector<8x512xf32>
    %524 = arith.addf %523, %520 : vector<8x512xf32>
    %525 = vector.extract_strided_slice %524 {offsets = [0, 0], sizes = [8, 128], strides = [1, 1]} : vector<8x512xf32> to vector<8x128xf32>
    %526 = arith.negf %525 : vector<8x128xf32>
    %527 = math.exp %526 : vector<8x128xf32>
    %cst_143 = arith.constant 1.000000e+00 : f32
    %528 = vector.broadcast %cst_143 : f32 to vector<8x128xf32>
    %529 = arith.addf %528, %527 : vector<8x128xf32>
    %530 = arith.divf %528, %529 : vector<8x128xf32>
    %531 = vector.extract_strided_slice %524 {offsets = [0, 128], sizes = [8, 128], strides = [1, 1]} : vector<8x512xf32> to vector<8x128xf32>
    %532 = arith.negf %531 : vector<8x128xf32>
    %533 = math.exp %532 : vector<8x128xf32>
    %cst_144 = arith.constant 1.000000e+00 : f32
    %534 = vector.broadcast %cst_144 : f32 to vector<8x128xf32>
    %535 = arith.addf %534, %533 : vector<8x128xf32>
    %536 = arith.divf %534, %535 : vector<8x128xf32>
    %537 = vector.extract_strided_slice %524 {offsets = [0, 256], sizes = [8, 128], strides = [1, 1]} : vector<8x512xf32> to vector<8x128xf32>
    %538 = math.tanh %537 : vector<8x128xf32>
    %539 = vector.extract_strided_slice %524 {offsets = [0, 384], sizes = [8, 128], strides = [1, 1]} : vector<8x512xf32> to vector<8x128xf32>
    %540 = arith.negf %539 : vector<8x128xf32>
    %541 = math.exp %540 : vector<8x128xf32>
    %cst_145 = arith.constant 1.000000e+00 : f32
    %542 = vector.broadcast %cst_145 : f32 to vector<8x128xf32>
    %543 = arith.addf %542, %541 : vector<8x128xf32>
    %544 = arith.divf %542, %543 : vector<8x128xf32>
    %545 = arith.mulf %536, %475 : vector<8x128xf32>
    %546 = arith.mulf %530, %538 : vector<8x128xf32>
    %547 = arith.addf %545, %546 : vector<8x128xf32>
    %548 = math.tanh %547 : vector<8x128xf32>
    %549 = arith.mulf %544, %548 : vector<8x128xf32>
    %550 = arith.truncf %549 : vector<8x128xf32> to vector<8x128xbf16>
    %c7_146 = arith.constant 7 : index
    %c0_147 = arith.constant 0 : index
    %c0_148 = arith.constant 0 : index
    %551 = vector.load %arg4[%c7_146, %c0_147, %c0_148] : memref<8x8x128xbf16, #tpu.memory_space<vmem>>, vector<1x8x128xbf16>
    %552 = vector.shape_cast %551 : vector<1x8x128xbf16> to vector<8x128xbf16>
    %553 = vector.shape_cast %550 : vector<8x128xbf16> to vector<1x8x128xbf16>
    tpu.vector_store %arg4[%c7_146, %c0_147, %c0_148], %553 {strides = array<i32>} : memref<8x8x128xbf16, #tpu.memory_space<vmem>>, vector<1x8x128xbf16>,
    %554 = vector.extract_strided_slice %519 {offsets = [0, 512], sizes = [8, 512], strides = [1, 1]} : vector<8x1024xf32> to vector<8x512xf32>
    %c0_149 = arith.constant 0 : index
    %c0_150 = arith.constant 0 : index
    %c0_151 = arith.constant 0 : index
    %555 = vector.load %arg2[%c0_149, %c0_150, %c0_151] : memref<8x8x512xbf16, #tpu.memory_space<vmem>>, vector<1x8x512xbf16>
    %556 = vector.shape_cast %555 : vector<1x8x512xbf16> to vector<8x512xbf16>
    %557 = arith.extf %556 : vector<8x512xbf16> to vector<8x512xf32>
    %558 = arith.addf %557, %554 : vector<8x512xf32>
    %559 = vector.extract_strided_slice %558 {offsets = [0, 0], sizes = [8, 128], strides = [1, 1]} : vector<8x512xf32> to vector<8x128xf32>
    %560 = arith.negf %559 : vector<8x128xf32>
    %561 = math.exp %560 : vector<8x128xf32>
    %cst_152 = arith.constant 1.000000e+00 : f32
    %562 = vector.broadcast %cst_152 : f32 to vector<8x128xf32>
    %563 = arith.addf %562, %561 : vector<8x128xf32>
    %564 = arith.divf %562, %563 : vector<8x128xf32>
    %565 = vector.extract_strided_slice %558 {offsets = [0, 128], sizes = [8, 128], strides = [1, 1]} : vector<8x512xf32> to vector<8x128xf32>
    %566 = arith.negf %565 : vector<8x128xf32>
    %567 = math.exp %566 : vector<8x128xf32>
    %cst_153 = arith.constant 1.000000e+00 : f32
    %568 = vector.broadcast %cst_153 : f32 to vector<8x128xf32>
    %569 = arith.addf %568, %567 : vector<8x128xf32>
    %570 = arith.divf %568, %569 : vector<8x128xf32>
    %571 = vector.extract_strided_slice %558 {offsets = [0, 256], sizes = [8, 128], strides = [1, 1]} : vector<8x512xf32> to vector<8x128xf32>
    %572 = math.tanh %571 : vector<8x128xf32>
    %573 = vector.extract_strided_slice %558 {offsets = [0, 384], sizes = [8, 128], strides = [1, 1]} : vector<8x512xf32> to vector<8x128xf32>
    %574 = arith.negf %573 : vector<8x128xf32>
    %575 = math.exp %574 : vector<8x128xf32>
    %cst_154 = arith.constant 1.000000e+00 : f32
    %576 = vector.broadcast %cst_154 : f32 to vector<8x128xf32>
    %577 = arith.addf %576, %575 : vector<8x128xf32>
    %578 = arith.divf %576, %577 : vector<8x128xf32>
    %579 = arith.mulf %570, %509 : vector<8x128xf32>
    %580 = arith.mulf %564, %572 : vector<8x128xf32>
    %581 = arith.addf %579, %580 : vector<8x128xf32>
    %582 = math.tanh %581 : vector<8x128xf32>
    %583 = arith.mulf %578, %582 : vector<8x128xf32>
    %584 = arith.truncf %583 : vector<8x128xf32> to vector<8x128xbf16>
    %c0_155 = arith.constant 0 : index
    %c0_156 = arith.constant 0 : index
    %c0_157 = arith.constant 0 : index
    %585 = vector.load %arg5[%c0_155, %c0_156, %c0_157] : memref<8x8x128xbf16, #tpu.memory_space<vmem>>, vector<1x8x128xbf16>
    %586 = vector.shape_cast %585 : vector<1x8x128xbf16> to vector<8x128xbf16>
    %587 = vector.shape_cast %584 : vector<8x128xbf16> to vector<1x8x128xbf16>
    tpu.vector_store %arg5[%c0_155, %c0_156, %c0_157], %587 {strides = array<i32>} : memref<8x8x128xbf16, #tpu.memory_space<vmem>>, vector<1x8x128xbf16>,
    %c0_158 = arith.constant 0 : index
    %c0_159 = arith.constant 0 : index
    %c0_160 = arith.constant 0 : index
    %588 = vector.load %arg6[%c0_158, %c0_159, %c0_160] : memref<2x8x128xf32, #tpu.memory_space<vmem>>, vector<1x8x128xf32>
    %589 = vector.shape_cast %588 : vector<1x8x128xf32> to vector<8x128xf32>
    %590 = vector.shape_cast %549 : vector<8x128xf32> to vector<1x8x128xf32>
    tpu.vector_store %arg6[%c0_158, %c0_159, %c0_160], %590 {strides = array<i32>} : memref<2x8x128xf32, #tpu.memory_space<vmem>>, vector<1x8x128xf32>,
    %c0_161 = arith.constant 0 : index
    %c0_162 = arith.constant 0 : index
    %c0_163 = arith.constant 0 : index
    %591 = vector.load %arg7[%c0_161, %c0_162, %c0_163] : memref<2x8x128xf32, #tpu.memory_space<vmem>>, vector<1x8x128xf32>
    %592 = vector.shape_cast %591 : vector<1x8x128xf32> to vector<8x128xf32>
    %593 = vector.shape_cast %547 : vector<8x128xf32> to vector<1x8x128xf32>
    tpu.vector_store %arg7[%c0_161, %c0_162, %c0_163], %593 {strides = array<i32>} : memref<2x8x128xf32, #tpu.memory_space<vmem>>, vector<1x8x128xf32>,
    %c1_164 = arith.constant 1 : index
    %c0_165 = arith.constant 0 : index
    %c0_166 = arith.constant 0 : index
    %594 = vector.load %arg6[%c1_164, %c0_165, %c0_166] : memref<2x8x128xf32, #tpu.memory_space<vmem>>, vector<1x8x128xf32>
    %595 = vector.shape_cast %594 : vector<1x8x128xf32> to vector<8x128xf32>
    %596 = vector.shape_cast %583 : vector<8x128xf32> to vector<1x8x128xf32>
    tpu.vector_store %arg6[%c1_164, %c0_165, %c0_166], %596 {strides = array<i32>} : memref<2x8x128xf32, #tpu.memory_space<vmem>>, vector<1x8x128xf32>,
    %c1_167 = arith.constant 1 : index
    %c0_168 = arith.constant 0 : index
    %c0_169 = arith.constant 0 : index
    %597 = vector.load %arg7[%c1_167, %c0_168, %c0_169] : memref<2x8x128xf32, #tpu.memory_space<vmem>>, vector<1x8x128xf32>
    %598 = vector.shape_cast %597 : vector<1x8x128xf32> to vector<8x128xf32>
    %599 = vector.shape_cast %581 : vector<8x128xf32> to vector<1x8x128xf32>
    tpu.vector_store %arg7[%c1_167, %c0_168, %c0_169], %599 {strides = array<i32>} : memref<2x8x128xf32, #tpu.memory_space<vmem>>, vector<1x8x128xf32>,
    return
  }
  func.func @transform_0(%arg0: i32) -> (i32, i32, i32) {
    %c0_i32 = arith.constant 0 : i32
    %c0_i32_0 = arith.constant 0 : i32
    %c0_i32_1 = arith.constant 0 : i32
    return %arg0, %c0_i32, %c0_i32_0 : i32, i32, i32
  }
  func.func @transform_1(%arg0: i32) -> (i32, i32, i32) {
    %c0_i32 = arith.constant 0 : i32
    %0 = arith.subi %c0_i32, %arg0 : i32
    %c0_i32_0 = arith.constant 0 : i32
    %c1_i32 = arith.constant 1 : i32
    %c0_i32_1 = arith.constant 0 : i32
    return %0, %c0_i32_0, %c1_i32 : i32, i32, i32
  }
  func.func @transform_2(%arg0: i32) -> (i32, i32) {
    %c0_i32 = arith.constant 0 : i32
    %c0_i32_0 = arith.constant 0 : i32
    %c0_i32_1 = arith.constant 0 : i32
    return %c0_i32, %c0_i32_0 : i32, i32
  }
  func.func @transform_3(%arg0: i32) -> (i32, i32, i32) {
    %c0_i32 = arith.constant 0 : i32
    %c0_i32_0 = arith.constant 0 : i32
    %c0_i32_1 = arith.constant 0 : i32
    return %arg0, %c0_i32, %c0_i32_0 : i32, i32, i32
  }
  func.func @transform_4(%arg0: i32) -> (i32, i32, i32) {
    %c0_i32 = arith.constant 0 : i32
    %0 = arith.subi %c0_i32, %arg0 : i32
    %c0_i32_0 = arith.constant 0 : i32
    %c0_i32_1 = arith.constant 0 : i32
    %c0_i32_2 = arith.constant 0 : i32
    return %0, %c0_i32_0, %c0_i32_1 : i32, i32, i32
  }
}

module attributes {stable_mosaic.version = 11 : i64} {
  func.func @_dense2_kernel(%arg0: i32, %arg1: memref<32x128xbf16, #tpu.memory_space<vmem>>, %arg2: memref<32x128xbf16, #tpu.memory_space<vmem>>, %arg3: memref<128x16xbf16, #tpu.memory_space<vmem>>, %arg4: memref<128x16xbf16, #tpu.memory_space<vmem>>, %arg5: memref<1x16xf32, #tpu.memory_space<vmem>>, %arg6: memref<32x16xf32, #tpu.memory_space<vmem>>) attributes {dimension_semantics = [#tpu.dimension_semantics<parallel>], iteration_bounds = array<i64: 2>, scalar_prefetch = 0 : i64, scratch_operands = 0 : i64, tpu.core_type = #tpu.core_type<tc>, window_params = [{transform_indices = @transform_0, window_bounds = array<i64: 32, 128>}, {transform_indices = @transform_1, window_bounds = array<i64: 32, 128>}, {pipeline_mode = #tpu.pipeline_mode<synchronous>, transform_indices = @transform_2, window_bounds = array<i64: 128, 16>}, {pipeline_mode = #tpu.pipeline_mode<synchronous>, transform_indices = @transform_3, window_bounds = array<i64: 128, 16>}, {pipeline_mode = #tpu.pipeline_mode<synchronous>, transform_indices = @transform_4, window_bounds = array<i64: 1, 16>}, {transform_indices = @transform_5, window_bounds = array<i64: 32, 16>}]} {
    %c0 = arith.constant 0 : index
    %c0_0 = arith.constant 0 : index
    %0 = vector.load %arg1[%c0, %c0_0] : memref<32x128xbf16, #tpu.memory_space<vmem>>, vector<32x128xbf16>
    %c0_1 = arith.constant 0 : index
    %c0_2 = arith.constant 0 : index
    %1 = vector.load %arg3[%c0_1, %c0_2] : memref<128x16xbf16, #tpu.memory_space<vmem>>, vector<128x16xbf16>
    %cst = arith.constant dense<0.000000e+00> : vector<32x16xf32>
    %2 = tpu.matmul %0, %1, %cst {dimension_numbers = #tpu.dot_dimension_numbers<[1], [0], [0], [1], [0, 0, 1, 1], [], []>} : vector<32x128xbf16>, vector<128x16xbf16>, vector<32x16xf32> -> vector<32x16xf32>
    %c0_3 = arith.constant 0 : index
    %c0_4 = arith.constant 0 : index
    %3 = vector.load %arg2[%c0_3, %c0_4] : memref<32x128xbf16, #tpu.memory_space<vmem>>, vector<32x128xbf16>
    %c0_5 = arith.constant 0 : index
    %c0_6 = arith.constant 0 : index
    %4 = vector.load %arg4[%c0_5, %c0_6] : memref<128x16xbf16, #tpu.memory_space<vmem>>, vector<128x16xbf16>
    %cst_7 = arith.constant dense<0.000000e+00> : vector<32x16xf32>
    %5 = tpu.matmul %3, %4, %cst_7 {dimension_numbers = #tpu.dot_dimension_numbers<[1], [0], [0], [1], [0, 0, 1, 1], [], []>} : vector<32x128xbf16>, vector<128x16xbf16>, vector<32x16xf32> -> vector<32x16xf32>
    %6 = arith.addf %2, %5 : vector<32x16xf32>
    %c0_8 = arith.constant 0 : index
    %c0_9 = arith.constant 0 : index
    %7 = vector.load %arg5[%c0_8, %c0_9] : memref<1x16xf32, #tpu.memory_space<vmem>>, vector<1x16xf32>
    %8 = vector.broadcast %7 : vector<1x16xf32> to vector<32x16xf32>
    %9 = arith.addf %6, %8 : vector<32x16xf32>
    %c0_10 = arith.constant 0 : index
    %c0_11 = arith.constant 0 : index
    %10 = vector.load %arg6[%c0_10, %c0_11] : memref<32x16xf32, #tpu.memory_space<vmem>>, vector<32x16xf32>
    tpu.vector_store %arg6[%c0_10, %c0_11], %9 {strides = array<i32>} : memref<32x16xf32, #tpu.memory_space<vmem>>, vector<32x16xf32>,
    return
  }
  func.func @transform_0(%arg0: i32) -> (i32, i32) {
    %c0_i32 = arith.constant 0 : i32
    %c0_i32_0 = arith.constant 0 : i32
    return %arg0, %c0_i32 : i32, i32
  }
  func.func @transform_1(%arg0: i32) -> (i32, i32) {
    %c0_i32 = arith.constant 0 : i32
    %c0_i32_0 = arith.constant 0 : i32
    return %arg0, %c0_i32 : i32, i32
  }
  func.func @transform_2(%arg0: i32) -> (i32, i32) {
    %c0_i32 = arith.constant 0 : i32
    %c0_i32_0 = arith.constant 0 : i32
    %c0_i32_1 = arith.constant 0 : i32
    return %c0_i32, %c0_i32_0 : i32, i32
  }
  func.func @transform_3(%arg0: i32) -> (i32, i32) {
    %c0_i32 = arith.constant 0 : i32
    %c0_i32_0 = arith.constant 0 : i32
    %c0_i32_1 = arith.constant 0 : i32
    return %c0_i32, %c0_i32_0 : i32, i32
  }
  func.func @transform_4(%arg0: i32) -> (i32, i32) {
    %c0_i32 = arith.constant 0 : i32
    %c0_i32_0 = arith.constant 0 : i32
    %c0_i32_1 = arith.constant 0 : i32
    return %c0_i32, %c0_i32_0 : i32, i32
  }
  func.func @transform_5(%arg0: i32) -> (i32, i32) {
    %c0_i32 = arith.constant 0 : i32
    %c0_i32_0 = arith.constant 0 : i32
    return %arg0, %c0_i32 : i32, i32
  }
}

</mosaic_0001>

<llo_original>
// kernel: lstm_feature_extractor.5
$region0: #{lstm_feature_extractor.5}
  #allocation0 [shape = 'u32[]', space=smem, size = 0x4, offset = 0x4, fixed_abs, tag = 'smem constant byte address 0x4 - core index']
  #allocation1 [shape = 'u32[144,128]{1,0:T(1,128)}', space=vmem, size = 0x12000, scoped, tag = 'internal scratch']
  %s0 = inlined_call_operand.vmem [shape: bf16[64,16], index: 0, kind: input, shape index: {}]
  %s1 = inlined_call_operand.vmem [shape: bf16[16,1024], index: 1, kind: input, shape index: {}]
  %s2 = inlined_call_operand.vmem [shape: f32[1,1024], index: 2, kind: input, shape index: {}]
  %s3 = inlined_call_operand.vmem [shape: bf16[64,1024], index: 3, kind: output, shape index: {}]
  %s4 = sld [smem:[#allocation0]]
  $region45: #{lstm_feature_extractor.5} parent=0
    _
  %s6 = ssub.s32 1, %s4
  %s7 = scalar_select 0, %s6, %s4
  loop: start=0, step=1, limit=4
  $region2: #{lstm_feature_extractor.5} parent=0 // loop_pre_header
    _
  $region3: #{lstm_feature_extractor.5} parent=0 // loop_header
    %s9 = sphi 0, %s13
    %p10 = scmp.ge.s32.totalorder %s9, 4
    %s19 = sphi 0, %s21
    %s22 = sphi 0, %s19
    %s23 = sphi 0, %s22
    %s39 = sphi 0, %s23
    %s43 = sphi 0, %s43
    %s45 = sphi 0, %s43
    %s46 = sphi 0, %s45
    %s60 = sphi 0, %s46
    %s64 = sphi 0, %s64
    %s66 = sphi 0, %s64
    %s67 = sphi 0, %s66
    %s81 = sphi 0, %s67
    %s87 = sphi 0, %s89
    %s90 = sphi 0, %s87
    %s91 = sphi 0, %s90
    %s107 = sphi 0, %s91
  $region4: #{lstm_feature_extractor.5} parent=0 // loop_header_branch
    %12 = sbr.rel (%p10) target = $region8
  $region5: #{lstm_feature_extractor.5} parent=0 // loop_body
    %s14 = ssub.s32 %s9, 1
    %s15 = ssub.s32 %s9, 2
    %s16 = sadd.s32 %s9, 1
    %s17 = ssub.s32 %s9, %s16
    %p18 = scmp.eq.s32.totalorder %s17, 0
    %s20 = sadd.s32 %s19, 1
    %s21 = scalar_select %p18, %s19, %s20
    %p24 = pneg %p18
    %p25 = scmp.eq.s32.totalorder %s9, 1
    %p26 = por %p24, %p25
    %p27 = scmp.ne.s32.totalorder %s19, %s22
    %p28 = scmp.eq.s32.totalorder %s9, 0
    %p29 = por %p27, %p28
    %p30 = scmp.ne.s32.totalorder %s19, %s22
    %p31 = scmp.eq.s32.totalorder %s14, 1
    %p32 = por %p30, %p31
    %p33 = scmp.ne.s32.totalorder %s22, %s23
    %p34 = scmp.eq.s32.totalorder %s14, 0
    %p35 = por %p33, %p34
    %p36 = scmp.ne.s32.totalorder %s22, %s23
    %p37 = scmp.eq.s32.totalorder %s15, 1
    %p38 = por %p36, %p37
    %p40 = scmp.ne.s32.totalorder %s23, %s39
    %p41 = scmp.eq.s32.totalorder %s15, 0
    %p42 = por %p40, %p41
    %s44 = sadd.s32 %s43, 1
    %p47 = scmp.eq.s32.totalorder %s9, 1
    %p48 = scmp.ne.s32.totalorder %s43, %s45
    %p49 = scmp.eq.s32.totalorder %s9, 0
    %p50 = por %p48, %p49
    %p51 = scmp.ne.s32.totalorder %s43, %s45
    %p52 = scmp.eq.s32.totalorder %s14, 1
    %p53 = por %p51, %p52
    %p54 = scmp.ne.s32.totalorder %s45, %s46
    %p55 = scmp.eq.s32.totalorder %s14, 0
    %p56 = por %p54, %p55
    %p57 = scmp.ne.s32.totalorder %s45, %s46
    %p58 = scmp.eq.s32.totalorder %s15, 1
    %p59 = por %p57, %p58
    %p61 = scmp.ne.s32.totalorder %s46, %s60
    %p62 = scmp.eq.s32.totalorder %s15, 0
    %p63 = por %p61, %p62
    %s65 = sadd.s32 %s64, 1
    %p68 = scmp.eq.s32.totalorder %s9, 1
    %p69 = scmp.ne.s32.totalorder %s64, %s66
    %p70 = scmp.eq.s32.totalorder %s9, 0
    %p71 = por %p69, %p70
    %p72 = scmp.ne.s32.totalorder %s64, %s66
    %p73 = scmp.eq.s32.totalorder %s14, 1
    %p74 = por %p72, %p73
    %p75 = scmp.ne.s32.totalorder %s66, %s67
    %p76 = scmp.eq.s32.totalorder %s14, 0
    %p77 = por %p75, %p76
    %p78 = scmp.ne.s32.totalorder %s66, %s67
    %p79 = scmp.eq.s32.totalorder %s15, 1
    %p80 = por %p78, %p79
    %p82 = scmp.ne.s32.totalorder %s67, %s81
    %p83 = scmp.eq.s32.totalorder %s15, 0
    %p84 = por %p82, %p83
    %s85 = ssub.s32 %s9, %s16
    %p86 = scmp.eq.s32.totalorder %s85, 0
    %s88 = sadd.s32 %s87, 1
    %s89 = scalar_select %p86, %s87, %s88
    %p92 = pneg %p86
    %p93 = scmp.eq.s32.totalorder %s9, 1
    %p94 = por %p92, %p93
    %p95 = scmp.ne.s32.totalorder %s87, %s90
    %p96 = scmp.eq.s32.totalorder %s9, 0
    %p97 = por %p95, %p96
    %p98 = scmp.ne.s32.totalorder %s87, %s90
    %p99 = scmp.eq.s32.totalorder %s14, 1
    %p100 = por %p98, %p99
    %p101 = scmp.ne.s32.totalorder %s90, %s91
    %p102 = scmp.eq.s32.totalorder %s14, 0
    %p103 = por %p101, %p102
    %p104 = scmp.ne.s32.totalorder %s90, %s91
    %p105 = scmp.eq.s32.totalorder %s15, 1
    %p106 = por %p104, %p105
    %p108 = scmp.ne.s32.totalorder %s91, %s107
    %p109 = scmp.eq.s32.totalorder %s15, 0
    %p110 = por %p108, %p109
    %p111 = scmp.le.s32.totalorder 1, %s9
    %p112 = scmp.lt.s32.totalorder %s9, 3
    %p113 = pnand %p111, %p112
    %p114 = pneg %p113
    // Predicated region
    $region9: #{lstm_feature_extractor.5} parent=5 // pred_check
      _
    $region10: #{lstm_feature_extractor.5} parent=5 // pred_check_branch
      %116 = sbr.rel (%p113) target = $region12
    $region11: #{lstm_feature_extractor.5} parent=5 // pred_region
      %s117 = ssub.s32 %s9, 1
      // Predicated region
      $region13: #{lstm_feature_extractor.5} parent=11 // pred_check
        %p118 = pneg %p56
      $region14: #{lstm_feature_extractor.5} parent=11 // pred_check_branch
        %120 = sbr.rel (%p118) target = $region16
      $region15: #{lstm_feature_extractor.5} parent=11 // pred_region
        _
      $region16: #{lstm_feature_extractor.5} parent=11 // pred_fallthru
        _
      // Predicated region
      $region17: #{lstm_feature_extractor.5} parent=11 // pred_check
        %p121 = pneg %p77
      $region18: #{lstm_feature_extractor.5} parent=11 // pred_check_branch
        %123 = sbr.rel (%p121) target = $region20
      $region19: #{lstm_feature_extractor.5} parent=11 // pred_region
        _
      $region20: #{lstm_feature_extractor.5} parent=11 // pred_fallthru
        _
    $region12: #{lstm_feature_extractor.5} parent=5 // pred_fallthru
      _
    %p124 = scmp.lt.s32.totalorder %s9, 2
    // Predicated region
    $region21: #{lstm_feature_extractor.5} parent=5 // pred_check
      %p125 = pneg %p124
    $region22: #{lstm_feature_extractor.5} parent=5 // pred_check_branch
      %127 = sbr.rel (%p125) target = $region24
    $region23: #{lstm_feature_extractor.5} parent=5 // pred_region
      // Predicated region
      $region25: #{lstm_feature_extractor.5} parent=23 // pred_check
        %p128 = pneg %p29
      $region26: #{lstm_feature_extractor.5} parent=23 // pred_check_branch
        %130 = sbr.rel (%p128) target = $region28
      $region27: #{lstm_feature_extractor.5} parent=23 // pred_region
        %s131 = smul.u32 4, %s9
        %p132 = scmp.lt.s32.totalorder %s131, 7
        %s133 = scalar_select %p132, %s131, 7
        %s134 = smul.addr %s133, 4
        %s135 = scalar_lea.vmem %s0, %s134
        %s136 = smul.u32 4, %s9
      $region28: #{lstm_feature_extractor.5} parent=23 // pred_fallthru
        _
    $region24: #{lstm_feature_extractor.5} parent=5 // pred_fallthru
      _
    %p137 = scmp.le.s32.totalorder 1, %s9
    %p138 = scmp.lt.s32.totalorder %s9, 3
    %p139 = pnand %p137, %p138
    %p140 = pneg %p139
    // Predicated region
    $region29: #{lstm_feature_extractor.5} parent=5 // pred_check
      _
    $region30: #{lstm_feature_extractor.5} parent=5 // pred_check_branch
      %142 = sbr.rel (%p139) target = $region32
    $region31: #{lstm_feature_extractor.5} parent=5 // pred_region
      %s143 = ssub.s32 %s9, 1
      %s144 = smul.u32 4, %s14
      %p145 = scmp.lt.s32.totalorder %s144, 7
      %s146 = scalar_select %p145, %s144, 7
      %s147 = smul.addr %s146, 4
      %s148 = scalar_lea.vmem %s0, %s147
      %p149 = pneg %p35
      %p150 = pneg %p32
      %p151 = pneg %p56
      %p152 = pneg %p53
      %p153 = pneg %p77
      %p154 = pneg %p74
      %p155 = pneg %p103
      %p156 = pneg %p100
      %s157 = smul.u32 4, %s14
      %p158 = scmp.lt.s32.totalorder %s157, 7
      %s159 = scalar_select %p158, %s157, 7
      %s160 = smul.addr %s159, 8
      %s161 = smul.addr %s160, 4
      %s162 = scalar_lea.vmem %s3, %s161
      %s163 = smul.u32 4, %s14
      %p164 = scmp.lt.s32.totalorder %s163, 7
      %s165 = scalar_select %p164, %s163, 7
      %s166 = smul.addr %s165, 4
      %s167 = scalar_lea.vmem %s0, %s166
      %s168 = smul.u32 4, %s14
      %s169 = smul.u32 4, %s14
      %p170 = scmp.lt.s32.totalorder %s169, 7
      %s171 = scalar_select %p170, %s169, 7
      %s172 = smul.addr %s171, 8
      %s173 = smul.addr %s172, 4
      %s174 = scalar_lea.vmem %s3, %s173
      %s175 = smul.u32 4, %s14
      %v177 = vld [vmem:[%s167] sm:$0xf]
      %v178 = vld [vmem:[%s167 + $0x4] sm:$0xf]
      %v179 = vld [vmem:[%s167 + $0x8] sm:$0xf]
      %v180 = vld [vmem:[%s167 + $0xc] sm:$0xf]
      %v181 = vld [vmem:[%s1] sm:$0xff]
      %v182 = vld [vmem:[%s1 + $0x8] sm:$0xff]
      %v183 = vld [vmem:[%s1 + $0x10] sm:$0xff]
      %v184 = vld [vmem:[%s1 + $0x18] sm:$0xff]
      %v185 = vld [vmem:[%s1 + $0x20] sm:$0xff]
      %v186 = vld [vmem:[%s1 + $0x28] sm:$0xff]
      %v187 = vld [vmem:[%s1 + $0x30] sm:$0xff]
      %v188 = vld [vmem:[%s1 + $0x38] sm:$0xff]
      %v189 = vld [vmem:[%s2] sm:$0xff]
      %v191 = vlaneseq
      %v192 = vshrl.u32 %v191, 7
      %v193 = vsub.s32 0, %v192
      %v194 = vrot.slane %v189, %v193
      %v195 = vlaneseq
      %v196 = vshrl.u32 %v195, 7
      %v197 = vsub.s32 1, %v196
      %v198 = vrot.slane %v189, %v197
      %v199 = vlaneseq
      %v200 = vshrl.u32 %v199, 7
      %v201 = vsub.s32 2, %v200
      %v202 = vrot.slane %v189, %v201
      %v203 = vlaneseq
      %v204 = vshrl.u32 %v203, 7
      %v205 = vsub.s32 3, %v204
      %v206 = vrot.slane %v189, %v205
      %v207 = vlaneseq
      %v208 = vshrl.u32 %v207, 7
      %v209 = vsub.s32 4, %v208
      %v210 = vrot.slane %v189, %v209
      %v211 = vlaneseq
      %v212 = vshrl.u32 %v211, 7
      %v213 = vsub.s32 5, %v212
      %v214 = vrot.slane %v189, %v213
      %v215 = vlaneseq
      %v216 = vshrl.u32 %v215, 7
      %v217 = vsub.s32 6, %v216
      %v218 = vrot.slane %v189, %v217
      %v219 = vlaneseq
      %v220 = vshrl.u32 %v219, 7
      %v221 = vsub.s32 7, %v220
      %v222 = vrot.slane %v189, %v221
      %v235 = vunpack.c.l.b16 %v177
      %v236 = vunpack.c.l.b16 %v178
      %v237 = vunpack.c.l.b16 %v179
      %v238 = vunpack.c.l.b16 %v180
      %v239 = vpack.c.b16 %v236, %v235
      %v240 = vpack.c.b16 %v238, %v237
      %v249 = vunpack.c.l.b16 %v181
      %v250 = vunpack.c.h.b16 %v181
      %v251 = vunpack.c.l.b16 %v182
      %v252 = vunpack.c.h.b16 %v182
      %v253 = vunpack.c.l.b16 %v183
      %v254 = vunpack.c.h.b16 %v183
      %v255 = vunpack.c.l.b16 %v184
      %v256 = vunpack.c.h.b16 %v184
      %v257 = vunpack.c.l.b16 %v185
      %v258 = vunpack.c.h.b16 %v185
      %v259 = vunpack.c.l.b16 %v186
      %v260 = vunpack.c.h.b16 %v186
      %v261 = vunpack.c.l.b16 %v187
      %v262 = vunpack.c.h.b16 %v187
      %v263 = vunpack.c.l.b16 %v188
      %v264 = vunpack.c.h.b16 %v188
      %v265 = vpack.c.b16 %v257, %v249
      %v266 = vpack.c.b16 %v258, %v250
      %v267 = vpack.c.b16 %v259, %v251
      %v268 = vpack.c.b16 %v260, %v252
      %v269 = vpack.c.b16 %v261, %v253
      %v270 = vpack.c.b16 %v262, %v254
      %v271 = vpack.c.b16 %v263, %v255
      %v272 = vpack.c.b16 %v264, %v256
      %vm281 = vcmask 130048
      %v283 = vsel %vm281, %v239, 0
      %v286 = vsel %vm281, %v240, 0
      %288 = vmatprep.subr.bf16.mxu0 %v266
      %289 = vmatpush1.bf16.msra.mxu0 %v265
      %290 = vmatprep.subr.bf16.mxu0 0
      %291 = vmatpush1.bf16.msra.mxu0 0
      %292 = vmatprep.subr.bf16.mxu0 0
      %293 = vmatpush1.bf16.msra.mxu0 0
      %294 = vmatprep.subr.bf16.mxu0 0
      %295 = vmatpush1.bf16.msra.mxu0 0
      %296 = vmatprep.subr.bf16.mxu0 0
      %297 = vmatpush1.bf16.msra.mxu0 0
      %298 = vmatprep.subr.bf16.mxu0 0
      %299 = vmatpush1.bf16.msra.mxu0 0
      %300 = vmatprep.subr.bf16.mxu0 0
      %301 = vmatpush1.bf16.msra.mxu0 0
      %302 = vmatprep.subr.bf16.mxu0 0
      %303 = vmatpush1.bf16.msra.mxu0 0
      %304 = vmatprep.subr.bf16.mxu0 0
      %305 = vmatpush1.bf16.msra.mxu0 0
      %306 = vmatprep.subr.bf16.mxu0 0
      %307 = vmatpush1.bf16.msra.mxu0 0
      %308 = vmatprep.subr.bf16.mxu0 0
      %309 = vmatpush1.bf16.msra.mxu0 0
      %310 = vmatprep.subr.bf16.mxu0 0
      %311 = vmatpush1.bf16.msra.mxu0 0
      %312 = vmatprep.subr.bf16.mxu0 0
      %313 = vmatpush1.bf16.msra.mxu0 0
      %314 = vmatprep.subr.bf16.mxu0 0
      %315 = vmatpush1.bf16.msra.mxu0 0
      %316 = vmatprep.subr.bf16.mxu0 0
      %317 = vmatpush1.bf16.msra.mxu0 0
      %318 = vmatprep.subr.bf16.mxu0 0
      %319 = vmatpush1.bf16.msra.mxu0 0
      %320 = vmatprep.mubr.bf16.mxu0 0
      %321 = vmatmul.mubr.bf16.gmra.mrb[0].mxu0 %v283
      %v322 = vpop.f32.mrb[0].mxu0
      %v323 = vadd.f32 %v194, %v322
      %v324 = vpop.f32.mrb[0].mxu0
      %v325 = vadd.f32 %v198, %v324
      %v326 = vpop.f32.mrb[0].mxu0
      %v327 = vadd.f32 %v194, %v326
      %v328 = vpop.f32.mrb[0].mxu0
      %v329 = vadd.f32 %v198, %v328
      %330 = vmatprep.mubr.bf16.mxu0 0
      %331 = vmatmul.mubr.bf16.gmra.mrb[0].mxu0 %v286
      %v332 = vpop.f32.mrb[0].mxu0
      %v333 = vadd.f32 %v194, %v332
      %v334 = vpop.f32.mrb[0].mxu0
      %v335 = vadd.f32 %v198, %v334
      %v336 = vpop.f32.mrb[0].mxu0
      %v337 = vadd.f32 %v194, %v336
      %v338 = vpop.f32.mrb[0].mxu0
      %v339 = vadd.f32 %v198, %v338
      %340 = vdwg.mxu0
      %341 = vmatprep.subr.bf16.mxu0 %v268
      %342 = vmatpush1.bf16.msra.mxu0 %v267
      %343 = vmatprep.subr.bf16.mxu0 0
      %344 = vmatpush1.bf16.msra.mxu0 0
      %345 = vmatprep.subr.bf16.mxu0 0
      %346 = vmatpush1.bf16.msra.mxu0 0
      %347 = vmatprep.subr.bf16.mxu0 0
      %348 = vmatpush1.bf16.msra.mxu0 0
      %349 = vmatprep.subr.bf16.mxu0 0
      %350 = vmatpush1.bf16.msra.mxu0 0
      %351 = vmatprep.subr.bf16.mxu0 0
      %352 = vmatpush1.bf16.msra.mxu0 0
      %353 = vmatprep.subr.bf16.mxu0 0
      %354 = vmatpush1.bf16.msra.mxu0 0
      %355 = vmatprep.subr.bf16.mxu0 0
      %356 = vmatpush1.bf16.msra.mxu0 0
      %357 = vmatprep.subr.bf16.mxu0 0
      %358 = vmatpush1.bf16.msra.mxu0 0
      %359 = vmatprep.subr.bf16.mxu0 0
      %360 = vmatpush1.bf16.msra.mxu0 0
      %361 = vmatprep.subr.bf16.mxu0 0
      %362 = vmatpush1.bf16.msra.mxu0 0
      %363 = vmatprep.subr.bf16.mxu0 0
      %364 = vmatpush1.bf16.msra.mxu0 0
      %365 = vmatprep.subr.bf16.mxu0 0
      %366 = vmatpush1.bf16.msra.mxu0 0
      %367 = vmatprep.subr.bf16.mxu0 0
      %368 = vmatpush1.bf16.msra.mxu0 0
      %369 = vmatprep.subr.bf16.mxu0 0
      %370 = vmatpush1.bf16.msra.mxu0 0
      %371 = vmatprep.subr.bf16.mxu0 0
      %372 = vmatpush1.bf16.msra.mxu0 0
      %373 = vmatprep.mubr.bf16.mxu0 0
      %374 = vmatmul.mubr.bf16.gmra.mrb[0].mxu0 %v283
      %v375 = vpop.f32.mrb[0].mxu0
      %v376 = vadd.f32 %v202, %v375
      %v377 = vpop.f32.mrb[0].mxu0
      %v378 = vadd.f32 %v206, %v377
      %v379 = vpop.f32.mrb[0].mxu0
      %v380 = vadd.f32 %v202, %v379
      %v381 = vpop.f32.mrb[0].mxu0
      %v382 = vadd.f32 %v206, %v381
      %383 = vmatprep.mubr.bf16.mxu0 0
      %384 = vmatmul.mubr.bf16.gmra.mrb[0].mxu0 %v286
      %v385 = vpop.f32.mrb[0].mxu0
      %v386 = vadd.f32 %v202, %v385
      %v387 = vpop.f32.mrb[0].mxu0
      %v388 = vadd.f32 %v206, %v387
      %v389 = vpop.f32.mrb[0].mxu0
      %v390 = vadd.f32 %v202, %v389
      %v391 = vpop.f32.mrb[0].mxu0
      %v392 = vadd.f32 %v206, %v391
      %393 = vdwg.mxu0
      %394 = vmatprep.subr.bf16.mxu0 %v270
      %395 = vmatpush1.bf16.msra.mxu0 %v269
      %396 = vmatprep.subr.bf16.mxu0 0
      %397 = vmatpush1.bf16.msra.mxu0 0
      %398 = vmatprep.subr.bf16.mxu0 0
      %399 = vmatpush1.bf16.msra.mxu0 0
      %400 = vmatprep.subr.bf16.mxu0 0
      %401 = vmatpush1.bf16.msra.mxu0 0
      %402 = vmatprep.subr.bf16.mxu0 0
      %403 = vmatpush1.bf16.msra.mxu0 0
      %404 = vmatprep.subr.bf16.mxu0 0
      %405 = vmatpush1.bf16.msra.mxu0 0
      %406 = vmatprep.subr.bf16.mxu0 0
      %407 = vmatpush1.bf16.msra.mxu0 0
      %408 = vmatprep.subr.bf16.mxu0 0
      %409 = vmatpush1.bf16.msra.mxu0 0
      %410 = vmatprep.subr.bf16.mxu0 0
      %411 = vmatpush1.bf16.msra.mxu0 0
      %412 = vmatprep.subr.bf16.mxu0 0
      %413 = vmatpush1.bf16.msra.mxu0 0
      %414 = vmatprep.subr.bf16.mxu0 0
      %415 = vmatpush1.bf16.msra.mxu0 0
      %416 = vmatprep.subr.bf16.mxu0 0
      %417 = vmatpush1.bf16.msra.mxu0 0
      %418 = vmatprep.subr.bf16.mxu0 0
      %419 = vmatpush1.bf16.msra.mxu0 0
      %420 = vmatprep.subr.bf16.mxu0 0
      %421 = vmatpush1.bf16.msra.mxu0 0
      %422 = vmatprep.subr.bf16.mxu0 0
      %423 = vmatpush1.bf16.msra.mxu0 0
      %424 = vmatprep.subr.bf16.mxu0 0
      %425 = vmatpush1.bf16.msra.mxu0 0
      %426 = vmatprep.mubr.bf16.mxu0 0
      %427 = vmatmul.mubr.bf16.gmra.mrb[0].mxu0 %v283
      %v428 = vpop.f32.mrb[0].mxu0
      %v429 = vadd.f32 %v210, %v428
      %v430 = vpop.f32.mrb[0].mxu0
      %v431 = vadd.f32 %v214, %v430
      %v432 = vpop.f32.mrb[0].mxu0
      %v433 = vadd.f32 %v210, %v432
      %v434 = vpop.f32.mrb[0].mxu0
      %v435 = vadd.f32 %v214, %v434
      %436 = vmatprep.mubr.bf16.mxu0 0
      %437 = vmatmul.mubr.bf16.gmra.mrb[0].mxu0 %v286
      %v438 = vpop.f32.mrb[0].mxu0
      %v439 = vadd.f32 %v210, %v438
      %v440 = vpop.f32.mrb[0].mxu0
      %v441 = vadd.f32 %v214, %v440
      %v442 = vpop.f32.mrb[0].mxu0
      %v443 = vadd.f32 %v210, %v442
      %v444 = vpop.f32.mrb[0].mxu0
      %v445 = vadd.f32 %v214, %v444
      %446 = vdwg.mxu0
      %447 = vmatprep.subr.bf16.mxu0 %v272
      %448 = vmatpush1.bf16.msra.mxu0 %v271
      %449 = vmatprep.subr.bf16.mxu0 0
      %450 = vmatpush1.bf16.msra.mxu0 0
      %451 = vmatprep.subr.bf16.mxu0 0
      %452 = vmatpush1.bf16.msra.mxu0 0
      %453 = vmatprep.subr.bf16.mxu0 0
      %454 = vmatpush1.bf16.msra.mxu0 0
      %455 = vmatprep.subr.bf16.mxu0 0
      %456 = vmatpush1.bf16.msra.mxu0 0
      %457 = vmatprep.subr.bf16.mxu0 0
      %458 = vmatpush1.bf16.msra.mxu0 0
      %459 = vmatprep.subr.bf16.mxu0 0
      %460 = vmatpush1.bf16.msra.mxu0 0
      %461 = vmatprep.subr.bf16.mxu0 0
      %462 = vmatpush1.bf16.msra.mxu0 0
      %463 = vmatprep.subr.bf16.mxu0 0
      %464 = vmatpush1.bf16.msra.mxu0 0
      %465 = vmatprep.subr.bf16.mxu0 0
      %466 = vmatpush1.bf16.msra.mxu0 0
      %467 = vmatprep.subr.bf16.mxu0 0
      %468 = vmatpush1.bf16.msra.mxu0 0
      %469 = vmatprep.subr.bf16.mxu0 0
      %470 = vmatpush1.bf16.msra.mxu0 0
      %471 = vmatprep.subr.bf16.mxu0 0
      %472 = vmatpush1.bf16.msra.mxu0 0
      %473 = vmatprep.subr.bf16.mxu0 0
      %474 = vmatpush1.bf16.msra.mxu0 0
      %475 = vmatprep.subr.bf16.mxu0 0
      %476 = vmatpush1.bf16.msra.mxu0 0
      %477 = vmatprep.subr.bf16.mxu0 0
      %478 = vmatpush1.bf16.msra.mxu0 0
      %479 = vmatprep.mubr.bf16.mxu0 0
      %480 = vmatmul.mubr.bf16.gmra.mrb[0].mxu0 %v283
      %v481 = vpop.f32.mrb[0].mxu0
      %v482 = vadd.f32 %v218, %v481
      %v483 = vpop.f32.mrb[0].mxu0
      %v484 = vadd.f32 %v222, %v483
      %v485 = vpop.f32.mrb[0].mxu0
      %v486 = vadd.f32 %v218, %v485
      %v487 = vpop.f32.mrb[0].mxu0
      %v488 = vadd.f32 %v222, %v487
      %489 = vmatprep.mubr.bf16.mxu0 0
      %490 = vmatmul.mubr.bf16.gmra.mrb[0].mxu0 %v286
      %v491 = vpop.f32.mrb[0].mxu0
      %v492 = vadd.f32 %v218, %v491
      %v493 = vpop.f32.mrb[0].mxu0
      %v494 = vadd.f32 %v222, %v493
      %v495 = vpop.f32.mrb[0].mxu0
      %v496 = vadd.f32 %v218, %v495
      %v497 = vpop.f32.mrb[0].mxu0
      %v498 = vadd.f32 %v222, %v497
      %499 = vdwg.mxu0
      %v500 = vpack.c.bf16 %v327, %v323
      %v501 = vpack.c.bf16 %v329, %v325
      %v502 = vpack.c.bf16 %v380, %v376
      %v503 = vpack.c.bf16 %v382, %v378
      %v504 = vpack.c.bf16 %v433, %v429
      %v505 = vpack.c.bf16 %v435, %v431
      %v506 = vpack.c.bf16 %v486, %v482
      %v507 = vpack.c.bf16 %v488, %v484
      %v508 = vpack.c.bf16 %v337, %v333
      %v509 = vpack.c.bf16 %v339, %v335
      %v510 = vpack.c.bf16 %v390, %v386
      %v511 = vpack.c.bf16 %v392, %v388
      %v512 = vpack.c.bf16 %v443, %v439
      %v513 = vpack.c.bf16 %v445, %v441
      %v514 = vpack.c.bf16 %v496, %v492
      %v515 = vpack.c.bf16 %v498, %v494
      %v532 = vunpack.c.l.b16 %v500
      %v533 = vunpack.c.l.b16 %v501
      %v534 = vunpack.c.l.b16 %v502
      %v535 = vunpack.c.l.b16 %v503
      %v536 = vunpack.c.l.b16 %v504
      %v537 = vunpack.c.l.b16 %v505
      %v538 = vunpack.c.l.b16 %v506
      %v539 = vunpack.c.l.b16 %v507
      %v540 = vunpack.c.h.b16 %v500
      %v541 = vunpack.c.h.b16 %v501
      %v542 = vunpack.c.h.b16 %v502
      %v543 = vunpack.c.h.b16 %v503
      %v544 = vunpack.c.h.b16 %v504
      %v545 = vunpack.c.h.b16 %v505
      %v546 = vunpack.c.h.b16 %v506
      %v547 = vunpack.c.h.b16 %v507
      %v548 = vunpack.c.l.b16 %v508
      %v549 = vunpack.c.l.b16 %v509
      %v550 = vunpack.c.l.b16 %v510
      %v551 = vunpack.c.l.b16 %v511
      %v552 = vunpack.c.l.b16 %v512
      %v553 = vunpack.c.l.b16 %v513
      %v554 = vunpack.c.l.b16 %v514
      %v555 = vunpack.c.l.b16 %v515
      %v556 = vunpack.c.h.b16 %v508
      %v557 = vunpack.c.h.b16 %v509
      %v558 = vunpack.c.h.b16 %v510
      %v559 = vunpack.c.h.b16 %v511
      %v560 = vunpack.c.h.b16 %v512
      %v561 = vunpack.c.h.b16 %v513
      %v562 = vunpack.c.h.b16 %v514
      %v563 = vunpack.c.h.b16 %v515
      %v564 = vpack.c.b16 %v533, %v532
      %v565 = vpack.c.b16 %v535, %v534
      %v566 = vpack.c.b16 %v537, %v536
      %v567 = vpack.c.b16 %v539, %v538
      %v568 = vpack.c.b16 %v541, %v540
      %v569 = vpack.c.b16 %v543, %v542
      %v570 = vpack.c.b16 %v545, %v544
      %v571 = vpack.c.b16 %v547, %v546
      %v572 = vpack.c.b16 %v549, %v548
      %v573 = vpack.c.b16 %v551, %v550
      %v574 = vpack.c.b16 %v553, %v552
      %v575 = vpack.c.b16 %v555, %v554
      %v576 = vpack.c.b16 %v557, %v556
      %v577 = vpack.c.b16 %v559, %v558
      %v578 = vpack.c.b16 %v561, %v560
      %v579 = vpack.c.b16 %v563, %v562
      %596 = vst [vmem:[%s174] sm:$0xff] %v564
      %597 = vst [vmem:[%s174 + $0x8] sm:$0xff] %v565
      %598 = vst [vmem:[%s174 + $0x10] sm:$0xff] %v566
      %599 = vst [vmem:[%s174 + $0x18] sm:$0xff] %v567
      %600 = vst [vmem:[%s174 + $0x20] sm:$0xff] %v568
      %601 = vst [vmem:[%s174 + $0x28] sm:$0xff] %v569
      %602 = vst [vmem:[%s174 + $0x30] sm:$0xff] %v570
      %603 = vst [vmem:[%s174 + $0x38] sm:$0xff] %v571
      %604 = vst [vmem:[%s174 + $0x40] sm:$0xff] %v572
      %605 = vst [vmem:[%s174 + $0x48] sm:$0xff] %v573
      %606 = vst [vmem:[%s174 + $0x50] sm:$0xff] %v574
      %607 = vst [vmem:[%s174 + $0x58] sm:$0xff] %v575
      %608 = vst [vmem:[%s174 + $0x60] sm:$0xff] %v576
      %609 = vst [vmem:[%s174 + $0x68] sm:$0xff] %v577
      %610 = vst [vmem:[%s174 + $0x70] sm:$0xff] %v578
      %611 = vst [vmem:[%s174 + $0x78] sm:$0xff] %v579
      %s612 = smul.u32 4, %s14
      %p613 = scmp.lt.s32.totalorder %s612, 7
      %s614 = scalar_select %p613, %s612, 7
      %s615 = smul.addr %s614, 8
      %s616 = smul.addr %s615, 4
      %s617 = scalar_lea.vmem %s3, %s616
      // Predicated region
      $region33: #{lstm_feature_extractor.5} parent=31 // pred_check
        %p618 = pneg %p100
      $region34: #{lstm_feature_extractor.5} parent=31 // pred_check_branch
        %620 = sbr.rel (%p618) target = $region36
      $region35: #{lstm_feature_extractor.5} parent=31 // pred_region
        %s621 = smul.u32 4, %s14
      $region36: #{lstm_feature_extractor.5} parent=31 // pred_fallthru
        _
    $region32: #{lstm_feature_extractor.5} parent=5 // pred_fallthru
      _
    %p622 = scmp.le.s32.totalorder 2, %s9
    // Predicated region
    $region37: #{lstm_feature_extractor.5} parent=5 // pred_check
      %p623 = pneg %p622
    $region38: #{lstm_feature_extractor.5} parent=5 // pred_check_branch
      %625 = sbr.rel (%p623) target = $region40
    $region39: #{lstm_feature_extractor.5} parent=5 // pred_region
      %s626 = ssub.s32 %s9, 2
      // Predicated region
      $region41: #{lstm_feature_extractor.5} parent=39 // pred_check
        %p627 = pneg %p106
      $region42: #{lstm_feature_extractor.5} parent=39 // pred_check_branch
        %629 = sbr.rel (%p627) target = $region44
      $region43: #{lstm_feature_extractor.5} parent=39 // pred_region
        %s630 = smul.u32 4, %s15
        %p631 = scmp.lt.s32.totalorder %s630, 7
        %s632 = scalar_select %p631, %s630, 7
        %s633 = smul.addr %s632, 8
        %s634 = smul.addr %s633, 4
        %s635 = scalar_lea.vmem %s3, %s634
      $region44: #{lstm_feature_extractor.5} parent=39 // pred_fallthru
        _
    $region40: #{lstm_feature_extractor.5} parent=5 // pred_fallthru
      _
  $region6: #{lstm_feature_extractor.5} parent=0 // loop_footer
    %s13 = sadd.s32 1, %s9
  $region7: #{lstm_feature_extractor.5} parent=0 // loop_footer_branch
    %8 = sbr.rel target = $region3
  $region8: #{lstm_feature_extractor.5} parent=0 // loop_exit
    _

// kernel: lstm_feature_extractor.7
$region0: #{lstm_feature_extractor.7}
  #allocation0 [shape = 'u32[]', space=smem, size = 0x4, offset = 0x4, fixed_abs, tag = 'smem constant byte address 0x4 - core index']
  #allocation1 [shape = 'u32[144,128]{1,0:T(1,128)}', space=vmem, size = 0x12000, scoped, tag = 'internal scratch']
  %s0 = inlined_call_operand.vmem [shape: bf16[64,128], index: 0, kind: input, shape index: {}]
  %s1 = inlined_call_operand.vmem [shape: bf16[64,128], index: 1, kind: input, shape index: {}]
  %s2 = inlined_call_operand.vmem [shape: bf16[128,1024], index: 2, kind: input, shape index: {}]
  %s3 = inlined_call_operand.vmem [shape: bf16[128,1024], index: 3, kind: input, shape index: {}]
  %s4 = inlined_call_operand.vmem [shape: f32[1,1024], index: 4, kind: input, shape index: {}]
  %s5 = inlined_call_operand.vmem [shape: bf16[64,1024], index: 5, kind: output, shape index: {}]
  %s6 = sld [smem:[#allocation0]]
  $region53: #{lstm_feature_extractor.7} parent=0
    _
  %s8 = ssub.s32 1, %s6
  %s9 = scalar_select 0, %s8, %s6
  loop: start=0, step=1, limit=4
  $region2: #{lstm_feature_extractor.7} parent=0 // loop_pre_header
    _
  $region3: #{lstm_feature_extractor.7} parent=0 // loop_header
    %s11 = sphi 0, %s15
    %p12 = scmp.ge.s32.totalorder %s11, 4
    %s21 = sphi 0, %s23
    %s24 = sphi 0, %s21
    %s25 = sphi 0, %s24
    %s41 = sphi 0, %s25
    %s47 = sphi 0, %s49
    %s50 = sphi 0, %s47
    %s51 = sphi 0, %s50
    %s67 = sphi 0, %s51
    %s71 = sphi 0, %s71
    %s73 = sphi 0, %s71
    %s74 = sphi 0, %s73
    %s88 = sphi 0, %s74
    %s92 = sphi 0, %s92
    %s94 = sphi 0, %s92
    %s95 = sphi 0, %s94
    %s109 = sphi 0, %s95
    %s113 = sphi 0, %s113
    %s115 = sphi 0, %s113
    %s116 = sphi 0, %s115
    %s130 = sphi 0, %s116
    %s136 = sphi 0, %s138
    %s139 = sphi 0, %s136
    %s140 = sphi 0, %s139
    %s156 = sphi 0, %s140
  $region4: #{lstm_feature_extractor.7} parent=0 // loop_header_branch
    %14 = sbr.rel (%p12) target = $region8
  $region5: #{lstm_feature_extractor.7} parent=0 // loop_body
    %s16 = ssub.s32 %s11, 1
    %s17 = ssub.s32 %s11, 2
    %s18 = sadd.s32 %s11, 1
    %s19 = ssub.s32 %s11, %s18
    %p20 = scmp.eq.s32.totalorder %s19, 0
    %s22 = sadd.s32 %s21, 1
    %s23 = scalar_select %p20, %s21, %s22
    %p26 = pneg %p20
    %p27 = scmp.eq.s32.totalorder %s11, 1
    %p28 = por %p26, %p27
    %p29 = scmp.ne.s32.totalorder %s21, %s24
    %p30 = scmp.eq.s32.totalorder %s11, 0
    %p31 = por %p29, %p30
    %p32 = scmp.ne.s32.totalorder %s21, %s24
    %p33 = scmp.eq.s32.totalorder %s16, 1
    %p34 = por %p32, %p33
    %p35 = scmp.ne.s32.totalorder %s24, %s25
    %p36 = scmp.eq.s32.totalorder %s16, 0
    %p37 = por %p35, %p36
    %p38 = scmp.ne.s32.totalorder %s24, %s25
    %p39 = scmp.eq.s32.totalorder %s17, 1
    %p40 = por %p38, %p39
    %p42 = scmp.ne.s32.totalorder %s25, %s41
    %p43 = scmp.eq.s32.totalorder %s17, 0
    %p44 = por %p42, %p43
    %s45 = ssub.s32 %s11, %s18
    %p46 = scmp.eq.s32.totalorder %s45, 0
    %s48 = sadd.s32 %s47, 1
    %s49 = scalar_select %p46, %s47, %s48
    %p52 = pneg %p46
    %p53 = scmp.eq.s32.totalorder %s11, 1
    %p54 = por %p52, %p53
    %p55 = scmp.ne.s32.totalorder %s47, %s50
    %p56 = scmp.eq.s32.totalorder %s11, 0
    %p57 = por %p55, %p56
    %p58 = scmp.ne.s32.totalorder %s47, %s50
    %p59 = scmp.eq.s32.totalorder %s16, 1
    %p60 = por %p58, %p59
    %p61 = scmp.ne.s32.totalorder %s50, %s51
    %p62 = scmp.eq.s32.totalorder %s16, 0
    %p63 = por %p61, %p62
    %p64 = scmp.ne.s32.totalorder %s50, %s51
    %p65 = scmp.eq.s32.totalorder %s17, 1
    %p66 = por %p64, %p65
    %p68 = scmp.ne.s32.totalorder %s51, %s67
    %p69 = scmp.eq.s32.totalorder %s17, 0
    %p70 = por %p68, %p69
    %s72 = sadd.s32 %s71, 1
    %p75 = scmp.eq.s32.totalorder %s11, 1
    %p76 = scmp.ne.s32.totalorder %s71, %s73
    %p77 = scmp.eq.s32.totalorder %s11, 0
    %p78 = por %p76, %p77
    %p79 = scmp.ne.s32.totalorder %s71, %s73
    %p80 = scmp.eq.s32.totalorder %s16, 1
    %p81 = por %p79, %p80
    %p82 = scmp.ne.s32.totalorder %s73, %s74
    %p83 = scmp.eq.s32.totalorder %s16, 0
    %p84 = por %p82, %p83
    %p85 = scmp.ne.s32.totalorder %s73, %s74
    %p86 = scmp.eq.s32.totalorder %s17, 1
    %p87 = por %p85, %p86
    %p89 = scmp.ne.s32.totalorder %s74, %s88
    %p90 = scmp.eq.s32.totalorder %s17, 0
    %p91 = por %p89, %p90
    %s93 = sadd.s32 %s92, 1
    %p96 = scmp.eq.s32.totalorder %s11, 1
    %p97 = scmp.ne.s32.totalorder %s92, %s94
    %p98 = scmp.eq.s32.totalorder %s11, 0
    %p99 = por %p97, %p98
    %p100 = scmp.ne.s32.totalorder %s92, %s94
    %p101 = scmp.eq.s32.totalorder %s16, 1
    %p102 = por %p100, %p101
    %p103 = scmp.ne.s32.totalorder %s94, %s95
    %p104 = scmp.eq.s32.totalorder %s16, 0
    %p105 = por %p103, %p104
    %p106 = scmp.ne.s32.totalorder %s94, %s95
    %p107 = scmp.eq.s32.totalorder %s17, 1
    %p108 = por %p106, %p107
    %p110 = scmp.ne.s32.totalorder %s95, %s109
    %p111 = scmp.eq.s32.totalorder %s17, 0
    %p112 = por %p110, %p111
    %s114 = sadd.s32 %s113, 1
    %p117 = scmp.eq.s32.totalorder %s11, 1
    %p118 = scmp.ne.s32.totalorder %s113, %s115
    %p119 = scmp.eq.s32.totalorder %s11, 0
    %p120 = por %p118, %p119
    %p121 = scmp.ne.s32.totalorder %s113, %s115
    %p122 = scmp.eq.s32.totalorder %s16, 1
    %p123 = por %p121, %p122
    %p124 = scmp.ne.s32.totalorder %s115, %s116
    %p125 = scmp.eq.s32.totalorder %s16, 0
    %p126 = por %p124, %p125
    %p127 = scmp.ne.s32.totalorder %s115, %s116
    %p128 = scmp.eq.s32.totalorder %s17, 1
    %p129 = por %p127, %p128
    %p131 = scmp.ne.s32.totalorder %s116, %s130
    %p132 = scmp.eq.s32.totalorder %s17, 0
    %p133 = por %p131, %p132
    %s134 = ssub.s32 %s11, %s18
    %p135 = scmp.eq.s32.totalorder %s134, 0
    %s137 = sadd.s32 %s136, 1
    %s138 = scalar_select %p135, %s136, %s137
    %p141 = pneg %p135
    %p142 = scmp.eq.s32.totalorder %s11, 1
    %p143 = por %p141, %p142
    %p144 = scmp.ne.s32.totalorder %s136, %s139
    %p145 = scmp.eq.s32.totalorder %s11, 0
    %p146 = por %p144, %p145
    %p147 = scmp.ne.s32.totalorder %s136, %s139
    %p148 = scmp.eq.s32.totalorder %s16, 1
    %p149 = por %p147, %p148
    %p150 = scmp.ne.s32.totalorder %s139, %s140
    %p151 = scmp.eq.s32.totalorder %s16, 0
    %p152 = por %p150, %p151
    %p153 = scmp.ne.s32.totalorder %s139, %s140
    %p154 = scmp.eq.s32.totalorder %s17, 1
    %p155 = por %p153, %p154
    %p157 = scmp.ne.s32.totalorder %s140, %s156
    %p158 = scmp.eq.s32.totalorder %s17, 0
    %p159 = por %p157, %p158
    %p160 = scmp.le.s32.totalorder 1, %s11
    %p161 = scmp.lt.s32.totalorder %s11, 3
    %p162 = pnand %p160, %p161
    %p163 = pneg %p162
    // Predicated region
    $region9: #{lstm_feature_extractor.7} parent=5 // pred_check
      _
    $region10: #{lstm_feature_extractor.7} parent=5 // pred_check_branch
      %165 = sbr.rel (%p162) target = $region12
    $region11: #{lstm_feature_extractor.7} parent=5 // pred_region
      %s166 = ssub.s32 %s11, 1
      // Predicated region
      $region13: #{lstm_feature_extractor.7} parent=11 // pred_check
        %p167 = pneg %p84
      $region14: #{lstm_feature_extractor.7} parent=11 // pred_check_branch
        %169 = sbr.rel (%p167) target = $region16
      $region15: #{lstm_feature_extractor.7} parent=11 // pred_region
        _
      $region16: #{lstm_feature_extractor.7} parent=11 // pred_fallthru
        _
      // Predicated region
      $region17: #{lstm_feature_extractor.7} parent=11 // pred_check
        %p170 = pneg %p105
      $region18: #{lstm_feature_extractor.7} parent=11 // pred_check_branch
        %172 = sbr.rel (%p170) target = $region20
      $region19: #{lstm_feature_extractor.7} parent=11 // pred_region
        _
      $region20: #{lstm_feature_extractor.7} parent=11 // pred_fallthru
        _
      // Predicated region
      $region21: #{lstm_feature_extractor.7} parent=11 // pred_check
        %p173 = pneg %p126
      $region22: #{lstm_feature_extractor.7} parent=11 // pred_check_branch
        %175 = sbr.rel (%p173) target = $region24
      $region23: #{lstm_feature_extractor.7} parent=11 // pred_region
        _
      $region24: #{lstm_feature_extractor.7} parent=11 // pred_fallthru
        _
    $region12: #{lstm_feature_extractor.7} parent=5 // pred_fallthru
      _
    %p176 = scmp.lt.s32.totalorder %s11, 2
    // Predicated region
    $region25: #{lstm_feature_extractor.7} parent=5 // pred_check
      %p177 = pneg %p176
    $region26: #{lstm_feature_extractor.7} parent=5 // pred_check_branch
      %179 = sbr.rel (%p177) target = $region28
    $region27: #{lstm_feature_extractor.7} parent=5 // pred_region
      // Predicated region
      $region29: #{lstm_feature_extractor.7} parent=27 // pred_check
        %p180 = pneg %p31
      $region30: #{lstm_feature_extractor.7} parent=27 // pred_check_branch
        %182 = sbr.rel (%p180) target = $region32
      $region31: #{lstm_feature_extractor.7} parent=27 // pred_region
        %s183 = smul.u32 4, %s11
        %p184 = scmp.lt.s32.totalorder %s183, 7
        %s185 = scalar_select %p184, %s183, 7
        %s186 = smul.addr %s185, 4
        %s187 = scalar_lea.vmem %s0, %s186
        %s188 = smul.u32 4, %s11
      $region32: #{lstm_feature_extractor.7} parent=27 // pred_fallthru
        _
      // Predicated region
      $region33: #{lstm_feature_extractor.7} parent=27 // pred_check
        %p189 = pneg %p57
      $region34: #{lstm_feature_extractor.7} parent=27 // pred_check_branch
        %191 = sbr.rel (%p189) target = $region36
      $region35: #{lstm_feature_extractor.7} parent=27 // pred_region
        %s192 = smul.u32 4, %s11
        %p193 = scmp.lt.s32.totalorder %s192, 7
        %s194 = scalar_select %p193, %s192, 7
        %s195 = smul.addr %s194, 4
        %s196 = scalar_lea.vmem %s1, %s195
        %s197 = smul.u32 4, %s11
      $region36: #{lstm_feature_extractor.7} parent=27 // pred_fallthru
        _
    $region28: #{lstm_feature_extractor.7} parent=5 // pred_fallthru
      _
    %p198 = scmp.le.s32.totalorder 1, %s11
    %p199 = scmp.lt.s32.totalorder %s11, 3
    %p200 = pnand %p198, %p199
    %p201 = pneg %p200
    // Predicated region
    $region37: #{lstm_feature_extractor.7} parent=5 // pred_check
      _
    $region38: #{lstm_feature_extractor.7} parent=5 // pred_check_branch
      %203 = sbr.rel (%p200) target = $region40
    $region39: #{lstm_feature_extractor.7} parent=5 // pred_region
      %s204 = ssub.s32 %s11, 1
      %s205 = smul.u32 4, %s16
      %p206 = scmp.lt.s32.totalorder %s205, 7
      %s207 = scalar_select %p206, %s205, 7
      %s208 = smul.addr %s207, 4
      %s209 = scalar_lea.vmem %s0, %s208
      %p210 = pneg %p37
      %p211 = pneg %p34
      %s212 = smul.u32 4, %s16
      %p213 = scmp.lt.s32.totalorder %s212, 7
      %s214 = scalar_select %p213, %s212, 7
      %s215 = smul.addr %s214, 4
      %s216 = scalar_lea.vmem %s1, %s215
      %p217 = pneg %p63
      %p218 = pneg %p60
      %p219 = pneg %p84
      %p220 = pneg %p81
      %p221 = pneg %p105
      %p222 = pneg %p102
      %p223 = pneg %p126
      %p224 = pneg %p123
      %p225 = pneg %p152
      %p226 = pneg %p149
      %s227 = smul.u32 4, %s16
      %p228 = scmp.lt.s32.totalorder %s227, 7
      %s229 = scalar_select %p228, %s227, 7
      %s230 = smul.addr %s229, 8
      %s231 = smul.addr %s230, 4
      %s232 = scalar_lea.vmem %s5, %s231
      %s233 = smul.u32 4, %s16
      %p234 = scmp.lt.s32.totalorder %s233, 7
      %s235 = scalar_select %p234, %s233, 7
      %s236 = smul.addr %s235, 4
      %s237 = scalar_lea.vmem %s0, %s236
      %s238 = smul.u32 4, %s16
      %s239 = smul.u32 4, %s16
      %p240 = scmp.lt.s32.totalorder %s239, 7
      %s241 = scalar_select %p240, %s239, 7
      %s242 = smul.addr %s241, 4
      %s243 = scalar_lea.vmem %s1, %s242
      %s244 = smul.u32 4, %s16
      %s245 = smul.u32 4, %s16
      %p246 = scmp.lt.s32.totalorder %s245, 7
      %s247 = scalar_select %p246, %s245, 7
      %s248 = smul.addr %s247, 8
      %s249 = smul.addr %s248, 4
      %s250 = scalar_lea.vmem %s5, %s249
      %s251 = smul.u32 4, %s16
      %v253 = vld [vmem:[%s237] sm:$0xf]
      %v254 = vld [vmem:[%s237 + $0x4] sm:$0xf]
      %v255 = vld [vmem:[%s237 + $0x8] sm:$0xf]
      %v256 = vld [vmem:[%s237 + $0xc] sm:$0xf]
      %v257 = vld [vmem:[%s2] sm:$0xff]
      %v258 = vld [vmem:[%s2 + $0x8] sm:$0xff]
      %v259 = vld [vmem:[%s2 + $0x10] sm:$0xff]
      %v260 = vld [vmem:[%s2 + $0x18] sm:$0xff]
      %v261 = vld [vmem:[%s2 + $0x20] sm:$0xff]
      %v262 = vld [vmem:[%s2 + $0x28] sm:$0xff]
      %v263 = vld [vmem:[%s2 + $0x30] sm:$0xff]
      %v264 = vld [vmem:[%s2 + $0x38] sm:$0xff]
      %v265 = vld [vmem:[%s2 + $0x40] sm:$0xff]
      %v266 = vld [vmem:[%s2 + $0x48] sm:$0xff]
      %v267 = vld [vmem:[%s2 + $0x50] sm:$0xff]
      %v268 = vld [vmem:[%s2 + $0x58] sm:$0xff]
      %v269 = vld [vmem:[%s2 + $0x60] sm:$0xff]
      %v270 = vld [vmem:[%s2 + $0x68] sm:$0xff]
      %v271 = vld [vmem:[%s2 + $0x70] sm:$0xff]
      %v272 = vld [vmem:[%s2 + $0x78] sm:$0xff]
      %v273 = vld [vmem:[%s2 + $0x80] sm:$0xff]
      %v274 = vld [vmem:[%s2 + $0x88] sm:$0xff]
      %v275 = vld [vmem:[%s2 + $0x90] sm:$0xff]
      %v276 = vld [vmem:[%s2 + $0x98] sm:$0xff]
      %v277 = vld [vmem:[%s2 + $0xa0] sm:$0xff]
      %v278 = vld [vmem:[%s2 + $0xa8] sm:$0xff]
      %v279 = vld [vmem:[%s2 + $0xb0] sm:$0xff]
      %v280 = vld [vmem:[%s2 + $0xb8] sm:$0xff]
      %v281 = vld [vmem:[%s2 + $0xc0] sm:$0xff]
      %v282 = vld [vmem:[%s2 + $0xc8] sm:$0xff]
      %v283 = vld [vmem:[%s2 + $0xd0] sm:$0xff]
      %v284 = vld [vmem:[%s2 + $0xd8] sm:$0xff]
      %v285 = vld [vmem:[%s2 + $0xe0] sm:$0xff]
      %v286 = vld [vmem:[%s2 + $0xe8] sm:$0xff]
      %v287 = vld [vmem:[%s2 + $0xf0] sm:$0xff]
      %v288 = vld [vmem:[%s2 + $0xf8] sm:$0xff]
      %v289 = vld [vmem:[%s2 + $0x100] sm:$0xff]
      %v290 = vld [vmem:[%s2 + $0x108] sm:$0xff]
      %v291 = vld [vmem:[%s2 + $0x110] sm:$0xff]
      %v292 = vld [vmem:[%s2 + $0x118] sm:$0xff]
      %v293 = vld [vmem:[%s2 + $0x120] sm:$0xff]
      %v294 = vld [vmem:[%s2 + $0x128] sm:$0xff]
      %v295 = vld [vmem:[%s2 + $0x130] sm:$0xff]
      %v296 = vld [vmem:[%s2 + $0x138] sm:$0xff]
      %v297 = vld [vmem:[%s2 + $0x140] sm:$0xff]
      %v298 = vld [vmem:[%s2 + $0x148] sm:$0xff]
      %v299 = vld [vmem:[%s2 + $0x150] sm:$0xff]
      %v300 = vld [vmem:[%s2 + $0x158] sm:$0xff]
      %v301 = vld [vmem:[%s2 + $0x160] sm:$0xff]
      %v302 = vld [vmem:[%s2 + $0x168] sm:$0xff]
      %v303 = vld [vmem:[%s2 + $0x170] sm:$0xff]
      %v304 = vld [vmem:[%s2 + $0x178] sm:$0xff]
      %v305 = vld [vmem:[%s2 + $0x180] sm:$0xff]
      %v306 = vld [vmem:[%s2 + $0x188] sm:$0xff]
      %v307 = vld [vmem:[%s2 + $0x190] sm:$0xff]
      %v308 = vld [vmem:[%s2 + $0x198] sm:$0xff]
      %v309 = vld [vmem:[%s2 + $0x1a0] sm:$0xff]
      %v310 = vld [vmem:[%s2 + $0x1a8] sm:$0xff]
      %v311 = vld [vmem:[%s2 + $0x1b0] sm:$0xff]
      %v312 = vld [vmem:[%s2 + $0x1b8] sm:$0xff]
      %v313 = vld [vmem:[%s2 + $0x1c0] sm:$0xff]
      %v314 = vld [vmem:[%s2 + $0x1c8] sm:$0xff]
      %v315 = vld [vmem:[%s2 + $0x1d0] sm:$0xff]
      %v316 = vld [vmem:[%s2 + $0x1d8] sm:$0xff]
      %v317 = vld [vmem:[%s2 + $0x1e0] sm:$0xff]
      %v318 = vld [vmem:[%s2 + $0x1e8] sm:$0xff]
      %v319 = vld [vmem:[%s2 + $0x1f0] sm:$0xff]
      %v320 = vld [vmem:[%s2 + $0x1f8] sm:$0xff]
      %v321 = vld [vmem:[%s243] sm:$0xf]
      %v322 = vld [vmem:[%s243 + $0x4] sm:$0xf]
      %v323 = vld [vmem:[%s243 + $0x8] sm:$0xf]
      %v324 = vld [vmem:[%s243 + $0xc] sm:$0xf]
      %v325 = vld [vmem:[%s3] sm:$0xff]
      %v326 = vld [vmem:[%s3 + $0x8] sm:$0xff]
      %v327 = vld [vmem:[%s3 + $0x10] sm:$0xff]
      %v328 = vld [vmem:[%s3 + $0x18] sm:$0xff]
      %v329 = vld [vmem:[%s3 + $0x20] sm:$0xff]
      %v330 = vld [vmem:[%s3 + $0x28] sm:$0xff]
      %v331 = vld [vmem:[%s3 + $0x30] sm:$0xff]
      %v332 = vld [vmem:[%s3 + $0x38] sm:$0xff]
      %v333 = vld [vmem:[%s3 + $0x40] sm:$0xff]
      %v334 = vld [vmem:[%s3 + $0x48] sm:$0xff]
      %v335 = vld [vmem:[%s3 + $0x50] sm:$0xff]
      %v336 = vld [vmem:[%s3 + $0x58] sm:$0xff]
      %v337 = vld [vmem:[%s3 + $0x60] sm:$0xff]
      %v338 = vld [vmem:[%s3 + $0x68] sm:$0xff]
      %v339 = vld [vmem:[%s3 + $0x70] sm:$0xff]
      %v340 = vld [vmem:[%s3 + $0x78] sm:$0xff]
      %v341 = vld [vmem:[%s3 + $0x80] sm:$0xff]
      %v342 = vld [vmem:[%s3 + $0x88] sm:$0xff]
      %v343 = vld [vmem:[%s3 + $0x90] sm:$0xff]
      %v344 = vld [vmem:[%s3 + $0x98] sm:$0xff]
      %v345 = vld [vmem:[%s3 + $0xa0] sm:$0xff]
      %v346 = vld [vmem:[%s3 + $0xa8] sm:$0xff]
      %v347 = vld [vmem:[%s3 + $0xb0] sm:$0xff]
      %v348 = vld [vmem:[%s3 + $0xb8] sm:$0xff]
      %v349 = vld [vmem:[%s3 + $0xc0] sm:$0xff]
      %v350 = vld [vmem:[%s3 + $0xc8] sm:$0xff]
      %v351 = vld [vmem:[%s3 + $0xd0] sm:$0xff]
      %v352 = vld [vmem:[%s3 + $0xd8] sm:$0xff]
      %v353 = vld [vmem:[%s3 + $0xe0] sm:$0xff]
      %v354 = vld [vmem:[%s3 + $0xe8] sm:$0xff]
      %v355 = vld [vmem:[%s3 + $0xf0] sm:$0xff]
      %v356 = vld [vmem:[%s3 + $0xf8] sm:$0xff]
      %v357 = vld [vmem:[%s3 + $0x100] sm:$0xff]
      %v358 = vld [vmem:[%s3 + $0x108] sm:$0xff]
      %v359 = vld [vmem:[%s3 + $0x110] sm:$0xff]
      %v360 = vld [vmem:[%s3 + $0x118] sm:$0xff]
      %v361 = vld [vmem:[%s3 + $0x120] sm:$0xff]
      %v362 = vld [vmem:[%s3 + $0x128] sm:$0xff]
      %v363 = vld [vmem:[%s3 + $0x130] sm:$0xff]
      %v364 = vld [vmem:[%s3 + $0x138] sm:$0xff]
      %v365 = vld [vmem:[%s3 + $0x140] sm:$0xff]
      %v366 = vld [vmem:[%s3 + $0x148] sm:$0xff]
      %v367 = vld [vmem:[%s3 + $0x150] sm:$0xff]
      %v368 = vld [vmem:[%s3 + $0x158] sm:$0xff]
      %v369 = vld [vmem:[%s3 + $0x160] sm:$0xff]
      %v370 = vld [vmem:[%s3 + $0x168] sm:$0xff]
      %v371 = vld [vmem:[%s3 + $0x170] sm:$0xff]
      %v372 = vld [vmem:[%s3 + $0x178] sm:$0xff]
      %v373 = vld [vmem:[%s3 + $0x180] sm:$0xff]
      %v374 = vld [vmem:[%s3 + $0x188] sm:$0xff]
      %v375 = vld [vmem:[%s3 + $0x190] sm:$0xff]
      %v376 = vld [vmem:[%s3 + $0x198] sm:$0xff]
      %v377 = vld [vmem:[%s3 + $0x1a0] sm:$0xff]
      %v378 = vld [vmem:[%s3 + $0x1a8] sm:$0xff]
      %v379 = vld [vmem:[%s3 + $0x1b0] sm:$0xff]
      %v380 = vld [vmem:[%s3 + $0x1b8] sm:$0xff]
      %v381 = vld [vmem:[%s3 + $0x1c0] sm:$0xff]
      %v382 = vld [vmem:[%s3 + $0x1c8] sm:$0xff]
      %v383 = vld [vmem:[%s3 + $0x1d0] sm:$0xff]
      %v384 = vld [vmem:[%s3 + $0x1d8] sm:$0xff]
      %v385 = vld [vmem:[%s3 + $0x1e0] sm:$0xff]
      %v386 = vld [vmem:[%s3 + $0x1e8] sm:$0xff]
      %v387 = vld [vmem:[%s3 + $0x1f0] sm:$0xff]
      %v388 = vld [vmem:[%s3 + $0x1f8] sm:$0xff]
      %v393 = vunpack.c.l.b16 %v321
      %v394 = vunpack.c.l.b16 %v322
      %v395 = vunpack.c.l.b16 %v323
      %v396 = vunpack.c.l.b16 %v324
      %v397 = vpack.c.b16 %v394, %v393
      %v398 = vpack.c.b16 %v396, %v395
      %v465 = vunpack.c.l.b16 %v325
      %v466 = vunpack.c.h.b16 %v325
      %v467 = vunpack.c.l.b16 %v326
      %v468 = vunpack.c.h.b16 %v326
      %v469 = vunpack.c.l.b16 %v327
      %v470 = vunpack.c.h.b16 %v327
      %v471 = vunpack.c.l.b16 %v328
      %v472 = vunpack.c.h.b16 %v328
      %v473 = vunpack.c.l.b16 %v329
      %v474 = vunpack.c.h.b16 %v329
      %v475 = vunpack.c.l.b16 %v330
      %v476 = vunpack.c.h.b16 %v330
      %v477 = vunpack.c.l.b16 %v331
      %v478 = vunpack.c.h.b16 %v331
      %v479 = vunpack.c.l.b16 %v332
      %v480 = vunpack.c.h.b16 %v332
      %v481 = vunpack.c.l.b16 %v333
      %v482 = vunpack.c.h.b16 %v333
      %v483 = vunpack.c.l.b16 %v334
      %v484 = vunpack.c.h.b16 %v334
      %v485 = vunpack.c.l.b16 %v335
      %v486 = vunpack.c.h.b16 %v335
      %v487 = vunpack.c.l.b16 %v336
      %v488 = vunpack.c.h.b16 %v336
      %v489 = vunpack.c.l.b16 %v337
      %v490 = vunpack.c.h.b16 %v337
      %v491 = vunpack.c.l.b16 %v338
      %v492 = vunpack.c.h.b16 %v338
      %v493 = vunpack.c.l.b16 %v339
      %v494 = vunpack.c.h.b16 %v339
      %v495 = vunpack.c.l.b16 %v340
      %v496 = vunpack.c.h.b16 %v340
      %v497 = vunpack.c.l.b16 %v341
      %v498 = vunpack.c.h.b16 %v341
      %v499 = vunpack.c.l.b16 %v342
      %v500 = vunpack.c.h.b16 %v342
      %v501 = vunpack.c.l.b16 %v343
      %v502 = vunpack.c.h.b16 %v343
      %v503 = vunpack.c.l.b16 %v344
      %v504 = vunpack.c.h.b16 %v344
      %v505 = vunpack.c.l.b16 %v345
      %v506 = vunpack.c.h.b16 %v345
      %v507 = vunpack.c.l.b16 %v346
      %v508 = vunpack.c.h.b16 %v346
      %v509 = vunpack.c.l.b16 %v347
      %v510 = vunpack.c.h.b16 %v347
      %v511 = vunpack.c.l.b16 %v348
      %v512 = vunpack.c.h.b16 %v348
      %v513 = vunpack.c.l.b16 %v349
      %v514 = vunpack.c.h.b16 %v349
      %v515 = vunpack.c.l.b16 %v350
      %v516 = vunpack.c.h.b16 %v350
      %v517 = vunpack.c.l.b16 %v351
      %v518 = vunpack.c.h.b16 %v351
      %v519 = vunpack.c.l.b16 %v352
      %v520 = vunpack.c.h.b16 %v352
      %v521 = vunpack.c.l.b16 %v353
      %v522 = vunpack.c.h.b16 %v353
      %v523 = vunpack.c.l.b16 %v354
      %v524 = vunpack.c.h.b16 %v354
      %v525 = vunpack.c.l.b16 %v355
      %v526 = vunpack.c.h.b16 %v355
      %v527 = vunpack.c.l.b16 %v356
      %v528 = vunpack.c.h.b16 %v356
      %v529 = vunpack.c.l.b16 %v357
      %v530 = vunpack.c.h.b16 %v357
      %v531 = vunpack.c.l.b16 %v358
      %v532 = vunpack.c.h.b16 %v358
      %v533 = vunpack.c.l.b16 %v359
      %v534 = vunpack.c.h.b16 %v359
      %v535 = vunpack.c.l.b16 %v360
      %v536 = vunpack.c.h.b16 %v360
      %v537 = vunpack.c.l.b16 %v361
      %v538 = vunpack.c.h.b16 %v361
      %v539 = vunpack.c.l.b16 %v362
      %v540 = vunpack.c.h.b16 %v362
      %v541 = vunpack.c.l.b16 %v363
      %v542 = vunpack.c.h.b16 %v363
      %v543 = vunpack.c.l.b16 %v364
      %v544 = vunpack.c.h.b16 %v364
      %v545 = vunpack.c.l.b16 %v365
      %v546 = vunpack.c.h.b16 %v365
      %v547 = vunpack.c.l.b16 %v366
      %v548 = vunpack.c.h.b16 %v366
      %v549 = vunpack.c.l.b16 %v367
      %v550 = vunpack.c.h.b16 %v367
      %v551 = vunpack.c.l.b16 %v368
      %v552 = vunpack.c.h.b16 %v368
      %v553 = vunpack.c.l.b16 %v369
      %v554 = vunpack.c.h.b16 %v369
      %v555 = vunpack.c.l.b16 %v370
      %v556 = vunpack.c.h.b16 %v370
      %v557 = vunpack.c.l.b16 %v371
      %v558 = vunpack.c.h.b16 %v371
      %v559 = vunpack.c.l.b16 %v372
      %v560 = vunpack.c.h.b16 %v372
      %v561 = vunpack.c.l.b16 %v373
      %v562 = vunpack.c.h.b16 %v373
      %v563 = vunpack.c.l.b16 %v374
      %v564 = vunpack.c.h.b16 %v374
      %v565 = vunpack.c.l.b16 %v375
      %v566 = vunpack.c.h.b16 %v375
      %v567 = vunpack.c.l.b16 %v376
      %v568 = vunpack.c.h.b16 %v376
      %v569 = vunpack.c.l.b16 %v377
      %v570 = vunpack.c.h.b16 %v377
      %v571 = vunpack.c.l.b16 %v378
      %v572 = vunpack.c.h.b16 %v378
      %v573 = vunpack.c.l.b16 %v379
      %v574 = vunpack.c.h.b16 %v379
      %v575 = vunpack.c.l.b16 %v380
      %v576 = vunpack.c.h.b16 %v380
      %v577 = vunpack.c.l.b16 %v381
      %v578 = vunpack.c.h.b16 %v381
      %v579 = vunpack.c.l.b16 %v382
      %v580 = vunpack.c.h.b16 %v382
      %v581 = vunpack.c.l.b16 %v383
      %v582 = vunpack.c.h.b16 %v383
      %v583 = vunpack.c.l.b16 %v384
      %v584 = vunpack.c.h.b16 %v384
      %v585 = vunpack.c.l.b16 %v385
      %v586 = vunpack.c.h.b16 %v385
      %v587 = vunpack.c.l.b16 %v386
      %v588 = vunpack.c.h.b16 %v386
      %v589 = vunpack.c.l.b16 %v387
      %v590 = vunpack.c.h.b16 %v387
      %v591 = vunpack.c.l.b16 %v388
      %v592 = vunpack.c.h.b16 %v388
      %v593 = vpack.c.b16 %v473, %v465
      %v594 = vpack.c.b16 %v474, %v466
      %v595 = vpack.c.b16 %v475, %v467
      %v596 = vpack.c.b16 %v476, %v468
      %v597 = vpack.c.b16 %v477, %v469
      %v598 = vpack.c.b16 %v478, %v470
      %v599 = vpack.c.b16 %v479, %v471
      %v600 = vpack.c.b16 %v480, %v472
      %v601 = vpack.c.b16 %v489, %v481
      %v602 = vpack.c.b16 %v490, %v482
      %v603 = vpack.c.b16 %v491, %v483
      %v604 = vpack.c.b16 %v492, %v484
      %v605 = vpack.c.b16 %v493, %v485
      %v606 = vpack.c.b16 %v494, %v486
      %v607 = vpack.c.b16 %v495, %v487
      %v608 = vpack.c.b16 %v496, %v488
      %v609 = vpack.c.b16 %v505, %v497
      %v610 = vpack.c.b16 %v506, %v498
      %v611 = vpack.c.b16 %v507, %v499
      %v612 = vpack.c.b16 %v508, %v500
      %v613 = vpack.c.b16 %v509, %v501
      %v614 = vpack.c.b16 %v510, %v502
      %v615 = vpack.c.b16 %v511, %v503
      %v616 = vpack.c.b16 %v512, %v504
      %v617 = vpack.c.b16 %v521, %v513
      %v618 = vpack.c.b16 %v522, %v514
      %v619 = vpack.c.b16 %v523, %v515
      %v620 = vpack.c.b16 %v524, %v516
      %v621 = vpack.c.b16 %v525, %v517
      %v622 = vpack.c.b16 %v526, %v518
      %v623 = vpack.c.b16 %v527, %v519
      %v624 = vpack.c.b16 %v528, %v520
      %v625 = vpack.c.b16 %v537, %v529
      %v626 = vpack.c.b16 %v538, %v530
      %v627 = vpack.c.b16 %v539, %v531
      %v628 = vpack.c.b16 %v540, %v532
      %v629 = vpack.c.b16 %v541, %v533
      %v630 = vpack.c.b16 %v542, %v534
      %v631 = vpack.c.b16 %v543, %v535
      %v632 = vpack.c.b16 %v544, %v536
      %v633 = vpack.c.b16 %v553, %v545
      %v634 = vpack.c.b16 %v554, %v546
      %v635 = vpack.c.b16 %v555, %v547
      %v636 = vpack.c.b16 %v556, %v548
      %v637 = vpack.c.b16 %v557, %v549
      %v638 = vpack.c.b16 %v558, %v550
      %v639 = vpack.c.b16 %v559, %v551
      %v640 = vpack.c.b16 %v560, %v552
      %v641 = vpack.c.b16 %v569, %v561
      %v642 = vpack.c.b16 %v570, %v562
      %v643 = vpack.c.b16 %v571, %v563
      %v644 = vpack.c.b16 %v572, %v564
      %v645 = vpack.c.b16 %v573, %v565
      %v646 = vpack.c.b16 %v574, %v566
      %v647 = vpack.c.b16 %v575, %v567
      %v648 = vpack.c.b16 %v576, %v568
      %v649 = vpack.c.b16 %v585, %v577
      %v650 = vpack.c.b16 %v586, %v578
      %v651 = vpack.c.b16 %v587, %v579
      %v652 = vpack.c.b16 %v588, %v580
      %v653 = vpack.c.b16 %v589, %v581
      %v654 = vpack.c.b16 %v590, %v582
      %v655 = vpack.c.b16 %v591, %v583
      %v656 = vpack.c.b16 %v592, %v584
      %721 = vmatprep.subr.bf16.mxu0 %v594
      %722 = vmatpush1.bf16.msra.mxu0 %v593
      %723 = vmatprep.subr.bf16.mxu0 %v602
      %724 = vmatpush1.bf16.msra.mxu0 %v601
      %725 = vmatprep.subr.bf16.mxu0 %v610
      %726 = vmatpush1.bf16.msra.mxu0 %v609
      %727 = vmatprep.subr.bf16.mxu0 %v618
      %728 = vmatpush1.bf16.msra.mxu0 %v617
      %729 = vmatprep.subr.bf16.mxu0 %v626
      %730 = vmatpush1.bf16.msra.mxu0 %v625
      %731 = vmatprep.subr.bf16.mxu0 %v634
      %732 = vmatpush1.bf16.msra.mxu0 %v633
      %733 = vmatprep.subr.bf16.mxu0 %v642
      %734 = vmatpush1.bf16.msra.mxu0 %v641
      %735 = vmatprep.subr.bf16.mxu0 %v650
      %736 = vmatpush1.bf16.msra.mxu0 %v649
      %737 = vmatprep.subr.bf16.mxu0 0
      %738 = vmatpush1.bf16.msra.mxu0 0
      %739 = vmatprep.subr.bf16.mxu0 0
      %740 = vmatpush1.bf16.msra.mxu0 0
      %741 = vmatprep.subr.bf16.mxu0 0
      %742 = vmatpush1.bf16.msra.mxu0 0
      %743 = vmatprep.subr.bf16.mxu0 0
      %744 = vmatpush1.bf16.msra.mxu0 0
      %745 = vmatprep.subr.bf16.mxu0 0
      %746 = vmatpush1.bf16.msra.mxu0 0
      %747 = vmatprep.subr.bf16.mxu0 0
      %748 = vmatpush1.bf16.msra.mxu0 0
      %749 = vmatprep.subr.bf16.mxu0 0
      %750 = vmatpush1.bf16.msra.mxu0 0
      %751 = vmatprep.subr.bf16.mxu0 0
      %752 = vmatpush1.bf16.msra.mxu0 0
      %753 = vmatprep.mubr.bf16.mxu0 0
      %754 = vmatmul.mubr.bf16.gmra.mrb[0].mxu0 %v397
      %v755 = vpop.f32.mrb[0].mxu0
      %v756 = vadd.f32 0.0, %v755
      %v757 = vpop.f32.mrb[0].mxu0
      %v758 = vadd.f32 0.0, %v757
      %v759 = vpop.f32.mrb[0].mxu0
      %v760 = vadd.f32 0.0, %v759
      %v761 = vpop.f32.mrb[0].mxu0
      %v762 = vadd.f32 0.0, %v761
      %763 = vmatprep.mubr.bf16.mxu0 0
      %764 = vmatmul.mubr.bf16.gmra.mrb[0].mxu0 %v398
      %v765 = vpop.f32.mrb[0].mxu0
      %v766 = vadd.f32 0.0, %v765
      %v767 = vpop.f32.mrb[0].mxu0
      %v768 = vadd.f32 0.0, %v767
      %v769 = vpop.f32.mrb[0].mxu0
      %v770 = vadd.f32 0.0, %v769
      %v771 = vpop.f32.mrb[0].mxu0
      %v772 = vadd.f32 0.0, %v771
      %773 = vdwg.mxu0
      %774 = vmatprep.subr.bf16.mxu0 %v596
      %775 = vmatpush1.bf16.msra.mxu0 %v595
      %776 = vmatprep.subr.bf16.mxu0 %v604
      %777 = vmatpush1.bf16.msra.mxu0 %v603
      %778 = vmatprep.subr.bf16.mxu0 %v612
      %779 = vmatpush1.bf16.msra.mxu0 %v611
      %780 = vmatprep.subr.bf16.mxu0 %v620
      %781 = vmatpush1.bf16.msra.mxu0 %v619
      %782 = vmatprep.subr.bf16.mxu0 %v628
      %783 = vmatpush1.bf16.msra.mxu0 %v627
      %784 = vmatprep.subr.bf16.mxu0 %v636
      %785 = vmatpush1.bf16.msra.mxu0 %v635
      %786 = vmatprep.subr.bf16.mxu0 %v644
      %787 = vmatpush1.bf16.msra.mxu0 %v643
      %788 = vmatprep.subr.bf16.mxu0 %v652
      %789 = vmatpush1.bf16.msra.mxu0 %v651
      %790 = vmatprep.subr.bf16.mxu0 0
      %791 = vmatpush1.bf16.msra.mxu0 0
      %792 = vmatprep.subr.bf16.mxu0 0
      %793 = vmatpush1.bf16.msra.mxu0 0
      %794 = vmatprep.subr.bf16.mxu0 0
      %795 = vmatpush1.bf16.msra.mxu0 0
      %796 = vmatprep.subr.bf16.mxu0 0
      %797 = vmatpush1.bf16.msra.mxu0 0
      %798 = vmatprep.subr.bf16.mxu0 0
      %799 = vmatpush1.bf16.msra.mxu0 0
      %800 = vmatprep.subr.bf16.mxu0 0
      %801 = vmatpush1.bf16.msra.mxu0 0
      %802 = vmatprep.subr.bf16.mxu0 0
      %803 = vmatpush1.bf16.msra.mxu0 0
      %804 = vmatprep.subr.bf16.mxu0 0
      %805 = vmatpush1.bf16.msra.mxu0 0
      %806 = vmatprep.mubr.bf16.mxu0 0
      %807 = vmatmul.mubr.bf16.gmra.mrb[0].mxu0 %v397
      %v808 = vpop.f32.mrb[0].mxu0
      %v809 = vadd.f32 0.0, %v808
      %v810 = vpop.f32.mrb[0].mxu0
      %v811 = vadd.f32 0.0, %v810
      %v812 = vpop.f32.mrb[0].mxu0
      %v813 = vadd.f32 0.0, %v812
      %v814 = vpop.f32.mrb[0].mxu0
      %v815 = vadd.f32 0.0, %v814
      %816 = vmatprep.mubr.bf16.mxu0 0
      %817 = vmatmul.mubr.bf16.gmra.mrb[0].mxu0 %v398
      %v818 = vpop.f32.mrb[0].mxu0
      %v819 = vadd.f32 0.0, %v818
      %v820 = vpop.f32.mrb[0].mxu0
      %v821 = vadd.f32 0.0, %v820
      %v822 = vpop.f32.mrb[0].mxu0
      %v823 = vadd.f32 0.0, %v822
      %v824 = vpop.f32.mrb[0].mxu0
      %v825 = vadd.f32 0.0, %v824
      %826 = vdwg.mxu0
      %827 = vmatprep.subr.bf16.mxu0 %v598
      %828 = vmatpush1.bf16.msra.mxu0 %v597
      %829 = vmatprep.subr.bf16.mxu0 %v606
      %830 = vmatpush1.bf16.msra.mxu0 %v605
      %831 = vmatprep.subr.bf16.mxu0 %v614
      %832 = vmatpush1.bf16.msra.mxu0 %v613
      %833 = vmatprep.subr.bf16.mxu0 %v622
      %834 = vmatpush1.bf16.msra.mxu0 %v621
      %835 = vmatprep.subr.bf16.mxu0 %v630
      %836 = vmatpush1.bf16.msra.mxu0 %v629
      %837 = vmatprep.subr.bf16.mxu0 %v638
      %838 = vmatpush1.bf16.msra.mxu0 %v637
      %839 = vmatprep.subr.bf16.mxu0 %v646
      %840 = vmatpush1.bf16.msra.mxu0 %v645
      %841 = vmatprep.subr.bf16.mxu0 %v654
      %842 = vmatpush1.bf16.msra.mxu0 %v653
      %843 = vmatprep.subr.bf16.mxu0 0
      %844 = vmatpush1.bf16.msra.mxu0 0
      %845 = vmatprep.subr.bf16.mxu0 0
      %846 = vmatpush1.bf16.msra.mxu0 0
      %847 = vmatprep.subr.bf16.mxu0 0
      %848 = vmatpush1.bf16.msra.mxu0 0
      %849 = vmatprep.subr.bf16.mxu0 0
      %850 = vmatpush1.bf16.msra.mxu0 0
      %851 = vmatprep.subr.bf16.mxu0 0
      %852 = vmatpush1.bf16.msra.mxu0 0
      %853 = vmatprep.subr.bf16.mxu0 0
      %854 = vmatpush1.bf16.msra.mxu0 0
      %855 = vmatprep.subr.bf16.mxu0 0
      %856 = vmatpush1.bf16.msra.mxu0 0
      %857 = vmatprep.subr.bf16.mxu0 0
      %858 = vmatpush1.bf16.msra.mxu0 0
      %859 = vmatprep.mubr.bf16.mxu0 0
      %860 = vmatmul.mubr.bf16.gmra.mrb[0].mxu0 %v397
      %v861 = vpop.f32.mrb[0].mxu0
      %v862 = vadd.f32 0.0, %v861
      %v863 = vpop.f32.mrb[0].mxu0
      %v864 = vadd.f32 0.0, %v863
      %v865 = vpop.f32.mrb[0].mxu0
      %v866 = vadd.f32 0.0, %v865
      %v867 = vpop.f32.mrb[0].mxu0
      %v868 = vadd.f32 0.0, %v867
      %869 = vmatprep.mubr.bf16.mxu0 0
      %870 = vmatmul.mubr.bf16.gmra.mrb[0].mxu0 %v398
      %v871 = vpop.f32.mrb[0].mxu0
      %v872 = vadd.f32 0.0, %v871
      %v873 = vpop.f32.mrb[0].mxu0
      %v874 = vadd.f32 0.0, %v873
      %v875 = vpop.f32.mrb[0].mxu0
      %v876 = vadd.f32 0.0, %v875
      %v877 = vpop.f32.mrb[0].mxu0
      %v878 = vadd.f32 0.0, %v877
      %879 = vdwg.mxu0
      %880 = vmatprep.subr.bf16.mxu0 %v600
      %881 = vmatpush1.bf16.msra.mxu0 %v599
      %882 = vmatprep.subr.bf16.mxu0 %v608
      %883 = vmatpush1.bf16.msra.mxu0 %v607
      %884 = vmatprep.subr.bf16.mxu0 %v616
      %885 = vmatpush1.bf16.msra.mxu0 %v615
      %886 = vmatprep.subr.bf16.mxu0 %v624
      %887 = vmatpush1.bf16.msra.mxu0 %v623
      %888 = vmatprep.subr.bf16.mxu0 %v632
      %889 = vmatpush1.bf16.msra.mxu0 %v631
      %890 = vmatprep.subr.bf16.mxu0 %v640
      %891 = vmatpush1.bf16.msra.mxu0 %v639
      %892 = vmatprep.subr.bf16.mxu0 %v648
      %893 = vmatpush1.bf16.msra.mxu0 %v647
      %894 = vmatprep.subr.bf16.mxu0 %v656
      %895 = vmatpush1.bf16.msra.mxu0 %v655
      %896 = vmatprep.subr.bf16.mxu0 0
      %897 = vmatpush1.bf16.msra.mxu0 0
      %898 = vmatprep.subr.bf16.mxu0 0
      %899 = vmatpush1.bf16.msra.mxu0 0
      %900 = vmatprep.subr.bf16.mxu0 0
      %901 = vmatpush1.bf16.msra.mxu0 0
      %902 = vmatprep.subr.bf16.mxu0 0
      %903 = vmatpush1.bf16.msra.mxu0 0
      %904 = vmatprep.subr.bf16.mxu0 0
      %905 = vmatpush1.bf16.msra.mxu0 0
      %906 = vmatprep.subr.bf16.mxu0 0
      %907 = vmatpush1.bf16.msra.mxu0 0
      %908 = vmatprep.subr.bf16.mxu0 0
      %909 = vmatpush1.bf16.msra.mxu0 0
      %910 = vmatprep.subr.bf16.mxu0 0
      %911 = vmatpush1.bf16.msra.mxu0 0
      %912 = vmatprep.mubr.bf16.mxu0 0
      %913 = vmatmul.mubr.bf16.gmra.mrb[0].mxu0 %v397
      %v914 = vpop.f32.mrb[0].mxu0
      %v915 = vadd.f32 0.0, %v914
      %v916 = vpop.f32.mrb[0].mxu0
      %v917 = vadd.f32 0.0, %v916
      %v918 = vpop.f32.mrb[0].mxu0
      %v919 = vadd.f32 0.0, %v918
      %v920 = vpop.f32.mrb[0].mxu0
      %v921 = vadd.f32 0.0, %v920
      %922 = vmatprep.mubr.bf16.mxu0 0
      %923 = vmatmul.mubr.bf16.gmra.mrb[0].mxu0 %v398
      %v924 = vpop.f32.mrb[0].mxu0
      %v925 = vadd.f32 0.0, %v924
      %v926 = vpop.f32.mrb[0].mxu0
      %v927 = vadd.f32 0.0, %v926
      %v928 = vpop.f32.mrb[0].mxu0
      %v929 = vadd.f32 0.0, %v928
      %v930 = vpop.f32.mrb[0].mxu0
      %v931 = vadd.f32 0.0, %v930
      %932 = vdwg.mxu0
      %v937 = vunpack.c.l.b16 %v253
      %v938 = vunpack.c.l.b16 %v254
      %v939 = vunpack.c.l.b16 %v255
      %v940 = vunpack.c.l.b16 %v256
      %v941 = vpack.c.b16 %v938, %v937
      %v942 = vpack.c.b16 %v940, %v939
      %v1009 = vunpack.c.l.b16 %v257
      %v1010 = vunpack.c.h.b16 %v257
      %v1011 = vunpack.c.l.b16 %v258
      %v1012 = vunpack.c.h.b16 %v258
      %v1013 = vunpack.c.l.b16 %v259
      %v1014 = vunpack.c.h.b16 %v259
      %v1015 = vunpack.c.l.b16 %v260
      %v1016 = vunpack.c.h.b16 %v260
      %v1017 = vunpack.c.l.b16 %v261
      %v1018 = vunpack.c.h.b16 %v261
      %v1019 = vunpack.c.l.b16 %v262
      %v1020 = vunpack.c.h.b16 %v262
      %v1021 = vunpack.c.l.b16 %v263
      %v1022 = vunpack.c.h.b16 %v263
      %v1023 = vunpack.c.l.b16 %v264
      %v1024 = vunpack.c.h.b16 %v264
      %v1025 = vunpack.c.l.b16 %v265
      %v1026 = vunpack.c.h.b16 %v265
      %v1027 = vunpack.c.l.b16 %v266
      %v1028 = vunpack.c.h.b16 %v266
      %v1029 = vunpack.c.l.b16 %v267
      %v1030 = vunpack.c.h.b16 %v267
      %v1031 = vunpack.c.l.b16 %v268
      %v1032 = vunpack.c.h.b16 %v268
      %v1033 = vunpack.c.l.b16 %v269
      %v1034 = vunpack.c.h.b16 %v269
      %v1035 = vunpack.c.l.b16 %v270
      %v1036 = vunpack.c.h.b16 %v270
      %v1037 = vunpack.c.l.b16 %v271
      %v1038 = vunpack.c.h.b16 %v271
      %v1039 = vunpack.c.l.b16 %v272
      %v1040 = vunpack.c.h.b16 %v272
      %v1041 = vunpack.c.l.b16 %v273
      %v1042 = vunpack.c.h.b16 %v273
      %v1043 = vunpack.c.l.b16 %v274
      %v1044 = vunpack.c.h.b16 %v274
      %v1045 = vunpack.c.l.b16 %v275
      %v1046 = vunpack.c.h.b16 %v275
      %v1047 = vunpack.c.l.b16 %v276
      %v1048 = vunpack.c.h.b16 %v276
      %v1049 = vunpack.c.l.b16 %v277
      %v1050 = vunpack.c.h.b16 %v277
      %v1051 = vunpack.c.l.b16 %v278
      %v1052 = vunpack.c.h.b16 %v278
      %v1053 = vunpack.c.l.b16 %v279
      %v1054 = vunpack.c.h.b16 %v279
      %v1055 = vunpack.c.l.b16 %v280
      %v1056 = vunpack.c.h.b16 %v280
      %v1057 = vunpack.c.l.b16 %v281
      %v1058 = vunpack.c.h.b16 %v281
      %v1059 = vunpack.c.l.b16 %v282
      %v1060 = vunpack.c.h.b16 %v282
      %v1061 = vunpack.c.l.b16 %v283
      %v1062 = vunpack.c.h.b16 %v283
      %v1063 = vunpack.c.l.b16 %v284
      %v1064 = vunpack.c.h.b16 %v284
      %v1065 = vunpack.c.l.b16 %v285
      %v1066 = vunpack.c.h.b16 %v285
      %v1067 = vunpack.c.l.b16 %v286
      %v1068 = vunpack.c.h.b16 %v286
      %v1069 = vunpack.c.l.b16 %v287
      %v1070 = vunpack.c.h.b16 %v287
      %v1071 = vunpack.c.l.b16 %v288
      %v1072 = vunpack.c.h.b16 %v288
      %v1073 = vunpack.c.l.b16 %v289
      %v1074 = vunpack.c.h.b16 %v289
      %v1075 = vunpack.c.l.b16 %v290
      %v1076 = vunpack.c.h.b16 %v290
      %v1077 = vunpack.c.l.b16 %v291
      %v1078 = vunpack.c.h.b16 %v291
      %v1079 = vunpack.c.l.b16 %v292
      %v1080 = vunpack.c.h.b16 %v292
      %v1081 = vunpack.c.l.b16 %v293
      %v1082 = vunpack.c.h.b16 %v293
      %v1083 = vunpack.c.l.b16 %v294
      %v1084 = vunpack.c.h.b16 %v294
      %v1085 = vunpack.c.l.b16 %v295
      %v1086 = vunpack.c.h.b16 %v295
      %v1087 = vunpack.c.l.b16 %v296
      %v1088 = vunpack.c.h.b16 %v296
      %v1089 = vunpack.c.l.b16 %v297
      %v1090 = vunpack.c.h.b16 %v297
      %v1091 = vunpack.c.l.b16 %v298
      %v1092 = vunpack.c.h.b16 %v298
      %v1093 = vunpack.c.l.b16 %v299
      %v1094 = vunpack.c.h.b16 %v299
      %v1095 = vunpack.c.l.b16 %v300
      %v1096 = vunpack.c.h.b16 %v300
      %v1097 = vunpack.c.l.b16 %v301
      %v1098 = vunpack.c.h.b16 %v301
      %v1099 = vunpack.c.l.b16 %v302
      %v1100 = vunpack.c.h.b16 %v302
      %v1101 = vunpack.c.l.b16 %v303
      %v1102 = vunpack.c.h.b16 %v303
      %v1103 = vunpack.c.l.b16 %v304
      %v1104 = vunpack.c.h.b16 %v304
      %v1105 = vunpack.c.l.b16 %v305
      %v1106 = vunpack.c.h.b16 %v305
      %v1107 = vunpack.c.l.b16 %v306
      %v1108 = vunpack.c.h.b16 %v306
      %v1109 = vunpack.c.l.b16 %v307
      %v1110 = vunpack.c.h.b16 %v307
      %v1111 = vunpack.c.l.b16 %v308
      %v1112 = vunpack.c.h.b16 %v308
      %v1113 = vunpack.c.l.b16 %v309
      %v1114 = vunpack.c.h.b16 %v309
      %v1115 = vunpack.c.l.b16 %v310
      %v1116 = vunpack.c.h.b16 %v310
      %v1117 = vunpack.c.l.b16 %v311
      %v1118 = vunpack.c.h.b16 %v311
      %v1119 = vunpack.c.l.b16 %v312
      %v1120 = vunpack.c.h.b16 %v312
      %v1121 = vunpack.c.l.b16 %v313
      %v1122 = vunpack.c.h.b16 %v313
      %v1123 = vunpack.c.l.b16 %v314
      %v1124 = vunpack.c.h.b16 %v314
      %v1125 = vunpack.c.l.b16 %v315
      %v1126 = vunpack.c.h.b16 %v315
      %v1127 = vunpack.c.l.b16 %v316
      %v1128 = vunpack.c.h.b16 %v316
      %v1129 = vunpack.c.l.b16 %v317
      %v1130 = vunpack.c.h.b16 %v317
      %v1131 = vunpack.c.l.b16 %v318
      %v1132 = vunpack.c.h.b16 %v318
      %v1133 = vunpack.c.l.b16 %v319
      %v1134 = vunpack.c.h.b16 %v319
      %v1135 = vunpack.c.l.b16 %v320
      %v1136 = vunpack.c.h.b16 %v320
      %v1137 = vpack.c.b16 %v1017, %v1009
      %v1138 = vpack.c.b16 %v1018, %v1010
      %v1139 = vpack.c.b16 %v1019, %v1011
      %v1140 = vpack.c.b16 %v1020, %v1012
      %v1141 = vpack.c.b16 %v1021, %v1013
      %v1142 = vpack.c.b16 %v1022, %v1014
      %v1143 = vpack.c.b16 %v1023, %v1015
      %v1144 = vpack.c.b16 %v1024, %v1016
      %v1145 = vpack.c.b16 %v1033, %v1025
      %v1146 = vpack.c.b16 %v1034, %v1026
      %v1147 = vpack.c.b16 %v1035, %v1027
      %v1148 = vpack.c.b16 %v1036, %v1028
      %v1149 = vpack.c.b16 %v1037, %v1029
      %v1150 = vpack.c.b16 %v1038, %v1030
      %v1151 = vpack.c.b16 %v1039, %v1031
      %v1152 = vpack.c.b16 %v1040, %v1032
      %v1153 = vpack.c.b16 %v1049, %v1041
      %v1154 = vpack.c.b16 %v1050, %v1042
      %v1155 = vpack.c.b16 %v1051, %v1043
      %v1156 = vpack.c.b16 %v1052, %v1044
      %v1157 = vpack.c.b16 %v1053, %v1045
      %v1158 = vpack.c.b16 %v1054, %v1046
      %v1159 = vpack.c.b16 %v1055, %v1047
      %v1160 = vpack.c.b16 %v1056, %v1048
      %v1161 = vpack.c.b16 %v1065, %v1057
      %v1162 = vpack.c.b16 %v1066, %v1058
      %v1163 = vpack.c.b16 %v1067, %v1059
      %v1164 = vpack.c.b16 %v1068, %v1060
      %v1165 = vpack.c.b16 %v1069, %v1061
      %v1166 = vpack.c.b16 %v1070, %v1062
      %v1167 = vpack.c.b16 %v1071, %v1063
      %v1168 = vpack.c.b16 %v1072, %v1064
      %v1169 = vpack.c.b16 %v1081, %v1073
      %v1170 = vpack.c.b16 %v1082, %v1074
      %v1171 = vpack.c.b16 %v1083, %v1075
      %v1172 = vpack.c.b16 %v1084, %v1076
      %v1173 = vpack.c.b16 %v1085, %v1077
      %v1174 = vpack.c.b16 %v1086, %v1078
      %v1175 = vpack.c.b16 %v1087, %v1079
      %v1176 = vpack.c.b16 %v1088, %v1080
      %v1177 = vpack.c.b16 %v1097, %v1089
      %v1178 = vpack.c.b16 %v1098, %v1090
      %v1179 = vpack.c.b16 %v1099, %v1091
      %v1180 = vpack.c.b16 %v1100, %v1092
      %v1181 = vpack.c.b16 %v1101, %v1093
      %v1182 = vpack.c.b16 %v1102, %v1094
      %v1183 = vpack.c.b16 %v1103, %v1095
      %v1184 = vpack.c.b16 %v1104, %v1096
      %v1185 = vpack.c.b16 %v1113, %v1105
      %v1186 = vpack.c.b16 %v1114, %v1106
      %v1187 = vpack.c.b16 %v1115, %v1107
      %v1188 = vpack.c.b16 %v1116, %v1108
      %v1189 = vpack.c.b16 %v1117, %v1109
      %v1190 = vpack.c.b16 %v1118, %v1110
      %v1191 = vpack.c.b16 %v1119, %v1111
      %v1192 = vpack.c.b16 %v1120, %v1112
      %v1193 = vpack.c.b16 %v1129, %v1121
      %v1194 = vpack.c.b16 %v1130, %v1122
      %v1195 = vpack.c.b16 %v1131, %v1123
      %v1196 = vpack.c.b16 %v1132, %v1124
      %v1197 = vpack.c.b16 %v1133, %v1125
      %v1198 = vpack.c.b16 %v1134, %v1126
      %v1199 = vpack.c.b16 %v1135, %v1127
      %v1200 = vpack.c.b16 %v1136, %v1128
      %1265 = vmatprep.subr.bf16.mxu0 %v1138
      %1266 = vmatpush1.bf16.msra.mxu0 %v1137
      %1267 = vmatprep.subr.bf16.mxu0 %v1146
      %1268 = vmatpush1.bf16.msra.mxu0 %v1145
      %1269 = vmatprep.subr.bf16.mxu0 %v1154
      %1270 = vmatpush1.bf16.msra.mxu0 %v1153
      %1271 = vmatprep.subr.bf16.mxu0 %v1162
      %1272 = vmatpush1.bf16.msra.mxu0 %v1161
      %1273 = vmatprep.subr.bf16.mxu0 %v1170
      %1274 = vmatpush1.bf16.msra.mxu0 %v1169
      %1275 = vmatprep.subr.bf16.mxu0 %v1178
      %1276 = vmatpush1.bf16.msra.mxu0 %v1177
      %1277 = vmatprep.subr.bf16.mxu0 %v1186
      %1278 = vmatpush1.bf16.msra.mxu0 %v1185
      %1279 = vmatprep.subr.bf16.mxu0 %v1194
      %1280 = vmatpush1.bf16.msra.mxu0 %v1193
      %1281 = vmatprep.subr.bf16.mxu0 0
      %1282 = vmatpush1.bf16.msra.mxu0 0
      %1283 = vmatprep.subr.bf16.mxu0 0
      %1284 = vmatpush1.bf16.msra.mxu0 0
      %1285 = vmatprep.subr.bf16.mxu0 0
      %1286 = vmatpush1.bf16.msra.mxu0 0
      %1287 = vmatprep.subr.bf16.mxu0 0
      %1288 = vmatpush1.bf16.msra.mxu0 0
      %1289 = vmatprep.subr.bf16.mxu0 0
      %1290 = vmatpush1.bf16.msra.mxu0 0
      %1291 = vmatprep.subr.bf16.mxu0 0
      %1292 = vmatpush1.bf16.msra.mxu0 0
      %1293 = vmatprep.subr.bf16.mxu0 0
      %1294 = vmatpush1.bf16.msra.mxu0 0
      %1295 = vmatprep.subr.bf16.mxu0 0
      %1296 = vmatpush1.bf16.msra.mxu0 0
      %1297 = vmatprep.mubr.bf16.mxu0 0
      %1298 = vmatmul.mubr.bf16.gmra.mrb[0].mxu0 %v941
      %v1299 = vpop.f32.mrb[0].mxu0
      %v1300 = vadd.f32 %v756, %v1299
      %v1301 = vpop.f32.mrb[0].mxu0
      %v1302 = vadd.f32 %v758, %v1301
      %v1303 = vpop.f32.mrb[0].mxu0
      %v1304 = vadd.f32 %v760, %v1303
      %v1305 = vpop.f32.mrb[0].mxu0
      %v1306 = vadd.f32 %v762, %v1305
      %1307 = vmatprep.mubr.bf16.mxu0 0
      %1308 = vmatmul.mubr.bf16.gmra.mrb[0].mxu0 %v942
      %v1309 = vpop.f32.mrb[0].mxu0
      %v1310 = vadd.f32 %v766, %v1309
      %v1311 = vpop.f32.mrb[0].mxu0
      %v1312 = vadd.f32 %v768, %v1311
      %v1313 = vpop.f32.mrb[0].mxu0
      %v1314 = vadd.f32 %v770, %v1313
      %v1315 = vpop.f32.mrb[0].mxu0
      %v1316 = vadd.f32 %v772, %v1315
      %1317 = vdwg.mxu0
      %1318 = vmatprep.subr.bf16.mxu0 %v1140
      %1319 = vmatpush1.bf16.msra.mxu0 %v1139
      %1320 = vmatprep.subr.bf16.mxu0 %v1148
      %1321 = vmatpush1.bf16.msra.mxu0 %v1147
      %1322 = vmatprep.subr.bf16.mxu0 %v1156
      %1323 = vmatpush1.bf16.msra.mxu0 %v1155
      %1324 = vmatprep.subr.bf16.mxu0 %v1164
      %1325 = vmatpush1.bf16.msra.mxu0 %v1163
      %1326 = vmatprep.subr.bf16.mxu0 %v1172
      %1327 = vmatpush1.bf16.msra.mxu0 %v1171
      %1328 = vmatprep.subr.bf16.mxu0 %v1180
      %1329 = vmatpush1.bf16.msra.mxu0 %v1179
      %1330 = vmatprep.subr.bf16.mxu0 %v1188
      %1331 = vmatpush1.bf16.msra.mxu0 %v1187
      %1332 = vmatprep.subr.bf16.mxu0 %v1196
      %1333 = vmatpush1.bf16.msra.mxu0 %v1195
      %1334 = vmatprep.subr.bf16.mxu0 0
      %1335 = vmatpush1.bf16.msra.mxu0 0
      %1336 = vmatprep.subr.bf16.mxu0 0
      %1337 = vmatpush1.bf16.msra.mxu0 0
      %1338 = vmatprep.subr.bf16.mxu0 0
      %1339 = vmatpush1.bf16.msra.mxu0 0
      %1340 = vmatprep.subr.bf16.mxu0 0
      %1341 = vmatpush1.bf16.msra.mxu0 0
      %1342 = vmatprep.subr.bf16.mxu0 0
      %1343 = vmatpush1.bf16.msra.mxu0 0
      %1344 = vmatprep.subr.bf16.mxu0 0
      %1345 = vmatpush1.bf16.msra.mxu0 0
      %1346 = vmatprep.subr.bf16.mxu0 0
      %1347 = vmatpush1.bf16.msra.mxu0 0
      %1348 = vmatprep.subr.bf16.mxu0 0
      %1349 = vmatpush1.bf16.msra.mxu0 0
      %1350 = vmatprep.mubr.bf16.mxu0 0
      %1351 = vmatmul.mubr.bf16.gmra.mrb[0].mxu0 %v941
      %v1352 = vpop.f32.mrb[0].mxu0
      %v1353 = vadd.f32 %v809, %v1352
      %v1354 = vpop.f32.mrb[0].mxu0
      %v1355 = vadd.f32 %v811, %v1354
      %v1356 = vpop.f32.mrb[0].mxu0
      %v1357 = vadd.f32 %v813, %v1356
      %v1358 = vpop.f32.mrb[0].mxu0
      %v1359 = vadd.f32 %v815, %v1358
      %1360 = vmatprep.mubr.bf16.mxu0 0
      %1361 = vmatmul.mubr.bf16.gmra.mrb[0].mxu0 %v942
      %v1362 = vpop.f32.mrb[0].mxu0
      %v1363 = vadd.f32 %v819, %v1362
      %v1364 = vpop.f32.mrb[0].mxu0
      %v1365 = vadd.f32 %v821, %v1364
      %v1366 = vpop.f32.mrb[0].mxu0
      %v1367 = vadd.f32 %v823, %v1366
      %v1368 = vpop.f32.mrb[0].mxu0
      %v1369 = vadd.f32 %v825, %v1368
      %1370 = vdwg.mxu0
      %1371 = vmatprep.subr.bf16.mxu0 %v1142
      %1372 = vmatpush1.bf16.msra.mxu0 %v1141
      %1373 = vmatprep.subr.bf16.mxu0 %v1150
      %1374 = vmatpush1.bf16.msra.mxu0 %v1149
      %1375 = vmatprep.subr.bf16.mxu0 %v1158
      %1376 = vmatpush1.bf16.msra.mxu0 %v1157
      %1377 = vmatprep.subr.bf16.mxu0 %v1166
      %1378 = vmatpush1.bf16.msra.mxu0 %v1165
      %1379 = vmatprep.subr.bf16.mxu0 %v1174
      %1380 = vmatpush1.bf16.msra.mxu0 %v1173
      %1381 = vmatprep.subr.bf16.mxu0 %v1182
      %1382 = vmatpush1.bf16.msra.mxu0 %v1181
      %1383 = vmatprep.subr.bf16.mxu0 %v1190
      %1384 = vmatpush1.bf16.msra.mxu0 %v1189
      %1385 = vmatprep.subr.bf16.mxu0 %v1198
      %1386 = vmatpush1.bf16.msra.mxu0 %v1197
      %1387 = vmatprep.subr.bf16.mxu0 0
      %1388 = vmatpush1.bf16.msra.mxu0 0
      %1389 = vmatprep.subr.bf16.mxu0 0
      %1390 = vmatpush1.bf16.msra.mxu0 0
      %1391 = vmatprep.subr.bf16.mxu0 0
      %1392 = vmatpush1.bf16.msra.mxu0 0
      %1393 = vmatprep.subr.bf16.mxu0 0
      %1394 = vmatpush1.bf16.msra.mxu0 0
      %1395 = vmatprep.subr.bf16.mxu0 0
      %1396 = vmatpush1.bf16.msra.mxu0 0
      %1397 = vmatprep.subr.bf16.mxu0 0
      %1398 = vmatpush1.bf16.msra.mxu0 0
      %1399 = vmatprep.subr.bf16.mxu0 0
      %1400 = vmatpush1.bf16.msra.mxu0 0
      %1401 = vmatprep.subr.bf16.mxu0 0
      %1402 = vmatpush1.bf16.msra.mxu0 0
      %1403 = vmatprep.mubr.bf16.mxu0 0
      %1404 = vmatmul.mubr.bf16.gmra.mrb[0].mxu0 %v941
      %v1405 = vpop.f32.mrb[0].mxu0
      %v1406 = vadd.f32 %v862, %v1405
      %v1407 = vpop.f32.mrb[0].mxu0
      %v1408 = vadd.f32 %v864, %v1407
      %v1409 = vpop.f32.mrb[0].mxu0
      %v1410 = vadd.f32 %v866, %v1409
      %v1411 = vpop.f32.mrb[0].mxu0
      %v1412 = vadd.f32 %v868, %v1411
      %1413 = vmatprep.mubr.bf16.mxu0 0
      %1414 = vmatmul.mubr.bf16.gmra.mrb[0].mxu0 %v942
      %v1415 = vpop.f32.mrb[0].mxu0
      %v1416 = vadd.f32 %v872, %v1415
      %v1417 = vpop.f32.mrb[0].mxu0
      %v1418 = vadd.f32 %v874, %v1417
      %v1419 = vpop.f32.mrb[0].mxu0
      %v1420 = vadd.f32 %v876, %v1419
      %v1421 = vpop.f32.mrb[0].mxu0
      %v1422 = vadd.f32 %v878, %v1421
      %1423 = vdwg.mxu0
      %1424 = vmatprep.subr.bf16.mxu0 %v1144
      %1425 = vmatpush1.bf16.msra.mxu0 %v1143
      %1426 = vmatprep.subr.bf16.mxu0 %v1152
      %1427 = vmatpush1.bf16.msra.mxu0 %v1151
      %1428 = vmatprep.subr.bf16.mxu0 %v1160
      %1429 = vmatpush1.bf16.msra.mxu0 %v1159
      %1430 = vmatprep.subr.bf16.mxu0 %v1168
      %1431 = vmatpush1.bf16.msra.mxu0 %v1167
      %1432 = vmatprep.subr.bf16.mxu0 %v1176
      %1433 = vmatpush1.bf16.msra.mxu0 %v1175
      %1434 = vmatprep.subr.bf16.mxu0 %v1184
      %1435 = vmatpush1.bf16.msra.mxu0 %v1183
      %1436 = vmatprep.subr.bf16.mxu0 %v1192
      %1437 = vmatpush1.bf16.msra.mxu0 %v1191
      %1438 = vmatprep.subr.bf16.mxu0 %v1200
      %1439 = vmatpush1.bf16.msra.mxu0 %v1199
      %1440 = vmatprep.subr.bf16.mxu0 0
      %1441 = vmatpush1.bf16.msra.mxu0 0
      %1442 = vmatprep.subr.bf16.mxu0 0
      %1443 = vmatpush1.bf16.msra.mxu0 0
      %1444 = vmatprep.subr.bf16.mxu0 0
      %1445 = vmatpush1.bf16.msra.mxu0 0
      %1446 = vmatprep.subr.bf16.mxu0 0
      %1447 = vmatpush1.bf16.msra.mxu0 0
      %1448 = vmatprep.subr.bf16.mxu0 0
      %1449 = vmatpush1.bf16.msra.mxu0 0
      %1450 = vmatprep.subr.bf16.mxu0 0
      %1451 = vmatpush1.bf16.msra.mxu0 0
      %1452 = vmatprep.subr.bf16.mxu0 0
      %1453 = vmatpush1.bf16.msra.mxu0 0
      %1454 = vmatprep.subr.bf16.mxu0 0
      %1455 = vmatpush1.bf16.msra.mxu0 0
      %1456 = vmatprep.mubr.bf16.mxu0 0
      %1457 = vmatmul.mubr.bf16.gmra.mrb[0].mxu0 %v941
      %v1458 = vpop.f32.mrb[0].mxu0
      %v1459 = vadd.f32 %v915, %v1458
      %v1460 = vpop.f32.mrb[0].mxu0
      %v1461 = vadd.f32 %v917, %v1460
      %v1462 = vpop.f32.mrb[0].mxu0
      %v1463 = vadd.f32 %v919, %v1462
      %v1464 = vpop.f32.mrb[0].mxu0
      %v1465 = vadd.f32 %v921, %v1464
      %1466 = vmatprep.mubr.bf16.mxu0 0
      %1467 = vmatmul.mubr.bf16.gmra.mrb[0].mxu0 %v942
      %v1468 = vpop.f32.mrb[0].mxu0
      %v1469 = vadd.f32 %v925, %v1468
      %v1470 = vpop.f32.mrb[0].mxu0
      %v1471 = vadd.f32 %v927, %v1470
      %v1472 = vpop.f32.mrb[0].mxu0
      %v1473 = vadd.f32 %v929, %v1472
      %v1474 = vpop.f32.mrb[0].mxu0
      %v1475 = vadd.f32 %v931, %v1474
      %1476 = vdwg.mxu0
      %v1477 = vld [vmem:[%s4] sm:$0xff]
      %v1479 = vlaneseq
      %v1480 = vshrl.u32 %v1479, 7
      %v1481 = vsub.s32 0, %v1480
      %v1482 = vrot.slane %v1477, %v1481
      %v1483 = vlaneseq
      %v1484 = vshrl.u32 %v1483, 7
      %v1485 = vsub.s32 1, %v1484
      %v1486 = vrot.slane %v1477, %v1485
      %v1487 = vlaneseq
      %v1488 = vshrl.u32 %v1487, 7
      %v1489 = vsub.s32 2, %v1488
      %v1490 = vrot.slane %v1477, %v1489
      %v1491 = vlaneseq
      %v1492 = vshrl.u32 %v1491, 7
      %v1493 = vsub.s32 3, %v1492
      %v1494 = vrot.slane %v1477, %v1493
      %v1495 = vlaneseq
      %v1496 = vshrl.u32 %v1495, 7
      %v1497 = vsub.s32 4, %v1496
      %v1498 = vrot.slane %v1477, %v1497
      %v1499 = vlaneseq
      %v1500 = vshrl.u32 %v1499, 7
      %v1501 = vsub.s32 5, %v1500
      %v1502 = vrot.slane %v1477, %v1501
      %v1503 = vlaneseq
      %v1504 = vshrl.u32 %v1503, 7
      %v1505 = vsub.s32 6, %v1504
      %v1506 = vrot.slane %v1477, %v1505
      %v1507 = vlaneseq
      %v1508 = vshrl.u32 %v1507, 7
      %v1509 = vsub.s32 7, %v1508
      %v1510 = vrot.slane %v1477, %v1509
      %v1519 = vadd.f32 %v1300, %v1482
      %v1520 = vadd.f32 %v1302, %v1486
      %v1521 = vadd.f32 %v1353, %v1490
      %v1522 = vadd.f32 %v1355, %v1494
      %v1523 = vadd.f32 %v1406, %v1498
      %v1524 = vadd.f32 %v1408, %v1502
      %v1525 = vadd.f32 %v1459, %v1506
      %v1526 = vadd.f32 %v1461, %v1510
      %v1527 = vadd.f32 %v1304, %v1482
      %v1528 = vadd.f32 %v1306, %v1486
      %v1529 = vadd.f32 %v1357, %v1490
      %v1530 = vadd.f32 %v1359, %v1494
      %v1531 = vadd.f32 %v1410, %v1498
      %v1532 = vadd.f32 %v1412, %v1502
      %v1533 = vadd.f32 %v1463, %v1506
      %v1534 = vadd.f32 %v1465, %v1510
      %v1535 = vadd.f32 %v1310, %v1482
      %v1536 = vadd.f32 %v1312, %v1486
      %v1537 = vadd.f32 %v1363, %v1490
      %v1538 = vadd.f32 %v1365, %v1494
      %v1539 = vadd.f32 %v1416, %v1498
      %v1540 = vadd.f32 %v1418, %v1502
      %v1541 = vadd.f32 %v1469, %v1506
      %v1542 = vadd.f32 %v1471, %v1510
      %v1543 = vadd.f32 %v1314, %v1482
      %v1544 = vadd.f32 %v1316, %v1486
      %v1545 = vadd.f32 %v1367, %v1490
      %v1546 = vadd.f32 %v1369, %v1494
      %v1547 = vadd.f32 %v1420, %v1498
      %v1548 = vadd.f32 %v1422, %v1502
      %v1549 = vadd.f32 %v1473, %v1506
      %v1550 = vadd.f32 %v1475, %v1510
      %v1551 = vpack.c.bf16 %v1527, %v1519
      %v1552 = vpack.c.bf16 %v1528, %v1520
      %v1553 = vpack.c.bf16 %v1529, %v1521
      %v1554 = vpack.c.bf16 %v1530, %v1522
      %v1555 = vpack.c.bf16 %v1531, %v1523
      %v1556 = vpack.c.bf16 %v1532, %v1524
      %v1557 = vpack.c.bf16 %v1533, %v1525
      %v1558 = vpack.c.bf16 %v1534, %v1526
      %v1559 = vpack.c.bf16 %v1543, %v1535
      %v1560 = vpack.c.bf16 %v1544, %v1536
      %v1561 = vpack.c.bf16 %v1545, %v1537
      %v1562 = vpack.c.bf16 %v1546, %v1538
      %v1563 = vpack.c.bf16 %v1547, %v1539
      %v1564 = vpack.c.bf16 %v1548, %v1540
      %v1565 = vpack.c.bf16 %v1549, %v1541
      %v1566 = vpack.c.bf16 %v1550, %v1542
      %v1583 = vunpack.c.l.b16 %v1551
      %v1584 = vunpack.c.l.b16 %v1552
      %v1585 = vunpack.c.l.b16 %v1553
      %v1586 = vunpack.c.l.b16 %v1554
      %v1587 = vunpack.c.l.b16 %v1555
      %v1588 = vunpack.c.l.b16 %v1556
      %v1589 = vunpack.c.l.b16 %v1557
      %v1590 = vunpack.c.l.b16 %v1558
      %v1591 = vunpack.c.h.b16 %v1551
      %v1592 = vunpack.c.h.b16 %v1552
      %v1593 = vunpack.c.h.b16 %v1553
      %v1594 = vunpack.c.h.b16 %v1554
      %v1595 = vunpack.c.h.b16 %v1555
      %v1596 = vunpack.c.h.b16 %v1556
      %v1597 = vunpack.c.h.b16 %v1557
      %v1598 = vunpack.c.h.b16 %v1558
      %v1599 = vunpack.c.l.b16 %v1559
      %v1600 = vunpack.c.l.b16 %v1560
      %v1601 = vunpack.c.l.b16 %v1561
      %v1602 = vunpack.c.l.b16 %v1562
      %v1603 = vunpack.c.l.b16 %v1563
      %v1604 = vunpack.c.l.b16 %v1564
      %v1605 = vunpack.c.l.b16 %v1565
      %v1606 = vunpack.c.l.b16 %v1566
      %v1607 = vunpack.c.h.b16 %v1559
      %v1608 = vunpack.c.h.b16 %v1560
      %v1609 = vunpack.c.h.b16 %v1561
      %v1610 = vunpack.c.h.b16 %v1562
      %v1611 = vunpack.c.h.b16 %v1563
      %v1612 = vunpack.c.h.b16 %v1564
      %v1613 = vunpack.c.h.b16 %v1565
      %v1614 = vunpack.c.h.b16 %v1566
      %v1615 = vpack.c.b16 %v1584, %v1583
      %v1616 = vpack.c.b16 %v1586, %v1585
      %v1617 = vpack.c.b16 %v1588, %v1587
      %v1618 = vpack.c.b16 %v1590, %v1589
      %v1619 = vpack.c.b16 %v1592, %v1591
      %v1620 = vpack.c.b16 %v1594, %v1593
      %v1621 = vpack.c.b16 %v1596, %v1595
      %v1622 = vpack.c.b16 %v1598, %v1597
      %v1623 = vpack.c.b16 %v1600, %v1599
      %v1624 = vpack.c.b16 %v1602, %v1601
      %v1625 = vpack.c.b16 %v1604, %v1603
      %v1626 = vpack.c.b16 %v1606, %v1605
      %v1627 = vpack.c.b16 %v1608, %v1607
      %v1628 = vpack.c.b16 %v1610, %v1609
      %v1629 = vpack.c.b16 %v1612, %v1611
      %v1630 = vpack.c.b16 %v1614, %v1613
      %1647 = vst [vmem:[%s250] sm:$0xff] %v1615
      %1648 = vst [vmem:[%s250 + $0x8] sm:$0xff] %v1616
      %1649 = vst [vmem:[%s250 + $0x10] sm:$0xff] %v1617
      %1650 = vst [vmem:[%s250 + $0x18] sm:$0xff] %v1618
      %1651 = vst [vmem:[%s250 + $0x20] sm:$0xff] %v1619
      %1652 = vst [vmem:[%s250 + $0x28] sm:$0xff] %v1620
      %1653 = vst [vmem:[%s250 + $0x30] sm:$0xff] %v1621
      %1654 = vst [vmem:[%s250 + $0x38] sm:$0xff] %v1622
      %1655 = vst [vmem:[%s250 + $0x40] sm:$0xff] %v1623
      %1656 = vst [vmem:[%s250 + $0x48] sm:$0xff] %v1624
      %1657 = vst [vmem:[%s250 + $0x50] sm:$0xff] %v1625
      %1658 = vst [vmem:[%s250 + $0x58] sm:$0xff] %v1626
      %1659 = vst [vmem:[%s250 + $0x60] sm:$0xff] %v1627
      %1660 = vst [vmem:[%s250 + $0x68] sm:$0xff] %v1628
      %1661 = vst [vmem:[%s250 + $0x70] sm:$0xff] %v1629
      %1662 = vst [vmem:[%s250 + $0x78] sm:$0xff] %v1630
      %s1663 = smul.u32 4, %s16
      %p1664 = scmp.lt.s32.totalorder %s1663, 7
      %s1665 = scalar_select %p1664, %s1663, 7
      %s1666 = smul.addr %s1665, 8
      %s1667 = smul.addr %s1666, 4
      %s1668 = scalar_lea.vmem %s5, %s1667
      // Predicated region
      $region41: #{lstm_feature_extractor.7} parent=39 // pred_check
        %p1669 = pneg %p149
      $region42: #{lstm_feature_extractor.7} parent=39 // pred_check_branch
        %1671 = sbr.rel (%p1669) target = $region44
      $region43: #{lstm_feature_extractor.7} parent=39 // pred_region
        %s1672 = smul.u32 4, %s16
      $region44: #{lstm_feature_extractor.7} parent=39 // pred_fallthru
        _
    $region40: #{lstm_feature_extractor.7} parent=5 // pred_fallthru
      _
    %p1673 = scmp.le.s32.totalorder 2, %s11
    // Predicated region
    $region45: #{lstm_feature_extractor.7} parent=5 // pred_check
      %p1674 = pneg %p1673
    $region46: #{lstm_feature_extractor.7} parent=5 // pred_check_branch
      %1676 = sbr.rel (%p1674) target = $region48
    $region47: #{lstm_feature_extractor.7} parent=5 // pred_region
      %s1677 = ssub.s32 %s11, 2
      // Predicated region
      $region49: #{lstm_feature_extractor.7} parent=47 // pred_check
        %p1678 = pneg %p155
      $region50: #{lstm_feature_extractor.7} parent=47 // pred_check_branch
        %1680 = sbr.rel (%p1678) target = $region52
      $region51: #{lstm_feature_extractor.7} parent=47 // pred_region
        %s1681 = smul.u32 4, %s17
        %p1682 = scmp.lt.s32.totalorder %s1681, 7
        %s1683 = scalar_select %p1682, %s1681, 7
        %s1684 = smul.addr %s1683, 8
        %s1685 = smul.addr %s1684, 4
        %s1686 = scalar_lea.vmem %s5, %s1685
      $region52: #{lstm_feature_extractor.7} parent=47 // pred_fallthru
        _
    $region48: #{lstm_feature_extractor.7} parent=5 // pred_fallthru
      _
  $region6: #{lstm_feature_extractor.7} parent=0 // loop_footer
    %s15 = sadd.s32 1, %s11
  $region7: #{lstm_feature_extractor.7} parent=0 // loop_footer_branch
    %10 = sbr.rel target = $region3
  $region8: #{lstm_feature_extractor.7} parent=0 // loop_exit
    _

// kernel: lstm_feature_extractor.9
$region0: #{lstm_feature_extractor.9}
  #allocation0 [shape = 'u32[]', space=smem, size = 0x4, offset = 0x4, fixed_abs, tag = 'smem constant byte address 0x4 - core index']
  #allocation1 [shape = 'u32[144,128]{1,0:T(1,128)}', space=vmem, size = 0x12000, scoped, tag = 'internal scratch']
  %s0 = inlined_call_operand.vmem [shape: bf16[64,128], index: 0, kind: input, shape index: {}]
  %s1 = inlined_call_operand.vmem [shape: bf16[64,128], index: 1, kind: input, shape index: {}]
  %s2 = inlined_call_operand.vmem [shape: bf16[128,16], index: 2, kind: input, shape index: {}]
  %s3 = inlined_call_operand.vmem [shape: bf16[128,16], index: 3, kind: input, shape index: {}]
  %s4 = inlined_call_operand.vmem [shape: f32[1,16], index: 4, kind: input, shape index: {}]
  %s5 = inlined_call_operand.vmem [shape: f32[64,16], index: 5, kind: output, shape index: {}]
  %s6 = sld [smem:[#allocation0]]
  $region53: #{lstm_feature_extractor.9} parent=0
    _
  %s8 = ssub.s32 1, %s6
  %s9 = scalar_select 0, %s8, %s6
  loop: start=0, step=1, limit=4
  $region2: #{lstm_feature_extractor.9} parent=0 // loop_pre_header
    _
  $region3: #{lstm_feature_extractor.9} parent=0 // loop_header
    %s11 = sphi 0, %s15
    %p12 = scmp.ge.s32.totalorder %s11, 4
    %s21 = sphi 0, %s23
    %s24 = sphi 0, %s21
    %s25 = sphi 0, %s24
    %s41 = sphi 0, %s25
    %s47 = sphi 0, %s49
    %s50 = sphi 0, %s47
    %s51 = sphi 0, %s50
    %s67 = sphi 0, %s51
    %s71 = sphi 0, %s71
    %s73 = sphi 0, %s71
    %s74 = sphi 0, %s73
    %s88 = sphi 0, %s74
    %s92 = sphi 0, %s92
    %s94 = sphi 0, %s92
    %s95 = sphi 0, %s94
    %s109 = sphi 0, %s95
    %s113 = sphi 0, %s113
    %s115 = sphi 0, %s113
    %s116 = sphi 0, %s115
    %s130 = sphi 0, %s116
    %s136 = sphi 0, %s138
    %s139 = sphi 0, %s136
    %s140 = sphi 0, %s139
    %s156 = sphi 0, %s140
  $region4: #{lstm_feature_extractor.9} parent=0 // loop_header_branch
    %14 = sbr.rel (%p12) target = $region8
  $region5: #{lstm_feature_extractor.9} parent=0 // loop_body
    %s16 = ssub.s32 %s11, 1
    %s17 = ssub.s32 %s11, 2
    %s18 = sadd.s32 %s11, 1
    %s19 = ssub.s32 %s11, %s18
    %p20 = scmp.eq.s32.totalorder %s19, 0
    %s22 = sadd.s32 %s21, 1
    %s23 = scalar_select %p20, %s21, %s22
    %p26 = pneg %p20
    %p27 = scmp.eq.s32.totalorder %s11, 1
    %p28 = por %p26, %p27
    %p29 = scmp.ne.s32.totalorder %s21, %s24
    %p30 = scmp.eq.s32.totalorder %s11, 0
    %p31 = por %p29, %p30
    %p32 = scmp.ne.s32.totalorder %s21, %s24
    %p33 = scmp.eq.s32.totalorder %s16, 1
    %p34 = por %p32, %p33
    %p35 = scmp.ne.s32.totalorder %s24, %s25
    %p36 = scmp.eq.s32.totalorder %s16, 0
    %p37 = por %p35, %p36
    %p38 = scmp.ne.s32.totalorder %s24, %s25
    %p39 = scmp.eq.s32.totalorder %s17, 1
    %p40 = por %p38, %p39
    %p42 = scmp.ne.s32.totalorder %s25, %s41
    %p43 = scmp.eq.s32.totalorder %s17, 0
    %p44 = por %p42, %p43
    %s45 = ssub.s32 %s11, %s18
    %p46 = scmp.eq.s32.totalorder %s45, 0
    %s48 = sadd.s32 %s47, 1
    %s49 = scalar_select %p46, %s47, %s48
    %p52 = pneg %p46
    %p53 = scmp.eq.s32.totalorder %s11, 1
    %p54 = por %p52, %p53
    %p55 = scmp.ne.s32.totalorder %s47, %s50
    %p56 = scmp.eq.s32.totalorder %s11, 0
    %p57 = por %p55, %p56
    %p58 = scmp.ne.s32.totalorder %s47, %s50
    %p59 = scmp.eq.s32.totalorder %s16, 1
    %p60 = por %p58, %p59
    %p61 = scmp.ne.s32.totalorder %s50, %s51
    %p62 = scmp.eq.s32.totalorder %s16, 0
    %p63 = por %p61, %p62
    %p64 = scmp.ne.s32.totalorder %s50, %s51
    %p65 = scmp.eq.s32.totalorder %s17, 1
    %p66 = por %p64, %p65
    %p68 = scmp.ne.s32.totalorder %s51, %s67
    %p69 = scmp.eq.s32.totalorder %s17, 0
    %p70 = por %p68, %p69
    %s72 = sadd.s32 %s71, 1
    %p75 = scmp.eq.s32.totalorder %s11, 1
    %p76 = scmp.ne.s32.totalorder %s71, %s73
    %p77 = scmp.eq.s32.totalorder %s11, 0
    %p78 = por %p76, %p77
    %p79 = scmp.ne.s32.totalorder %s71, %s73
    %p80 = scmp.eq.s32.totalorder %s16, 1
    %p81 = por %p79, %p80
    %p82 = scmp.ne.s32.totalorder %s73, %s74
    %p83 = scmp.eq.s32.totalorder %s16, 0
    %p84 = por %p82, %p83
    %p85 = scmp.ne.s32.totalorder %s73, %s74
    %p86 = scmp.eq.s32.totalorder %s17, 1
    %p87 = por %p85, %p86
    %p89 = scmp.ne.s32.totalorder %s74, %s88
    %p90 = scmp.eq.s32.totalorder %s17, 0
    %p91 = por %p89, %p90
    %s93 = sadd.s32 %s92, 1
    %p96 = scmp.eq.s32.totalorder %s11, 1
    %p97 = scmp.ne.s32.totalorder %s92, %s94
    %p98 = scmp.eq.s32.totalorder %s11, 0
    %p99 = por %p97, %p98
    %p100 = scmp.ne.s32.totalorder %s92, %s94
    %p101 = scmp.eq.s32.totalorder %s16, 1
    %p102 = por %p100, %p101
    %p103 = scmp.ne.s32.totalorder %s94, %s95
    %p104 = scmp.eq.s32.totalorder %s16, 0
    %p105 = por %p103, %p104
    %p106 = scmp.ne.s32.totalorder %s94, %s95
    %p107 = scmp.eq.s32.totalorder %s17, 1
    %p108 = por %p106, %p107
    %p110 = scmp.ne.s32.totalorder %s95, %s109
    %p111 = scmp.eq.s32.totalorder %s17, 0
    %p112 = por %p110, %p111
    %s114 = sadd.s32 %s113, 1
    %p117 = scmp.eq.s32.totalorder %s11, 1
    %p118 = scmp.ne.s32.totalorder %s113, %s115
    %p119 = scmp.eq.s32.totalorder %s11, 0
    %p120 = por %p118, %p119
    %p121 = scmp.ne.s32.totalorder %s113, %s115
    %p122 = scmp.eq.s32.totalorder %s16, 1
    %p123 = por %p121, %p122
    %p124 = scmp.ne.s32.totalorder %s115, %s116
    %p125 = scmp.eq.s32.totalorder %s16, 0
    %p126 = por %p124, %p125
    %p127 = scmp.ne.s32.totalorder %s115, %s116
    %p128 = scmp.eq.s32.totalorder %s17, 1
    %p129 = por %p127, %p128
    %p131 = scmp.ne.s32.totalorder %s116, %s130
    %p132 = scmp.eq.s32.totalorder %s17, 0
    %p133 = por %p131, %p132
    %s134 = ssub.s32 %s11, %s18
    %p135 = scmp.eq.s32.totalorder %s134, 0
    %s137 = sadd.s32 %s136, 1
    %s138 = scalar_select %p135, %s136, %s137
    %p141 = pneg %p135
    %p142 = scmp.eq.s32.totalorder %s11, 1
    %p143 = por %p141, %p142
    %p144 = scmp.ne.s32.totalorder %s136, %s139
    %p145 = scmp.eq.s32.totalorder %s11, 0
    %p146 = por %p144, %p145
    %p147 = scmp.ne.s32.totalorder %s136, %s139
    %p148 = scmp.eq.s32.totalorder %s16, 1
    %p149 = por %p147, %p148
    %p150 = scmp.ne.s32.totalorder %s139, %s140
    %p151 = scmp.eq.s32.totalorder %s16, 0
    %p152 = por %p150, %p151
    %p153 = scmp.ne.s32.totalorder %s139, %s140
    %p154 = scmp.eq.s32.totalorder %s17, 1
    %p155 = por %p153, %p154
    %p157 = scmp.ne.s32.totalorder %s140, %s156
    %p158 = scmp.eq.s32.totalorder %s17, 0
    %p159 = por %p157, %p158
    %p160 = scmp.le.s32.totalorder 1, %s11
    %p161 = scmp.lt.s32.totalorder %s11, 3
    %p162 = pnand %p160, %p161
    %p163 = pneg %p162
    // Predicated region
    $region9: #{lstm_feature_extractor.9} parent=5 // pred_check
      _
    $region10: #{lstm_feature_extractor.9} parent=5 // pred_check_branch
      %165 = sbr.rel (%p162) target = $region12
    $region11: #{lstm_feature_extractor.9} parent=5 // pred_region
      %s166 = ssub.s32 %s11, 1
      // Predicated region
      $region13: #{lstm_feature_extractor.9} parent=11 // pred_check
        %p167 = pneg %p84
      $region14: #{lstm_feature_extractor.9} parent=11 // pred_check_branch
        %169 = sbr.rel (%p167) target = $region16
      $region15: #{lstm_feature_extractor.9} parent=11 // pred_region
        _
      $region16: #{lstm_feature_extractor.9} parent=11 // pred_fallthru
        _
      // Predicated region
      $region17: #{lstm_feature_extractor.9} parent=11 // pred_check
        %p170 = pneg %p105
      $region18: #{lstm_feature_extractor.9} parent=11 // pred_check_branch
        %172 = sbr.rel (%p170) target = $region20
      $region19: #{lstm_feature_extractor.9} parent=11 // pred_region
        _
      $region20: #{lstm_feature_extractor.9} parent=11 // pred_fallthru
        _
      // Predicated region
      $region21: #{lstm_feature_extractor.9} parent=11 // pred_check
        %p173 = pneg %p126
      $region22: #{lstm_feature_extractor.9} parent=11 // pred_check_branch
        %175 = sbr.rel (%p173) target = $region24
      $region23: #{lstm_feature_extractor.9} parent=11 // pred_region
        _
      $region24: #{lstm_feature_extractor.9} parent=11 // pred_fallthru
        _
    $region12: #{lstm_feature_extractor.9} parent=5 // pred_fallthru
      _
    %p176 = scmp.lt.s32.totalorder %s11, 2
    // Predicated region
    $region25: #{lstm_feature_extractor.9} parent=5 // pred_check
      %p177 = pneg %p176
    $region26: #{lstm_feature_extractor.9} parent=5 // pred_check_branch
      %179 = sbr.rel (%p177) target = $region28
    $region27: #{lstm_feature_extractor.9} parent=5 // pred_region
      // Predicated region
      $region29: #{lstm_feature_extractor.9} parent=27 // pred_check
        %p180 = pneg %p31
      $region30: #{lstm_feature_extractor.9} parent=27 // pred_check_branch
        %182 = sbr.rel (%p180) target = $region32
      $region31: #{lstm_feature_extractor.9} parent=27 // pred_region
        %s183 = smul.u32 4, %s11
        %p184 = scmp.lt.s32.totalorder %s183, 7
        %s185 = scalar_select %p184, %s183, 7
        %s186 = smul.addr %s185, 4
        %s187 = scalar_lea.vmem %s0, %s186
        %s188 = smul.u32 4, %s11
      $region32: #{lstm_feature_extractor.9} parent=27 // pred_fallthru
        _
      // Predicated region
      $region33: #{lstm_feature_extractor.9} parent=27 // pred_check
        %p189 = pneg %p57
      $region34: #{lstm_feature_extractor.9} parent=27 // pred_check_branch
        %191 = sbr.rel (%p189) target = $region36
      $region35: #{lstm_feature_extractor.9} parent=27 // pred_region
        %s192 = smul.u32 4, %s11
        %p193 = scmp.lt.s32.totalorder %s192, 7
        %s194 = scalar_select %p193, %s192, 7
        %s195 = smul.addr %s194, 4
        %s196 = scalar_lea.vmem %s1, %s195
        %s197 = smul.u32 4, %s11
      $region36: #{lstm_feature_extractor.9} parent=27 // pred_fallthru
        _
    $region28: #{lstm_feature_extractor.9} parent=5 // pred_fallthru
      _
    %p198 = scmp.le.s32.totalorder 1, %s11
    %p199 = scmp.lt.s32.totalorder %s11, 3
    %p200 = pnand %p198, %p199
    %p201 = pneg %p200
    // Predicated region
    $region37: #{lstm_feature_extractor.9} parent=5 // pred_check
      _
    $region38: #{lstm_feature_extractor.9} parent=5 // pred_check_branch
      %203 = sbr.rel (%p200) target = $region40
    $region39: #{lstm_feature_extractor.9} parent=5 // pred_region
      %s204 = ssub.s32 %s11, 1
      %s205 = smul.u32 4, %s16
      %p206 = scmp.lt.s32.totalorder %s205, 7
      %s207 = scalar_select %p206, %s205, 7
      %s208 = smul.addr %s207, 4
      %s209 = scalar_lea.vmem %s0, %s208
      %p210 = pneg %p37
      %p211 = pneg %p34
      %s212 = smul.u32 4, %s16
      %p213 = scmp.lt.s32.totalorder %s212, 7
      %s214 = scalar_select %p213, %s212, 7
      %s215 = smul.addr %s214, 4
      %s216 = scalar_lea.vmem %s1, %s215
      %p217 = pneg %p63
      %p218 = pneg %p60
      %p219 = pneg %p84
      %p220 = pneg %p81
      %p221 = pneg %p105
      %p222 = pneg %p102
      %p223 = pneg %p126
      %p224 = pneg %p123
      %p225 = pneg %p152
      %p226 = pneg %p149
      %s227 = smul.u32 4, %s16
      %p228 = scmp.lt.s32.totalorder %s227, 7
      %s229 = scalar_select %p228, %s227, 7
      %s230 = smul.addr %s229, 8
      %s231 = scalar_lea.vmem %s5, %s230
      %s232 = smul.u32 4, %s16
      %p233 = scmp.lt.s32.totalorder %s232, 7
      %s234 = scalar_select %p233, %s232, 7
      %s235 = smul.addr %s234, 4
      %s236 = scalar_lea.vmem %s0, %s235
      %s237 = smul.u32 4, %s16
      %s238 = smul.u32 4, %s16
      %p239 = scmp.lt.s32.totalorder %s238, 7
      %s240 = scalar_select %p239, %s238, 7
      %s241 = smul.addr %s240, 4
      %s242 = scalar_lea.vmem %s1, %s241
      %s243 = smul.u32 4, %s16
      %s244 = smul.u32 4, %s16
      %p245 = scmp.lt.s32.totalorder %s244, 7
      %s246 = scalar_select %p245, %s244, 7
      %s247 = smul.addr %s246, 8
      %s248 = scalar_lea.vmem %s5, %s247
      %s249 = smul.u32 4, %s16
      %v251 = vld [vmem:[%s236] sm:$0xf]
      %v252 = vld [vmem:[%s236 + $0x4] sm:$0xf]
      %v253 = vld [vmem:[%s236 + $0x8] sm:$0xf]
      %v254 = vld [vmem:[%s236 + $0xc] sm:$0xf]
      %v255 = vld [vmem:[%s2] sm:$0xf]
      %v256 = vld [vmem:[%s2 + $0x4] sm:$0xf]
      %v257 = vld [vmem:[%s2 + $0x8] sm:$0xf]
      %v258 = vld [vmem:[%s2 + $0xc] sm:$0xf]
      %v259 = vld [vmem:[%s2 + $0x10] sm:$0xf]
      %v260 = vld [vmem:[%s2 + $0x14] sm:$0xf]
      %v261 = vld [vmem:[%s2 + $0x18] sm:$0xf]
      %v262 = vld [vmem:[%s2 + $0x1c] sm:$0xf]
      %v263 = vld [vmem:[%s2 + $0x20] sm:$0xf]
      %v264 = vld [vmem:[%s2 + $0x24] sm:$0xf]
      %v265 = vld [vmem:[%s2 + $0x28] sm:$0xf]
      %v266 = vld [vmem:[%s2 + $0x2c] sm:$0xf]
      %v267 = vld [vmem:[%s2 + $0x30] sm:$0xf]
      %v268 = vld [vmem:[%s2 + $0x34] sm:$0xf]
      %v269 = vld [vmem:[%s2 + $0x38] sm:$0xf]
      %v270 = vld [vmem:[%s2 + $0x3c] sm:$0xf]
      %v271 = vld [vmem:[%s242] sm:$0xf]
      %v272 = vld [vmem:[%s242 + $0x4] sm:$0xf]
      %v273 = vld [vmem:[%s242 + $0x8] sm:$0xf]
      %v274 = vld [vmem:[%s242 + $0xc] sm:$0xf]
      %v275 = vld [vmem:[%s3] sm:$0xf]
      %v276 = vld [vmem:[%s3 + $0x4] sm:$0xf]
      %v277 = vld [vmem:[%s3 + $0x8] sm:$0xf]
      %v278 = vld [vmem:[%s3 + $0xc] sm:$0xf]
      %v279 = vld [vmem:[%s3 + $0x10] sm:$0xf]
      %v280 = vld [vmem:[%s3 + $0x14] sm:$0xf]
      %v281 = vld [vmem:[%s3 + $0x18] sm:$0xf]
      %v282 = vld [vmem:[%s3 + $0x1c] sm:$0xf]
      %v283 = vld [vmem:[%s3 + $0x20] sm:$0xf]
      %v284 = vld [vmem:[%s3 + $0x24] sm:$0xf]
      %v285 = vld [vmem:[%s3 + $0x28] sm:$0xf]
      %v286 = vld [vmem:[%s3 + $0x2c] sm:$0xf]
      %v287 = vld [vmem:[%s3 + $0x30] sm:$0xf]
      %v288 = vld [vmem:[%s3 + $0x34] sm:$0xf]
      %v289 = vld [vmem:[%s3 + $0x38] sm:$0xf]
      %v290 = vld [vmem:[%s3 + $0x3c] sm:$0xf]
      %v295 = vunpack.c.l.b16 %v271
      %v296 = vunpack.c.l.b16 %v272
      %v297 = vunpack.c.l.b16 %v273
      %v298 = vunpack.c.l.b16 %v274
      %v299 = vpack.c.b16 %v296, %v295
      %v300 = vpack.c.b16 %v298, %v297
      %v319 = vunpack.c.l.b16 %v275
      %v320 = vunpack.c.l.b16 %v276
      %v321 = vunpack.c.l.b16 %v277
      %v322 = vunpack.c.l.b16 %v278
      %v323 = vunpack.c.l.b16 %v279
      %v324 = vunpack.c.l.b16 %v280
      %v325 = vunpack.c.l.b16 %v281
      %v326 = vunpack.c.l.b16 %v282
      %v327 = vunpack.c.l.b16 %v283
      %v328 = vunpack.c.l.b16 %v284
      %v329 = vunpack.c.l.b16 %v285
      %v330 = vunpack.c.l.b16 %v286
      %v331 = vunpack.c.l.b16 %v287
      %v332 = vunpack.c.l.b16 %v288
      %v333 = vunpack.c.l.b16 %v289
      %v334 = vunpack.c.l.b16 %v290
      %v335 = vpack.c.b16 %v320, %v319
      %v336 = vpack.c.b16 %v322, %v321
      %v337 = vpack.c.b16 %v324, %v323
      %v338 = vpack.c.b16 %v326, %v325
      %v339 = vpack.c.b16 %v328, %v327
      %v340 = vpack.c.b16 %v330, %v329
      %v341 = vpack.c.b16 %v332, %v331
      %v342 = vpack.c.b16 %v334, %v333
      %351 = vmatprep.subr.bf16.mxu0 0
      %352 = vmatpush1.bf16.msra.mxu0 %v335
      %353 = vmatprep.subr.bf16.mxu0 0
      %354 = vmatpush1.bf16.msra.mxu0 %v336
      %355 = vmatprep.subr.bf16.mxu0 0
      %356 = vmatpush1.bf16.msra.mxu0 %v337
      %357 = vmatprep.subr.bf16.mxu0 0
      %358 = vmatpush1.bf16.msra.mxu0 %v338
      %359 = vmatprep.subr.bf16.mxu0 0
      %360 = vmatpush1.bf16.msra.mxu0 %v339
      %361 = vmatprep.subr.bf16.mxu0 0
      %362 = vmatpush1.bf16.msra.mxu0 %v340
      %363 = vmatprep.subr.bf16.mxu0 0
      %364 = vmatpush1.bf16.msra.mxu0 %v341
      %365 = vmatprep.subr.bf16.mxu0 0
      %366 = vmatpush1.bf16.msra.mxu0 %v342
      %367 = vmatprep.subr.bf16.mxu0 0
      %368 = vmatpush1.bf16.msra.mxu0 0
      %369 = vmatprep.subr.bf16.mxu0 0
      %370 = vmatpush1.bf16.msra.mxu0 0
      %371 = vmatprep.subr.bf16.mxu0 0
      %372 = vmatpush1.bf16.msra.mxu0 0
      %373 = vmatprep.subr.bf16.mxu0 0
      %374 = vmatpush1.bf16.msra.mxu0 0
      %375 = vmatprep.subr.bf16.mxu0 0
      %376 = vmatpush1.bf16.msra.mxu0 0
      %377 = vmatprep.subr.bf16.mxu0 0
      %378 = vmatpush1.bf16.msra.mxu0 0
      %379 = vmatprep.subr.bf16.mxu0 0
      %380 = vmatpush1.bf16.msra.mxu0 0
      %381 = vmatprep.subr.bf16.mxu0 0
      %382 = vmatpush1.bf16.msra.mxu0 0
      %383 = vmatprep.mubr.bf16.mxu0 0
      %384 = vmatmul.mubr.bf16.gmra.mrb[0].mxu0 %v299
      %v385 = vpop.f32.mrb[0].mxu0
      %v386 = vadd.f32 0.0, %v385
      %v387 = vpop.f32.mrb[0].mxu0
      %v388 = vpop.f32.mrb[0].mxu0
      %v389 = vadd.f32 0.0, %v388
      %v390 = vpop.f32.mrb[0].mxu0
      %391 = vmatprep.mubr.bf16.mxu0 0
      %392 = vmatmul.mubr.bf16.gmra.mrb[0].mxu0 %v300
      %v393 = vpop.f32.mrb[0].mxu0
      %v394 = vadd.f32 0.0, %v393
      %v395 = vpop.f32.mrb[0].mxu0
      %v396 = vpop.f32.mrb[0].mxu0
      %v397 = vadd.f32 0.0, %v396
      %v398 = vpop.f32.mrb[0].mxu0
      %399 = vdwg.mxu0
      %v404 = vunpack.c.l.b16 %v251
      %v405 = vunpack.c.l.b16 %v252
      %v406 = vunpack.c.l.b16 %v253
      %v407 = vunpack.c.l.b16 %v254
      %v408 = vpack.c.b16 %v405, %v404
      %v409 = vpack.c.b16 %v407, %v406
      %v428 = vunpack.c.l.b16 %v255
      %v429 = vunpack.c.l.b16 %v256
      %v430 = vunpack.c.l.b16 %v257
      %v431 = vunpack.c.l.b16 %v258
      %v432 = vunpack.c.l.b16 %v259
      %v433 = vunpack.c.l.b16 %v260
      %v434 = vunpack.c.l.b16 %v261
      %v435 = vunpack.c.l.b16 %v262
      %v436 = vunpack.c.l.b16 %v263
      %v437 = vunpack.c.l.b16 %v264
      %v438 = vunpack.c.l.b16 %v265
      %v439 = vunpack.c.l.b16 %v266
      %v440 = vunpack.c.l.b16 %v267
      %v441 = vunpack.c.l.b16 %v268
      %v442 = vunpack.c.l.b16 %v269
      %v443 = vunpack.c.l.b16 %v270
      %v444 = vpack.c.b16 %v429, %v428
      %v445 = vpack.c.b16 %v431, %v430
      %v446 = vpack.c.b16 %v433, %v432
      %v447 = vpack.c.b16 %v435, %v434
      %v448 = vpack.c.b16 %v437, %v436
      %v449 = vpack.c.b16 %v439, %v438
      %v450 = vpack.c.b16 %v441, %v440
      %v451 = vpack.c.b16 %v443, %v442
      %460 = vmatprep.subr.bf16.mxu0 0
      %461 = vmatpush1.bf16.msra.mxu0 %v444
      %462 = vmatprep.subr.bf16.mxu0 0
      %463 = vmatpush1.bf16.msra.mxu0 %v445
      %464 = vmatprep.subr.bf16.mxu0 0
      %465 = vmatpush1.bf16.msra.mxu0 %v446
      %466 = vmatprep.subr.bf16.mxu0 0
      %467 = vmatpush1.bf16.msra.mxu0 %v447
      %468 = vmatprep.subr.bf16.mxu0 0
      %469 = vmatpush1.bf16.msra.mxu0 %v448
      %470 = vmatprep.subr.bf16.mxu0 0
      %471 = vmatpush1.bf16.msra.mxu0 %v449
      %472 = vmatprep.subr.bf16.mxu0 0
      %473 = vmatpush1.bf16.msra.mxu0 %v450
      %474 = vmatprep.subr.bf16.mxu0 0
      %475 = vmatpush1.bf16.msra.mxu0 %v451
      %476 = vmatprep.subr.bf16.mxu0 0
      %477 = vmatpush1.bf16.msra.mxu0 0
      %478 = vmatprep.subr.bf16.mxu0 0
      %479 = vmatpush1.bf16.msra.mxu0 0
      %480 = vmatprep.subr.bf16.mxu0 0
      %481 = vmatpush1.bf16.msra.mxu0 0
      %482 = vmatprep.subr.bf16.mxu0 0
      %483 = vmatpush1.bf16.msra.mxu0 0
      %484 = vmatprep.subr.bf16.mxu0 0
      %485 = vmatpush1.bf16.msra.mxu0 0
      %486 = vmatprep.subr.bf16.mxu0 0
      %487 = vmatpush1.bf16.msra.mxu0 0
      %488 = vmatprep.subr.bf16.mxu0 0
      %489 = vmatpush1.bf16.msra.mxu0 0
      %490 = vmatprep.subr.bf16.mxu0 0
      %491 = vmatpush1.bf16.msra.mxu0 0
      %492 = vmatprep.mubr.bf16.mxu0 0
      %493 = vmatmul.mubr.bf16.gmra.mrb[0].mxu0 %v408
      %v494 = vpop.f32.mrb[0].mxu0
      %v495 = vadd.f32 %v386, %v494
      %v496 = vpop.f32.mrb[0].mxu0
      %v497 = vpop.f32.mrb[0].mxu0
      %v498 = vadd.f32 %v389, %v497
      %v499 = vpop.f32.mrb[0].mxu0
      %500 = vmatprep.mubr.bf16.mxu0 0
      %501 = vmatmul.mubr.bf16.gmra.mrb[0].mxu0 %v409
      %v502 = vpop.f32.mrb[0].mxu0
      %v503 = vadd.f32 %v394, %v502
      %v504 = vpop.f32.mrb[0].mxu0
      %v505 = vpop.f32.mrb[0].mxu0
      %v506 = vadd.f32 %v397, %v505
      %v507 = vpop.f32.mrb[0].mxu0
      %508 = vdwg.mxu0
      %v509 = vld [vmem:[%s4] sm:$0x1]
      %v511 = vlaneseq
      %v512 = vshrl.u32 %v511, 7
      %v513 = vsub.s32 0, %v512
      %v514 = vrot.slane %v509, %v513
      %v516 = vadd.f32 %v495, %v514
      %v517 = vadd.f32 %v498, %v514
      %v518 = vadd.f32 %v503, %v514
      %v519 = vadd.f32 %v506, %v514
      %vm520 = vcmask 130048
      %521 = vst.msk [vmem:[%s248] sm:$0xff] %vm520, %v516
      %522 = vst.msk [vmem:[%s248 + $0x8] sm:$0xff] %vm520, %v517
      %523 = vst.msk [vmem:[%s248 + $0x10] sm:$0xff] %vm520, %v518
      %524 = vst.msk [vmem:[%s248 + $0x18] sm:$0xff] %vm520, %v519
      %s525 = smul.u32 4, %s16
      %p526 = scmp.lt.s32.totalorder %s525, 7
      %s527 = scalar_select %p526, %s525, 7
      %s528 = smul.addr %s527, 8
      %s529 = scalar_lea.vmem %s5, %s528
      // Predicated region
      $region41: #{lstm_feature_extractor.9} parent=39 // pred_check
        %p530 = pneg %p149
      $region42: #{lstm_feature_extractor.9} parent=39 // pred_check_branch
        %532 = sbr.rel (%p530) target = $region44
      $region43: #{lstm_feature_extractor.9} parent=39 // pred_region
        %s533 = smul.u32 4, %s16
      $region44: #{lstm_feature_extractor.9} parent=39 // pred_fallthru
        _
    $region40: #{lstm_feature_extractor.9} parent=5 // pred_fallthru
      _
    %p534 = scmp.le.s32.totalorder 2, %s11
    // Predicated region
    $region45: #{lstm_feature_extractor.9} parent=5 // pred_check
      %p535 = pneg %p534
    $region46: #{lstm_feature_extractor.9} parent=5 // pred_check_branch
      %537 = sbr.rel (%p535) target = $region48
    $region47: #{lstm_feature_extractor.9} parent=5 // pred_region
      %s538 = ssub.s32 %s11, 2
      // Predicated region
      $region49: #{lstm_feature_extractor.9} parent=47 // pred_check
        %p539 = pneg %p155
      $region50: #{lstm_feature_extractor.9} parent=47 // pred_check_branch
        %541 = sbr.rel (%p539) target = $region52
      $region51: #{lstm_feature_extractor.9} parent=47 // pred_region
        %s542 = smul.u32 4, %s17
        %p543 = scmp.lt.s32.totalorder %s542, 7
        %s544 = scalar_select %p543, %s542, 7
        %s545 = smul.addr %s544, 8
        %s546 = scalar_lea.vmem %s5, %s545
      $region52: #{lstm_feature_extractor.9} parent=47 // pred_fallthru
        _
    $region48: #{lstm_feature_extractor.9} parent=5 // pred_fallthru
      _
  $region6: #{lstm_feature_extractor.9} parent=0 // loop_footer
    %s15 = sadd.s32 1, %s11
  $region7: #{lstm_feature_extractor.9} parent=0 // loop_footer_branch
    %10 = sbr.rel target = $region3
  $region8: #{lstm_feature_extractor.9} parent=0 // loop_exit
    _

// kernel: lstm_feature_extractor.6
$region0: #{lstm_feature_extractor.6}
  #allocation0 [shape = 'u32[]', space=smem, size = 0x4, offset = 0x4, fixed_abs, tag = 'smem constant byte address 0x4 - core index']
  #allocation1 [shape = 'u32[144,128]{1,0:T(1,128)}', space=vmem, size = 0x12000, scoped, tag = 'internal scratch']
  #allocation2 [shape = 'f32[2,8,128]{2,1,0:T(8,128)}', space=vmem, size = 0x2000, scoped, tag = 'scratch operand']
  #allocation3 [shape = 'f32[2,8,128]{2,1,0:T(8,128)}', space=vmem, size = 0x2000, scoped, tag = 'scratch operand']
  %s0 = inlined_call_operand.vmem [shape: bf16[8,8,1024], index: 0, kind: input, shape index: {}, may-alias: {0,1}]
  %s1 = inlined_call_operand.vmem [shape: bf16[8,8,1024], index: 1, kind: input, shape index: {}, may-alias: {0,1}]
  %s2 = inlined_call_operand.hbm [shape: bf16[256,1024], index: 2, kind: input, shape index: {}]
  %s3 = inlined_call_operand.vmem [shape: bf16[8,8,128], index: 3, kind: output, shape index: {0}]
  %s4 = inlined_call_operand.vmem [shape: bf16[8,8,128], index: 4, kind: output, shape index: {1}]
  %5 = xla_tuple %s3, %s4
  %s6 = sld [smem:[#allocation0]]
  $region84: #{lstm_feature_extractor.6} parent=0
    _
  %s8 = ssub.s32 1, %s6
  %s9 = scalar_select 0, %s8, %s6
  $region1: #{lstm_feature_extractor.6} parent=0
    #allocation4 [shape = 'u8[65536]{0}', space=vmem, size = 0x10000, scoped, tag = 'input window, operand 0, single buffered']
    #allocation5 [shape = 'u8[65536]{0}', space=vmem, size = 0x10000, scoped, tag = 'input window, operand 1, single buffered']
    #allocation6 [shape = 'u8[524288]{0}', space=vmem, size = 0x80000, scoped, tag = 'input window, operand 2, single buffered']
    #allocation7 [shape = 's32[1]{0}', space=sflag, size = 0x4, scoped, tag = 'scoped memory for lstm_feature_extractor.6']
    %10 = vsyncpa [#allocation7], 0
    // Predicated region
    $region2: #{lstm_feature_extractor.6} parent=1 // pred_check
      _
    $region3: #{lstm_feature_extractor.6} parent=1 // pred_check_branch
      %12 = sbr.rel (0) target = $region5
    $region4: #{lstm_feature_extractor.6} parent=1 // pred_region
      // Predicated region
      $region6: #{lstm_feature_extractor.6} parent=4 // pred_check
        _
      $region7: #{lstm_feature_extractor.6} parent=4 // pred_check_branch
        %14 = sbr.rel (0) target = $region9
      $region8: #{lstm_feature_extractor.6} parent=4 // pred_region
        // Predicated region
        $region10: #{lstm_feature_extractor.6} parent=8 // pred_check
          _
        $region11: #{lstm_feature_extractor.6} parent=8 // pred_check_branch
          %16 = sbr.rel (0) target = $region13
        $region12: #{lstm_feature_extractor.6} parent=8 // pred_region
          loop: start=0, step=1, limit=1
          $region14: #{lstm_feature_extractor.6} parent=12 // loop_pre_header
            _
          $region15: #{lstm_feature_extractor.6} parent=12 // loop_header
            %s18 = sphi 0, %s22
            %p19 = scmp.ge.s32.totalorder %s18, 1
            %s23 = sphi %s0, %s0
            %s24 = sphi [#allocation4], [#allocation4]
          $region16: #{lstm_feature_extractor.6} parent=12 // loop_header_branch
            %21 = sbr.rel (%p19) target = $region20
          $region17: #{lstm_feature_extractor.6} parent=12 // loop_body
            %v25 = vld [vmem:[%s23] sm:$0xff]
            %26 = vst [vmem:[%s24] sm:$0xff] %v25
            %v27 = vld [vmem:[%s23 + $0x8] sm:$0xff]
            %28 = vst [vmem:[%s24 + $0x8] sm:$0xff] %v27
            %v29 = vld [vmem:[%s23 + $0x20] sm:$0xff]
            %30 = vst [vmem:[%s24 + $0x10] sm:$0xff] %v29
            %v31 = vld [vmem:[%s23 + $0x28] sm:$0xff]
            %32 = vst [vmem:[%s24 + $0x18] sm:$0xff] %v31
            %v33 = vld [vmem:[%s23 + $0x40] sm:$0xff]
            %34 = vst [vmem:[%s24 + $0x20] sm:$0xff] %v33
            %v35 = vld [vmem:[%s23 + $0x48] sm:$0xff]
            %36 = vst [vmem:[%s24 + $0x28] sm:$0xff] %v35
            %v37 = vld [vmem:[%s23 + $0x60] sm:$0xff]
            %38 = vst [vmem:[%s24 + $0x30] sm:$0xff] %v37
            %v39 = vld [vmem:[%s23 + $0x68] sm:$0xff]
            %40 = vst [vmem:[%s24 + $0x38] sm:$0xff] %v39
            %v41 = vld [vmem:[%s23 + $0x80] sm:$0xff]
            %42 = vst [vmem:[%s24 + $0x40] sm:$0xff] %v41
            %v43 = vld [vmem:[%s23 + $0x88] sm:$0xff]
            %44 = vst [vmem:[%s24 + $0x48] sm:$0xff] %v43
            %v45 = vld [vmem:[%s23 + $0xa0] sm:$0xff]
            %46 = vst [vmem:[%s24 + $0x50] sm:$0xff] %v45
            %v47 = vld [vmem:[%s23 + $0xa8] sm:$0xff]
            %48 = vst [vmem:[%s24 + $0x58] sm:$0xff] %v47
            %v49 = vld [vmem:[%s23 + $0xc0] sm:$0xff]
            %50 = vst [vmem:[%s24 + $0x60] sm:$0xff] %v49
            %v51 = vld [vmem:[%s23 + $0xc8] sm:$0xff]
            %52 = vst [vmem:[%s24 + $0x68] sm:$0xff] %v51
            %v53 = vld [vmem:[%s23 + $0xe0] sm:$0xff]
            %54 = vst [vmem:[%s24 + $0x70] sm:$0xff] %v53
            %v55 = vld [vmem:[%s23 + $0xe8] sm:$0xff]
            %56 = vst [vmem:[%s24 + $0x78] sm:$0xff] %v55
          $region18: #{lstm_feature_extractor.6} parent=12 // loop_footer
            %s22 = sadd.s32 1, %s18
          $region19: #{lstm_feature_extractor.6} parent=12 // loop_footer_branch
            %17 = sbr.rel target = $region15
          $region20: #{lstm_feature_extractor.6} parent=12 // loop_exit
            _
        $region13: #{lstm_feature_extractor.6} parent=8 // pred_fallthru
          _
        // Predicated region
        $region21: #{lstm_feature_extractor.6} parent=8 // pred_check
          _
        $region22: #{lstm_feature_extractor.6} parent=8 // pred_check_branch
          %58 = sbr.rel target = $region24
        $region23: #{lstm_feature_extractor.6} parent=8 // pred_region
          _
        $region24: #{lstm_feature_extractor.6} parent=8 // pred_fallthru
          _
      $region9: #{lstm_feature_extractor.6} parent=4 // pred_fallthru
        _
      %59 = vnop
    $region5: #{lstm_feature_extractor.6} parent=1 // pred_fallthru
      _
    // Predicated region
    $region25: #{lstm_feature_extractor.6} parent=1 // pred_check
      _
    $region26: #{lstm_feature_extractor.6} parent=1 // pred_check_branch
      %61 = sbr.rel (0) target = $region28
    $region27: #{lstm_feature_extractor.6} parent=1 // pred_region
      %s62 = ssub.s32 0, 0
      %s63 = smul.u32 8, %s62
      %s64 = smul.addr %s63, 8
      %s65 = sadd.s32 4, %s64
      %s66 = smul.addr %s65, 4
      %s67 = scalar_lea.vmem %s1, %s66
      // Predicated region
      $region29: #{lstm_feature_extractor.6} parent=27 // pred_check
        _
      $region30: #{lstm_feature_extractor.6} parent=27 // pred_check_branch
        %69 = sbr.rel (0) target = $region32
      $region31: #{lstm_feature_extractor.6} parent=27 // pred_region
        // Predicated region
        $region33: #{lstm_feature_extractor.6} parent=31 // pred_check
          _
        $region34: #{lstm_feature_extractor.6} parent=31 // pred_check_branch
          %71 = sbr.rel (0) target = $region36
        $region35: #{lstm_feature_extractor.6} parent=31 // pred_region
          loop: start=0, step=1, limit=1
          $region37: #{lstm_feature_extractor.6} parent=35 // loop_pre_header
            _
          $region38: #{lstm_feature_extractor.6} parent=35 // loop_header
            %s73 = sphi 0, %s77
            %p74 = scmp.ge.s32.totalorder %s73, 1
            %s78 = sphi %s67, %s67
            %s79 = sphi [#allocation5], [#allocation5]
          $region39: #{lstm_feature_extractor.6} parent=35 // loop_header_branch
            %76 = sbr.rel (%p74) target = $region43
          $region40: #{lstm_feature_extractor.6} parent=35 // loop_body
            %v80 = vld [vmem:[%s78] sm:$0xff]
            %81 = vst [vmem:[%s79] sm:$0xff] %v80
            %v82 = vld [vmem:[%s78 + $0x8] sm:$0xff]
            %83 = vst [vmem:[%s79 + $0x8] sm:$0xff] %v82
            %v84 = vld [vmem:[%s78 + $0x20] sm:$0xff]
            %85 = vst [vmem:[%s79 + $0x10] sm:$0xff] %v84
            %v86 = vld [vmem:[%s78 + $0x28] sm:$0xff]
            %87 = vst [vmem:[%s79 + $0x18] sm:$0xff] %v86
            %v88 = vld [vmem:[%s78 + $0x40] sm:$0xff]
            %89 = vst [vmem:[%s79 + $0x20] sm:$0xff] %v88
            %v90 = vld [vmem:[%s78 + $0x48] sm:$0xff]
            %91 = vst [vmem:[%s79 + $0x28] sm:$0xff] %v90
            %v92 = vld [vmem:[%s78 + $0x60] sm:$0xff]
            %93 = vst [vmem:[%s79 + $0x30] sm:$0xff] %v92
            %v94 = vld [vmem:[%s78 + $0x68] sm:$0xff]
            %95 = vst [vmem:[%s79 + $0x38] sm:$0xff] %v94
            %v96 = vld [vmem:[%s78 + $0x80] sm:$0xff]
            %97 = vst [vmem:[%s79 + $0x40] sm:$0xff] %v96
            %v98 = vld [vmem:[%s78 + $0x88] sm:$0xff]
            %99 = vst [vmem:[%s79 + $0x48] sm:$0xff] %v98
            %v100 = vld [vmem:[%s78 + $0xa0] sm:$0xff]
            %101 = vst [vmem:[%s79 + $0x50] sm:$0xff] %v100
            %v102 = vld [vmem:[%s78 + $0xa8] sm:$0xff]
            %103 = vst [vmem:[%s79 + $0x58] sm:$0xff] %v102
            %v104 = vld [vmem:[%s78 + $0xc0] sm:$0xff]
            %105 = vst [vmem:[%s79 + $0x60] sm:$0xff] %v104
            %v106 = vld [vmem:[%s78 + $0xc8] sm:$0xff]
            %107 = vst [vmem:[%s79 + $0x68] sm:$0xff] %v106
            %v108 = vld [vmem:[%s78 + $0xe0] sm:$0xff]
            %109 = vst [vmem:[%s79 + $0x70] sm:$0xff] %v108
            %v110 = vld [vmem:[%s78 + $0xe8] sm:$0xff]
            %111 = vst [vmem:[%s79 + $0x78] sm:$0xff] %v110
          $region41: #{lstm_feature_extractor.6} parent=35 // loop_footer
            %s77 = sadd.s32 1, %s73
          $region42: #{lstm_feature_extractor.6} parent=35 // loop_footer_branch
            %72 = sbr.rel target = $region38
          $region43: #{lstm_feature_extractor.6} parent=35 // loop_exit
            _
        $region36: #{lstm_feature_extractor.6} parent=31 // pred_fallthru
          _
        // Predicated region
        $region44: #{lstm_feature_extractor.6} parent=31 // pred_check
          _
        $region45: #{lstm_feature_extractor.6} parent=31 // pred_check_branch
          %113 = sbr.rel target = $region47
        $region46: #{lstm_feature_extractor.6} parent=31 // pred_region
          _
        $region47: #{lstm_feature_extractor.6} parent=31 // pred_fallthru
          _
      $region32: #{lstm_feature_extractor.6} parent=27 // pred_fallthru
        _
      %114 = vnop
    $region28: #{lstm_feature_extractor.6} parent=1 // pred_fallthru
      _
    // Predicated region
    $region48: #{lstm_feature_extractor.6} parent=1 // pred_check
      _
    $region49: #{lstm_feature_extractor.6} parent=1 // pred_check_branch
      %116 = sbr.rel (0) target = $region51
    $region50: #{lstm_feature_extractor.6} parent=1 // pred_region
      %s118 = ssub.s32 16384, 16384
      %119 = vsyncadd [#allocation7], %s118
      %s120 = sshll.u32 [#allocation6], 4
      %s121 = int_to_ptr.vmem [resolvable:$true] %s120
      %126 = dma.hbm_to_vmem [thread:$0]  %s2, 16384, %s121, [#allocation7], 512, 512, 32
    $region51: #{lstm_feature_extractor.6} parent=1 // pred_fallthru
      _
    // Predicated region
    $region52: #{lstm_feature_extractor.6} parent=1 // pred_check
      _
    $region53: #{lstm_feature_extractor.6} parent=1 // pred_check_branch
      %128 = sbr.rel (0) target = $region55
    $region54: #{lstm_feature_extractor.6} parent=1 // pred_region
      _
    $region55: #{lstm_feature_extractor.6} parent=1 // pred_fallthru
      _
    // Predicated region
    $region56: #{lstm_feature_extractor.6} parent=1 // pred_check
      _
    $region57: #{lstm_feature_extractor.6} parent=1 // pred_check_branch
      %130 = sbr.rel (0) target = $region59
    $region58: #{lstm_feature_extractor.6} parent=1 // pred_region
      _
    $region59: #{lstm_feature_extractor.6} parent=1 // pred_fallthru
      _
    // Predicated region
    $region60: #{lstm_feature_extractor.6} parent=1 // pred_check
      _
    $region61: #{lstm_feature_extractor.6} parent=1 // pred_check_branch
      %132 = sbr.rel (0) target = $region63
    $region62: #{lstm_feature_extractor.6} parent=1 // pred_region
      %133 = dma.done [#allocation7], 16384
    $region63: #{lstm_feature_extractor.6} parent=1 // pred_fallthru
      _
    %s134 = ssub.s32 0, 0
    %s135 = smul.u32 8, %s134
    %p136 = scmp.lt.s32.totalorder %s135, 7
    %s137 = scalar_select %p136, %s135, 7
    %s138 = smul.addr %s137, 4
    %s139 = scalar_lea.vmem %s4, %s138
    %s140 = ssub.s32 0, 0
    %s141 = smul.u32 8, %s140
    %s142 = ssub.s32 0, 0
    %s143 = smul.u32 8, %s142
    %p144 = scmp.lt.s32.totalorder %s143, 7
    %s145 = scalar_select %p144, %s143, 7
    %s146 = smul.addr %s145, 4
    %s147 = scalar_lea.vmem %s4, %s146
    %s148 = ssub.s32 0, 0
    %s149 = smul.u32 8, %s148
    %p150 = scmp.eq.s32.totalorder 0, 0
    // Predicated region
    $region64: #{lstm_feature_extractor.6} parent=1 // pred_check
      %p151 = pneg %p150
    $region65: #{lstm_feature_extractor.6} parent=1 // pred_check_branch
      %153 = sbr.rel (%p151) target = $region67
    $region66: #{lstm_feature_extractor.6} parent=1 // pred_region
      %154 = vst [vmem:[#allocation2] sm:$0xff] 0.0
      %155 = vst [vmem:[#allocation2 + $0x8] sm:$0xff] 0.0
      %156 = vst [vmem:[#allocation3] sm:$0xff] 0.0
      %157 = vst [vmem:[#allocation3 + $0x8] sm:$0xff] 0.0
    $region67: #{lstm_feature_extractor.6} parent=1 // pred_fallthru
      _
    %v158 = vld [vmem:[#allocation6] sm:$0xff]
    %v159 = vld [vmem:[#allocation6 + $0x8] sm:$0xff]
    %v160 = vld [vmem:[#allocation6 + $0x10] sm:$0xff]
    %v161 = vld [vmem:[#allocation6 + $0x18] sm:$0xff]
    %v162 = vld [vmem:[#allocation6 + $0x20] sm:$0xff]
    %v163 = vld [vmem:[#allocation6 + $0x28] sm:$0xff]
    %v164 = vld [vmem:[#allocation6 + $0x30] sm:$0xff]
    %v165 = vld [vmem:[#allocation6 + $0x38] sm:$0xff]
    %v166 = vld [vmem:[#allocation6 + $0x40] sm:$0xff]
    %v167 = vld [vmem:[#allocation6 + $0x48] sm:$0xff]
    %v168 = vld [vmem:[#allocation6 + $0x50] sm:$0xff]
    %v169 = vld [vmem:[#allocation6 + $0x58] sm:$0xff]
    %v170 = vld [vmem:[#allocation6 + $0x60] sm:$0xff]
    %v171 = vld [vmem:[#allocation6 + $0x68] sm:$0xff]
    %v172 = vld [vmem:[#allocation6 + $0x70] sm:$0xff]
    %v173 = vld [vmem:[#allocation6 + $0x78] sm:$0xff]
    %v174 = vld [vmem:[#allocation6 + $0x80] sm:$0xff]
    %v175 = vld [vmem:[#allocation6 + $0x88] sm:$0xff]
    %v176 = vld [vmem:[#allocation6 + $0x90] sm:$0xff]
    %v177 = vld [vmem:[#allocation6 + $0x98] sm:$0xff]
    %v178 = vld [vmem:[#allocation6 + $0xa0] sm:$0xff]
    %v179 = vld [vmem:[#allocation6 + $0xa8] sm:$0xff]
    %v180 = vld [vmem:[#allocation6 + $0xb0] sm:$0xff]
    %v181 = vld [vmem:[#allocation6 + $0xb8] sm:$0xff]
    %v182 = vld [vmem:[#allocation6 + $0xc0] sm:$0xff]
    %v183 = vld [vmem:[#allocation6 + $0xc8] sm:$0xff]
    %v184 = vld [vmem:[#allocation6 + $0xd0] sm:$0xff]
    %v185 = vld [vmem:[#allocation6 + $0xd8] sm:$0xff]
    %v186 = vld [vmem:[#allocation6 + $0xe0] sm:$0xff]
    %v187 = vld [vmem:[#allocation6 + $0xe8] sm:$0xff]
    %v188 = vld [vmem:[#allocation6 + $0xf0] sm:$0xff]
    %v189 = vld [vmem:[#allocation6 + $0xf8] sm:$0xff]
    %v190 = vld [vmem:[#allocation6 + $0x100] sm:$0xff]
    %v191 = vld [vmem:[#allocation6 + $0x108] sm:$0xff]
    %v192 = vld [vmem:[#allocation6 + $0x110] sm:$0xff]
    %v193 = vld [vmem:[#allocation6 + $0x118] sm:$0xff]
    %v194 = vld [vmem:[#allocation6 + $0x120] sm:$0xff]
    %v195 = vld [vmem:[#allocation6 + $0x128] sm:$0xff]
    %v196 = vld [vmem:[#allocation6 + $0x130] sm:$0xff]
    %v197 = vld [vmem:[#allocation6 + $0x138] sm:$0xff]
    %v198 = vld [vmem:[#allocation6 + $0x140] sm:$0xff]
    %v199 = vld [vmem:[#allocation6 + $0x148] sm:$0xff]
    %v200 = vld [vmem:[#allocation6 + $0x150] sm:$0xff]
    %v201 = vld [vmem:[#allocation6 + $0x158] sm:$0xff]
    %v202 = vld [vmem:[#allocation6 + $0x160] sm:$0xff]
    %v203 = vld [vmem:[#allocation6 + $0x168] sm:$0xff]
    %v204 = vld [vmem:[#allocation6 + $0x170] sm:$0xff]
    %v205 = vld [vmem:[#allocation6 + $0x178] sm:$0xff]
    %v206 = vld [vmem:[#allocation6 + $0x180] sm:$0xff]
    %v207 = vld [vmem:[#allocation6 + $0x188] sm:$0xff]
    %v208 = vld [vmem:[#allocation6 + $0x190] sm:$0xff]
    %v209 = vld [vmem:[#allocation6 + $0x198] sm:$0xff]
    %v210 = vld [vmem:[#allocation6 + $0x1a0] sm:$0xff]
    %v211 = vld [vmem:[#allocation6 + $0x1a8] sm:$0xff]
    %v212 = vld [vmem:[#allocation6 + $0x1b0] sm:$0xff]
    %v213 = vld [vmem:[#allocation6 + $0x1b8] sm:$0xff]
    %v214 = vld [vmem:[#allocation6 + $0x1c0] sm:$0xff]
    %v215 = vld [vmem:[#allocation6 + $0x1c8] sm:$0xff]
    %v216 = vld [vmem:[#allocation6 + $0x1d0] sm:$0xff]
    %v217 = vld [vmem:[#allocation6 + $0x1d8] sm:$0xff]
    %v218 = vld [vmem:[#allocation6 + $0x1e0] sm:$0xff]
    %v219 = vld [vmem:[#allocation6 + $0x1e8] sm:$0xff]
    %v220 = vld [vmem:[#allocation6 + $0x1f0] sm:$0xff]
    %v221 = vld [vmem:[#allocation6 + $0x1f8] sm:$0xff]
    %v222 = vld [vmem:[#allocation6 + $0x200] sm:$0xff]
    %v223 = vld [vmem:[#allocation6 + $0x208] sm:$0xff]
    %v224 = vld [vmem:[#allocation6 + $0x210] sm:$0xff]
    %v225 = vld [vmem:[#allocation6 + $0x218] sm:$0xff]
    %v226 = vld [vmem:[#allocation6 + $0x220] sm:$0xff]
    %v227 = vld [vmem:[#allocation6 + $0x228] sm:$0xff]
    %v228 = vld [vmem:[#allocation6 + $0x230] sm:$0xff]
    %v229 = vld [vmem:[#allocation6 + $0x238] sm:$0xff]
    %v230 = vld [vmem:[#allocation6 + $0x240] sm:$0xff]
    %v231 = vld [vmem:[#allocation6 + $0x248] sm:$0xff]
    %v232 = vld [vmem:[#allocation6 + $0x250] sm:$0xff]
    %v233 = vld [vmem:[#allocation6 + $0x258] sm:$0xff]
    %v234 = vld [vmem:[#allocation6 + $0x260] sm:$0xff]
    %v235 = vld [vmem:[#allocation6 + $0x268] sm:$0xff]
    %v236 = vld [vmem:[#allocation6 + $0x270] sm:$0xff]
    %v237 = vld [vmem:[#allocation6 + $0x278] sm:$0xff]
    %v238 = vld [vmem:[#allocation6 + $0x280] sm:$0xff]
    %v239 = vld [vmem:[#allocation6 + $0x288] sm:$0xff]
    %v240 = vld [vmem:[#allocation6 + $0x290] sm:$0xff]
    %v241 = vld [vmem:[#allocation6 + $0x298] sm:$0xff]
    %v242 = vld [vmem:[#allocation6 + $0x2a0] sm:$0xff]
    %v243 = vld [vmem:[#allocation6 + $0x2a8] sm:$0xff]
    %v244 = vld [vmem:[#allocation6 + $0x2b0] sm:$0xff]
    %v245 = vld [vmem:[#allocation6 + $0x2b8] sm:$0xff]
    %v246 = vld [vmem:[#allocation6 + $0x2c0] sm:$0xff]
    %v247 = vld [vmem:[#allocation6 + $0x2c8] sm:$0xff]
    %v248 = vld [vmem:[#allocation6 + $0x2d0] sm:$0xff]
    %v249 = vld [vmem:[#allocation6 + $0x2d8] sm:$0xff]
    %v250 = vld [vmem:[#allocation6 + $0x2e0] sm:$0xff]
    %v251 = vld [vmem:[#allocation6 + $0x2e8] sm:$0xff]
    %v252 = vld [vmem:[#allocation6 + $0x2f0] sm:$0xff]
    %v253 = vld [vmem:[#allocation6 + $0x2f8] sm:$0xff]
    %v254 = vld [vmem:[#allocation6 + $0x300] sm:$0xff]
    %v255 = vld [vmem:[#allocation6 + $0x308] sm:$0xff]
    %v256 = vld [vmem:[#allocation6 + $0x310] sm:$0xff]
    %v257 = vld [vmem:[#allocation6 + $0x318] sm:$0xff]
    %v258 = vld [vmem:[#allocation6 + $0x320] sm:$0xff]
    %v259 = vld [vmem:[#allocation6 + $0x328] sm:$0xff]
    %v260 = vld [vmem:[#allocation6 + $0x330] sm:$0xff]
    %v261 = vld [vmem:[#allocation6 + $0x338] sm:$0xff]
    %v262 = vld [vmem:[#allocation6 + $0x340] sm:$0xff]
    %v263 = vld [vmem:[#allocation6 + $0x348] sm:$0xff]
    %v264 = vld [vmem:[#allocation6 + $0x350] sm:$0xff]
    %v265 = vld [vmem:[#allocation6 + $0x358] sm:$0xff]
    %v266 = vld [vmem:[#allocation6 + $0x360] sm:$0xff]
    %v267 = vld [vmem:[#allocation6 + $0x368] sm:$0xff]
    %v268 = vld [vmem:[#allocation6 + $0x370] sm:$0xff]
    %v269 = vld [vmem:[#allocation6 + $0x378] sm:$0xff]
    %v270 = vld [vmem:[#allocation6 + $0x380] sm:$0xff]
    %v271 = vld [vmem:[#allocation6 + $0x388] sm:$0xff]
    %v272 = vld [vmem:[#allocation6 + $0x390] sm:$0xff]
    %v273 = vld [vmem:[#allocation6 + $0x398] sm:$0xff]
    %v274 = vld [vmem:[#allocation6 + $0x3a0] sm:$0xff]
    %v275 = vld [vmem:[#allocation6 + $0x3a8] sm:$0xff]
    %v276 = vld [vmem:[#allocation6 + $0x3b0] sm:$0xff]
    %v277 = vld [vmem:[#allocation6 + $0x3b8] sm:$0xff]
    %v278 = vld [vmem:[#allocation6 + $0x3c0] sm:$0xff]
    %v279 = vld [vmem:[#allocation6 + $0x3c8] sm:$0xff]
    %v280 = vld [vmem:[#allocation6 + $0x3d0] sm:$0xff]
    %v281 = vld [vmem:[#allocation6 + $0x3d8] sm:$0xff]
    %v282 = vld [vmem:[#allocation6 + $0x3e0] sm:$0xff]
    %v283 = vld [vmem:[#allocation6 + $0x3e8] sm:$0xff]
    %v284 = vld [vmem:[#allocation6 + $0x3f0] sm:$0xff]
    %v285 = vld [vmem:[#allocation6 + $0x3f8] sm:$0xff]
    %v286 = vld [vmem:[#allocation2] sm:$0xff]
    %v287 = vld [vmem:[#allocation3] sm:$0xff]
    %s288 = scalar_lea.vmem [#allocation2], 8
    %v289 = vld [vmem:[%s288] sm:$0xff]
    %s290 = scalar_lea.vmem [#allocation3], 8
    %v291 = vld [vmem:[%s290] sm:$0xff]
    %v292 = vpack.c.bf16 %v286, %v286
    %v293 = vpack.c.bf16 %v289, %v289
    %v422 = vunpack.c.l.b16 %v158
    %v423 = vunpack.c.h.b16 %v158
    %v424 = vunpack.c.l.b16 %v159
    %v425 = vunpack.c.h.b16 %v159
    %v426 = vunpack.c.l.b16 %v160
    %v427 = vunpack.c.h.b16 %v160
    %v428 = vunpack.c.l.b16 %v161
    %v429 = vunpack.c.h.b16 %v161
    %v430 = vunpack.c.l.b16 %v162
    %v431 = vunpack.c.h.b16 %v162
    %v432 = vunpack.c.l.b16 %v163
    %v433 = vunpack.c.h.b16 %v163
    %v434 = vunpack.c.l.b16 %v164
    %v435 = vunpack.c.h.b16 %v164
    %v436 = vunpack.c.l.b16 %v165
    %v437 = vunpack.c.h.b16 %v165
    %v438 = vunpack.c.l.b16 %v166
    %v439 = vunpack.c.h.b16 %v166
    %v440 = vunpack.c.l.b16 %v167
    %v441 = vunpack.c.h.b16 %v167
    %v442 = vunpack.c.l.b16 %v168
    %v443 = vunpack.c.h.b16 %v168
    %v444 = vunpack.c.l.b16 %v169
    %v445 = vunpack.c.h.b16 %v169
    %v446 = vunpack.c.l.b16 %v170
    %v447 = vunpack.c.h.b16 %v170
    %v448 = vunpack.c.l.b16 %v171
    %v449 = vunpack.c.h.b16 %v171
    %v450 = vunpack.c.l.b16 %v172
    %v451 = vunpack.c.h.b16 %v172
    %v452 = vunpack.c.l.b16 %v173
    %v453 = vunpack.c.h.b16 %v173
    %v454 = vunpack.c.l.b16 %v174
    %v455 = vunpack.c.h.b16 %v174
    %v456 = vunpack.c.l.b16 %v175
    %v457 = vunpack.c.h.b16 %v175
    %v458 = vunpack.c.l.b16 %v176
    %v459 = vunpack.c.h.b16 %v176
    %v460 = vunpack.c.l.b16 %v177
    %v461 = vunpack.c.h.b16 %v177
    %v462 = vunpack.c.l.b16 %v178
    %v463 = vunpack.c.h.b16 %v178
    %v464 = vunpack.c.l.b16 %v179
    %v465 = vunpack.c.h.b16 %v179
    %v466 = vunpack.c.l.b16 %v180
    %v467 = vunpack.c.h.b16 %v180
    %v468 = vunpack.c.l.b16 %v181
    %v469 = vunpack.c.h.b16 %v181
    %v470 = vunpack.c.l.b16 %v182
    %v471 = vunpack.c.h.b16 %v182
    %v472 = vunpack.c.l.b16 %v183
    %v473 = vunpack.c.h.b16 %v183
    %v474 = vunpack.c.l.b16 %v184
    %v475 = vunpack.c.h.b16 %v184
    %v476 = vunpack.c.l.b16 %v185
    %v477 = vunpack.c.h.b16 %v185
    %v478 = vunpack.c.l.b16 %v186
    %v479 = vunpack.c.h.b16 %v186
    %v480 = vunpack.c.l.b16 %v187
    %v481 = vunpack.c.h.b16 %v187
    %v482 = vunpack.c.l.b16 %v188
    %v483 = vunpack.c.h.b16 %v188
    %v484 = vunpack.c.l.b16 %v189
    %v485 = vunpack.c.h.b16 %v189
    %v486 = vunpack.c.l.b16 %v190
    %v487 = vunpack.c.h.b16 %v190
    %v488 = vunpack.c.l.b16 %v191
    %v489 = vunpack.c.h.b16 %v191
    %v490 = vunpack.c.l.b16 %v192
    %v491 = vunpack.c.h.b16 %v192
    %v492 = vunpack.c.l.b16 %v193
    %v493 = vunpack.c.h.b16 %v193
    %v494 = vunpack.c.l.b16 %v194
    %v495 = vunpack.c.h.b16 %v194
    %v496 = vunpack.c.l.b16 %v195
    %v497 = vunpack.c.h.b16 %v195
    %v498 = vunpack.c.l.b16 %v196
    %v499 = vunpack.c.h.b16 %v196
    %v500 = vunpack.c.l.b16 %v197
    %v501 = vunpack.c.h.b16 %v197
    %v502 = vunpack.c.l.b16 %v198
    %v503 = vunpack.c.h.b16 %v198
    %v504 = vunpack.c.l.b16 %v199
    %v505 = vunpack.c.h.b16 %v199
    %v506 = vunpack.c.l.b16 %v200
    %v507 = vunpack.c.h.b16 %v200
    %v508 = vunpack.c.l.b16 %v201
    %v509 = vunpack.c.h.b16 %v201
    %v510 = vunpack.c.l.b16 %v202
    %v511 = vunpack.c.h.b16 %v202
    %v512 = vunpack.c.l.b16 %v203
    %v513 = vunpack.c.h.b16 %v203
    %v514 = vunpack.c.l.b16 %v204
    %v515 = vunpack.c.h.b16 %v204
    %v516 = vunpack.c.l.b16 %v205
    %v517 = vunpack.c.h.b16 %v205
    %v518 = vunpack.c.l.b16 %v206
    %v519 = vunpack.c.h.b16 %v206
    %v520 = vunpack.c.l.b16 %v207
    %v521 = vunpack.c.h.b16 %v207
    %v522 = vunpack.c.l.b16 %v208
    %v523 = vunpack.c.h.b16 %v208
    %v524 = vunpack.c.l.b16 %v209
    %v525 = vunpack.c.h.b16 %v209
    %v526 = vunpack.c.l.b16 %v210
    %v527 = vunpack.c.h.b16 %v210
    %v528 = vunpack.c.l.b16 %v211
    %v529 = vunpack.c.h.b16 %v211
    %v530 = vunpack.c.l.b16 %v212
    %v531 = vunpack.c.h.b16 %v212
    %v532 = vunpack.c.l.b16 %v213
    %v533 = vunpack.c.h.b16 %v213
    %v534 = vunpack.c.l.b16 %v214
    %v535 = vunpack.c.h.b16 %v214
    %v536 = vunpack.c.l.b16 %v215
    %v537 = vunpack.c.h.b16 %v215
    %v538 = vunpack.c.l.b16 %v216
    %v539 = vunpack.c.h.b16 %v216
    %v540 = vunpack.c.l.b16 %v217
    %v541 = vunpack.c.h.b16 %v217
    %v542 = vunpack.c.l.b16 %v218
    %v543 = vunpack.c.h.b16 %v218
    %v544 = vunpack.c.l.b16 %v219
    %v545 = vunpack.c.h.b16 %v219
    %v546 = vunpack.c.l.b16 %v220
    %v547 = vunpack.c.h.b16 %v220
    %v548 = vunpack.c.l.b16 %v221
    %v549 = vunpack.c.h.b16 %v221
    %v550 = vunpack.c.l.b16 %v222
    %v551 = vunpack.c.h.b16 %v222
    %v552 = vunpack.c.l.b16 %v223
    %v553 = vunpack.c.h.b16 %v223
    %v554 = vunpack.c.l.b16 %v224
    %v555 = vunpack.c.h.b16 %v224
    %v556 = vunpack.c.l.b16 %v225
    %v557 = vunpack.c.h.b16 %v225
    %v558 = vunpack.c.l.b16 %v226
    %v559 = vunpack.c.h.b16 %v226
    %v560 = vunpack.c.l.b16 %v227
    %v561 = vunpack.c.h.b16 %v227
    %v562 = vunpack.c.l.b16 %v228
    %v563 = vunpack.c.h.b16 %v228
    %v564 = vunpack.c.l.b16 %v229
    %v565 = vunpack.c.h.b16 %v229
    %v566 = vunpack.c.l.b16 %v230
    %v567 = vunpack.c.h.b16 %v230
    %v568 = vunpack.c.l.b16 %v231
    %v569 = vunpack.c.h.b16 %v231
    %v570 = vunpack.c.l.b16 %v232
    %v571 = vunpack.c.h.b16 %v232
    %v572 = vunpack.c.l.b16 %v233
    %v573 = vunpack.c.h.b16 %v233
    %v574 = vunpack.c.l.b16 %v234
    %v575 = vunpack.c.h.b16 %v234
    %v576 = vunpack.c.l.b16 %v235
    %v577 = vunpack.c.h.b16 %v235
    %v578 = vunpack.c.l.b16 %v236
    %v579 = vunpack.c.h.b16 %v236
    %v580 = vunpack.c.l.b16 %v237
    %v581 = vunpack.c.h.b16 %v237
    %v582 = vunpack.c.l.b16 %v238
    %v583 = vunpack.c.h.b16 %v238
    %v584 = vunpack.c.l.b16 %v239
    %v585 = vunpack.c.h.b16 %v239
    %v586 = vunpack.c.l.b16 %v240
    %v587 = vunpack.c.h.b16 %v240
    %v588 = vunpack.c.l.b16 %v241
    %v589 = vunpack.c.h.b16 %v241
    %v590 = vunpack.c.l.b16 %v242
    %v591 = vunpack.c.h.b16 %v242
    %v592 = vunpack.c.l.b16 %v243
    %v593 = vunpack.c.h.b16 %v243
    %v594 = vunpack.c.l.b16 %v244
    %v595 = vunpack.c.h.b16 %v244
    %v596 = vunpack.c.l.b16 %v245
    %v597 = vunpack.c.h.b16 %v245
    %v598 = vunpack.c.l.b16 %v246
    %v599 = vunpack.c.h.b16 %v246
    %v600 = vunpack.c.l.b16 %v247
    %v601 = vunpack.c.h.b16 %v247
    %v602 = vunpack.c.l.b16 %v248
    %v603 = vunpack.c.h.b16 %v248
    %v604 = vunpack.c.l.b16 %v249
    %v605 = vunpack.c.h.b16 %v249
    %v606 = vunpack.c.l.b16 %v250
    %v607 = vunpack.c.h.b16 %v250
    %v608 = vunpack.c.l.b16 %v251
    %v609 = vunpack.c.h.b16 %v251
    %v610 = vunpack.c.l.b16 %v252
    %v611 = vunpack.c.h.b16 %v252
    %v612 = vunpack.c.l.b16 %v253
    %v613 = vunpack.c.h.b16 %v253
    %v614 = vunpack.c.l.b16 %v254
    %v615 = vunpack.c.h.b16 %v254
    %v616 = vunpack.c.l.b16 %v255
    %v617 = vunpack.c.h.b16 %v255
    %v618 = vunpack.c.l.b16 %v256
    %v619 = vunpack.c.h.b16 %v256
    %v620 = vunpack.c.l.b16 %v257
    %v621 = vunpack.c.h.b16 %v257
    %v622 = vunpack.c.l.b16 %v258
    %v623 = vunpack.c.h.b16 %v258
    %v624 = vunpack.c.l.b16 %v259
    %v625 = vunpack.c.h.b16 %v259
    %v626 = vunpack.c.l.b16 %v260
    %v627 = vunpack.c.h.b16 %v260
    %v628 = vunpack.c.l.b16 %v261
    %v629 = vunpack.c.h.b16 %v261
    %v630 = vunpack.c.l.b16 %v262
    %v631 = vunpack.c.h.b16 %v262
    %v632 = vunpack.c.l.b16 %v263
    %v633 = vunpack.c.h.b16 %v263
    %v634 = vunpack.c.l.b16 %v264
    %v635 = vunpack.c.h.b16 %v264
    %v636 = vunpack.c.l.b16 %v265
    %v637 = vunpack.c.h.b16 %v265
    %v638 = vunpack.c.l.b16 %v266
    %v639 = vunpack.c.h.b16 %v266
    %v640 = vunpack.c.l.b16 %v267
    %v641 = vunpack.c.h.b16 %v267
    %v642 = vunpack.c.l.b16 %v268
    %v643 = vunpack.c.h.b16 %v268
    %v644 = vunpack.c.l.b16 %v269
    %v645 = vunpack.c.h.b16 %v269
    %v646 = vunpack.c.l.b16 %v270
    %v647 = vunpack.c.h.b16 %v270
    %v648 = vunpack.c.l.b16 %v271
    %v649 = vunpack.c.h.b16 %v271
    %v650 = vunpack.c.l.b16 %v272
    %v651 = vunpack.c.h.b16 %v272
    %v652 = vunpack.c.l.b16 %v273
    %v653 = vunpack.c.h.b16 %v273
    %v654 = vunpack.c.l.b16 %v274
    %v655 = vunpack.c.h.b16 %v274
    %v656 = vunpack.c.l.b16 %v275
    %v657 = vunpack.c.h.b16 %v275
    %v658 = vunpack.c.l.b16 %v276
    %v659 = vunpack.c.h.b16 %v276
    %v660 = vunpack.c.l.b16 %v277
    %v661 = vunpack.c.h.b16 %v277
    %v662 = vunpack.c.l.b16 %v278
    %v663 = vunpack.c.h.b16 %v278
    %v664 = vunpack.c.l.b16 %v279
    %v665 = vunpack.c.h.b16 %v279
    %v666 = vunpack.c.l.b16 %v280
    %v667 = vunpack.c.h.b16 %v280
    %v668 = vunpack.c.l.b16 %v281
    %v669 = vunpack.c.h.b16 %v281
    %v670 = vunpack.c.l.b16 %v282
    %v671 = vunpack.c.h.b16 %v282
    %v672 = vunpack.c.l.b16 %v283
    %v673 = vunpack.c.h.b16 %v283
    %v674 = vunpack.c.l.b16 %v284
    %v675 = vunpack.c.h.b16 %v284
    %v676 = vunpack.c.l.b16 %v285
    %v677 = vunpack.c.h.b16 %v285
    %v678 = vpack.c.b16 %v430, %v422
    %v679 = vpack.c.b16 %v431, %v423
    %v680 = vpack.c.b16 %v432, %v424
    %v681 = vpack.c.b16 %v433, %v425
    %v682 = vpack.c.b16 %v434, %v426
    %v683 = vpack.c.b16 %v435, %v427
    %v684 = vpack.c.b16 %v436, %v428
    %v685 = vpack.c.b16 %v437, %v429
    %v686 = vpack.c.b16 %v446, %v438
    %v687 = vpack.c.b16 %v447, %v439
    %v688 = vpack.c.b16 %v448, %v440
    %v689 = vpack.c.b16 %v449, %v441
    %v690 = vpack.c.b16 %v450, %v442
    %v691 = vpack.c.b16 %v451, %v443
    %v692 = vpack.c.b16 %v452, %v444
    %v693 = vpack.c.b16 %v453, %v445
    %v694 = vpack.c.b16 %v462, %v454
    %v695 = vpack.c.b16 %v463, %v455
    %v696 = vpack.c.b16 %v464, %v456
    %v697 = vpack.c.b16 %v465, %v457
    %v698 = vpack.c.b16 %v466, %v458
    %v699 = vpack.c.b16 %v467, %v459
    %v700 = vpack.c.b16 %v468, %v460
    %v701 = vpack.c.b16 %v469, %v461
    %v702 = vpack.c.b16 %v478, %v470
    %v703 = vpack.c.b16 %v479, %v471
    %v704 = vpack.c.b16 %v480, %v472
    %v705 = vpack.c.b16 %v481, %v473
    %v706 = vpack.c.b16 %v482, %v474
    %v707 = vpack.c.b16 %v483, %v475
    %v708 = vpack.c.b16 %v484, %v476
    %v709 = vpack.c.b16 %v485, %v477
    %v710 = vpack.c.b16 %v494, %v486
    %v711 = vpack.c.b16 %v495, %v487
    %v712 = vpack.c.b16 %v496, %v488
    %v713 = vpack.c.b16 %v497, %v489
    %v714 = vpack.c.b16 %v498, %v490
    %v715 = vpack.c.b16 %v499, %v491
    %v716 = vpack.c.b16 %v500, %v492
    %v717 = vpack.c.b16 %v501, %v493
    %v718 = vpack.c.b16 %v510, %v502
    %v719 = vpack.c.b16 %v511, %v503
    %v720 = vpack.c.b16 %v512, %v504
    %v721 = vpack.c.b16 %v513, %v505
    %v722 = vpack.c.b16 %v514, %v506
    %v723 = vpack.c.b16 %v515, %v507
    %v724 = vpack.c.b16 %v516, %v508
    %v725 = vpack.c.b16 %v517, %v509
    %v726 = vpack.c.b16 %v526, %v518
    %v727 = vpack.c.b16 %v527, %v519
    %v728 = vpack.c.b16 %v528, %v520
    %v729 = vpack.c.b16 %v529, %v521
    %v730 = vpack.c.b16 %v530, %v522
    %v731 = vpack.c.b16 %v531, %v523
    %v732 = vpack.c.b16 %v532, %v524
    %v733 = vpack.c.b16 %v533, %v525
    %v734 = vpack.c.b16 %v542, %v534
    %v735 = vpack.c.b16 %v543, %v535
    %v736 = vpack.c.b16 %v544, %v536
    %v737 = vpack.c.b16 %v545, %v537
    %v738 = vpack.c.b16 %v546, %v538
    %v739 = vpack.c.b16 %v547, %v539
    %v740 = vpack.c.b16 %v548, %v540
    %v741 = vpack.c.b16 %v549, %v541
    %v742 = vpack.c.b16 %v558, %v550
    %v743 = vpack.c.b16 %v559, %v551
    %v744 = vpack.c.b16 %v560, %v552
    %v745 = vpack.c.b16 %v561, %v553
    %v746 = vpack.c.b16 %v562, %v554
    %v747 = vpack.c.b16 %v563, %v555
    %v748 = vpack.c.b16 %v564, %v556
    %v749 = vpack.c.b16 %v565, %v557
    %v750 = vpack.c.b16 %v574, %v566
    %v751 = vpack.c.b16 %v575, %v567
    %v752 = vpack.c.b16 %v576, %v568
    %v753 = vpack.c.b16 %v577, %v569
    %v754 = vpack.c.b16 %v578, %v570
    %v755 = vpack.c.b16 %v579, %v571
    %v756 = vpack.c.b16 %v580, %v572
    %v757 = vpack.c.b16 %v581, %v573
    %v758 = vpack.c.b16 %v590, %v582
    %v759 = vpack.c.b16 %v591, %v583
    %v760 = vpack.c.b16 %v592, %v584
    %v761 = vpack.c.b16 %v593, %v585
    %v762 = vpack.c.b16 %v594, %v586
    %v763 = vpack.c.b16 %v595, %v587
    %v764 = vpack.c.b16 %v596, %v588
    %v765 = vpack.c.b16 %v597, %v589
    %v766 = vpack.c.b16 %v606, %v598
    %v767 = vpack.c.b16 %v607, %v599
    %v768 = vpack.c.b16 %v608, %v600
    %v769 = vpack.c.b16 %v609, %v601
    %v770 = vpack.c.b16 %v610, %v602
    %v771 = vpack.c.b16 %v611, %v603
    %v772 = vpack.c.b16 %v612, %v604
    %v773 = vpack.c.b16 %v613, %v605
    %v774 = vpack.c.b16 %v622, %v614
    %v775 = vpack.c.b16 %v623, %v615
    %v776 = vpack.c.b16 %v624, %v616
    %v777 = vpack.c.b16 %v625, %v617
    %v778 = vpack.c.b16 %v626, %v618
    %v779 = vpack.c.b16 %v627, %v619
    %v780 = vpack.c.b16 %v628, %v620
    %v781 = vpack.c.b16 %v629, %v621
    %v782 = vpack.c.b16 %v638, %v630
    %v783 = vpack.c.b16 %v639, %v631
    %v784 = vpack.c.b16 %v640, %v632
    %v785 = vpack.c.b16 %v641, %v633
    %v786 = vpack.c.b16 %v642, %v634
    %v787 = vpack.c.b16 %v643, %v635
    %v788 = vpack.c.b16 %v644, %v636
    %v789 = vpack.c.b16 %v645, %v637
    %v790 = vpack.c.b16 %v654, %v646
    %v791 = vpack.c.b16 %v655, %v647
    %v792 = vpack.c.b16 %v656, %v648
    %v793 = vpack.c.b16 %v657, %v649
    %v794 = vpack.c.b16 %v658, %v650
    %v795 = vpack.c.b16 %v659, %v651
    %v796 = vpack.c.b16 %v660, %v652
    %v797 = vpack.c.b16 %v661, %v653
    %v798 = vpack.c.b16 %v670, %v662
    %v799 = vpack.c.b16 %v671, %v663
    %v800 = vpack.c.b16 %v672, %v664
    %v801 = vpack.c.b16 %v673, %v665
    %v802 = vpack.c.b16 %v674, %v666
    %v803 = vpack.c.b16 %v675, %v667
    %v804 = vpack.c.b16 %v676, %v668
    %v805 = vpack.c.b16 %v677, %v669
    %934 = vmatprep.subr.bf16.mxu0 %v679
    %935 = vmatpush1.bf16.msra.mxu0 %v678
    %936 = vmatprep.subr.bf16.mxu0 %v687
    %937 = vmatpush1.bf16.msra.mxu0 %v686
    %938 = vmatprep.subr.bf16.mxu0 %v695
    %939 = vmatpush1.bf16.msra.mxu0 %v694
    %940 = vmatprep.subr.bf16.mxu0 %v703
    %941 = vmatpush1.bf16.msra.mxu0 %v702
    %942 = vmatprep.subr.bf16.mxu0 %v711
    %943 = vmatpush1.bf16.msra.mxu0 %v710
    %944 = vmatprep.subr.bf16.mxu0 %v719
    %945 = vmatpush1.bf16.msra.mxu0 %v718
    %946 = vmatprep.subr.bf16.mxu0 %v727
    %947 = vmatpush1.bf16.msra.mxu0 %v726
    %948 = vmatprep.subr.bf16.mxu0 %v735
    %949 = vmatpush1.bf16.msra.mxu0 %v734
    %950 = vmatprep.subr.bf16.mxu0 %v743
    %951 = vmatpush1.bf16.msra.mxu0 %v742
    %952 = vmatprep.subr.bf16.mxu0 %v751
    %953 = vmatpush1.bf16.msra.mxu0 %v750
    %954 = vmatprep.subr.bf16.mxu0 %v759
    %955 = vmatpush1.bf16.msra.mxu0 %v758
    %956 = vmatprep.subr.bf16.mxu0 %v767
    %957 = vmatpush1.bf16.msra.mxu0 %v766
    %958 = vmatprep.subr.bf16.mxu0 %v775
    %959 = vmatpush1.bf16.msra.mxu0 %v774
    %960 = vmatprep.subr.bf16.mxu0 %v783
    %961 = vmatpush1.bf16.msra.mxu0 %v782
    %962 = vmatprep.subr.bf16.mxu0 %v791
    %963 = vmatpush1.bf16.msra.mxu0 %v790
    %964 = vmatprep.subr.bf16.mxu0 %v799
    %965 = vmatpush1.bf16.msra.mxu0 %v798
    %966 = vmatprep.mubr.bf16.mxu0 %v293
    %967 = vmatmul.mubr.bf16.gmra.mrb[0].mxu0 %v292
    %v968 = vpop.f32.mrb[0].mxu0
    %v969 = vadd.f32 0.0, %v968
    %v970 = vpop.f32.mrb[0].mxu0
    %v971 = vadd.f32 0.0, %v970
    %v972 = vpop.f32.mrb[0].mxu0
    %v973 = vpop.f32.mrb[0].mxu0
    %974 = vdwg.mxu0
    %975 = vmatprep.subr.bf16.mxu0 %v681
    %976 = vmatpush1.bf16.msra.mxu0 %v680
    %977 = vmatprep.subr.bf16.mxu0 %v689
    %978 = vmatpush1.bf16.msra.mxu0 %v688
    %979 = vmatprep.subr.bf16.mxu0 %v697
    %980 = vmatpush1.bf16.msra.mxu0 %v696
    %981 = vmatprep.subr.bf16.mxu0 %v705
    %982 = vmatpush1.bf16.msra.mxu0 %v704
    %983 = vmatprep.subr.bf16.mxu0 %v713
    %984 = vmatpush1.bf16.msra.mxu0 %v712
    %985 = vmatprep.subr.bf16.mxu0 %v721
    %986 = vmatpush1.bf16.msra.mxu0 %v720
    %987 = vmatprep.subr.bf16.mxu0 %v729
    %988 = vmatpush1.bf16.msra.mxu0 %v728
    %989 = vmatprep.subr.bf16.mxu0 %v737
    %990 = vmatpush1.bf16.msra.mxu0 %v736
    %991 = vmatprep.subr.bf16.mxu0 %v745
    %992 = vmatpush1.bf16.msra.mxu0 %v744
    %993 = vmatprep.subr.bf16.mxu0 %v753
    %994 = vmatpush1.bf16.msra.mxu0 %v752
    %995 = vmatprep.subr.bf16.mxu0 %v761
    %996 = vmatpush1.bf16.msra.mxu0 %v760
    %997 = vmatprep.subr.bf16.mxu0 %v769
    %998 = vmatpush1.bf16.msra.mxu0 %v768
    %999 = vmatprep.subr.bf16.mxu0 %v777
    %1000 = vmatpush1.bf16.msra.mxu0 %v776
    %1001 = vmatprep.subr.bf16.mxu0 %v785
    %1002 = vmatpush1.bf16.msra.mxu0 %v784
    %1003 = vmatprep.subr.bf16.mxu0 %v793
    %1004 = vmatpush1.bf16.msra.mxu0 %v792
    %1005 = vmatprep.subr.bf16.mxu0 %v801
    %1006 = vmatpush1.bf16.msra.mxu0 %v800
    %1007 = vmatprep.mubr.bf16.mxu0 %v293
    %1008 = vmatmul.mubr.bf16.gmra.mrb[0].mxu0 %v292
    %v1009 = vpop.f32.mrb[0].mxu0
    %v1010 = vadd.f32 0.0, %v1009
    %v1011 = vpop.f32.mrb[0].mxu0
    %v1012 = vadd.f32 0.0, %v1011
    %v1013 = vpop.f32.mrb[0].mxu0
    %v1014 = vpop.f32.mrb[0].mxu0
    %1015 = vdwg.mxu0
    %1016 = vmatprep.subr.bf16.mxu0 %v683
    %1017 = vmatpush1.bf16.msra.mxu0 %v682
    %1018 = vmatprep.subr.bf16.mxu0 %v691
    %1019 = vmatpush1.bf16.msra.mxu0 %v690
    %1020 = vmatprep.subr.bf16.mxu0 %v699
    %1021 = vmatpush1.bf16.msra.mxu0 %v698
    %1022 = vmatprep.subr.bf16.mxu0 %v707
    %1023 = vmatpush1.bf16.msra.mxu0 %v706
    %1024 = vmatprep.subr.bf16.mxu0 %v715
    %1025 = vmatpush1.bf16.msra.mxu0 %v714
    %1026 = vmatprep.subr.bf16.mxu0 %v723
    %1027 = vmatpush1.bf16.msra.mxu0 %v722
    %1028 = vmatprep.subr.bf16.mxu0 %v731
    %1029 = vmatpush1.bf16.msra.mxu0 %v730
    %1030 = vmatprep.subr.bf16.mxu0 %v739
    %1031 = vmatpush1.bf16.msra.mxu0 %v738
    %1032 = vmatprep.subr.bf16.mxu0 %v747
    %1033 = vmatpush1.bf16.msra.mxu0 %v746
    %1034 = vmatprep.subr.bf16.mxu0 %v755
    %1035 = vmatpush1.bf16.msra.mxu0 %v754
    %1036 = vmatprep.subr.bf16.mxu0 %v763
    %1037 = vmatpush1.bf16.msra.mxu0 %v762
    %1038 = vmatprep.subr.bf16.mxu0 %v771
    %1039 = vmatpush1.bf16.msra.mxu0 %v770
    %1040 = vmatprep.subr.bf16.mxu0 %v779
    %1041 = vmatpush1.bf16.msra.mxu0 %v778
    %1042 = vmatprep.subr.bf16.mxu0 %v787
    %1043 = vmatpush1.bf16.msra.mxu0 %v786
    %1044 = vmatprep.subr.bf16.mxu0 %v795
    %1045 = vmatpush1.bf16.msra.mxu0 %v794
    %1046 = vmatprep.subr.bf16.mxu0 %v803
    %1047 = vmatpush1.bf16.msra.mxu0 %v802
    %1048 = vmatprep.mubr.bf16.mxu0 %v293
    %1049 = vmatmul.mubr.bf16.gmra.mrb[0].mxu0 %v292
    %v1050 = vpop.f32.mrb[0].mxu0
    %v1051 = vadd.f32 0.0, %v1050
    %v1052 = vpop.f32.mrb[0].mxu0
    %v1053 = vadd.f32 0.0, %v1052
    %v1054 = vpop.f32.mrb[0].mxu0
    %v1055 = vpop.f32.mrb[0].mxu0
    %1056 = vdwg.mxu0
    %1057 = vmatprep.subr.bf16.mxu0 %v685
    %1058 = vmatpush1.bf16.msra.mxu0 %v684
    %1059 = vmatprep.subr.bf16.mxu0 %v693
    %1060 = vmatpush1.bf16.msra.mxu0 %v692
    %1061 = vmatprep.subr.bf16.mxu0 %v701
    %1062 = vmatpush1.bf16.msra.mxu0 %v700
    %1063 = vmatprep.subr.bf16.mxu0 %v709
    %1064 = vmatpush1.bf16.msra.mxu0 %v708
    %1065 = vmatprep.subr.bf16.mxu0 %v717
    %1066 = vmatpush1.bf16.msra.mxu0 %v716
    %1067 = vmatprep.subr.bf16.mxu0 %v725
    %1068 = vmatpush1.bf16.msra.mxu0 %v724
    %1069 = vmatprep.subr.bf16.mxu0 %v733
    %1070 = vmatpush1.bf16.msra.mxu0 %v732
    %1071 = vmatprep.subr.bf16.mxu0 %v741
    %1072 = vmatpush1.bf16.msra.mxu0 %v740
    %1073 = vmatprep.subr.bf16.mxu0 %v749
    %1074 = vmatpush1.bf16.msra.mxu0 %v748
    %1075 = vmatprep.subr.bf16.mxu0 %v757
    %1076 = vmatpush1.bf16.msra.mxu0 %v756
    %1077 = vmatprep.subr.bf16.mxu0 %v765
    %1078 = vmatpush1.bf16.msra.mxu0 %v764
    %1079 = vmatprep.subr.bf16.mxu0 %v773
    %1080 = vmatpush1.bf16.msra.mxu0 %v772
    %1081 = vmatprep.subr.bf16.mxu0 %v781
    %1082 = vmatpush1.bf16.msra.mxu0 %v780
    %1083 = vmatprep.subr.bf16.mxu0 %v789
    %1084 = vmatpush1.bf16.msra.mxu0 %v788
    %1085 = vmatprep.subr.bf16.mxu0 %v797
    %1086 = vmatpush1.bf16.msra.mxu0 %v796
    %1087 = vmatprep.subr.bf16.mxu0 %v805
    %1088 = vmatpush1.bf16.msra.mxu0 %v804
    %1089 = vmatprep.mubr.bf16.mxu0 %v293
    %1090 = vmatmul.mubr.bf16.gmra.mrb[0].mxu0 %v292
    %v1091 = vpop.f32.mrb[0].mxu0
    %v1092 = vadd.f32 0.0, %v1091
    %v1093 = vpop.f32.mrb[0].mxu0
    %v1094 = vadd.f32 0.0, %v1093
    %v1095 = vpop.f32.mrb[0].mxu0
    %v1096 = vpop.f32.mrb[0].mxu0
    %1097 = vdwg.mxu0
    %v1098 = vld [vmem:[#allocation4] sm:$0xff]
    %v1099 = vld [vmem:[#allocation4 + $0x8] sm:$0xff]
    %v1100 = vunpack.c.l.bf16 %v1098
    %v1101 = vunpack.c.h.bf16 %v1098
    %v1102 = vunpack.c.l.bf16 %v1099
    %v1103 = vunpack.c.h.bf16 %v1099
    %v1104 = vadd.f32 %v1100, %v969
    %v1105 = vadd.f32 %v1101, %v971
    %v1106 = vadd.f32 %v1102, %v1010
    %v1107 = vadd.f32 %v1103, %v1012
    %v1108 = vxor.u32 %v1104, 2147483648
    %v1109 = vmul.f32 %v1108, 1.442695
    %v1110 = vpow.pop %v1109
    %v1111 = vadd.f32 %v1110, 1.0
    %v1112 = vrcp.pop %v1111
    %v1113 = vmul.f32 1.0, %v1112
    %v1114 = vxor.u32 %v1105, 2147483648
    %v1115 = vmul.f32 %v1114, 1.442695
    %v1116 = vpow.pop %v1115
    %v1117 = vadd.f32 %v1116, 1.0
    %v1118 = vrcp.pop %v1117
    %v1119 = vmul.f32 1.0, %v1118
    %v1120 = vtanh.pop %v1106
    %v1121 = vxor.u32 %v1107, 2147483648
    %v1122 = vmul.f32 %v1121, 1.442695
    %v1123 = vpow.pop %v1122
    %v1124 = vadd.f32 %v1123, 1.0
    %v1125 = vrcp.pop %v1124
    %v1126 = vmul.f32 1.0, %v1125
    %v1127 = vmul.f32 %v1119, %v287
    %v1128 = vmul.f32 %v1113, %v1120
    %v1129 = vadd.f32 %v1127, %v1128
    %v1130 = vtanh.pop %v1129
    %v1131 = vmul.f32 %v1126, %v1130
    %v1132 = vpack.c.bf16 %v1131, %v1131
    %1133 = vst [vmem:[%s3] sm:$0xf] %v1132
    %s1134 = scalar_lea.vmem [#allocation5], 112
    %v1135 = vld [vmem:[%s1134] sm:$0xff]
    %v1136 = vld [vmem:[%s1134 + $0x8] sm:$0xff]
    %v1137 = vunpack.c.l.bf16 %v1135
    %v1138 = vunpack.c.h.bf16 %v1135
    %v1139 = vunpack.c.l.bf16 %v1136
    %v1140 = vunpack.c.h.bf16 %v1136
    %v1141 = vadd.f32 %v1137, %v1051
    %v1142 = vadd.f32 %v1138, %v1053
    %v1143 = vadd.f32 %v1139, %v1092
    %v1144 = vadd.f32 %v1140, %v1094
    %v1145 = vxor.u32 %v1141, 2147483648
    %v1146 = vmul.f32 %v1145, 1.442695
    %v1147 = vpow.pop %v1146
    %v1148 = vadd.f32 %v1147, 1.0
    %v1149 = vrcp.pop %v1148
    %v1150 = vmul.f32 1.0, %v1149
    %v1151 = vxor.u32 %v1142, 2147483648
    %v1152 = vmul.f32 %v1151, 1.442695
    %v1153 = vpow.pop %v1152
    %v1154 = vadd.f32 %v1153, 1.0
    %v1155 = vrcp.pop %v1154
    %v1156 = vmul.f32 1.0, %v1155
    %v1157 = vtanh.pop %v1143
    %v1158 = vxor.u32 %v1144, 2147483648
    %v1159 = vmul.f32 %v1158, 1.442695
    %v1160 = vpow.pop %v1159
    %v1161 = vadd.f32 %v1160, 1.0
    %v1162 = vrcp.pop %v1161
    %v1163 = vmul.f32 1.0, %v1162
    %v1164 = vmul.f32 %v1156, %v291
    %v1165 = vmul.f32 %v1150, %v1157
    %v1166 = vadd.f32 %v1164, %v1165
    %v1167 = vtanh.pop %v1166
    %v1168 = vmul.f32 %v1163, %v1167
    %v1169 = vpack.c.bf16 %v1168, %v1168
    %s1170 = scalar_lea.vmem %s147, 28
    %1171 = vst [vmem:[%s1170] sm:$0xf] %v1169
    %1172 = vmatprep.subr.bf16.mxu0 %v679
    %1173 = vmatpush1.bf16.msra.mxu0 %v678
    %1174 = vmatprep.subr.bf16.mxu0 %v687
    %1175 = vmatpush1.bf16.msra.mxu0 %v686
    %1176 = vmatprep.subr.bf16.mxu0 %v695
    %1177 = vmatpush1.bf16.msra.mxu0 %v694
    %1178 = vmatprep.subr.bf16.mxu0 %v703
    %1179 = vmatpush1.bf16.msra.mxu0 %v702
    %1180 = vmatprep.subr.bf16.mxu0 %v711
    %1181 = vmatpush1.bf16.msra.mxu0 %v710
    %1182 = vmatprep.subr.bf16.mxu0 %v719
    %1183 = vmatpush1.bf16.msra.mxu0 %v718
    %1184 = vmatprep.subr.bf16.mxu0 %v727
    %1185 = vmatpush1.bf16.msra.mxu0 %v726
    %1186 = vmatprep.subr.bf16.mxu0 %v735
    %1187 = vmatpush1.bf16.msra.mxu0 %v734
    %1188 = vmatprep.subr.bf16.mxu0 %v743
    %1189 = vmatpush1.bf16.msra.mxu0 %v742
    %1190 = vmatprep.subr.bf16.mxu0 %v751
    %1191 = vmatpush1.bf16.msra.mxu0 %v750
    %1192 = vmatprep.subr.bf16.mxu0 %v759
    %1193 = vmatpush1.bf16.msra.mxu0 %v758
    %1194 = vmatprep.subr.bf16.mxu0 %v767
    %1195 = vmatpush1.bf16.msra.mxu0 %v766
    %1196 = vmatprep.subr.bf16.mxu0 %v775
    %1197 = vmatpush1.bf16.msra.mxu0 %v774
    %1198 = vmatprep.subr.bf16.mxu0 %v783
    %1199 = vmatpush1.bf16.msra.mxu0 %v782
    %1200 = vmatprep.subr.bf16.mxu0 %v791
    %1201 = vmatpush1.bf16.msra.mxu0 %v790
    %1202 = vmatprep.subr.bf16.mxu0 %v799
    %1203 = vmatpush1.bf16.msra.mxu0 %v798
    %1204 = vmatprep.mubr.bf16.mxu0 %v1169
    %1205 = vmatmul.mubr.bf16.gmra.mrb[0].mxu0 %v1132
    %v1206 = vpop.f32.mrb[0].mxu0
    %v1207 = vadd.f32 0.0, %v1206
    %v1208 = vpop.f32.mrb[0].mxu0
    %v1209 = vadd.f32 0.0, %v1208
    %v1210 = vpop.f32.mrb[0].mxu0
    %v1211 = vpop.f32.mrb[0].mxu0
    %1212 = vdwg.mxu0
    %1213 = vmatprep.subr.bf16.mxu0 %v681
    %1214 = vmatpush1.bf16.msra.mxu0 %v680
    %1215 = vmatprep.subr.bf16.mxu0 %v689
    %1216 = vmatpush1.bf16.msra.mxu0 %v688
    %1217 = vmatprep.subr.bf16.mxu0 %v697
    %1218 = vmatpush1.bf16.msra.mxu0 %v696
    %1219 = vmatprep.subr.bf16.mxu0 %v705
    %1220 = vmatpush1.bf16.msra.mxu0 %v704
    %1221 = vmatprep.subr.bf16.mxu0 %v713
    %1222 = vmatpush1.bf16.msra.mxu0 %v712
    %1223 = vmatprep.subr.bf16.mxu0 %v721
    %1224 = vmatpush1.bf16.msra.mxu0 %v720
    %1225 = vmatprep.subr.bf16.mxu0 %v729
    %1226 = vmatpush1.bf16.msra.mxu0 %v728
    %1227 = vmatprep.subr.bf16.mxu0 %v737
    %1228 = vmatpush1.bf16.msra.mxu0 %v736
    %1229 = vmatprep.subr.bf16.mxu0 %v745
    %1230 = vmatpush1.bf16.msra.mxu0 %v744
    %1231 = vmatprep.subr.bf16.mxu0 %v753
    %1232 = vmatpush1.bf16.msra.mxu0 %v752
    %1233 = vmatprep.subr.bf16.mxu0 %v761
    %1234 = vmatpush1.bf16.msra.mxu0 %v760
    %1235 = vmatprep.subr.bf16.mxu0 %v769
    %1236 = vmatpush1.bf16.msra.mxu0 %v768
    %1237 = vmatprep.subr.bf16.mxu0 %v777
    %1238 = vmatpush1.bf16.msra.mxu0 %v776
    %1239 = vmatprep.subr.bf16.mxu0 %v785
    %1240 = vmatpush1.bf16.msra.mxu0 %v784
    %1241 = vmatprep.subr.bf16.mxu0 %v793
    %1242 = vmatpush1.bf16.msra.mxu0 %v792
    %1243 = vmatprep.subr.bf16.mxu0 %v801
    %1244 = vmatpush1.bf16.msra.mxu0 %v800
    %1245 = vmatprep.mubr.bf16.mxu0 %v1169
    %1246 = vmatmul.mubr.bf16.gmra.mrb[0].mxu0 %v1132
    %v1247 = vpop.f32.mrb[0].mxu0
    %v1248 = vadd.f32 0.0, %v1247
    %v1249 = vpop.f32.mrb[0].mxu0
    %v1250 = vadd.f32 0.0, %v1249
    %v1251 = vpop.f32.mrb[0].mxu0
    %v1252 = vpop.f32.mrb[0].mxu0
    %1253 = vdwg.mxu0
    %1254 = vmatprep.subr.bf16.mxu0 %v683
    %1255 = vmatpush1.bf16.msra.mxu0 %v682
    %1256 = vmatprep.subr.bf16.mxu0 %v691
    %1257 = vmatpush1.bf16.msra.mxu0 %v690
    %1258 = vmatprep.subr.bf16.mxu0 %v699
    %1259 = vmatpush1.bf16.msra.mxu0 %v698
    %1260 = vmatprep.subr.bf16.mxu0 %v707
    %1261 = vmatpush1.bf16.msra.mxu0 %v706
    %1262 = vmatprep.subr.bf16.mxu0 %v715
    %1263 = vmatpush1.bf16.msra.mxu0 %v714
    %1264 = vmatprep.subr.bf16.mxu0 %v723
    %1265 = vmatpush1.bf16.msra.mxu0 %v722
    %1266 = vmatprep.subr.bf16.mxu0 %v731
    %1267 = vmatpush1.bf16.msra.mxu0 %v730
    %1268 = vmatprep.subr.bf16.mxu0 %v739
    %1269 = vmatpush1.bf16.msra.mxu0 %v738
    %1270 = vmatprep.subr.bf16.mxu0 %v747
    %1271 = vmatpush1.bf16.msra.mxu0 %v746
    %1272 = vmatprep.subr.bf16.mxu0 %v755
    %1273 = vmatpush1.bf16.msra.mxu0 %v754
    %1274 = vmatprep.subr.bf16.mxu0 %v763
    %1275 = vmatpush1.bf16.msra.mxu0 %v762
    %1276 = vmatprep.subr.bf16.mxu0 %v771
    %1277 = vmatpush1.bf16.msra.mxu0 %v770
    %1278 = vmatprep.subr.bf16.mxu0 %v779
    %1279 = vmatpush1.bf16.msra.mxu0 %v778
    %1280 = vmatprep.subr.bf16.mxu0 %v787
    %1281 = vmatpush1.bf16.msra.mxu0 %v786
    %1282 = vmatprep.subr.bf16.mxu0 %v795
    %1283 = vmatpush1.bf16.msra.mxu0 %v794
    %1284 = vmatprep.subr.bf16.mxu0 %v803
    %1285 = vmatpush1.bf16.msra.mxu0 %v802
    %1286 = vmatprep.mubr.bf16.mxu0 %v1169
    %1287 = vmatmul.mubr.bf16.gmra.mrb[0].mxu0 %v1132
    %v1288 = vpop.f32.mrb[0].mxu0
    %v1289 = vadd.f32 0.0, %v1288
    %v1290 = vpop.f32.mrb[0].mxu0
    %v1291 = vadd.f32 0.0, %v1290
    %v1292 = vpop.f32.mrb[0].mxu0
    %v1293 = vpop.f32.mrb[0].mxu0
    %1294 = vdwg.mxu0
    %1295 = vmatprep.subr.bf16.mxu0 %v685
    %1296 = vmatpush1.bf16.msra.mxu0 %v684
    %1297 = vmatprep.subr.bf16.mxu0 %v693
    %1298 = vmatpush1.bf16.msra.mxu0 %v692
    %1299 = vmatprep.subr.bf16.mxu0 %v701
    %1300 = vmatpush1.bf16.msra.mxu0 %v700
    %1301 = vmatprep.subr.bf16.mxu0 %v709
    %1302 = vmatpush1.bf16.msra.mxu0 %v708
    %1303 = vmatprep.subr.bf16.mxu0 %v717
    %1304 = vmatpush1.bf16.msra.mxu0 %v716
    %1305 = vmatprep.subr.bf16.mxu0 %v725
    %1306 = vmatpush1.bf16.msra.mxu0 %v724
    %1307 = vmatprep.subr.bf16.mxu0 %v733
    %1308 = vmatpush1.bf16.msra.mxu0 %v732
    %1309 = vmatprep.subr.bf16.mxu0 %v741
    %1310 = vmatpush1.bf16.msra.mxu0 %v740
    %1311 = vmatprep.subr.bf16.mxu0 %v749
    %1312 = vmatpush1.bf16.msra.mxu0 %v748
    %1313 = vmatprep.subr.bf16.mxu0 %v757
    %1314 = vmatpush1.bf16.msra.mxu0 %v756
    %1315 = vmatprep.subr.bf16.mxu0 %v765
    %1316 = vmatpush1.bf16.msra.mxu0 %v764
    %1317 = vmatprep.subr.bf16.mxu0 %v773
    %1318 = vmatpush1.bf16.msra.mxu0 %v772
    %1319 = vmatprep.subr.bf16.mxu0 %v781
    %1320 = vmatpush1.bf16.msra.mxu0 %v780
    %1321 = vmatprep.subr.bf16.mxu0 %v789
    %1322 = vmatpush1.bf16.msra.mxu0 %v788
    %1323 = vmatprep.subr.bf16.mxu0 %v797
    %1324 = vmatpush1.bf16.msra.mxu0 %v796
    %1325 = vmatprep.subr.bf16.mxu0 %v805
    %1326 = vmatpush1.bf16.msra.mxu0 %v804
    %1327 = vmatprep.mubr.bf16.mxu0 %v1169
    %1328 = vmatmul.mubr.bf16.gmra.mrb[0].mxu0 %v1132
    %v1329 = vpop.f32.mrb[0].mxu0
    %v1330 = vadd.f32 0.0, %v1329
    %v1331 = vpop.f32.mrb[0].mxu0
    %v1332 = vadd.f32 0.0, %v1331
    %v1333 = vpop.f32.mrb[0].mxu0
    %v1334 = vpop.f32.mrb[0].mxu0
    %1335 = vdwg.mxu0
    %s1336 = scalar_lea.vmem [#allocation4], 16
    %v1337 = vld [vmem:[%s1336] sm:$0xff]
    %v1338 = vld [vmem:[%s1336 + $0x8] sm:$0xff]
    %v1339 = vunpack.c.l.bf16 %v1337
    %v1340 = vunpack.c.h.bf16 %v1337
    %v1341 = vunpack.c.l.bf16 %v1338
    %v1342 = vunpack.c.h.bf16 %v1338
    %v1343 = vadd.f32 %v1339, %v1207
    %v1344 = vadd.f32 %v1340, %v1209
    %v1345 = vadd.f32 %v1341, %v1248
    %v1346 = vadd.f32 %v1342, %v1250
    %v1347 = vxor.u32 %v1343, 2147483648
    %v1348 = vmul.f32 %v1347, 1.442695
    %v1349 = vpow.pop %v1348
    %v1350 = vadd.f32 %v1349, 1.0
    %v1351 = vrcp.pop %v1350
    %v1352 = vmul.f32 1.0, %v1351
    %v1353 = vxor.u32 %v1344, 2147483648
    %v1354 = vmul.f32 %v1353, 1.442695
    %v1355 = vpow.pop %v1354
    %v1356 = vadd.f32 %v1355, 1.0
    %v1357 = vrcp.pop %v1356
    %v1358 = vmul.f32 1.0, %v1357
    %v1359 = vtanh.pop %v1345
    %v1360 = vxor.u32 %v1346, 2147483648
    %v1361 = vmul.f32 %v1360, 1.442695
    %v1362 = vpow.pop %v1361
    %v1363 = vadd.f32 %v1362, 1.0
    %v1364 = vrcp.pop %v1363
    %v1365 = vmul.f32 1.0, %v1364
    %v1366 = vmul.f32 %v1358, %v1129
    %v1367 = vmul.f32 %v1352, %v1359
    %v1368 = vadd.f32 %v1366, %v1367
    %v1369 = vtanh.pop %v1368
    %v1370 = vmul.f32 %v1365, %v1369
    %v1371 = vpack.c.bf16 %v1370, %v1370
    %s1372 = scalar_lea.vmem %s3, 4
    %1373 = vst [vmem:[%s1372] sm:$0xf] %v1371
    %s1374 = scalar_lea.vmem [#allocation5], 96
    %v1375 = vld [vmem:[%s1374] sm:$0xff]
    %v1376 = vld [vmem:[%s1374 + $0x8] sm:$0xff]
    %v1377 = vunpack.c.l.bf16 %v1375
    %v1378 = vunpack.c.h.bf16 %v1375
    %v1379 = vunpack.c.l.bf16 %v1376
    %v1380 = vunpack.c.h.bf16 %v1376
    %v1381 = vadd.f32 %v1377, %v1289
    %v1382 = vadd.f32 %v1378, %v1291
    %v1383 = vadd.f32 %v1379, %v1330
    %v1384 = vadd.f32 %v1380, %v1332
    %v1385 = vxor.u32 %v1381, 2147483648
    %v1386 = vmul.f32 %v1385, 1.442695
    %v1387 = vpow.pop %v1386
    %v1388 = vadd.f32 %v1387, 1.0
    %v1389 = vrcp.pop %v1388
    %v1390 = vmul.f32 1.0, %v1389
    %v1391 = vxor.u32 %v1382, 2147483648
    %v1392 = vmul.f32 %v1391, 1.442695
    %v1393 = vpow.pop %v1392
    %v1394 = vadd.f32 %v1393, 1.0
    %v1395 = vrcp.pop %v1394
    %v1396 = vmul.f32 1.0, %v1395
    %v1397 = vtanh.pop %v1383
    %v1398 = vxor.u32 %v1384, 2147483648
    %v1399 = vmul.f32 %v1398, 1.442695
    %v1400 = vpow.pop %v1399
    %v1401 = vadd.f32 %v1400, 1.0
    %v1402 = vrcp.pop %v1401
    %v1403 = vmul.f32 1.0, %v1402
    %v1404 = vmul.f32 %v1396, %v1166
    %v1405 = vmul.f32 %v1390, %v1397
    %v1406 = vadd.f32 %v1404, %v1405
    %v1407 = vtanh.pop %v1406
    %v1408 = vmul.f32 %v1403, %v1407
    %v1409 = vpack.c.bf16 %v1408, %v1408
    %s1410 = scalar_lea.vmem %s147, 24
    %1411 = vst [vmem:[%s1410] sm:$0xf] %v1409
    %1412 = vmatprep.subr.bf16.mxu0 %v679
    %1413 = vmatpush1.bf16.msra.mxu0 %v678
    %1414 = vmatprep.subr.bf16.mxu0 %v687
    %1415 = vmatpush1.bf16.msra.mxu0 %v686
    %1416 = vmatprep.subr.bf16.mxu0 %v695
    %1417 = vmatpush1.bf16.msra.mxu0 %v694
    %1418 = vmatprep.subr.bf16.mxu0 %v703
    %1419 = vmatpush1.bf16.msra.mxu0 %v702
    %1420 = vmatprep.subr.bf16.mxu0 %v711
    %1421 = vmatpush1.bf16.msra.mxu0 %v710
    %1422 = vmatprep.subr.bf16.mxu0 %v719
    %1423 = vmatpush1.bf16.msra.mxu0 %v718
    %1424 = vmatprep.subr.bf16.mxu0 %v727
    %1425 = vmatpush1.bf16.msra.mxu0 %v726
    %1426 = vmatprep.subr.bf16.mxu0 %v735
    %1427 = vmatpush1.bf16.msra.mxu0 %v734
    %1428 = vmatprep.subr.bf16.mxu0 %v743
    %1429 = vmatpush1.bf16.msra.mxu0 %v742
    %1430 = vmatprep.subr.bf16.mxu0 %v751
    %1431 = vmatpush1.bf16.msra.mxu0 %v750
    %1432 = vmatprep.subr.bf16.mxu0 %v759
    %1433 = vmatpush1.bf16.msra.mxu0 %v758
    %1434 = vmatprep.subr.bf16.mxu0 %v767
    %1435 = vmatpush1.bf16.msra.mxu0 %v766
    %1436 = vmatprep.subr.bf16.mxu0 %v775
    %1437 = vmatpush1.bf16.msra.mxu0 %v774
    %1438 = vmatprep.subr.bf16.mxu0 %v783
    %1439 = vmatpush1.bf16.msra.mxu0 %v782
    %1440 = vmatprep.subr.bf16.mxu0 %v791
    %1441 = vmatpush1.bf16.msra.mxu0 %v790
    %1442 = vmatprep.subr.bf16.mxu0 %v799
    %1443 = vmatpush1.bf16.msra.mxu0 %v798
    %1444 = vmatprep.mubr.bf16.mxu0 %v1409
    %1445 = vmatmul.mubr.bf16.gmra.mrb[0].mxu0 %v1371
    %v1446 = vpop.f32.mrb[0].mxu0
    %v1447 = vadd.f32 0.0, %v1446
    %v1448 = vpop.f32.mrb[0].mxu0
    %v1449 = vadd.f32 0.0, %v1448
    %v1450 = vpop.f32.mrb[0].mxu0
    %v1451 = vpop.f32.mrb[0].mxu0
    %1452 = vdwg.mxu0
    %1453 = vmatprep.subr.bf16.mxu0 %v681
    %1454 = vmatpush1.bf16.msra.mxu0 %v680
    %1455 = vmatprep.subr.bf16.mxu0 %v689
    %1456 = vmatpush1.bf16.msra.mxu0 %v688
    %1457 = vmatprep.subr.bf16.mxu0 %v697
    %1458 = vmatpush1.bf16.msra.mxu0 %v696
    %1459 = vmatprep.subr.bf16.mxu0 %v705
    %1460 = vmatpush1.bf16.msra.mxu0 %v704
    %1461 = vmatprep.subr.bf16.mxu0 %v713
    %1462 = vmatpush1.bf16.msra.mxu0 %v712
    %1463 = vmatprep.subr.bf16.mxu0 %v721
    %1464 = vmatpush1.bf16.msra.mxu0 %v720
    %1465 = vmatprep.subr.bf16.mxu0 %v729
    %1466 = vmatpush1.bf16.msra.mxu0 %v728
    %1467 = vmatprep.subr.bf16.mxu0 %v737
    %1468 = vmatpush1.bf16.msra.mxu0 %v736
    %1469 = vmatprep.subr.bf16.mxu0 %v745
    %1470 = vmatpush1.bf16.msra.mxu0 %v744
    %1471 = vmatprep.subr.bf16.mxu0 %v753
    %1472 = vmatpush1.bf16.msra.mxu0 %v752
    %1473 = vmatprep.subr.bf16.mxu0 %v761
    %1474 = vmatpush1.bf16.msra.mxu0 %v760
    %1475 = vmatprep.subr.bf16.mxu0 %v769
    %1476 = vmatpush1.bf16.msra.mxu0 %v768
    %1477 = vmatprep.subr.bf16.mxu0 %v777
    %1478 = vmatpush1.bf16.msra.mxu0 %v776
    %1479 = vmatprep.subr.bf16.mxu0 %v785
    %1480 = vmatpush1.bf16.msra.mxu0 %v784
    %1481 = vmatprep.subr.bf16.mxu0 %v793
    %1482 = vmatpush1.bf16.msra.mxu0 %v792
    %1483 = vmatprep.subr.bf16.mxu0 %v801
    %1484 = vmatpush1.bf16.msra.mxu0 %v800
    %1485 = vmatprep.mubr.bf16.mxu0 %v1409
    %1486 = vmatmul.mubr.bf16.gmra.mrb[0].mxu0 %v1371
    %v1487 = vpop.f32.mrb[0].mxu0
    %v1488 = vadd.f32 0.0, %v1487
    %v1489 = vpop.f32.mrb[0].mxu0
    %v1490 = vadd.f32 0.0, %v1489
    %v1491 = vpop.f32.mrb[0].mxu0
    %v1492 = vpop.f32.mrb[0].mxu0
    %1493 = vdwg.mxu0
    %1494 = vmatprep.subr.bf16.mxu0 %v683
    %1495 = vmatpush1.bf16.msra.mxu0 %v682
    %1496 = vmatprep.subr.bf16.mxu0 %v691
    %1497 = vmatpush1.bf16.msra.mxu0 %v690
    %1498 = vmatprep.subr.bf16.mxu0 %v699
    %1499 = vmatpush1.bf16.msra.mxu0 %v698
    %1500 = vmatprep.subr.bf16.mxu0 %v707
    %1501 = vmatpush1.bf16.msra.mxu0 %v706
    %1502 = vmatprep.subr.bf16.mxu0 %v715
    %1503 = vmatpush1.bf16.msra.mxu0 %v714
    %1504 = vmatprep.subr.bf16.mxu0 %v723
    %1505 = vmatpush1.bf16.msra.mxu0 %v722
    %1506 = vmatprep.subr.bf16.mxu0 %v731
    %1507 = vmatpush1.bf16.msra.mxu0 %v730
    %1508 = vmatprep.subr.bf16.mxu0 %v739
    %1509 = vmatpush1.bf16.msra.mxu0 %v738
    %1510 = vmatprep.subr.bf16.mxu0 %v747
    %1511 = vmatpush1.bf16.msra.mxu0 %v746
    %1512 = vmatprep.subr.bf16.mxu0 %v755
    %1513 = vmatpush1.bf16.msra.mxu0 %v754
    %1514 = vmatprep.subr.bf16.mxu0 %v763
    %1515 = vmatpush1.bf16.msra.mxu0 %v762
    %1516 = vmatprep.subr.bf16.mxu0 %v771
    %1517 = vmatpush1.bf16.msra.mxu0 %v770
    %1518 = vmatprep.subr.bf16.mxu0 %v779
    %1519 = vmatpush1.bf16.msra.mxu0 %v778
    %1520 = vmatprep.subr.bf16.mxu0 %v787
    %1521 = vmatpush1.bf16.msra.mxu0 %v786
    %1522 = vmatprep.subr.bf16.mxu0 %v795
    %1523 = vmatpush1.bf16.msra.mxu0 %v794
    %1524 = vmatprep.subr.bf16.mxu0 %v803
    %1525 = vmatpush1.bf16.msra.mxu0 %v802
    %1526 = vmatprep.mubr.bf16.mxu0 %v1409
    %1527 = vmatmul.mubr.bf16.gmra.mrb[0].mxu0 %v1371
    %v1528 = vpop.f32.mrb[0].mxu0
    %v1529 = vadd.f32 0.0, %v1528
    %v1530 = vpop.f32.mrb[0].mxu0
    %v1531 = vadd.f32 0.0, %v1530
    %v1532 = vpop.f32.mrb[0].mxu0
    %v1533 = vpop.f32.mrb[0].mxu0
    %1534 = vdwg.mxu0
    %1535 = vmatprep.subr.bf16.mxu0 %v685
    %1536 = vmatpush1.bf16.msra.mxu0 %v684
    %1537 = vmatprep.subr.bf16.mxu0 %v693
    %1538 = vmatpush1.bf16.msra.mxu0 %v692
    %1539 = vmatprep.subr.bf16.mxu0 %v701
    %1540 = vmatpush1.bf16.msra.mxu0 %v700
    %1541 = vmatprep.subr.bf16.mxu0 %v709
    %1542 = vmatpush1.bf16.msra.mxu0 %v708
    %1543 = vmatprep.subr.bf16.mxu0 %v717
    %1544 = vmatpush1.bf16.msra.mxu0 %v716
    %1545 = vmatprep.subr.bf16.mxu0 %v725
    %1546 = vmatpush1.bf16.msra.mxu0 %v724
    %1547 = vmatprep.subr.bf16.mxu0 %v733
    %1548 = vmatpush1.bf16.msra.mxu0 %v732
    %1549 = vmatprep.subr.bf16.mxu0 %v741
    %1550 = vmatpush1.bf16.msra.mxu0 %v740
    %1551 = vmatprep.subr.bf16.mxu0 %v749
    %1552 = vmatpush1.bf16.msra.mxu0 %v748
    %1553 = vmatprep.subr.bf16.mxu0 %v757
    %1554 = vmatpush1.bf16.msra.mxu0 %v756
    %1555 = vmatprep.subr.bf16.mxu0 %v765
    %1556 = vmatpush1.bf16.msra.mxu0 %v764
    %1557 = vmatprep.subr.bf16.mxu0 %v773
    %1558 = vmatpush1.bf16.msra.mxu0 %v772
    %1559 = vmatprep.subr.bf16.mxu0 %v781
    %1560 = vmatpush1.bf16.msra.mxu0 %v780
    %1561 = vmatprep.subr.bf16.mxu0 %v789
    %1562 = vmatpush1.bf16.msra.mxu0 %v788
    %1563 = vmatprep.subr.bf16.mxu0 %v797
    %1564 = vmatpush1.bf16.msra.mxu0 %v796
    %1565 = vmatprep.subr.bf16.mxu0 %v805
    %1566 = vmatpush1.bf16.msra.mxu0 %v804
    %1567 = vmatprep.mubr.bf16.mxu0 %v1409
    %1568 = vmatmul.mubr.bf16.gmra.mrb[0].mxu0 %v1371
    %v1569 = vpop.f32.mrb[0].mxu0
    %v1570 = vadd.f32 0.0, %v1569
    %v1571 = vpop.f32.mrb[0].mxu0
    %v1572 = vadd.f32 0.0, %v1571
    %v1573 = vpop.f32.mrb[0].mxu0
    %v1574 = vpop.f32.mrb[0].mxu0
    %1575 = vdwg.mxu0
    %s1576 = scalar_lea.vmem [#allocation4], 32
    %v1577 = vld [vmem:[%s1576] sm:$0xff]
    %v1578 = vld [vmem:[%s1576 + $0x8] sm:$0xff]
    %v1579 = vunpack.c.l.bf16 %v1577
    %v1580 = vunpack.c.h.bf16 %v1577
    %v1581 = vunpack.c.l.bf16 %v1578
    %v1582 = vunpack.c.h.bf16 %v1578
    %v1583 = vadd.f32 %v1579, %v1447
    %v1584 = vadd.f32 %v1580, %v1449
    %v1585 = vadd.f32 %v1581, %v1488
    %v1586 = vadd.f32 %v1582, %v1490
    %v1587 = vxor.u32 %v1583, 2147483648
    %v1588 = vmul.f32 %v1587, 1.442695
    %v1589 = vpow.pop %v1588
    %v1590 = vadd.f32 %v1589, 1.0
    %v1591 = vrcp.pop %v1590
    %v1592 = vmul.f32 1.0, %v1591
    %v1593 = vxor.u32 %v1584, 2147483648
    %v1594 = vmul.f32 %v1593, 1.442695
    %v1595 = vpow.pop %v1594
    %v1596 = vadd.f32 %v1595, 1.0
    %v1597 = vrcp.pop %v1596
    %v1598 = vmul.f32 1.0, %v1597
    %v1599 = vtanh.pop %v1585
    %v1600 = vxor.u32 %v1586, 2147483648
    %v1601 = vmul.f32 %v1600, 1.442695
    %v1602 = vpow.pop %v1601
    %v1603 = vadd.f32 %v1602, 1.0
    %v1604 = vrcp.pop %v1603
    %v1605 = vmul.f32 1.0, %v1604
    %v1606 = vmul.f32 %v1598, %v1368
    %v1607 = vmul.f32 %v1592, %v1599
    %v1608 = vadd.f32 %v1606, %v1607
    %v1609 = vtanh.pop %v1608
    %v1610 = vmul.f32 %v1605, %v1609
    %v1611 = vpack.c.bf16 %v1610, %v1610
    %s1612 = scalar_lea.vmem %s3, 8
    %1613 = vst [vmem:[%s1612] sm:$0xf] %v1611
    %s1614 = scalar_lea.vmem [#allocation5], 80
    %v1615 = vld [vmem:[%s1614] sm:$0xff]
    %v1616 = vld [vmem:[%s1614 + $0x8] sm:$0xff]
    %v1617 = vunpack.c.l.bf16 %v1615
    %v1618 = vunpack.c.h.bf16 %v1615
    %v1619 = vunpack.c.l.bf16 %v1616
    %v1620 = vunpack.c.h.bf16 %v1616
    %v1621 = vadd.f32 %v1617, %v1529
    %v1622 = vadd.f32 %v1618, %v1531
    %v1623 = vadd.f32 %v1619, %v1570
    %v1624 = vadd.f32 %v1620, %v1572
    %v1625 = vxor.u32 %v1621, 2147483648
    %v1626 = vmul.f32 %v1625, 1.442695
    %v1627 = vpow.pop %v1626
    %v1628 = vadd.f32 %v1627, 1.0
    %v1629 = vrcp.pop %v1628
    %v1630 = vmul.f32 1.0, %v1629
    %v1631 = vxor.u32 %v1622, 2147483648
    %v1632 = vmul.f32 %v1631, 1.442695
    %v1633 = vpow.pop %v1632
    %v1634 = vadd.f32 %v1633, 1.0
    %v1635 = vrcp.pop %v1634
    %v1636 = vmul.f32 1.0, %v1635
    %v1637 = vtanh.pop %v1623
    %v1638 = vxor.u32 %v1624, 2147483648
    %v1639 = vmul.f32 %v1638, 1.442695
    %v1640 = vpow.pop %v1639
    %v1641 = vadd.f32 %v1640, 1.0
    %v1642 = vrcp.pop %v1641
    %v1643 = vmul.f32 1.0, %v1642
    %v1644 = vmul.f32 %v1636, %v1406
    %v1645 = vmul.f32 %v1630, %v1637
    %v1646 = vadd.f32 %v1644, %v1645
    %v1647 = vtanh.pop %v1646
    %v1648 = vmul.f32 %v1643, %v1647
    %v1649 = vpack.c.bf16 %v1648, %v1648
    %s1650 = scalar_lea.vmem %s147, 20
    %1651 = vst [vmem:[%s1650] sm:$0xf] %v1649
    %1652 = vmatprep.subr.bf16.mxu0 %v679
    %1653 = vmatpush1.bf16.msra.mxu0 %v678
    %1654 = vmatprep.subr.bf16.mxu0 %v687
    %1655 = vmatpush1.bf16.msra.mxu0 %v686
    %1656 = vmatprep.subr.bf16.mxu0 %v695
    %1657 = vmatpush1.bf16.msra.mxu0 %v694
    %1658 = vmatprep.subr.bf16.mxu0 %v703
    %1659 = vmatpush1.bf16.msra.mxu0 %v702
    %1660 = vmatprep.subr.bf16.mxu0 %v711
    %1661 = vmatpush1.bf16.msra.mxu0 %v710
    %1662 = vmatprep.subr.bf16.mxu0 %v719
    %1663 = vmatpush1.bf16.msra.mxu0 %v718
    %1664 = vmatprep.subr.bf16.mxu0 %v727
    %1665 = vmatpush1.bf16.msra.mxu0 %v726
    %1666 = vmatprep.subr.bf16.mxu0 %v735
    %1667 = vmatpush1.bf16.msra.mxu0 %v734
    %1668 = vmatprep.subr.bf16.mxu0 %v743
    %1669 = vmatpush1.bf16.msra.mxu0 %v742
    %1670 = vmatprep.subr.bf16.mxu0 %v751
    %1671 = vmatpush1.bf16.msra.mxu0 %v750
    %1672 = vmatprep.subr.bf16.mxu0 %v759
    %1673 = vmatpush1.bf16.msra.mxu0 %v758
    %1674 = vmatprep.subr.bf16.mxu0 %v767
    %1675 = vmatpush1.bf16.msra.mxu0 %v766
    %1676 = vmatprep.subr.bf16.mxu0 %v775
    %1677 = vmatpush1.bf16.msra.mxu0 %v774
    %1678 = vmatprep.subr.bf16.mxu0 %v783
    %1679 = vmatpush1.bf16.msra.mxu0 %v782
    %1680 = vmatprep.subr.bf16.mxu0 %v791
    %1681 = vmatpush1.bf16.msra.mxu0 %v790
    %1682 = vmatprep.subr.bf16.mxu0 %v799
    %1683 = vmatpush1.bf16.msra.mxu0 %v798
    %1684 = vmatprep.mubr.bf16.mxu0 %v1649
    %1685 = vmatmul.mubr.bf16.gmra.mrb[0].mxu0 %v1611
    %v1686 = vpop.f32.mrb[0].mxu0
    %v1687 = vadd.f32 0.0, %v1686
    %v1688 = vpop.f32.mrb[0].mxu0
    %v1689 = vadd.f32 0.0, %v1688
    %v1690 = vpop.f32.mrb[0].mxu0
    %v1691 = vpop.f32.mrb[0].mxu0
    %1692 = vdwg.mxu0
    %1693 = vmatprep.subr.bf16.mxu0 %v681
    %1694 = vmatpush1.bf16.msra.mxu0 %v680
    %1695 = vmatprep.subr.bf16.mxu0 %v689
    %1696 = vmatpush1.bf16.msra.mxu0 %v688
    %1697 = vmatprep.subr.bf16.mxu0 %v697
    %1698 = vmatpush1.bf16.msra.mxu0 %v696
    %1699 = vmatprep.subr.bf16.mxu0 %v705
    %1700 = vmatpush1.bf16.msra.mxu0 %v704
    %1701 = vmatprep.subr.bf16.mxu0 %v713
    %1702 = vmatpush1.bf16.msra.mxu0 %v712
    %1703 = vmatprep.subr.bf16.mxu0 %v721
    %1704 = vmatpush1.bf16.msra.mxu0 %v720
    %1705 = vmatprep.subr.bf16.mxu0 %v729
    %1706 = vmatpush1.bf16.msra.mxu0 %v728
    %1707 = vmatprep.subr.bf16.mxu0 %v737
    %1708 = vmatpush1.bf16.msra.mxu0 %v736
    %1709 = vmatprep.subr.bf16.mxu0 %v745
    %1710 = vmatpush1.bf16.msra.mxu0 %v744
    %1711 = vmatprep.subr.bf16.mxu0 %v753
    %1712 = vmatpush1.bf16.msra.mxu0 %v752
    %1713 = vmatprep.subr.bf16.mxu0 %v761
    %1714 = vmatpush1.bf16.msra.mxu0 %v760
    %1715 = vmatprep.subr.bf16.mxu0 %v769
    %1716 = vmatpush1.bf16.msra.mxu0 %v768
    %1717 = vmatprep.subr.bf16.mxu0 %v777
    %1718 = vmatpush1.bf16.msra.mxu0 %v776
    %1719 = vmatprep.subr.bf16.mxu0 %v785
    %1720 = vmatpush1.bf16.msra.mxu0 %v784
    %1721 = vmatprep.subr.bf16.mxu0 %v793
    %1722 = vmatpush1.bf16.msra.mxu0 %v792
    %1723 = vmatprep.subr.bf16.mxu0 %v801
    %1724 = vmatpush1.bf16.msra.mxu0 %v800
    %1725 = vmatprep.mubr.bf16.mxu0 %v1649
    %1726 = vmatmul.mubr.bf16.gmra.mrb[0].mxu0 %v1611
    %v1727 = vpop.f32.mrb[0].mxu0
    %v1728 = vadd.f32 0.0, %v1727
    %v1729 = vpop.f32.mrb[0].mxu0
    %v1730 = vadd.f32 0.0, %v1729
    %v1731 = vpop.f32.mrb[0].mxu0
    %v1732 = vpop.f32.mrb[0].mxu0
    %1733 = vdwg.mxu0
    %1734 = vmatprep.subr.bf16.mxu0 %v683
    %1735 = vmatpush1.bf16.msra.mxu0 %v682
    %1736 = vmatprep.subr.bf16.mxu0 %v691
    %1737 = vmatpush1.bf16.msra.mxu0 %v690
    %1738 = vmatprep.subr.bf16.mxu0 %v699
    %1739 = vmatpush1.bf16.msra.mxu0 %v698
    %1740 = vmatprep.subr.bf16.mxu0 %v707
    %1741 = vmatpush1.bf16.msra.mxu0 %v706
    %1742 = vmatprep.subr.bf16.mxu0 %v715
    %1743 = vmatpush1.bf16.msra.mxu0 %v714
    %1744 = vmatprep.subr.bf16.mxu0 %v723
    %1745 = vmatpush1.bf16.msra.mxu0 %v722
    %1746 = vmatprep.subr.bf16.mxu0 %v731
    %1747 = vmatpush1.bf16.msra.mxu0 %v730
    %1748 = vmatprep.subr.bf16.mxu0 %v739
    %1749 = vmatpush1.bf16.msra.mxu0 %v738
    %1750 = vmatprep.subr.bf16.mxu0 %v747
    %1751 = vmatpush1.bf16.msra.mxu0 %v746
    %1752 = vmatprep.subr.bf16.mxu0 %v755
    %1753 = vmatpush1.bf16.msra.mxu0 %v754
    %1754 = vmatprep.subr.bf16.mxu0 %v763
    %1755 = vmatpush1.bf16.msra.mxu0 %v762
    %1756 = vmatprep.subr.bf16.mxu0 %v771
    %1757 = vmatpush1.bf16.msra.mxu0 %v770
    %1758 = vmatprep.subr.bf16.mxu0 %v779
    %1759 = vmatpush1.bf16.msra.mxu0 %v778
    %1760 = vmatprep.subr.bf16.mxu0 %v787
    %1761 = vmatpush1.bf16.msra.mxu0 %v786
    %1762 = vmatprep.subr.bf16.mxu0 %v795
    %1763 = vmatpush1.bf16.msra.mxu0 %v794
    %1764 = vmatprep.subr.bf16.mxu0 %v803
    %1765 = vmatpush1.bf16.msra.mxu0 %v802
    %1766 = vmatprep.mubr.bf16.mxu0 %v1649
    %1767 = vmatmul.mubr.bf16.gmra.mrb[0].mxu0 %v1611
    %v1768 = vpop.f32.mrb[0].mxu0
    %v1769 = vadd.f32 0.0, %v1768
    %v1770 = vpop.f32.mrb[0].mxu0
    %v1771 = vadd.f32 0.0, %v1770
    %v1772 = vpop.f32.mrb[0].mxu0
    %v1773 = vpop.f32.mrb[0].mxu0
    %1774 = vdwg.mxu0
    %1775 = vmatprep.subr.bf16.mxu0 %v685
    %1776 = vmatpush1.bf16.msra.mxu0 %v684
    %1777 = vmatprep.subr.bf16.mxu0 %v693
    %1778 = vmatpush1.bf16.msra.mxu0 %v692
    %1779 = vmatprep.subr.bf16.mxu0 %v701
    %1780 = vmatpush1.bf16.msra.mxu0 %v700
    %1781 = vmatprep.subr.bf16.mxu0 %v709
    %1782 = vmatpush1.bf16.msra.mxu0 %v708
    %1783 = vmatprep.subr.bf16.mxu0 %v717
    %1784 = vmatpush1.bf16.msra.mxu0 %v716
    %1785 = vmatprep.subr.bf16.mxu0 %v725
    %1786 = vmatpush1.bf16.msra.mxu0 %v724
    %1787 = vmatprep.subr.bf16.mxu0 %v733
    %1788 = vmatpush1.bf16.msra.mxu0 %v732
    %1789 = vmatprep.subr.bf16.mxu0 %v741
    %1790 = vmatpush1.bf16.msra.mxu0 %v740
    %1791 = vmatprep.subr.bf16.mxu0 %v749
    %1792 = vmatpush1.bf16.msra.mxu0 %v748
    %1793 = vmatprep.subr.bf16.mxu0 %v757
    %1794 = vmatpush1.bf16.msra.mxu0 %v756
    %1795 = vmatprep.subr.bf16.mxu0 %v765
    %1796 = vmatpush1.bf16.msra.mxu0 %v764
    %1797 = vmatprep.subr.bf16.mxu0 %v773
    %1798 = vmatpush1.bf16.msra.mxu0 %v772
    %1799 = vmatprep.subr.bf16.mxu0 %v781
    %1800 = vmatpush1.bf16.msra.mxu0 %v780
    %1801 = vmatprep.subr.bf16.mxu0 %v789
    %1802 = vmatpush1.bf16.msra.mxu0 %v788
    %1803 = vmatprep.subr.bf16.mxu0 %v797
    %1804 = vmatpush1.bf16.msra.mxu0 %v796
    %1805 = vmatprep.subr.bf16.mxu0 %v805
    %1806 = vmatpush1.bf16.msra.mxu0 %v804
    %1807 = vmatprep.mubr.bf16.mxu0 %v1649
    %1808 = vmatmul.mubr.bf16.gmra.mrb[0].mxu0 %v1611
    %v1809 = vpop.f32.mrb[0].mxu0
    %v1810 = vadd.f32 0.0, %v1809
    %v1811 = vpop.f32.mrb[0].mxu0
    %v1812 = vadd.f32 0.0, %v1811
    %v1813 = vpop.f32.mrb[0].mxu0
    %v1814 = vpop.f32.mrb[0].mxu0
    %1815 = vdwg.mxu0
    %s1816 = scalar_lea.vmem [#allocation4], 48
    %v1817 = vld [vmem:[%s1816] sm:$0xff]
    %v1818 = vld [vmem:[%s1816 + $0x8] sm:$0xff]
    %v1819 = vunpack.c.l.bf16 %v1817
    %v1820 = vunpack.c.h.bf16 %v1817
    %v1821 = vunpack.c.l.bf16 %v1818
    %v1822 = vunpack.c.h.bf16 %v1818
    %v1823 = vadd.f32 %v1819, %v1687
    %v1824 = vadd.f32 %v1820, %v1689
    %v1825 = vadd.f32 %v1821, %v1728
    %v1826 = vadd.f32 %v1822, %v1730
    %v1827 = vxor.u32 %v1823, 2147483648
    %v1828 = vmul.f32 %v1827, 1.442695
    %v1829 = vpow.pop %v1828
    %v1830 = vadd.f32 %v1829, 1.0
    %v1831 = vrcp.pop %v1830
    %v1832 = vmul.f32 1.0, %v1831
    %v1833 = vxor.u32 %v1824, 2147483648
    %v1834 = vmul.f32 %v1833, 1.442695
    %v1835 = vpow.pop %v1834
    %v1836 = vadd.f32 %v1835, 1.0
    %v1837 = vrcp.pop %v1836
    %v1838 = vmul.f32 1.0, %v1837
    %v1839 = vtanh.pop %v1825
    %v1840 = vxor.u32 %v1826, 2147483648
    %v1841 = vmul.f32 %v1840, 1.442695
    %v1842 = vpow.pop %v1841
    %v1843 = vadd.f32 %v1842, 1.0
    %v1844 = vrcp.pop %v1843
    %v1845 = vmul.f32 1.0, %v1844
    %v1846 = vmul.f32 %v1838, %v1608
    %v1847 = vmul.f32 %v1832, %v1839
    %v1848 = vadd.f32 %v1846, %v1847
    %v1849 = vtanh.pop %v1848
    %v1850 = vmul.f32 %v1845, %v1849
    %v1851 = vpack.c.bf16 %v1850, %v1850
    %s1852 = scalar_lea.vmem %s3, 12
    %1853 = vst [vmem:[%s1852] sm:$0xf] %v1851
    %s1854 = scalar_lea.vmem [#allocation5], 64
    %v1855 = vld [vmem:[%s1854] sm:$0xff]
    %v1856 = vld [vmem:[%s1854 + $0x8] sm:$0xff]
    %v1857 = vunpack.c.l.bf16 %v1855
    %v1858 = vunpack.c.h.bf16 %v1855
    %v1859 = vunpack.c.l.bf16 %v1856
    %v1860 = vunpack.c.h.bf16 %v1856
    %v1861 = vadd.f32 %v1857, %v1769
    %v1862 = vadd.f32 %v1858, %v1771
    %v1863 = vadd.f32 %v1859, %v1810
    %v1864 = vadd.f32 %v1860, %v1812
    %v1865 = vxor.u32 %v1861, 2147483648
    %v1866 = vmul.f32 %v1865, 1.442695
    %v1867 = vpow.pop %v1866
    %v1868 = vadd.f32 %v1867, 1.0
    %v1869 = vrcp.pop %v1868
    %v1870 = vmul.f32 1.0, %v1869
    %v1871 = vxor.u32 %v1862, 2147483648
    %v1872 = vmul.f32 %v1871, 1.442695
    %v1873 = vpow.pop %v1872
    %v1874 = vadd.f32 %v1873, 1.0
    %v1875 = vrcp.pop %v1874
    %v1876 = vmul.f32 1.0, %v1875
    %v1877 = vtanh.pop %v1863
    %v1878 = vxor.u32 %v1864, 2147483648
    %v1879 = vmul.f32 %v1878, 1.442695
    %v1880 = vpow.pop %v1879
    %v1881 = vadd.f32 %v1880, 1.0
    %v1882 = vrcp.pop %v1881
    %v1883 = vmul.f32 1.0, %v1882
    %v1884 = vmul.f32 %v1876, %v1646
    %v1885 = vmul.f32 %v1870, %v1877
    %v1886 = vadd.f32 %v1884, %v1885
    %v1887 = vtanh.pop %v1886
    %v1888 = vmul.f32 %v1883, %v1887
    %v1889 = vpack.c.bf16 %v1888, %v1888
    %s1890 = scalar_lea.vmem %s147, 16
    %1891 = vst [vmem:[%s1890] sm:$0xf] %v1889
    %1892 = vmatprep.subr.bf16.mxu0 %v679
    %1893 = vmatpush1.bf16.msra.mxu0 %v678
    %1894 = vmatprep.subr.bf16.mxu0 %v687
    %1895 = vmatpush1.bf16.msra.mxu0 %v686
    %1896 = vmatprep.subr.bf16.mxu0 %v695
    %1897 = vmatpush1.bf16.msra.mxu0 %v694
    %1898 = vmatprep.subr.bf16.mxu0 %v703
    %1899 = vmatpush1.bf16.msra.mxu0 %v702
    %1900 = vmatprep.subr.bf16.mxu0 %v711
    %1901 = vmatpush1.bf16.msra.mxu0 %v710
    %1902 = vmatprep.subr.bf16.mxu0 %v719
    %1903 = vmatpush1.bf16.msra.mxu0 %v718
    %1904 = vmatprep.subr.bf16.mxu0 %v727
    %1905 = vmatpush1.bf16.msra.mxu0 %v726
    %1906 = vmatprep.subr.bf16.mxu0 %v735
    %1907 = vmatpush1.bf16.msra.mxu0 %v734
    %1908 = vmatprep.subr.bf16.mxu0 %v743
    %1909 = vmatpush1.bf16.msra.mxu0 %v742
    %1910 = vmatprep.subr.bf16.mxu0 %v751
    %1911 = vmatpush1.bf16.msra.mxu0 %v750
    %1912 = vmatprep.subr.bf16.mxu0 %v759
    %1913 = vmatpush1.bf16.msra.mxu0 %v758
    %1914 = vmatprep.subr.bf16.mxu0 %v767
    %1915 = vmatpush1.bf16.msra.mxu0 %v766
    %1916 = vmatprep.subr.bf16.mxu0 %v775
    %1917 = vmatpush1.bf16.msra.mxu0 %v774
    %1918 = vmatprep.subr.bf16.mxu0 %v783
    %1919 = vmatpush1.bf16.msra.mxu0 %v782
    %1920 = vmatprep.subr.bf16.mxu0 %v791
    %1921 = vmatpush1.bf16.msra.mxu0 %v790
    %1922 = vmatprep.subr.bf16.mxu0 %v799
    %1923 = vmatpush1.bf16.msra.mxu0 %v798
    %1924 = vmatprep.mubr.bf16.mxu0 %v1889
    %1925 = vmatmul.mubr.bf16.gmra.mrb[0].mxu0 %v1851
    %v1926 = vpop.f32.mrb[0].mxu0
    %v1927 = vadd.f32 0.0, %v1926
    %v1928 = vpop.f32.mrb[0].mxu0
    %v1929 = vadd.f32 0.0, %v1928
    %v1930 = vpop.f32.mrb[0].mxu0
    %v1931 = vpop.f32.mrb[0].mxu0
    %1932 = vdwg.mxu0
    %1933 = vmatprep.subr.bf16.mxu0 %v681
    %1934 = vmatpush1.bf16.msra.mxu0 %v680
    %1935 = vmatprep.subr.bf16.mxu0 %v689
    %1936 = vmatpush1.bf16.msra.mxu0 %v688
    %1937 = vmatprep.subr.bf16.mxu0 %v697
    %1938 = vmatpush1.bf16.msra.mxu0 %v696
    %1939 = vmatprep.subr.bf16.mxu0 %v705
    %1940 = vmatpush1.bf16.msra.mxu0 %v704
    %1941 = vmatprep.subr.bf16.mxu0 %v713
    %1942 = vmatpush1.bf16.msra.mxu0 %v712
    %1943 = vmatprep.subr.bf16.mxu0 %v721
    %1944 = vmatpush1.bf16.msra.mxu0 %v720
    %1945 = vmatprep.subr.bf16.mxu0 %v729
    %1946 = vmatpush1.bf16.msra.mxu0 %v728
    %1947 = vmatprep.subr.bf16.mxu0 %v737
    %1948 = vmatpush1.bf16.msra.mxu0 %v736
    %1949 = vmatprep.subr.bf16.mxu0 %v745
    %1950 = vmatpush1.bf16.msra.mxu0 %v744
    %1951 = vmatprep.subr.bf16.mxu0 %v753
    %1952 = vmatpush1.bf16.msra.mxu0 %v752
    %1953 = vmatprep.subr.bf16.mxu0 %v761
    %1954 = vmatpush1.bf16.msra.mxu0 %v760
    %1955 = vmatprep.subr.bf16.mxu0 %v769
    %1956 = vmatpush1.bf16.msra.mxu0 %v768
    %1957 = vmatprep.subr.bf16.mxu0 %v777
    %1958 = vmatpush1.bf16.msra.mxu0 %v776
    %1959 = vmatprep.subr.bf16.mxu0 %v785
    %1960 = vmatpush1.bf16.msra.mxu0 %v784
    %1961 = vmatprep.subr.bf16.mxu0 %v793
    %1962 = vmatpush1.bf16.msra.mxu0 %v792
    %1963 = vmatprep.subr.bf16.mxu0 %v801
    %1964 = vmatpush1.bf16.msra.mxu0 %v800
    %1965 = vmatprep.mubr.bf16.mxu0 %v1889
    %1966 = vmatmul.mubr.bf16.gmra.mrb[0].mxu0 %v1851
    %v1967 = vpop.f32.mrb[0].mxu0
    %v1968 = vadd.f32 0.0, %v1967
    %v1969 = vpop.f32.mrb[0].mxu0
    %v1970 = vadd.f32 0.0, %v1969
    %v1971 = vpop.f32.mrb[0].mxu0
    %v1972 = vpop.f32.mrb[0].mxu0
    %1973 = vdwg.mxu0
    %1974 = vmatprep.subr.bf16.mxu0 %v683
    %1975 = vmatpush1.bf16.msra.mxu0 %v682
    %1976 = vmatprep.subr.bf16.mxu0 %v691
    %1977 = vmatpush1.bf16.msra.mxu0 %v690
    %1978 = vmatprep.subr.bf16.mxu0 %v699
    %1979 = vmatpush1.bf16.msra.mxu0 %v698
    %1980 = vmatprep.subr.bf16.mxu0 %v707
    %1981 = vmatpush1.bf16.msra.mxu0 %v706
    %1982 = vmatprep.subr.bf16.mxu0 %v715
    %1983 = vmatpush1.bf16.msra.mxu0 %v714
    %1984 = vmatprep.subr.bf16.mxu0 %v723
    %1985 = vmatpush1.bf16.msra.mxu0 %v722
    %1986 = vmatprep.subr.bf16.mxu0 %v731
    %1987 = vmatpush1.bf16.msra.mxu0 %v730
    %1988 = vmatprep.subr.bf16.mxu0 %v739
    %1989 = vmatpush1.bf16.msra.mxu0 %v738
    %1990 = vmatprep.subr.bf16.mxu0 %v747
    %1991 = vmatpush1.bf16.msra.mxu0 %v746
    %1992 = vmatprep.subr.bf16.mxu0 %v755
    %1993 = vmatpush1.bf16.msra.mxu0 %v754
    %1994 = vmatprep.subr.bf16.mxu0 %v763
    %1995 = vmatpush1.bf16.msra.mxu0 %v762
    %1996 = vmatprep.subr.bf16.mxu0 %v771
    %1997 = vmatpush1.bf16.msra.mxu0 %v770
    %1998 = vmatprep.subr.bf16.mxu0 %v779
    %1999 = vmatpush1.bf16.msra.mxu0 %v778
    %2000 = vmatprep.subr.bf16.mxu0 %v787
    %2001 = vmatpush1.bf16.msra.mxu0 %v786
    %2002 = vmatprep.subr.bf16.mxu0 %v795
    %2003 = vmatpush1.bf16.msra.mxu0 %v794
    %2004 = vmatprep.subr.bf16.mxu0 %v803
    %2005 = vmatpush1.bf16.msra.mxu0 %v802
    %2006 = vmatprep.mubr.bf16.mxu0 %v1889
    %2007 = vmatmul.mubr.bf16.gmra.mrb[0].mxu0 %v1851
    %v2008 = vpop.f32.mrb[0].mxu0
    %v2009 = vadd.f32 0.0, %v2008
    %v2010 = vpop.f32.mrb[0].mxu0
    %v2011 = vadd.f32 0.0, %v2010
    %v2012 = vpop.f32.mrb[0].mxu0
    %v2013 = vpop.f32.mrb[0].mxu0
    %2014 = vdwg.mxu0
    %2015 = vmatprep.subr.bf16.mxu0 %v685
    %2016 = vmatpush1.bf16.msra.mxu0 %v684
    %2017 = vmatprep.subr.bf16.mxu0 %v693
    %2018 = vmatpush1.bf16.msra.mxu0 %v692
    %2019 = vmatprep.subr.bf16.mxu0 %v701
    %2020 = vmatpush1.bf16.msra.mxu0 %v700
    %2021 = vmatprep.subr.bf16.mxu0 %v709
    %2022 = vmatpush1.bf16.msra.mxu0 %v708
    %2023 = vmatprep.subr.bf16.mxu0 %v717
    %2024 = vmatpush1.bf16.msra.mxu0 %v716
    %2025 = vmatprep.subr.bf16.mxu0 %v725
    %2026 = vmatpush1.bf16.msra.mxu0 %v724
    %2027 = vmatprep.subr.bf16.mxu0 %v733
    %2028 = vmatpush1.bf16.msra.mxu0 %v732
    %2029 = vmatprep.subr.bf16.mxu0 %v741
    %2030 = vmatpush1.bf16.msra.mxu0 %v740
    %2031 = vmatprep.subr.bf16.mxu0 %v749
    %2032 = vmatpush1.bf16.msra.mxu0 %v748
    %2033 = vmatprep.subr.bf16.mxu0 %v757
    %2034 = vmatpush1.bf16.msra.mxu0 %v756
    %2035 = vmatprep.subr.bf16.mxu0 %v765
    %2036 = vmatpush1.bf16.msra.mxu0 %v764
    %2037 = vmatprep.subr.bf16.mxu0 %v773
    %2038 = vmatpush1.bf16.msra.mxu0 %v772
    %2039 = vmatprep.subr.bf16.mxu0 %v781
    %2040 = vmatpush1.bf16.msra.mxu0 %v780
    %2041 = vmatprep.subr.bf16.mxu0 %v789
    %2042 = vmatpush1.bf16.msra.mxu0 %v788
    %2043 = vmatprep.subr.bf16.mxu0 %v797
    %2044 = vmatpush1.bf16.msra.mxu0 %v796
    %2045 = vmatprep.subr.bf16.mxu0 %v805
    %2046 = vmatpush1.bf16.msra.mxu0 %v804
    %2047 = vmatprep.mubr.bf16.mxu0 %v1889
    %2048 = vmatmul.mubr.bf16.gmra.mrb[0].mxu0 %v1851
    %v2049 = vpop.f32.mrb[0].mxu0
    %v2050 = vadd.f32 0.0, %v2049
    %v2051 = vpop.f32.mrb[0].mxu0
    %v2052 = vadd.f32 0.0, %v2051
    %v2053 = vpop.f32.mrb[0].mxu0
    %v2054 = vpop.f32.mrb[0].mxu0
    %2055 = vdwg.mxu0
    %s2056 = scalar_lea.vmem [#allocation4], 64
    %v2057 = vld [vmem:[%s2056] sm:$0xff]
    %v2058 = vld [vmem:[%s2056 + $0x8] sm:$0xff]
    %v2059 = vunpack.c.l.bf16 %v2057
    %v2060 = vunpack.c.h.bf16 %v2057
    %v2061 = vunpack.c.l.bf16 %v2058
    %v2062 = vunpack.c.h.bf16 %v2058
    %v2063 = vadd.f32 %v2059, %v1927
    %v2064 = vadd.f32 %v2060, %v1929
    %v2065 = vadd.f32 %v2061, %v1968
    %v2066 = vadd.f32 %v2062, %v1970
    %v2067 = vxor.u32 %v2063, 2147483648
    %v2068 = vmul.f32 %v2067, 1.442695
    %v2069 = vpow.pop %v2068
    %v2070 = vadd.f32 %v2069, 1.0
    %v2071 = vrcp.pop %v2070
    %v2072 = vmul.f32 1.0, %v2071
    %v2073 = vxor.u32 %v2064, 2147483648
    %v2074 = vmul.f32 %v2073, 1.442695
    %v2075 = vpow.pop %v2074
    %v2076 = vadd.f32 %v2075, 1.0
    %v2077 = vrcp.pop %v2076
    %v2078 = vmul.f32 1.0, %v2077
    %v2079 = vtanh.pop %v2065
    %v2080 = vxor.u32 %v2066, 2147483648
    %v2081 = vmul.f32 %v2080, 1.442695
    %v2082 = vpow.pop %v2081
    %v2083 = vadd.f32 %v2082, 1.0
    %v2084 = vrcp.pop %v2083
    %v2085 = vmul.f32 1.0, %v2084
    %v2086 = vmul.f32 %v2078, %v1848
    %v2087 = vmul.f32 %v2072, %v2079
    %v2088 = vadd.f32 %v2086, %v2087
    %v2089 = vtanh.pop %v2088
    %v2090 = vmul.f32 %v2085, %v2089
    %v2091 = vpack.c.bf16 %v2090, %v2090
    %s2092 = scalar_lea.vmem %s3, 16
    %2093 = vst [vmem:[%s2092] sm:$0xf] %v2091
    %s2094 = scalar_lea.vmem [#allocation5], 48
    %v2095 = vld [vmem:[%s2094] sm:$0xff]
    %v2096 = vld [vmem:[%s2094 + $0x8] sm:$0xff]
    %v2097 = vunpack.c.l.bf16 %v2095
    %v2098 = vunpack.c.h.bf16 %v2095
    %v2099 = vunpack.c.l.bf16 %v2096
    %v2100 = vunpack.c.h.bf16 %v2096
    %v2101 = vadd.f32 %v2097, %v2009
    %v2102 = vadd.f32 %v2098, %v2011
    %v2103 = vadd.f32 %v2099, %v2050
    %v2104 = vadd.f32 %v2100, %v2052
    %v2105 = vxor.u32 %v2101, 2147483648
    %v2106 = vmul.f32 %v2105, 1.442695
    %v2107 = vpow.pop %v2106
    %v2108 = vadd.f32 %v2107, 1.0
    %v2109 = vrcp.pop %v2108
    %v2110 = vmul.f32 1.0, %v2109
    %v2111 = vxor.u32 %v2102, 2147483648
    %v2112 = vmul.f32 %v2111, 1.442695
    %v2113 = vpow.pop %v2112
    %v2114 = vadd.f32 %v2113, 1.0
    %v2115 = vrcp.pop %v2114
    %v2116 = vmul.f32 1.0, %v2115
    %v2117 = vtanh.pop %v2103
    %v2118 = vxor.u32 %v2104, 2147483648
    %v2119 = vmul.f32 %v2118, 1.442695
    %v2120 = vpow.pop %v2119
    %v2121 = vadd.f32 %v2120, 1.0
    %v2122 = vrcp.pop %v2121
    %v2123 = vmul.f32 1.0, %v2122
    %v2124 = vmul.f32 %v2116, %v1886
    %v2125 = vmul.f32 %v2110, %v2117
    %v2126 = vadd.f32 %v2124, %v2125
    %v2127 = vtanh.pop %v2126
    %v2128 = vmul.f32 %v2123, %v2127
    %v2129 = vpack.c.bf16 %v2128, %v2128
    %s2130 = scalar_lea.vmem %s147, 12
    %2131 = vst [vmem:[%s2130] sm:$0xf] %v2129
    %2132 = vmatprep.subr.bf16.mxu0 %v679
    %2133 = vmatpush1.bf16.msra.mxu0 %v678
    %2134 = vmatprep.subr.bf16.mxu0 %v687
    %2135 = vmatpush1.bf16.msra.mxu0 %v686
    %2136 = vmatprep.subr.bf16.mxu0 %v695
    %2137 = vmatpush1.bf16.msra.mxu0 %v694
    %2138 = vmatprep.subr.bf16.mxu0 %v703
    %2139 = vmatpush1.bf16.msra.mxu0 %v702
    %2140 = vmatprep.subr.bf16.mxu0 %v711
    %2141 = vmatpush1.bf16.msra.mxu0 %v710
    %2142 = vmatprep.subr.bf16.mxu0 %v719
    %2143 = vmatpush1.bf16.msra.mxu0 %v718
    %2144 = vmatprep.subr.bf16.mxu0 %v727
    %2145 = vmatpush1.bf16.msra.mxu0 %v726
    %2146 = vmatprep.subr.bf16.mxu0 %v735
    %2147 = vmatpush1.bf16.msra.mxu0 %v734
    %2148 = vmatprep.subr.bf16.mxu0 %v743
    %2149 = vmatpush1.bf16.msra.mxu0 %v742
    %2150 = vmatprep.subr.bf16.mxu0 %v751
    %2151 = vmatpush1.bf16.msra.mxu0 %v750
    %2152 = vmatprep.subr.bf16.mxu0 %v759
    %2153 = vmatpush1.bf16.msra.mxu0 %v758
    %2154 = vmatprep.subr.bf16.mxu0 %v767
    %2155 = vmatpush1.bf16.msra.mxu0 %v766
    %2156 = vmatprep.subr.bf16.mxu0 %v775
    %2157 = vmatpush1.bf16.msra.mxu0 %v774
    %2158 = vmatprep.subr.bf16.mxu0 %v783
    %2159 = vmatpush1.bf16.msra.mxu0 %v782
    %2160 = vmatprep.subr.bf16.mxu0 %v791
    %2161 = vmatpush1.bf16.msra.mxu0 %v790
    %2162 = vmatprep.subr.bf16.mxu0 %v799
    %2163 = vmatpush1.bf16.msra.mxu0 %v798
    %2164 = vmatprep.mubr.bf16.mxu0 %v2129
    %2165 = vmatmul.mubr.bf16.gmra.mrb[0].mxu0 %v2091
    %v2166 = vpop.f32.mrb[0].mxu0
    %v2167 = vadd.f32 0.0, %v2166
    %v2168 = vpop.f32.mrb[0].mxu0
    %v2169 = vadd.f32 0.0, %v2168
    %v2170 = vpop.f32.mrb[0].mxu0
    %v2171 = vpop.f32.mrb[0].mxu0
    %2172 = vdwg.mxu0
    %2173 = vmatprep.subr.bf16.mxu0 %v681
    %2174 = vmatpush1.bf16.msra.mxu0 %v680
    %2175 = vmatprep.subr.bf16.mxu0 %v689
    %2176 = vmatpush1.bf16.msra.mxu0 %v688
    %2177 = vmatprep.subr.bf16.mxu0 %v697
    %2178 = vmatpush1.bf16.msra.mxu0 %v696
    %2179 = vmatprep.subr.bf16.mxu0 %v705
    %2180 = vmatpush1.bf16.msra.mxu0 %v704
    %2181 = vmatprep.subr.bf16.mxu0 %v713
    %2182 = vmatpush1.bf16.msra.mxu0 %v712
    %2183 = vmatprep.subr.bf16.mxu0 %v721
    %2184 = vmatpush1.bf16.msra.mxu0 %v720
    %2185 = vmatprep.subr.bf16.mxu0 %v729
    %2186 = vmatpush1.bf16.msra.mxu0 %v728
    %2187 = vmatprep.subr.bf16.mxu0 %v737
    %2188 = vmatpush1.bf16.msra.mxu0 %v736
    %2189 = vmatprep.subr.bf16.mxu0 %v745
    %2190 = vmatpush1.bf16.msra.mxu0 %v744
    %2191 = vmatprep.subr.bf16.mxu0 %v753
    %2192 = vmatpush1.bf16.msra.mxu0 %v752
    %2193 = vmatprep.subr.bf16.mxu0 %v761
    %2194 = vmatpush1.bf16.msra.mxu0 %v760
    %2195 = vmatprep.subr.bf16.mxu0 %v769
    %2196 = vmatpush1.bf16.msra.mxu0 %v768
    %2197 = vmatprep.subr.bf16.mxu0 %v777
    %2198 = vmatpush1.bf16.msra.mxu0 %v776
    %2199 = vmatprep.subr.bf16.mxu0 %v785
    %2200 = vmatpush1.bf16.msra.mxu0 %v784
    %2201 = vmatprep.subr.bf16.mxu0 %v793
    %2202 = vmatpush1.bf16.msra.mxu0 %v792
    %2203 = vmatprep.subr.bf16.mxu0 %v801
    %2204 = vmatpush1.bf16.msra.mxu0 %v800
    %2205 = vmatprep.mubr.bf16.mxu0 %v2129
    %2206 = vmatmul.mubr.bf16.gmra.mrb[0].mxu0 %v2091
    %v2207 = vpop.f32.mrb[0].mxu0
    %v2208 = vadd.f32 0.0, %v2207
    %v2209 = vpop.f32.mrb[0].mxu0
    %v2210 = vadd.f32 0.0, %v2209
    %v2211 = vpop.f32.mrb[0].mxu0
    %v2212 = vpop.f32.mrb[0].mxu0
    %2213 = vdwg.mxu0
    %2214 = vmatprep.subr.bf16.mxu0 %v683
    %2215 = vmatpush1.bf16.msra.mxu0 %v682
    %2216 = vmatprep.subr.bf16.mxu0 %v691
    %2217 = vmatpush1.bf16.msra.mxu0 %v690
    %2218 = vmatprep.subr.bf16.mxu0 %v699
    %2219 = vmatpush1.bf16.msra.mxu0 %v698
    %2220 = vmatprep.subr.bf16.mxu0 %v707
    %2221 = vmatpush1.bf16.msra.mxu0 %v706
    %2222 = vmatprep.subr.bf16.mxu0 %v715
    %2223 = vmatpush1.bf16.msra.mxu0 %v714
    %2224 = vmatprep.subr.bf16.mxu0 %v723
    %2225 = vmatpush1.bf16.msra.mxu0 %v722
    %2226 = vmatprep.subr.bf16.mxu0 %v731
    %2227 = vmatpush1.bf16.msra.mxu0 %v730
    %2228 = vmatprep.subr.bf16.mxu0 %v739
    %2229 = vmatpush1.bf16.msra.mxu0 %v738
    %2230 = vmatprep.subr.bf16.mxu0 %v747
    %2231 = vmatpush1.bf16.msra.mxu0 %v746
    %2232 = vmatprep.subr.bf16.mxu0 %v755
    %2233 = vmatpush1.bf16.msra.mxu0 %v754
    %2234 = vmatprep.subr.bf16.mxu0 %v763
    %2235 = vmatpush1.bf16.msra.mxu0 %v762
    %2236 = vmatprep.subr.bf16.mxu0 %v771
    %2237 = vmatpush1.bf16.msra.mxu0 %v770
    %2238 = vmatprep.subr.bf16.mxu0 %v779
    %2239 = vmatpush1.bf16.msra.mxu0 %v778
    %2240 = vmatprep.subr.bf16.mxu0 %v787
    %2241 = vmatpush1.bf16.msra.mxu0 %v786
    %2242 = vmatprep.subr.bf16.mxu0 %v795
    %2243 = vmatpush1.bf16.msra.mxu0 %v794
    %2244 = vmatprep.subr.bf16.mxu0 %v803
    %2245 = vmatpush1.bf16.msra.mxu0 %v802
    %2246 = vmatprep.mubr.bf16.mxu0 %v2129
    %2247 = vmatmul.mubr.bf16.gmra.mrb[0].mxu0 %v2091
    %v2248 = vpop.f32.mrb[0].mxu0
    %v2249 = vadd.f32 0.0, %v2248
    %v2250 = vpop.f32.mrb[0].mxu0
    %v2251 = vadd.f32 0.0, %v2250
    %v2252 = vpop.f32.mrb[0].mxu0
    %v2253 = vpop.f32.mrb[0].mxu0
    %2254 = vdwg.mxu0
    %2255 = vmatprep.subr.bf16.mxu0 %v685
    %2256 = vmatpush1.bf16.msra.mxu0 %v684
    %2257 = vmatprep.subr.bf16.mxu0 %v693
    %2258 = vmatpush1.bf16.msra.mxu0 %v692
    %2259 = vmatprep.subr.bf16.mxu0 %v701
    %2260 = vmatpush1.bf16.msra.mxu0 %v700
    %2261 = vmatprep.subr.bf16.mxu0 %v709
    %2262 = vmatpush1.bf16.msra.mxu0 %v708
    %2263 = vmatprep.subr.bf16.mxu0 %v717
    %2264 = vmatpush1.bf16.msra.mxu0 %v716
    %2265 = vmatprep.subr.bf16.mxu0 %v725
    %2266 = vmatpush1.bf16.msra.mxu0 %v724
    %2267 = vmatprep.subr.bf16.mxu0 %v733
    %2268 = vmatpush1.bf16.msra.mxu0 %v732
    %2269 = vmatprep.subr.bf16.mxu0 %v741
    %2270 = vmatpush1.bf16.msra.mxu0 %v740
    %2271 = vmatprep.subr.bf16.mxu0 %v749
    %2272 = vmatpush1.bf16.msra.mxu0 %v748
    %2273 = vmatprep.subr.bf16.mxu0 %v757
    %2274 = vmatpush1.bf16.msra.mxu0 %v756
    %2275 = vmatprep.subr.bf16.mxu0 %v765
    %2276 = vmatpush1.bf16.msra.mxu0 %v764
    %2277 = vmatprep.subr.bf16.mxu0 %v773
    %2278 = vmatpush1.bf16.msra.mxu0 %v772
    %2279 = vmatprep.subr.bf16.mxu0 %v781
    %2280 = vmatpush1.bf16.msra.mxu0 %v780
    %2281 = vmatprep.subr.bf16.mxu0 %v789
    %2282 = vmatpush1.bf16.msra.mxu0 %v788
    %2283 = vmatprep.subr.bf16.mxu0 %v797
    %2284 = vmatpush1.bf16.msra.mxu0 %v796
    %2285 = vmatprep.subr.bf16.mxu0 %v805
    %2286 = vmatpush1.bf16.msra.mxu0 %v804
    %2287 = vmatprep.mubr.bf16.mxu0 %v2129
    %2288 = vmatmul.mubr.bf16.gmra.mrb[0].mxu0 %v2091
    %v2289 = vpop.f32.mrb[0].mxu0
    %v2290 = vadd.f32 0.0, %v2289
    %v2291 = vpop.f32.mrb[0].mxu0
    %v2292 = vadd.f32 0.0, %v2291
    %v2293 = vpop.f32.mrb[0].mxu0
    %v2294 = vpop.f32.mrb[0].mxu0
    %2295 = vdwg.mxu0
    %s2296 = scalar_lea.vmem [#allocation4], 80
    %v2297 = vld [vmem:[%s2296] sm:$0xff]
    %v2298 = vld [vmem:[%s2296 + $0x8] sm:$0xff]
    %v2299 = vunpack.c.l.bf16 %v2297
    %v2300 = vunpack.c.h.bf16 %v2297
    %v2301 = vunpack.c.l.bf16 %v2298
    %v2302 = vunpack.c.h.bf16 %v2298
    %v2303 = vadd.f32 %v2299, %v2167
    %v2304 = vadd.f32 %v2300, %v2169
    %v2305 = vadd.f32 %v2301, %v2208
    %v2306 = vadd.f32 %v2302, %v2210
    %v2307 = vxor.u32 %v2303, 2147483648
    %v2308 = vmul.f32 %v2307, 1.442695
    %v2309 = vpow.pop %v2308
    %v2310 = vadd.f32 %v2309, 1.0
    %v2311 = vrcp.pop %v2310
    %v2312 = vmul.f32 1.0, %v2311
    %v2313 = vxor.u32 %v2304, 2147483648
    %v2314 = vmul.f32 %v2313, 1.442695
    %v2315 = vpow.pop %v2314
    %v2316 = vadd.f32 %v2315, 1.0
    %v2317 = vrcp.pop %v2316
    %v2318 = vmul.f32 1.0, %v2317
    %v2319 = vtanh.pop %v2305
    %v2320 = vxor.u32 %v2306, 2147483648
    %v2321 = vmul.f32 %v2320, 1.442695
    %v2322 = vpow.pop %v2321
    %v2323 = vadd.f32 %v2322, 1.0
    %v2324 = vrcp.pop %v2323
    %v2325 = vmul.f32 1.0, %v2324
    %v2326 = vmul.f32 %v2318, %v2088
    %v2327 = vmul.f32 %v2312, %v2319
    %v2328 = vadd.f32 %v2326, %v2327
    %v2329 = vtanh.pop %v2328
    %v2330 = vmul.f32 %v2325, %v2329
    %v2331 = vpack.c.bf16 %v2330, %v2330
    %s2332 = scalar_lea.vmem %s3, 20
    %2333 = vst [vmem:[%s2332] sm:$0xf] %v2331
    %s2334 = scalar_lea.vmem [#allocation5], 32
    %v2335 = vld [vmem:[%s2334] sm:$0xff]
    %v2336 = vld [vmem:[%s2334 + $0x8] sm:$0xff]
    %v2337 = vunpack.c.l.bf16 %v2335
    %v2338 = vunpack.c.h.bf16 %v2335
    %v2339 = vunpack.c.l.bf16 %v2336
    %v2340 = vunpack.c.h.bf16 %v2336
    %v2341 = vadd.f32 %v2337, %v2249
    %v2342 = vadd.f32 %v2338, %v2251
    %v2343 = vadd.f32 %v2339, %v2290
    %v2344 = vadd.f32 %v2340, %v2292
    %v2345 = vxor.u32 %v2341, 2147483648
    %v2346 = vmul.f32 %v2345, 1.442695
    %v2347 = vpow.pop %v2346
    %v2348 = vadd.f32 %v2347, 1.0
    %v2349 = vrcp.pop %v2348
    %v2350 = vmul.f32 1.0, %v2349
    %v2351 = vxor.u32 %v2342, 2147483648
    %v2352 = vmul.f32 %v2351, 1.442695
    %v2353 = vpow.pop %v2352
    %v2354 = vadd.f32 %v2353, 1.0
    %v2355 = vrcp.pop %v2354
    %v2356 = vmul.f32 1.0, %v2355
    %v2357 = vtanh.pop %v2343
    %v2358 = vxor.u32 %v2344, 2147483648
    %v2359 = vmul.f32 %v2358, 1.442695
    %v2360 = vpow.pop %v2359
    %v2361 = vadd.f32 %v2360, 1.0
    %v2362 = vrcp.pop %v2361
    %v2363 = vmul.f32 1.0, %v2362
    %v2364 = vmul.f32 %v2356, %v2126
    %v2365 = vmul.f32 %v2350, %v2357
    %v2366 = vadd.f32 %v2364, %v2365
    %v2367 = vtanh.pop %v2366
    %v2368 = vmul.f32 %v2363, %v2367
    %v2369 = vpack.c.bf16 %v2368, %v2368
    %s2370 = scalar_lea.vmem %s147, 8
    %2371 = vst [vmem:[%s2370] sm:$0xf] %v2369
    %2372 = vmatprep.subr.bf16.mxu0 %v679
    %2373 = vmatpush1.bf16.msra.mxu0 %v678
    %2374 = vmatprep.subr.bf16.mxu0 %v687
    %2375 = vmatpush1.bf16.msra.mxu0 %v686
    %2376 = vmatprep.subr.bf16.mxu0 %v695
    %2377 = vmatpush1.bf16.msra.mxu0 %v694
    %2378 = vmatprep.subr.bf16.mxu0 %v703
    %2379 = vmatpush1.bf16.msra.mxu0 %v702
    %2380 = vmatprep.subr.bf16.mxu0 %v711
    %2381 = vmatpush1.bf16.msra.mxu0 %v710
    %2382 = vmatprep.subr.bf16.mxu0 %v719
    %2383 = vmatpush1.bf16.msra.mxu0 %v718
    %2384 = vmatprep.subr.bf16.mxu0 %v727
    %2385 = vmatpush1.bf16.msra.mxu0 %v726
    %2386 = vmatprep.subr.bf16.mxu0 %v735
    %2387 = vmatpush1.bf16.msra.mxu0 %v734
    %2388 = vmatprep.subr.bf16.mxu0 %v743
    %2389 = vmatpush1.bf16.msra.mxu0 %v742
    %2390 = vmatprep.subr.bf16.mxu0 %v751
    %2391 = vmatpush1.bf16.msra.mxu0 %v750
    %2392 = vmatprep.subr.bf16.mxu0 %v759
    %2393 = vmatpush1.bf16.msra.mxu0 %v758
    %2394 = vmatprep.subr.bf16.mxu0 %v767
    %2395 = vmatpush1.bf16.msra.mxu0 %v766
    %2396 = vmatprep.subr.bf16.mxu0 %v775
    %2397 = vmatpush1.bf16.msra.mxu0 %v774
    %2398 = vmatprep.subr.bf16.mxu0 %v783
    %2399 = vmatpush1.bf16.msra.mxu0 %v782
    %2400 = vmatprep.subr.bf16.mxu0 %v791
    %2401 = vmatpush1.bf16.msra.mxu0 %v790
    %2402 = vmatprep.subr.bf16.mxu0 %v799
    %2403 = vmatpush1.bf16.msra.mxu0 %v798
    %2404 = vmatprep.mubr.bf16.mxu0 %v2369
    %2405 = vmatmul.mubr.bf16.gmra.mrb[0].mxu0 %v2331
    %v2406 = vpop.f32.mrb[0].mxu0
    %v2407 = vadd.f32 0.0, %v2406
    %v2408 = vpop.f32.mrb[0].mxu0
    %v2409 = vadd.f32 0.0, %v2408
    %v2410 = vpop.f32.mrb[0].mxu0
    %v2411 = vpop.f32.mrb[0].mxu0
    %2412 = vdwg.mxu0
    %2413 = vmatprep.subr.bf16.mxu0 %v681
    %2414 = vmatpush1.bf16.msra.mxu0 %v680
    %2415 = vmatprep.subr.bf16.mxu0 %v689
    %2416 = vmatpush1.bf16.msra.mxu0 %v688
    %2417 = vmatprep.subr.bf16.mxu0 %v697
    %2418 = vmatpush1.bf16.msra.mxu0 %v696
    %2419 = vmatprep.subr.bf16.mxu0 %v705
    %2420 = vmatpush1.bf16.msra.mxu0 %v704
    %2421 = vmatprep.subr.bf16.mxu0 %v713
    %2422 = vmatpush1.bf16.msra.mxu0 %v712
    %2423 = vmatprep.subr.bf16.mxu0 %v721
    %2424 = vmatpush1.bf16.msra.mxu0 %v720
    %2425 = vmatprep.subr.bf16.mxu0 %v729
    %2426 = vmatpush1.bf16.msra.mxu0 %v728
    %2427 = vmatprep.subr.bf16.mxu0 %v737
    %2428 = vmatpush1.bf16.msra.mxu0 %v736
    %2429 = vmatprep.subr.bf16.mxu0 %v745
    %2430 = vmatpush1.bf16.msra.mxu0 %v744
    %2431 = vmatprep.subr.bf16.mxu0 %v753
    %2432 = vmatpush1.bf16.msra.mxu0 %v752
    %2433 = vmatprep.subr.bf16.mxu0 %v761
    %2434 = vmatpush1.bf16.msra.mxu0 %v760
    %2435 = vmatprep.subr.bf16.mxu0 %v769
    %2436 = vmatpush1.bf16.msra.mxu0 %v768
    %2437 = vmatprep.subr.bf16.mxu0 %v777
    %2438 = vmatpush1.bf16.msra.mxu0 %v776
    %2439 = vmatprep.subr.bf16.mxu0 %v785
    %2440 = vmatpush1.bf16.msra.mxu0 %v784
    %2441 = vmatprep.subr.bf16.mxu0 %v793
    %2442 = vmatpush1.bf16.msra.mxu0 %v792
    %2443 = vmatprep.subr.bf16.mxu0 %v801
    %2444 = vmatpush1.bf16.msra.mxu0 %v800
    %2445 = vmatprep.mubr.bf16.mxu0 %v2369
    %2446 = vmatmul.mubr.bf16.gmra.mrb[0].mxu0 %v2331
    %v2447 = vpop.f32.mrb[0].mxu0
    %v2448 = vadd.f32 0.0, %v2447
    %v2449 = vpop.f32.mrb[0].mxu0
    %v2450 = vadd.f32 0.0, %v2449
    %v2451 = vpop.f32.mrb[0].mxu0
    %v2452 = vpop.f32.mrb[0].mxu0
    %2453 = vdwg.mxu0
    %2454 = vmatprep.subr.bf16.mxu0 %v683
    %2455 = vmatpush1.bf16.msra.mxu0 %v682
    %2456 = vmatprep.subr.bf16.mxu0 %v691
    %2457 = vmatpush1.bf16.msra.mxu0 %v690
    %2458 = vmatprep.subr.bf16.mxu0 %v699
    %2459 = vmatpush1.bf16.msra.mxu0 %v698
    %2460 = vmatprep.subr.bf16.mxu0 %v707
    %2461 = vmatpush1.bf16.msra.mxu0 %v706
    %2462 = vmatprep.subr.bf16.mxu0 %v715
    %2463 = vmatpush1.bf16.msra.mxu0 %v714
    %2464 = vmatprep.subr.bf16.mxu0 %v723
    %2465 = vmatpush1.bf16.msra.mxu0 %v722
    %2466 = vmatprep.subr.bf16.mxu0 %v731
    %2467 = vmatpush1.bf16.msra.mxu0 %v730
    %2468 = vmatprep.subr.bf16.mxu0 %v739
    %2469 = vmatpush1.bf16.msra.mxu0 %v738
    %2470 = vmatprep.subr.bf16.mxu0 %v747
    %2471 = vmatpush1.bf16.msra.mxu0 %v746
    %2472 = vmatprep.subr.bf16.mxu0 %v755
    %2473 = vmatpush1.bf16.msra.mxu0 %v754
    %2474 = vmatprep.subr.bf16.mxu0 %v763
    %2475 = vmatpush1.bf16.msra.mxu0 %v762
    %2476 = vmatprep.subr.bf16.mxu0 %v771
    %2477 = vmatpush1.bf16.msra.mxu0 %v770
    %2478 = vmatprep.subr.bf16.mxu0 %v779
    %2479 = vmatpush1.bf16.msra.mxu0 %v778
    %2480 = vmatprep.subr.bf16.mxu0 %v787
    %2481 = vmatpush1.bf16.msra.mxu0 %v786
    %2482 = vmatprep.subr.bf16.mxu0 %v795
    %2483 = vmatpush1.bf16.msra.mxu0 %v794
    %2484 = vmatprep.subr.bf16.mxu0 %v803
    %2485 = vmatpush1.bf16.msra.mxu0 %v802
    %2486 = vmatprep.mubr.bf16.mxu0 %v2369
    %2487 = vmatmul.mubr.bf16.gmra.mrb[0].mxu0 %v2331
    %v2488 = vpop.f32.mrb[0].mxu0
    %v2489 = vadd.f32 0.0, %v2488
    %v2490 = vpop.f32.mrb[0].mxu0
    %v2491 = vadd.f32 0.0, %v2490
    %v2492 = vpop.f32.mrb[0].mxu0
    %v2493 = vpop.f32.mrb[0].mxu0
    %2494 = vdwg.mxu0
    %2495 = vmatprep.subr.bf16.mxu0 %v685
    %2496 = vmatpush1.bf16.msra.mxu0 %v684
    %2497 = vmatprep.subr.bf16.mxu0 %v693
    %2498 = vmatpush1.bf16.msra.mxu0 %v692
    %2499 = vmatprep.subr.bf16.mxu0 %v701
    %2500 = vmatpush1.bf16.msra.mxu0 %v700
    %2501 = vmatprep.subr.bf16.mxu0 %v709
    %2502 = vmatpush1.bf16.msra.mxu0 %v708
    %2503 = vmatprep.subr.bf16.mxu0 %v717
    %2504 = vmatpush1.bf16.msra.mxu0 %v716
    %2505 = vmatprep.subr.bf16.mxu0 %v725
    %2506 = vmatpush1.bf16.msra.mxu0 %v724
    %2507 = vmatprep.subr.bf16.mxu0 %v733
    %2508 = vmatpush1.bf16.msra.mxu0 %v732
    %2509 = vmatprep.subr.bf16.mxu0 %v741
    %2510 = vmatpush1.bf16.msra.mxu0 %v740
    %2511 = vmatprep.subr.bf16.mxu0 %v749
    %2512 = vmatpush1.bf16.msra.mxu0 %v748
    %2513 = vmatprep.subr.bf16.mxu0 %v757
    %2514 = vmatpush1.bf16.msra.mxu0 %v756
    %2515 = vmatprep.subr.bf16.mxu0 %v765
    %2516 = vmatpush1.bf16.msra.mxu0 %v764
    %2517 = vmatprep.subr.bf16.mxu0 %v773
    %2518 = vmatpush1.bf16.msra.mxu0 %v772
    %2519 = vmatprep.subr.bf16.mxu0 %v781
    %2520 = vmatpush1.bf16.msra.mxu0 %v780
    %2521 = vmatprep.subr.bf16.mxu0 %v789
    %2522 = vmatpush1.bf16.msra.mxu0 %v788
    %2523 = vmatprep.subr.bf16.mxu0 %v797
    %2524 = vmatpush1.bf16.msra.mxu0 %v796
    %2525 = vmatprep.subr.bf16.mxu0 %v805
    %2526 = vmatpush1.bf16.msra.mxu0 %v804
    %2527 = vmatprep.mubr.bf16.mxu0 %v2369
    %2528 = vmatmul.mubr.bf16.gmra.mrb[0].mxu0 %v2331
    %v2529 = vpop.f32.mrb[0].mxu0
    %v2530 = vadd.f32 0.0, %v2529
    %v2531 = vpop.f32.mrb[0].mxu0
    %v2532 = vadd.f32 0.0, %v2531
    %v2533 = vpop.f32.mrb[0].mxu0
    %v2534 = vpop.f32.mrb[0].mxu0
    %2535 = vdwg.mxu0
    %s2536 = scalar_lea.vmem [#allocation4], 96
    %v2537 = vld [vmem:[%s2536] sm:$0xff]
    %v2538 = vld [vmem:[%s2536 + $0x8] sm:$0xff]
    %v2539 = vunpack.c.l.bf16 %v2537
    %v2540 = vunpack.c.h.bf16 %v2537
    %v2541 = vunpack.c.l.bf16 %v2538
    %v2542 = vunpack.c.h.bf16 %v2538
    %v2543 = vadd.f32 %v2539, %v2407
    %v2544 = vadd.f32 %v2540, %v2409
    %v2545 = vadd.f32 %v2541, %v2448
    %v2546 = vadd.f32 %v2542, %v2450
    %v2547 = vxor.u32 %v2543, 2147483648
    %v2548 = vmul.f32 %v2547, 1.442695
    %v2549 = vpow.pop %v2548
    %v2550 = vadd.f32 %v2549, 1.0
    %v2551 = vrcp.pop %v2550
    %v2552 = vmul.f32 1.0, %v2551
    %v2553 = vxor.u32 %v2544, 2147483648
    %v2554 = vmul.f32 %v2553, 1.442695
    %v2555 = vpow.pop %v2554
    %v2556 = vadd.f32 %v2555, 1.0
    %v2557 = vrcp.pop %v2556
    %v2558 = vmul.f32 1.0, %v2557
    %v2559 = vtanh.pop %v2545
    %v2560 = vxor.u32 %v2546, 2147483648
    %v2561 = vmul.f32 %v2560, 1.442695
    %v2562 = vpow.pop %v2561
    %v2563 = vadd.f32 %v2562, 1.0
    %v2564 = vrcp.pop %v2563
    %v2565 = vmul.f32 1.0, %v2564
    %v2566 = vmul.f32 %v2558, %v2328
    %v2567 = vmul.f32 %v2552, %v2559
    %v2568 = vadd.f32 %v2566, %v2567
    %v2569 = vtanh.pop %v2568
    %v2570 = vmul.f32 %v2565, %v2569
    %v2571 = vpack.c.bf16 %v2570, %v2570
    %s2572 = scalar_lea.vmem %s3, 24
    %2573 = vst [vmem:[%s2572] sm:$0xf] %v2571
    %s2574 = scalar_lea.vmem [#allocation5], 16
    %v2575 = vld [vmem:[%s2574] sm:$0xff]
    %v2576 = vld [vmem:[%s2574 + $0x8] sm:$0xff]
    %v2577 = vunpack.c.l.bf16 %v2575
    %v2578 = vunpack.c.h.bf16 %v2575
    %v2579 = vunpack.c.l.bf16 %v2576
    %v2580 = vunpack.c.h.bf16 %v2576
    %v2581 = vadd.f32 %v2577, %v2489
    %v2582 = vadd.f32 %v2578, %v2491
    %v2583 = vadd.f32 %v2579, %v2530
    %v2584 = vadd.f32 %v2580, %v2532
    %v2585 = vxor.u32 %v2581, 2147483648
    %v2586 = vmul.f32 %v2585, 1.442695
    %v2587 = vpow.pop %v2586
    %v2588 = vadd.f32 %v2587, 1.0
    %v2589 = vrcp.pop %v2588
    %v2590 = vmul.f32 1.0, %v2589
    %v2591 = vxor.u32 %v2582, 2147483648
    %v2592 = vmul.f32 %v2591, 1.442695
    %v2593 = vpow.pop %v2592
    %v2594 = vadd.f32 %v2593, 1.0
    %v2595 = vrcp.pop %v2594
    %v2596 = vmul.f32 1.0, %v2595
    %v2597 = vtanh.pop %v2583
    %v2598 = vxor.u32 %v2584, 2147483648
    %v2599 = vmul.f32 %v2598, 1.442695
    %v2600 = vpow.pop %v2599
    %v2601 = vadd.f32 %v2600, 1.0
    %v2602 = vrcp.pop %v2601
    %v2603 = vmul.f32 1.0, %v2602
    %v2604 = vmul.f32 %v2596, %v2366
    %v2605 = vmul.f32 %v2590, %v2597
    %v2606 = vadd.f32 %v2604, %v2605
    %v2607 = vtanh.pop %v2606
    %v2608 = vmul.f32 %v2603, %v2607
    %v2609 = vpack.c.bf16 %v2608, %v2608
    %s2610 = scalar_lea.vmem %s147, 4
    %2611 = vst [vmem:[%s2610] sm:$0xf] %v2609
    %2612 = vmatprep.subr.bf16.mxu0 %v679
    %2613 = vmatpush1.bf16.msra.mxu0 %v678
    %2614 = vmatprep.subr.bf16.mxu0 %v687
    %2615 = vmatpush1.bf16.msra.mxu0 %v686
    %2616 = vmatprep.subr.bf16.mxu0 %v695
    %2617 = vmatpush1.bf16.msra.mxu0 %v694
    %2618 = vmatprep.subr.bf16.mxu0 %v703
    %2619 = vmatpush1.bf16.msra.mxu0 %v702
    %2620 = vmatprep.subr.bf16.mxu0 %v711
    %2621 = vmatpush1.bf16.msra.mxu0 %v710
    %2622 = vmatprep.subr.bf16.mxu0 %v719
    %2623 = vmatpush1.bf16.msra.mxu0 %v718
    %2624 = vmatprep.subr.bf16.mxu0 %v727
    %2625 = vmatpush1.bf16.msra.mxu0 %v726
    %2626 = vmatprep.subr.bf16.mxu0 %v735
    %2627 = vmatpush1.bf16.msra.mxu0 %v734
    %2628 = vmatprep.subr.bf16.mxu0 %v743
    %2629 = vmatpush1.bf16.msra.mxu0 %v742
    %2630 = vmatprep.subr.bf16.mxu0 %v751
    %2631 = vmatpush1.bf16.msra.mxu0 %v750
    %2632 = vmatprep.subr.bf16.mxu0 %v759
    %2633 = vmatpush1.bf16.msra.mxu0 %v758
    %2634 = vmatprep.subr.bf16.mxu0 %v767
    %2635 = vmatpush1.bf16.msra.mxu0 %v766
    %2636 = vmatprep.subr.bf16.mxu0 %v775
    %2637 = vmatpush1.bf16.msra.mxu0 %v774
    %2638 = vmatprep.subr.bf16.mxu0 %v783
    %2639 = vmatpush1.bf16.msra.mxu0 %v782
    %2640 = vmatprep.subr.bf16.mxu0 %v791
    %2641 = vmatpush1.bf16.msra.mxu0 %v790
    %2642 = vmatprep.subr.bf16.mxu0 %v799
    %2643 = vmatpush1.bf16.msra.mxu0 %v798
    %2644 = vmatprep.mubr.bf16.mxu0 %v2609
    %2645 = vmatmul.mubr.bf16.gmra.mrb[0].mxu0 %v2571
    %v2646 = vpop.f32.mrb[0].mxu0
    %v2647 = vadd.f32 0.0, %v2646
    %v2648 = vpop.f32.mrb[0].mxu0
    %v2649 = vadd.f32 0.0, %v2648
    %v2650 = vpop.f32.mrb[0].mxu0
    %v2651 = vpop.f32.mrb[0].mxu0
    %2652 = vdwg.mxu0
    %2653 = vmatprep.subr.bf16.mxu0 %v681
    %2654 = vmatpush1.bf16.msra.mxu0 %v680
    %2655 = vmatprep.subr.bf16.mxu0 %v689
    %2656 = vmatpush1.bf16.msra.mxu0 %v688
    %2657 = vmatprep.subr.bf16.mxu0 %v697
    %2658 = vmatpush1.bf16.msra.mxu0 %v696
    %2659 = vmatprep.subr.bf16.mxu0 %v705
    %2660 = vmatpush1.bf16.msra.mxu0 %v704
    %2661 = vmatprep.subr.bf16.mxu0 %v713
    %2662 = vmatpush1.bf16.msra.mxu0 %v712
    %2663 = vmatprep.subr.bf16.mxu0 %v721
    %2664 = vmatpush1.bf16.msra.mxu0 %v720
    %2665 = vmatprep.subr.bf16.mxu0 %v729
    %2666 = vmatpush1.bf16.msra.mxu0 %v728
    %2667 = vmatprep.subr.bf16.mxu0 %v737
    %2668 = vmatpush1.bf16.msra.mxu0 %v736
    %2669 = vmatprep.subr.bf16.mxu0 %v745
    %2670 = vmatpush1.bf16.msra.mxu0 %v744
    %2671 = vmatprep.subr.bf16.mxu0 %v753
    %2672 = vmatpush1.bf16.msra.mxu0 %v752
    %2673 = vmatprep.subr.bf16.mxu0 %v761
    %2674 = vmatpush1.bf16.msra.mxu0 %v760
    %2675 = vmatprep.subr.bf16.mxu0 %v769
    %2676 = vmatpush1.bf16.msra.mxu0 %v768
    %2677 = vmatprep.subr.bf16.mxu0 %v777
    %2678 = vmatpush1.bf16.msra.mxu0 %v776
    %2679 = vmatprep.subr.bf16.mxu0 %v785
    %2680 = vmatpush1.bf16.msra.mxu0 %v784
    %2681 = vmatprep.subr.bf16.mxu0 %v793
    %2682 = vmatpush1.bf16.msra.mxu0 %v792
    %2683 = vmatprep.subr.bf16.mxu0 %v801
    %2684 = vmatpush1.bf16.msra.mxu0 %v800
    %2685 = vmatprep.mubr.bf16.mxu0 %v2609
    %2686 = vmatmul.mubr.bf16.gmra.mrb[0].mxu0 %v2571
    %v2687 = vpop.f32.mrb[0].mxu0
    %v2688 = vadd.f32 0.0, %v2687
    %v2689 = vpop.f32.mrb[0].mxu0
    %v2690 = vadd.f32 0.0, %v2689
    %v2691 = vpop.f32.mrb[0].mxu0
    %v2692 = vpop.f32.mrb[0].mxu0
    %2693 = vdwg.mxu0
    %2694 = vmatprep.subr.bf16.mxu0 %v683
    %2695 = vmatpush1.bf16.msra.mxu0 %v682
    %2696 = vmatprep.subr.bf16.mxu0 %v691
    %2697 = vmatpush1.bf16.msra.mxu0 %v690
    %2698 = vmatprep.subr.bf16.mxu0 %v699
    %2699 = vmatpush1.bf16.msra.mxu0 %v698
    %2700 = vmatprep.subr.bf16.mxu0 %v707
    %2701 = vmatpush1.bf16.msra.mxu0 %v706
    %2702 = vmatprep.subr.bf16.mxu0 %v715
    %2703 = vmatpush1.bf16.msra.mxu0 %v714
    %2704 = vmatprep.subr.bf16.mxu0 %v723
    %2705 = vmatpush1.bf16.msra.mxu0 %v722
    %2706 = vmatprep.subr.bf16.mxu0 %v731
    %2707 = vmatpush1.bf16.msra.mxu0 %v730
    %2708 = vmatprep.subr.bf16.mxu0 %v739
    %2709 = vmatpush1.bf16.msra.mxu0 %v738
    %2710 = vmatprep.subr.bf16.mxu0 %v747
    %2711 = vmatpush1.bf16.msra.mxu0 %v746
    %2712 = vmatprep.subr.bf16.mxu0 %v755
    %2713 = vmatpush1.bf16.msra.mxu0 %v754
    %2714 = vmatprep.subr.bf16.mxu0 %v763
    %2715 = vmatpush1.bf16.msra.mxu0 %v762
    %2716 = vmatprep.subr.bf16.mxu0 %v771
    %2717 = vmatpush1.bf16.msra.mxu0 %v770
    %2718 = vmatprep.subr.bf16.mxu0 %v779
    %2719 = vmatpush1.bf16.msra.mxu0 %v778
    %2720 = vmatprep.subr.bf16.mxu0 %v787
    %2721 = vmatpush1.bf16.msra.mxu0 %v786
    %2722 = vmatprep.subr.bf16.mxu0 %v795
    %2723 = vmatpush1.bf16.msra.mxu0 %v794
    %2724 = vmatprep.subr.bf16.mxu0 %v803
    %2725 = vmatpush1.bf16.msra.mxu0 %v802
    %2726 = vmatprep.mubr.bf16.mxu0 %v2609
    %2727 = vmatmul.mubr.bf16.gmra.mrb[0].mxu0 %v2571
    %v2728 = vpop.f32.mrb[0].mxu0
    %v2729 = vadd.f32 0.0, %v2728
    %v2730 = vpop.f32.mrb[0].mxu0
    %v2731 = vadd.f32 0.0, %v2730
    %v2732 = vpop.f32.mrb[0].mxu0
    %v2733 = vpop.f32.mrb[0].mxu0
    %2734 = vdwg.mxu0
    %2735 = vmatprep.subr.bf16.mxu0 %v685
    %2736 = vmatpush1.bf16.msra.mxu0 %v684
    %2737 = vmatprep.subr.bf16.mxu0 %v693
    %2738 = vmatpush1.bf16.msra.mxu0 %v692
    %2739 = vmatprep.subr.bf16.mxu0 %v701
    %2740 = vmatpush1.bf16.msra.mxu0 %v700
    %2741 = vmatprep.subr.bf16.mxu0 %v709
    %2742 = vmatpush1.bf16.msra.mxu0 %v708
    %2743 = vmatprep.subr.bf16.mxu0 %v717
    %2744 = vmatpush1.bf16.msra.mxu0 %v716
    %2745 = vmatprep.subr.bf16.mxu0 %v725
    %2746 = vmatpush1.bf16.msra.mxu0 %v724
    %2747 = vmatprep.subr.bf16.mxu0 %v733
    %2748 = vmatpush1.bf16.msra.mxu0 %v732
    %2749 = vmatprep.subr.bf16.mxu0 %v741
    %2750 = vmatpush1.bf16.msra.mxu0 %v740
    %2751 = vmatprep.subr.bf16.mxu0 %v749
    %2752 = vmatpush1.bf16.msra.mxu0 %v748
    %2753 = vmatprep.subr.bf16.mxu0 %v757
    %2754 = vmatpush1.bf16.msra.mxu0 %v756
    %2755 = vmatprep.subr.bf16.mxu0 %v765
    %2756 = vmatpush1.bf16.msra.mxu0 %v764
    %2757 = vmatprep.subr.bf16.mxu0 %v773
    %2758 = vmatpush1.bf16.msra.mxu0 %v772
    %2759 = vmatprep.subr.bf16.mxu0 %v781
    %2760 = vmatpush1.bf16.msra.mxu0 %v780
    %2761 = vmatprep.subr.bf16.mxu0 %v789
    %2762 = vmatpush1.bf16.msra.mxu0 %v788
    %2763 = vmatprep.subr.bf16.mxu0 %v797
    %2764 = vmatpush1.bf16.msra.mxu0 %v796
    %2765 = vmatprep.subr.bf16.mxu0 %v805
    %2766 = vmatpush1.bf16.msra.mxu0 %v804
    %2767 = vmatprep.mubr.bf16.mxu0 %v2609
    %2768 = vmatmul.mubr.bf16.gmra.mrb[0].mxu0 %v2571
    %v2769 = vpop.f32.mrb[0].mxu0
    %v2770 = vadd.f32 0.0, %v2769
    %v2771 = vpop.f32.mrb[0].mxu0
    %v2772 = vadd.f32 0.0, %v2771
    %v2773 = vpop.f32.mrb[0].mxu0
    %v2774 = vpop.f32.mrb[0].mxu0
    %2775 = vdwg.mxu0
    %s2776 = scalar_lea.vmem [#allocation4], 112
    %v2777 = vld [vmem:[%s2776] sm:$0xff]
    %v2778 = vld [vmem:[%s2776 + $0x8] sm:$0xff]
    %v2779 = vunpack.c.l.bf16 %v2777
    %v2780 = vunpack.c.h.bf16 %v2777
    %v2781 = vunpack.c.l.bf16 %v2778
    %v2782 = vunpack.c.h.bf16 %v2778
    %v2783 = vadd.f32 %v2779, %v2647
    %v2784 = vadd.f32 %v2780, %v2649
    %v2785 = vadd.f32 %v2781, %v2688
    %v2786 = vadd.f32 %v2782, %v2690
    %v2787 = vxor.u32 %v2783, 2147483648
    %v2788 = vmul.f32 %v2787, 1.442695
    %v2789 = vpow.pop %v2788
    %v2790 = vadd.f32 %v2789, 1.0
    %v2791 = vrcp.pop %v2790
    %v2792 = vmul.f32 1.0, %v2791
    %v2793 = vxor.u32 %v2784, 2147483648
    %v2794 = vmul.f32 %v2793, 1.442695
    %v2795 = vpow.pop %v2794
    %v2796 = vadd.f32 %v2795, 1.0
    %v2797 = vrcp.pop %v2796
    %v2798 = vmul.f32 1.0, %v2797
    %v2799 = vtanh.pop %v2785
    %v2800 = vxor.u32 %v2786, 2147483648
    %v2801 = vmul.f32 %v2800, 1.442695
    %v2802 = vpow.pop %v2801
    %v2803 = vadd.f32 %v2802, 1.0
    %v2804 = vrcp.pop %v2803
    %v2805 = vmul.f32 1.0, %v2804
    %v2806 = vmul.f32 %v2798, %v2568
    %v2807 = vmul.f32 %v2792, %v2799
    %v2808 = vadd.f32 %v2806, %v2807
    %v2809 = vtanh.pop %v2808
    %v2810 = vmul.f32 %v2805, %v2809
    %v2811 = vpack.c.bf16 %v2810, %v2810
    %s2812 = scalar_lea.vmem %s3, 28
    %2813 = vst [vmem:[%s2812] sm:$0xf] %v2811
    %v2814 = vld [vmem:[#allocation5] sm:$0xff]
    %v2815 = vld [vmem:[#allocation5 + $0x8] sm:$0xff]
    %v2816 = vunpack.c.l.bf16 %v2814
    %v2817 = vunpack.c.h.bf16 %v2814
    %v2818 = vunpack.c.l.bf16 %v2815
    %v2819 = vunpack.c.h.bf16 %v2815
    %v2820 = vadd.f32 %v2816, %v2729
    %v2821 = vadd.f32 %v2817, %v2731
    %v2822 = vadd.f32 %v2818, %v2770
    %v2823 = vadd.f32 %v2819, %v2772
    %v2824 = vxor.u32 %v2820, 2147483648
    %v2825 = vmul.f32 %v2824, 1.442695
    %v2826 = vpow.pop %v2825
    %v2827 = vadd.f32 %v2826, 1.0
    %v2828 = vrcp.pop %v2827
    %v2829 = vmul.f32 1.0, %v2828
    %v2830 = vxor.u32 %v2821, 2147483648
    %v2831 = vmul.f32 %v2830, 1.442695
    %v2832 = vpow.pop %v2831
    %v2833 = vadd.f32 %v2832, 1.0
    %v2834 = vrcp.pop %v2833
    %v2835 = vmul.f32 1.0, %v2834
    %v2836 = vtanh.pop %v2822
    %v2837 = vxor.u32 %v2823, 2147483648
    %v2838 = vmul.f32 %v2837, 1.442695
    %v2839 = vpow.pop %v2838
    %v2840 = vadd.f32 %v2839, 1.0
    %v2841 = vrcp.pop %v2840
    %v2842 = vmul.f32 1.0, %v2841
    %v2843 = vmul.f32 %v2835, %v2606
    %v2844 = vmul.f32 %v2829, %v2836
    %v2845 = vadd.f32 %v2843, %v2844
    %v2846 = vtanh.pop %v2845
    %v2847 = vmul.f32 %v2842, %v2846
    %v2848 = vpack.c.bf16 %v2847, %v2847
    %2849 = vst [vmem:[%s147] sm:$0xf] %v2848
    %2850 = vst [vmem:[#allocation2] sm:$0xff] %v2810
    %2851 = vst [vmem:[#allocation3] sm:$0xff] %v2808
    %2852 = vst [vmem:[%s288] sm:$0xff] %v2847
    %2853 = vst [vmem:[%s290] sm:$0xff] %v2845
    %s2854 = ssub.s32 0, 0
    %s2855 = smul.u32 8, %s2854
    %p2856 = scmp.lt.s32.totalorder %s2855, 7
    %s2857 = scalar_select %p2856, %s2855, 7
    %s2858 = smul.addr %s2857, 4
    %s2859 = scalar_lea.vmem %s4, %s2858
    // Predicated region
    $region68: #{lstm_feature_extractor.6} parent=1 // pred_check
      _
    $region69: #{lstm_feature_extractor.6} parent=1 // pred_check_branch
      %2861 = sbr.rel (0) target = $region71
    $region70: #{lstm_feature_extractor.6} parent=1 // pred_region
      _
    $region71: #{lstm_feature_extractor.6} parent=1 // pred_fallthru
      _
    // Predicated region
    $region72: #{lstm_feature_extractor.6} parent=1 // pred_check
      _
    $region73: #{lstm_feature_extractor.6} parent=1 // pred_check_branch
      %2863 = sbr.rel (0) target = $region75
    $region74: #{lstm_feature_extractor.6} parent=1 // pred_region
      %s2864 = ssub.s32 0, 0
      %s2865 = smul.u32 8, %s2864
    $region75: #{lstm_feature_extractor.6} parent=1 // pred_fallthru
      _
    // Predicated region
    $region76: #{lstm_feature_extractor.6} parent=1 // pred_check
      _
    $region77: #{lstm_feature_extractor.6} parent=1 // pred_check_branch
      %2867 = sbr.rel (0) target = $region79
    $region78: #{lstm_feature_extractor.6} parent=1 // pred_region
      _
    $region79: #{lstm_feature_extractor.6} parent=1 // pred_fallthru
      _
    // Predicated region
    $region80: #{lstm_feature_extractor.6} parent=1 // pred_check
      _
    $region81: #{lstm_feature_extractor.6} parent=1 // pred_check_branch
      %2869 = sbr.rel (0) target = $region83
    $region82: #{lstm_feature_extractor.6} parent=1 // pred_region
      %s2870 = ssub.s32 0, 0
      %s2871 = smul.u32 8, %s2870
      %p2872 = scmp.lt.s32.totalorder %s2871, 7
      %s2873 = scalar_select %p2872, %s2871, 7
      %s2874 = smul.addr %s2873, 4
      %s2875 = scalar_lea.vmem %s4, %s2874
    $region83: #{lstm_feature_extractor.6} parent=1 // pred_fallthru
      _
    %2876 = vsyncpa [#allocation7], 1

// kernel: lstm_feature_extractor.8
$region0: #{lstm_feature_extractor.8}
  #allocation0 [shape = 'u32[]', space=smem, size = 0x4, offset = 0x4, fixed_abs, tag = 'smem constant byte address 0x4 - core index']
  #allocation1 [shape = 'u32[144,128]{1,0:T(1,128)}', space=vmem, size = 0x12000, scoped, tag = 'internal scratch']
  #allocation2 [shape = 'f32[2,8,128]{2,1,0:T(8,128)}', space=vmem, size = 0x2000, scoped, tag = 'scratch operand']
  #allocation3 [shape = 'f32[2,8,128]{2,1,0:T(8,128)}', space=vmem, size = 0x2000, scoped, tag = 'scratch operand']
  %s0 = inlined_call_operand.vmem [shape: bf16[8,8,1024], index: 0, kind: input, shape index: {}, may-alias: {0,1}]
  %s1 = inlined_call_operand.vmem [shape: bf16[8,8,1024], index: 1, kind: input, shape index: {}, may-alias: {0,1}]
  %s2 = inlined_call_operand.vmem [shape: bf16[256,1024], index: 2, kind: input, shape index: {}]
  %s3 = inlined_call_operand.vmem [shape: bf16[8,8,128], index: 3, kind: output, shape index: {0}]
  %s4 = inlined_call_operand.vmem [shape: bf16[8,8,128], index: 4, kind: output, shape index: {1}]
  %5 = xla_tuple %s3, %s4
  %s6 = sld [smem:[#allocation0]]
  $region80: #{lstm_feature_extractor.8} parent=0
    _
  %s8 = ssub.s32 1, %s6
  %s9 = scalar_select 0, %s8, %s6
  $region1: #{lstm_feature_extractor.8} parent=0
    #allocation4 [shape = 'u8[65536]{0}', space=vmem, size = 0x10000, scoped, tag = 'input window, operand 0, single buffered']
    #allocation5 [shape = 'u8[65536]{0}', space=vmem, size = 0x10000, scoped, tag = 'input window, operand 1, single buffered']
    // Predicated region
    $region2: #{lstm_feature_extractor.8} parent=1 // pred_check
      _
    $region3: #{lstm_feature_extractor.8} parent=1 // pred_check_branch
      %11 = sbr.rel (0) target = $region5
    $region4: #{lstm_feature_extractor.8} parent=1 // pred_region
      // Predicated region
      $region6: #{lstm_feature_extractor.8} parent=4 // pred_check
        _
      $region7: #{lstm_feature_extractor.8} parent=4 // pred_check_branch
        %13 = sbr.rel (0) target = $region9
      $region8: #{lstm_feature_extractor.8} parent=4 // pred_region
        // Predicated region
        $region10: #{lstm_feature_extractor.8} parent=8 // pred_check
          _
        $region11: #{lstm_feature_extractor.8} parent=8 // pred_check_branch
          %15 = sbr.rel (0) target = $region13
        $region12: #{lstm_feature_extractor.8} parent=8 // pred_region
          loop: start=0, step=1, limit=1
          $region14: #{lstm_feature_extractor.8} parent=12 // loop_pre_header
            _
          $region15: #{lstm_feature_extractor.8} parent=12 // loop_header
            %s17 = sphi 0, %s21
            %p18 = scmp.ge.s32.totalorder %s17, 1
            %s22 = sphi %s0, %s0
            %s23 = sphi [#allocation4], [#allocation4]
          $region16: #{lstm_feature_extractor.8} parent=12 // loop_header_branch
            %20 = sbr.rel (%p18) target = $region20
          $region17: #{lstm_feature_extractor.8} parent=12 // loop_body
            %v24 = vld [vmem:[%s22] sm:$0xff]
            %25 = vst [vmem:[%s23] sm:$0xff] %v24
            %v26 = vld [vmem:[%s22 + $0x8] sm:$0xff]
            %27 = vst [vmem:[%s23 + $0x8] sm:$0xff] %v26
            %v28 = vld [vmem:[%s22 + $0x20] sm:$0xff]
            %29 = vst [vmem:[%s23 + $0x10] sm:$0xff] %v28
            %v30 = vld [vmem:[%s22 + $0x28] sm:$0xff]
            %31 = vst [vmem:[%s23 + $0x18] sm:$0xff] %v30
            %v32 = vld [vmem:[%s22 + $0x40] sm:$0xff]
            %33 = vst [vmem:[%s23 + $0x20] sm:$0xff] %v32
            %v34 = vld [vmem:[%s22 + $0x48] sm:$0xff]
            %35 = vst [vmem:[%s23 + $0x28] sm:$0xff] %v34
            %v36 = vld [vmem:[%s22 + $0x60] sm:$0xff]
            %37 = vst [vmem:[%s23 + $0x30] sm:$0xff] %v36
            %v38 = vld [vmem:[%s22 + $0x68] sm:$0xff]
            %39 = vst [vmem:[%s23 + $0x38] sm:$0xff] %v38
            %v40 = vld [vmem:[%s22 + $0x80] sm:$0xff]
            %41 = vst [vmem:[%s23 + $0x40] sm:$0xff] %v40
            %v42 = vld [vmem:[%s22 + $0x88] sm:$0xff]
            %43 = vst [vmem:[%s23 + $0x48] sm:$0xff] %v42
            %v44 = vld [vmem:[%s22 + $0xa0] sm:$0xff]
            %45 = vst [vmem:[%s23 + $0x50] sm:$0xff] %v44
            %v46 = vld [vmem:[%s22 + $0xa8] sm:$0xff]
            %47 = vst [vmem:[%s23 + $0x58] sm:$0xff] %v46
            %v48 = vld [vmem:[%s22 + $0xc0] sm:$0xff]
            %49 = vst [vmem:[%s23 + $0x60] sm:$0xff] %v48
            %v50 = vld [vmem:[%s22 + $0xc8] sm:$0xff]
            %51 = vst [vmem:[%s23 + $0x68] sm:$0xff] %v50
            %v52 = vld [vmem:[%s22 + $0xe0] sm:$0xff]
            %53 = vst [vmem:[%s23 + $0x70] sm:$0xff] %v52
            %v54 = vld [vmem:[%s22 + $0xe8] sm:$0xff]
            %55 = vst [vmem:[%s23 + $0x78] sm:$0xff] %v54
          $region18: #{lstm_feature_extractor.8} parent=12 // loop_footer
            %s21 = sadd.s32 1, %s17
          $region19: #{lstm_feature_extractor.8} parent=12 // loop_footer_branch
            %16 = sbr.rel target = $region15
          $region20: #{lstm_feature_extractor.8} parent=12 // loop_exit
            _
        $region13: #{lstm_feature_extractor.8} parent=8 // pred_fallthru
          _
        // Predicated region
        $region21: #{lstm_feature_extractor.8} parent=8 // pred_check
          _
        $region22: #{lstm_feature_extractor.8} parent=8 // pred_check_branch
          %57 = sbr.rel target = $region24
        $region23: #{lstm_feature_extractor.8} parent=8 // pred_region
          _
        $region24: #{lstm_feature_extractor.8} parent=8 // pred_fallthru
          _
      $region9: #{lstm_feature_extractor.8} parent=4 // pred_fallthru
        _
      %58 = vnop
    $region5: #{lstm_feature_extractor.8} parent=1 // pred_fallthru
      _
    // Predicated region
    $region25: #{lstm_feature_extractor.8} parent=1 // pred_check
      _
    $region26: #{lstm_feature_extractor.8} parent=1 // pred_check_branch
      %60 = sbr.rel (0) target = $region28
    $region27: #{lstm_feature_extractor.8} parent=1 // pred_region
      %s61 = ssub.s32 0, 0
      %s62 = smul.u32 8, %s61
      %s63 = smul.addr %s62, 8
      %s64 = sadd.s32 4, %s63
      %s65 = smul.addr %s64, 4
      %s66 = scalar_lea.vmem %s1, %s65
      // Predicated region
      $region29: #{lstm_feature_extractor.8} parent=27 // pred_check
        _
      $region30: #{lstm_feature_extractor.8} parent=27 // pred_check_branch
        %68 = sbr.rel (0) target = $region32
      $region31: #{lstm_feature_extractor.8} parent=27 // pred_region
        // Predicated region
        $region33: #{lstm_feature_extractor.8} parent=31 // pred_check
          _
        $region34: #{lstm_feature_extractor.8} parent=31 // pred_check_branch
          %70 = sbr.rel (0) target = $region36
        $region35: #{lstm_feature_extractor.8} parent=31 // pred_region
          loop: start=0, step=1, limit=1
          $region37: #{lstm_feature_extractor.8} parent=35 // loop_pre_header
            _
          $region38: #{lstm_feature_extractor.8} parent=35 // loop_header
            %s72 = sphi 0, %s76
            %p73 = scmp.ge.s32.totalorder %s72, 1
            %s77 = sphi %s66, %s66
            %s78 = sphi [#allocation5], [#allocation5]
          $region39: #{lstm_feature_extractor.8} parent=35 // loop_header_branch
            %75 = sbr.rel (%p73) target = $region43
          $region40: #{lstm_feature_extractor.8} parent=35 // loop_body
            %v79 = vld [vmem:[%s77] sm:$0xff]
            %80 = vst [vmem:[%s78] sm:$0xff] %v79
            %v81 = vld [vmem:[%s77 + $0x8] sm:$0xff]
            %82 = vst [vmem:[%s78 + $0x8] sm:$0xff] %v81
            %v83 = vld [vmem:[%s77 + $0x20] sm:$0xff]
            %84 = vst [vmem:[%s78 + $0x10] sm:$0xff] %v83
            %v85 = vld [vmem:[%s77 + $0x28] sm:$0xff]
            %86 = vst [vmem:[%s78 + $0x18] sm:$0xff] %v85
            %v87 = vld [vmem:[%s77 + $0x40] sm:$0xff]
            %88 = vst [vmem:[%s78 + $0x20] sm:$0xff] %v87
            %v89 = vld [vmem:[%s77 + $0x48] sm:$0xff]
            %90 = vst [vmem:[%s78 + $0x28] sm:$0xff] %v89
            %v91 = vld [vmem:[%s77 + $0x60] sm:$0xff]
            %92 = vst [vmem:[%s78 + $0x30] sm:$0xff] %v91
            %v93 = vld [vmem:[%s77 + $0x68] sm:$0xff]
            %94 = vst [vmem:[%s78 + $0x38] sm:$0xff] %v93
            %v95 = vld [vmem:[%s77 + $0x80] sm:$0xff]
            %96 = vst [vmem:[%s78 + $0x40] sm:$0xff] %v95
            %v97 = vld [vmem:[%s77 + $0x88] sm:$0xff]
            %98 = vst [vmem:[%s78 + $0x48] sm:$0xff] %v97
            %v99 = vld [vmem:[%s77 + $0xa0] sm:$0xff]
            %100 = vst [vmem:[%s78 + $0x50] sm:$0xff] %v99
            %v101 = vld [vmem:[%s77 + $0xa8] sm:$0xff]
            %102 = vst [vmem:[%s78 + $0x58] sm:$0xff] %v101
            %v103 = vld [vmem:[%s77 + $0xc0] sm:$0xff]
            %104 = vst [vmem:[%s78 + $0x60] sm:$0xff] %v103
            %v105 = vld [vmem:[%s77 + $0xc8] sm:$0xff]
            %106 = vst [vmem:[%s78 + $0x68] sm:$0xff] %v105
            %v107 = vld [vmem:[%s77 + $0xe0] sm:$0xff]
            %108 = vst [vmem:[%s78 + $0x70] sm:$0xff] %v107
            %v109 = vld [vmem:[%s77 + $0xe8] sm:$0xff]
            %110 = vst [vmem:[%s78 + $0x78] sm:$0xff] %v109
          $region41: #{lstm_feature_extractor.8} parent=35 // loop_footer
            %s76 = sadd.s32 1, %s72
          $region42: #{lstm_feature_extractor.8} parent=35 // loop_footer_branch
            %71 = sbr.rel target = $region38
          $region43: #{lstm_feature_extractor.8} parent=35 // loop_exit
            _
        $region36: #{lstm_feature_extractor.8} parent=31 // pred_fallthru
          _
        // Predicated region
        $region44: #{lstm_feature_extractor.8} parent=31 // pred_check
          _
        $region45: #{lstm_feature_extractor.8} parent=31 // pred_check_branch
          %112 = sbr.rel target = $region47
        $region46: #{lstm_feature_extractor.8} parent=31 // pred_region
          _
        $region47: #{lstm_feature_extractor.8} parent=31 // pred_fallthru
          _
      $region32: #{lstm_feature_extractor.8} parent=27 // pred_fallthru
        _
      %113 = vnop
    $region28: #{lstm_feature_extractor.8} parent=1 // pred_fallthru
      _
    // Predicated region
    $region48: #{lstm_feature_extractor.8} parent=1 // pred_check
      _
    $region49: #{lstm_feature_extractor.8} parent=1 // pred_check_branch
      %115 = sbr.rel (0) target = $region51
    $region50: #{lstm_feature_extractor.8} parent=1 // pred_region
      _
    $region51: #{lstm_feature_extractor.8} parent=1 // pred_fallthru
      _
    // Predicated region
    $region52: #{lstm_feature_extractor.8} parent=1 // pred_check
      _
    $region53: #{lstm_feature_extractor.8} parent=1 // pred_check_branch
      %117 = sbr.rel (0) target = $region55
    $region54: #{lstm_feature_extractor.8} parent=1 // pred_region
      _
    $region55: #{lstm_feature_extractor.8} parent=1 // pred_fallthru
      _
    // Predicated region
    $region56: #{lstm_feature_extractor.8} parent=1 // pred_check
      _
    $region57: #{lstm_feature_extractor.8} parent=1 // pred_check_branch
      %119 = sbr.rel (0) target = $region59
    $region58: #{lstm_feature_extractor.8} parent=1 // pred_region
      _
    $region59: #{lstm_feature_extractor.8} parent=1 // pred_fallthru
      _
    %s120 = ssub.s32 0, 0
    %s121 = smul.u32 8, %s120
    %p122 = scmp.lt.s32.totalorder %s121, 7
    %s123 = scalar_select %p122, %s121, 7
    %s124 = smul.addr %s123, 4
    %s125 = scalar_lea.vmem %s4, %s124
    %s126 = ssub.s32 0, 0
    %s127 = smul.u32 8, %s126
    %s128 = ssub.s32 0, 0
    %s129 = smul.u32 8, %s128
    %p130 = scmp.lt.s32.totalorder %s129, 7
    %s131 = scalar_select %p130, %s129, 7
    %s132 = smul.addr %s131, 4
    %s133 = scalar_lea.vmem %s4, %s132
    %s134 = ssub.s32 0, 0
    %s135 = smul.u32 8, %s134
    %p136 = scmp.eq.s32.totalorder 0, 0
    // Predicated region
    $region60: #{lstm_feature_extractor.8} parent=1 // pred_check
      %p137 = pneg %p136
    $region61: #{lstm_feature_extractor.8} parent=1 // pred_check_branch
      %139 = sbr.rel (%p137) target = $region63
    $region62: #{lstm_feature_extractor.8} parent=1 // pred_region
      %140 = vst [vmem:[#allocation2] sm:$0xff] 0.0
      %141 = vst [vmem:[#allocation2 + $0x8] sm:$0xff] 0.0
      %142 = vst [vmem:[#allocation3] sm:$0xff] 0.0
      %143 = vst [vmem:[#allocation3 + $0x8] sm:$0xff] 0.0
    $region63: #{lstm_feature_extractor.8} parent=1 // pred_fallthru
      _
    %v144 = vld [vmem:[%s2] sm:$0xff]
    %v145 = vld [vmem:[%s2 + $0x8] sm:$0xff]
    %v146 = vld [vmem:[%s2 + $0x10] sm:$0xff]
    %v147 = vld [vmem:[%s2 + $0x18] sm:$0xff]
    %v148 = vld [vmem:[%s2 + $0x20] sm:$0xff]
    %v149 = vld [vmem:[%s2 + $0x28] sm:$0xff]
    %v150 = vld [vmem:[%s2 + $0x30] sm:$0xff]
    %v151 = vld [vmem:[%s2 + $0x38] sm:$0xff]
    %v152 = vld [vmem:[%s2 + $0x40] sm:$0xff]
    %v153 = vld [vmem:[%s2 + $0x48] sm:$0xff]
    %v154 = vld [vmem:[%s2 + $0x50] sm:$0xff]
    %v155 = vld [vmem:[%s2 + $0x58] sm:$0xff]
    %v156 = vld [vmem:[%s2 + $0x60] sm:$0xff]
    %v157 = vld [vmem:[%s2 + $0x68] sm:$0xff]
    %v158 = vld [vmem:[%s2 + $0x70] sm:$0xff]
    %v159 = vld [vmem:[%s2 + $0x78] sm:$0xff]
    %v160 = vld [vmem:[%s2 + $0x80] sm:$0xff]
    %v161 = vld [vmem:[%s2 + $0x88] sm:$0xff]
    %v162 = vld [vmem:[%s2 + $0x90] sm:$0xff]
    %v163 = vld [vmem:[%s2 + $0x98] sm:$0xff]
    %v164 = vld [vmem:[%s2 + $0xa0] sm:$0xff]
    %v165 = vld [vmem:[%s2 + $0xa8] sm:$0xff]
    %v166 = vld [vmem:[%s2 + $0xb0] sm:$0xff]
    %v167 = vld [vmem:[%s2 + $0xb8] sm:$0xff]
    %v168 = vld [vmem:[%s2 + $0xc0] sm:$0xff]
    %v169 = vld [vmem:[%s2 + $0xc8] sm:$0xff]
    %v170 = vld [vmem:[%s2 + $0xd0] sm:$0xff]
    %v171 = vld [vmem:[%s2 + $0xd8] sm:$0xff]
    %v172 = vld [vmem:[%s2 + $0xe0] sm:$0xff]
    %v173 = vld [vmem:[%s2 + $0xe8] sm:$0xff]
    %v174 = vld [vmem:[%s2 + $0xf0] sm:$0xff]
    %v175 = vld [vmem:[%s2 + $0xf8] sm:$0xff]
    %v176 = vld [vmem:[%s2 + $0x100] sm:$0xff]
    %v177 = vld [vmem:[%s2 + $0x108] sm:$0xff]
    %v178 = vld [vmem:[%s2 + $0x110] sm:$0xff]
    %v179 = vld [vmem:[%s2 + $0x118] sm:$0xff]
    %v180 = vld [vmem:[%s2 + $0x120] sm:$0xff]
    %v181 = vld [vmem:[%s2 + $0x128] sm:$0xff]
    %v182 = vld [vmem:[%s2 + $0x130] sm:$0xff]
    %v183 = vld [vmem:[%s2 + $0x138] sm:$0xff]
    %v184 = vld [vmem:[%s2 + $0x140] sm:$0xff]
    %v185 = vld [vmem:[%s2 + $0x148] sm:$0xff]
    %v186 = vld [vmem:[%s2 + $0x150] sm:$0xff]
    %v187 = vld [vmem:[%s2 + $0x158] sm:$0xff]
    %v188 = vld [vmem:[%s2 + $0x160] sm:$0xff]
    %v189 = vld [vmem:[%s2 + $0x168] sm:$0xff]
    %v190 = vld [vmem:[%s2 + $0x170] sm:$0xff]
    %v191 = vld [vmem:[%s2 + $0x178] sm:$0xff]
    %v192 = vld [vmem:[%s2 + $0x180] sm:$0xff]
    %v193 = vld [vmem:[%s2 + $0x188] sm:$0xff]
    %v194 = vld [vmem:[%s2 + $0x190] sm:$0xff]
    %v195 = vld [vmem:[%s2 + $0x198] sm:$0xff]
    %v196 = vld [vmem:[%s2 + $0x1a0] sm:$0xff]
    %v197 = vld [vmem:[%s2 + $0x1a8] sm:$0xff]
    %v198 = vld [vmem:[%s2 + $0x1b0] sm:$0xff]
    %v199 = vld [vmem:[%s2 + $0x1b8] sm:$0xff]
    %v200 = vld [vmem:[%s2 + $0x1c0] sm:$0xff]
    %v201 = vld [vmem:[%s2 + $0x1c8] sm:$0xff]
    %v202 = vld [vmem:[%s2 + $0x1d0] sm:$0xff]
    %v203 = vld [vmem:[%s2 + $0x1d8] sm:$0xff]
    %v204 = vld [vmem:[%s2 + $0x1e0] sm:$0xff]
    %v205 = vld [vmem:[%s2 + $0x1e8] sm:$0xff]
    %v206 = vld [vmem:[%s2 + $0x1f0] sm:$0xff]
    %v207 = vld [vmem:[%s2 + $0x1f8] sm:$0xff]
    %v208 = vld [vmem:[%s2 + $0x200] sm:$0xff]
    %v209 = vld [vmem:[%s2 + $0x208] sm:$0xff]
    %v210 = vld [vmem:[%s2 + $0x210] sm:$0xff]
    %v211 = vld [vmem:[%s2 + $0x218] sm:$0xff]
    %v212 = vld [vmem:[%s2 + $0x220] sm:$0xff]
    %v213 = vld [vmem:[%s2 + $0x228] sm:$0xff]
    %v214 = vld [vmem:[%s2 + $0x230] sm:$0xff]
    %v215 = vld [vmem:[%s2 + $0x238] sm:$0xff]
    %v216 = vld [vmem:[%s2 + $0x240] sm:$0xff]
    %v217 = vld [vmem:[%s2 + $0x248] sm:$0xff]
    %v218 = vld [vmem:[%s2 + $0x250] sm:$0xff]
    %v219 = vld [vmem:[%s2 + $0x258] sm:$0xff]
    %v220 = vld [vmem:[%s2 + $0x260] sm:$0xff]
    %v221 = vld [vmem:[%s2 + $0x268] sm:$0xff]
    %v222 = vld [vmem:[%s2 + $0x270] sm:$0xff]
    %v223 = vld [vmem:[%s2 + $0x278] sm:$0xff]
    %v224 = vld [vmem:[%s2 + $0x280] sm:$0xff]
    %v225 = vld [vmem:[%s2 + $0x288] sm:$0xff]
    %v226 = vld [vmem:[%s2 + $0x290] sm:$0xff]
    %v227 = vld [vmem:[%s2 + $0x298] sm:$0xff]
    %v228 = vld [vmem:[%s2 + $0x2a0] sm:$0xff]
    %v229 = vld [vmem:[%s2 + $0x2a8] sm:$0xff]
    %v230 = vld [vmem:[%s2 + $0x2b0] sm:$0xff]
    %v231 = vld [vmem:[%s2 + $0x2b8] sm:$0xff]
    %v232 = vld [vmem:[%s2 + $0x2c0] sm:$0xff]
    %v233 = vld [vmem:[%s2 + $0x2c8] sm:$0xff]
    %v234 = vld [vmem:[%s2 + $0x2d0] sm:$0xff]
    %v235 = vld [vmem:[%s2 + $0x2d8] sm:$0xff]
    %v236 = vld [vmem:[%s2 + $0x2e0] sm:$0xff]
    %v237 = vld [vmem:[%s2 + $0x2e8] sm:$0xff]
    %v238 = vld [vmem:[%s2 + $0x2f0] sm:$0xff]
    %v239 = vld [vmem:[%s2 + $0x2f8] sm:$0xff]
    %v240 = vld [vmem:[%s2 + $0x300] sm:$0xff]
    %v241 = vld [vmem:[%s2 + $0x308] sm:$0xff]
    %v242 = vld [vmem:[%s2 + $0x310] sm:$0xff]
    %v243 = vld [vmem:[%s2 + $0x318] sm:$0xff]
    %v244 = vld [vmem:[%s2 + $0x320] sm:$0xff]
    %v245 = vld [vmem:[%s2 + $0x328] sm:$0xff]
    %v246 = vld [vmem:[%s2 + $0x330] sm:$0xff]
    %v247 = vld [vmem:[%s2 + $0x338] sm:$0xff]
    %v248 = vld [vmem:[%s2 + $0x340] sm:$0xff]
    %v249 = vld [vmem:[%s2 + $0x348] sm:$0xff]
    %v250 = vld [vmem:[%s2 + $0x350] sm:$0xff]
    %v251 = vld [vmem:[%s2 + $0x358] sm:$0xff]
    %v252 = vld [vmem:[%s2 + $0x360] sm:$0xff]
    %v253 = vld [vmem:[%s2 + $0x368] sm:$0xff]
    %v254 = vld [vmem:[%s2 + $0x370] sm:$0xff]
    %v255 = vld [vmem:[%s2 + $0x378] sm:$0xff]
    %v256 = vld [vmem:[%s2 + $0x380] sm:$0xff]
    %v257 = vld [vmem:[%s2 + $0x388] sm:$0xff]
    %v258 = vld [vmem:[%s2 + $0x390] sm:$0xff]
    %v259 = vld [vmem:[%s2 + $0x398] sm:$0xff]
    %v260 = vld [vmem:[%s2 + $0x3a0] sm:$0xff]
    %v261 = vld [vmem:[%s2 + $0x3a8] sm:$0xff]
    %v262 = vld [vmem:[%s2 + $0x3b0] sm:$0xff]
    %v263 = vld [vmem:[%s2 + $0x3b8] sm:$0xff]
    %v264 = vld [vmem:[%s2 + $0x3c0] sm:$0xff]
    %v265 = vld [vmem:[%s2 + $0x3c8] sm:$0xff]
    %v266 = vld [vmem:[%s2 + $0x3d0] sm:$0xff]
    %v267 = vld [vmem:[%s2 + $0x3d8] sm:$0xff]
    %v268 = vld [vmem:[%s2 + $0x3e0] sm:$0xff]
    %v269 = vld [vmem:[%s2 + $0x3e8] sm:$0xff]
    %v270 = vld [vmem:[%s2 + $0x3f0] sm:$0xff]
    %v271 = vld [vmem:[%s2 + $0x3f8] sm:$0xff]
    %v272 = vld [vmem:[#allocation2] sm:$0xff]
    %v273 = vld [vmem:[#allocation3] sm:$0xff]
    %s274 = scalar_lea.vmem [#allocation2], 8
    %v275 = vld [vmem:[%s274] sm:$0xff]
    %s276 = scalar_lea.vmem [#allocation3], 8
    %v277 = vld [vmem:[%s276] sm:$0xff]
    %v278 = vpack.c.bf16 %v272, %v272
    %v279 = vpack.c.bf16 %v275, %v275
    %v408 = vunpack.c.l.b16 %v144
    %v409 = vunpack.c.h.b16 %v144
    %v410 = vunpack.c.l.b16 %v145
    %v411 = vunpack.c.h.b16 %v145
    %v412 = vunpack.c.l.b16 %v146
    %v413 = vunpack.c.h.b16 %v146
    %v414 = vunpack.c.l.b16 %v147
    %v415 = vunpack.c.h.b16 %v147
    %v416 = vunpack.c.l.b16 %v148
    %v417 = vunpack.c.h.b16 %v148
    %v418 = vunpack.c.l.b16 %v149
    %v419 = vunpack.c.h.b16 %v149
    %v420 = vunpack.c.l.b16 %v150
    %v421 = vunpack.c.h.b16 %v150
    %v422 = vunpack.c.l.b16 %v151
    %v423 = vunpack.c.h.b16 %v151
    %v424 = vunpack.c.l.b16 %v152
    %v425 = vunpack.c.h.b16 %v152
    %v426 = vunpack.c.l.b16 %v153
    %v427 = vunpack.c.h.b16 %v153
    %v428 = vunpack.c.l.b16 %v154
    %v429 = vunpack.c.h.b16 %v154
    %v430 = vunpack.c.l.b16 %v155
    %v431 = vunpack.c.h.b16 %v155
    %v432 = vunpack.c.l.b16 %v156
    %v433 = vunpack.c.h.b16 %v156
    %v434 = vunpack.c.l.b16 %v157
    %v435 = vunpack.c.h.b16 %v157
    %v436 = vunpack.c.l.b16 %v158
    %v437 = vunpack.c.h.b16 %v158
    %v438 = vunpack.c.l.b16 %v159
    %v439 = vunpack.c.h.b16 %v159
    %v440 = vunpack.c.l.b16 %v160
    %v441 = vunpack.c.h.b16 %v160
    %v442 = vunpack.c.l.b16 %v161
    %v443 = vunpack.c.h.b16 %v161
    %v444 = vunpack.c.l.b16 %v162
    %v445 = vunpack.c.h.b16 %v162
    %v446 = vunpack.c.l.b16 %v163
    %v447 = vunpack.c.h.b16 %v163
    %v448 = vunpack.c.l.b16 %v164
    %v449 = vunpack.c.h.b16 %v164
    %v450 = vunpack.c.l.b16 %v165
    %v451 = vunpack.c.h.b16 %v165
    %v452 = vunpack.c.l.b16 %v166
    %v453 = vunpack.c.h.b16 %v166
    %v454 = vunpack.c.l.b16 %v167
    %v455 = vunpack.c.h.b16 %v167
    %v456 = vunpack.c.l.b16 %v168
    %v457 = vunpack.c.h.b16 %v168
    %v458 = vunpack.c.l.b16 %v169
    %v459 = vunpack.c.h.b16 %v169
    %v460 = vunpack.c.l.b16 %v170
    %v461 = vunpack.c.h.b16 %v170
    %v462 = vunpack.c.l.b16 %v171
    %v463 = vunpack.c.h.b16 %v171
    %v464 = vunpack.c.l.b16 %v172
    %v465 = vunpack.c.h.b16 %v172
    %v466 = vunpack.c.l.b16 %v173
    %v467 = vunpack.c.h.b16 %v173
    %v468 = vunpack.c.l.b16 %v174
    %v469 = vunpack.c.h.b16 %v174
    %v470 = vunpack.c.l.b16 %v175
    %v471 = vunpack.c.h.b16 %v175
    %v472 = vunpack.c.l.b16 %v176
    %v473 = vunpack.c.h.b16 %v176
    %v474 = vunpack.c.l.b16 %v177
    %v475 = vunpack.c.h.b16 %v177
    %v476 = vunpack.c.l.b16 %v178
    %v477 = vunpack.c.h.b16 %v178
    %v478 = vunpack.c.l.b16 %v179
    %v479 = vunpack.c.h.b16 %v179
    %v480 = vunpack.c.l.b16 %v180
    %v481 = vunpack.c.h.b16 %v180
    %v482 = vunpack.c.l.b16 %v181
    %v483 = vunpack.c.h.b16 %v181
    %v484 = vunpack.c.l.b16 %v182
    %v485 = vunpack.c.h.b16 %v182
    %v486 = vunpack.c.l.b16 %v183
    %v487 = vunpack.c.h.b16 %v183
    %v488 = vunpack.c.l.b16 %v184
    %v489 = vunpack.c.h.b16 %v184
    %v490 = vunpack.c.l.b16 %v185
    %v491 = vunpack.c.h.b16 %v185
    %v492 = vunpack.c.l.b16 %v186
    %v493 = vunpack.c.h.b16 %v186
    %v494 = vunpack.c.l.b16 %v187
    %v495 = vunpack.c.h.b16 %v187
    %v496 = vunpack.c.l.b16 %v188
    %v497 = vunpack.c.h.b16 %v188
    %v498 = vunpack.c.l.b16 %v189
    %v499 = vunpack.c.h.b16 %v189
    %v500 = vunpack.c.l.b16 %v190
    %v501 = vunpack.c.h.b16 %v190
    %v502 = vunpack.c.l.b16 %v191
    %v503 = vunpack.c.h.b16 %v191
    %v504 = vunpack.c.l.b16 %v192
    %v505 = vunpack.c.h.b16 %v192
    %v506 = vunpack.c.l.b16 %v193
    %v507 = vunpack.c.h.b16 %v193
    %v508 = vunpack.c.l.b16 %v194
    %v509 = vunpack.c.h.b16 %v194
    %v510 = vunpack.c.l.b16 %v195
    %v511 = vunpack.c.h.b16 %v195
    %v512 = vunpack.c.l.b16 %v196
    %v513 = vunpack.c.h.b16 %v196
    %v514 = vunpack.c.l.b16 %v197
    %v515 = vunpack.c.h.b16 %v197
    %v516 = vunpack.c.l.b16 %v198
    %v517 = vunpack.c.h.b16 %v198
    %v518 = vunpack.c.l.b16 %v199
    %v519 = vunpack.c.h.b16 %v199
    %v520 = vunpack.c.l.b16 %v200
    %v521 = vunpack.c.h.b16 %v200
    %v522 = vunpack.c.l.b16 %v201
    %v523 = vunpack.c.h.b16 %v201
    %v524 = vunpack.c.l.b16 %v202
    %v525 = vunpack.c.h.b16 %v202
    %v526 = vunpack.c.l.b16 %v203
    %v527 = vunpack.c.h.b16 %v203
    %v528 = vunpack.c.l.b16 %v204
    %v529 = vunpack.c.h.b16 %v204
    %v530 = vunpack.c.l.b16 %v205
    %v531 = vunpack.c.h.b16 %v205
    %v532 = vunpack.c.l.b16 %v206
    %v533 = vunpack.c.h.b16 %v206
    %v534 = vunpack.c.l.b16 %v207
    %v535 = vunpack.c.h.b16 %v207
    %v536 = vunpack.c.l.b16 %v208
    %v537 = vunpack.c.h.b16 %v208
    %v538 = vunpack.c.l.b16 %v209
    %v539 = vunpack.c.h.b16 %v209
    %v540 = vunpack.c.l.b16 %v210
    %v541 = vunpack.c.h.b16 %v210
    %v542 = vunpack.c.l.b16 %v211
    %v543 = vunpack.c.h.b16 %v211
    %v544 = vunpack.c.l.b16 %v212
    %v545 = vunpack.c.h.b16 %v212
    %v546 = vunpack.c.l.b16 %v213
    %v547 = vunpack.c.h.b16 %v213
    %v548 = vunpack.c.l.b16 %v214
    %v549 = vunpack.c.h.b16 %v214
    %v550 = vunpack.c.l.b16 %v215
    %v551 = vunpack.c.h.b16 %v215
    %v552 = vunpack.c.l.b16 %v216
    %v553 = vunpack.c.h.b16 %v216
    %v554 = vunpack.c.l.b16 %v217
    %v555 = vunpack.c.h.b16 %v217
    %v556 = vunpack.c.l.b16 %v218
    %v557 = vunpack.c.h.b16 %v218
    %v558 = vunpack.c.l.b16 %v219
    %v559 = vunpack.c.h.b16 %v219
    %v560 = vunpack.c.l.b16 %v220
    %v561 = vunpack.c.h.b16 %v220
    %v562 = vunpack.c.l.b16 %v221
    %v563 = vunpack.c.h.b16 %v221
    %v564 = vunpack.c.l.b16 %v222
    %v565 = vunpack.c.h.b16 %v222
    %v566 = vunpack.c.l.b16 %v223
    %v567 = vunpack.c.h.b16 %v223
    %v568 = vunpack.c.l.b16 %v224
    %v569 = vunpack.c.h.b16 %v224
    %v570 = vunpack.c.l.b16 %v225
    %v571 = vunpack.c.h.b16 %v225
    %v572 = vunpack.c.l.b16 %v226
    %v573 = vunpack.c.h.b16 %v226
    %v574 = vunpack.c.l.b16 %v227
    %v575 = vunpack.c.h.b16 %v227
    %v576 = vunpack.c.l.b16 %v228
    %v577 = vunpack.c.h.b16 %v228
    %v578 = vunpack.c.l.b16 %v229
    %v579 = vunpack.c.h.b16 %v229
    %v580 = vunpack.c.l.b16 %v230
    %v581 = vunpack.c.h.b16 %v230
    %v582 = vunpack.c.l.b16 %v231
    %v583 = vunpack.c.h.b16 %v231
    %v584 = vunpack.c.l.b16 %v232
    %v585 = vunpack.c.h.b16 %v232
    %v586 = vunpack.c.l.b16 %v233
    %v587 = vunpack.c.h.b16 %v233
    %v588 = vunpack.c.l.b16 %v234
    %v589 = vunpack.c.h.b16 %v234
    %v590 = vunpack.c.l.b16 %v235
    %v591 = vunpack.c.h.b16 %v235
    %v592 = vunpack.c.l.b16 %v236
    %v593 = vunpack.c.h.b16 %v236
    %v594 = vunpack.c.l.b16 %v237
    %v595 = vunpack.c.h.b16 %v237
    %v596 = vunpack.c.l.b16 %v238
    %v597 = vunpack.c.h.b16 %v238
    %v598 = vunpack.c.l.b16 %v239
    %v599 = vunpack.c.h.b16 %v239
    %v600 = vunpack.c.l.b16 %v240
    %v601 = vunpack.c.h.b16 %v240
    %v602 = vunpack.c.l.b16 %v241
    %v603 = vunpack.c.h.b16 %v241
    %v604 = vunpack.c.l.b16 %v242
    %v605 = vunpack.c.h.b16 %v242
    %v606 = vunpack.c.l.b16 %v243
    %v607 = vunpack.c.h.b16 %v243
    %v608 = vunpack.c.l.b16 %v244
    %v609 = vunpack.c.h.b16 %v244
    %v610 = vunpack.c.l.b16 %v245
    %v611 = vunpack.c.h.b16 %v245
    %v612 = vunpack.c.l.b16 %v246
    %v613 = vunpack.c.h.b16 %v246
    %v614 = vunpack.c.l.b16 %v247
    %v615 = vunpack.c.h.b16 %v247
    %v616 = vunpack.c.l.b16 %v248
    %v617 = vunpack.c.h.b16 %v248
    %v618 = vunpack.c.l.b16 %v249
    %v619 = vunpack.c.h.b16 %v249
    %v620 = vunpack.c.l.b16 %v250
    %v621 = vunpack.c.h.b16 %v250
    %v622 = vunpack.c.l.b16 %v251
    %v623 = vunpack.c.h.b16 %v251
    %v624 = vunpack.c.l.b16 %v252
    %v625 = vunpack.c.h.b16 %v252
    %v626 = vunpack.c.l.b16 %v253
    %v627 = vunpack.c.h.b16 %v253
    %v628 = vunpack.c.l.b16 %v254
    %v629 = vunpack.c.h.b16 %v254
    %v630 = vunpack.c.l.b16 %v255
    %v631 = vunpack.c.h.b16 %v255
    %v632 = vunpack.c.l.b16 %v256
    %v633 = vunpack.c.h.b16 %v256
    %v634 = vunpack.c.l.b16 %v257
    %v635 = vunpack.c.h.b16 %v257
    %v636 = vunpack.c.l.b16 %v258
    %v637 = vunpack.c.h.b16 %v258
    %v638 = vunpack.c.l.b16 %v259
    %v639 = vunpack.c.h.b16 %v259
    %v640 = vunpack.c.l.b16 %v260
    %v641 = vunpack.c.h.b16 %v260
    %v642 = vunpack.c.l.b16 %v261
    %v643 = vunpack.c.h.b16 %v261
    %v644 = vunpack.c.l.b16 %v262
    %v645 = vunpack.c.h.b16 %v262
    %v646 = vunpack.c.l.b16 %v263
    %v647 = vunpack.c.h.b16 %v263
    %v648 = vunpack.c.l.b16 %v264
    %v649 = vunpack.c.h.b16 %v264
    %v650 = vunpack.c.l.b16 %v265
    %v651 = vunpack.c.h.b16 %v265
    %v652 = vunpack.c.l.b16 %v266
    %v653 = vunpack.c.h.b16 %v266
    %v654 = vunpack.c.l.b16 %v267
    %v655 = vunpack.c.h.b16 %v267
    %v656 = vunpack.c.l.b16 %v268
    %v657 = vunpack.c.h.b16 %v268
    %v658 = vunpack.c.l.b16 %v269
    %v659 = vunpack.c.h.b16 %v269
    %v660 = vunpack.c.l.b16 %v270
    %v661 = vunpack.c.h.b16 %v270
    %v662 = vunpack.c.l.b16 %v271
    %v663 = vunpack.c.h.b16 %v271
    %v664 = vpack.c.b16 %v416, %v408
    %v665 = vpack.c.b16 %v417, %v409
    %v666 = vpack.c.b16 %v418, %v410
    %v667 = vpack.c.b16 %v419, %v411
    %v668 = vpack.c.b16 %v420, %v412
    %v669 = vpack.c.b16 %v421, %v413
    %v670 = vpack.c.b16 %v422, %v414
    %v671 = vpack.c.b16 %v423, %v415
    %v672 = vpack.c.b16 %v432, %v424
    %v673 = vpack.c.b16 %v433, %v425
    %v674 = vpack.c.b16 %v434, %v426
    %v675 = vpack.c.b16 %v435, %v427
    %v676 = vpack.c.b16 %v436, %v428
    %v677 = vpack.c.b16 %v437, %v429
    %v678 = vpack.c.b16 %v438, %v430
    %v679 = vpack.c.b16 %v439, %v431
    %v680 = vpack.c.b16 %v448, %v440
    %v681 = vpack.c.b16 %v449, %v441
    %v682 = vpack.c.b16 %v450, %v442
    %v683 = vpack.c.b16 %v451, %v443
    %v684 = vpack.c.b16 %v452, %v444
    %v685 = vpack.c.b16 %v453, %v445
    %v686 = vpack.c.b16 %v454, %v446
    %v687 = vpack.c.b16 %v455, %v447
    %v688 = vpack.c.b16 %v464, %v456
    %v689 = vpack.c.b16 %v465, %v457
    %v690 = vpack.c.b16 %v466, %v458
    %v691 = vpack.c.b16 %v467, %v459
    %v692 = vpack.c.b16 %v468, %v460
    %v693 = vpack.c.b16 %v469, %v461
    %v694 = vpack.c.b16 %v470, %v462
    %v695 = vpack.c.b16 %v471, %v463
    %v696 = vpack.c.b16 %v480, %v472
    %v697 = vpack.c.b16 %v481, %v473
    %v698 = vpack.c.b16 %v482, %v474
    %v699 = vpack.c.b16 %v483, %v475
    %v700 = vpack.c.b16 %v484, %v476
    %v701 = vpack.c.b16 %v485, %v477
    %v702 = vpack.c.b16 %v486, %v478
    %v703 = vpack.c.b16 %v487, %v479
    %v704 = vpack.c.b16 %v496, %v488
    %v705 = vpack.c.b16 %v497, %v489
    %v706 = vpack.c.b16 %v498, %v490
    %v707 = vpack.c.b16 %v499, %v491
    %v708 = vpack.c.b16 %v500, %v492
    %v709 = vpack.c.b16 %v501, %v493
    %v710 = vpack.c.b16 %v502, %v494
    %v711 = vpack.c.b16 %v503, %v495
    %v712 = vpack.c.b16 %v512, %v504
    %v713 = vpack.c.b16 %v513, %v505
    %v714 = vpack.c.b16 %v514, %v506
    %v715 = vpack.c.b16 %v515, %v507
    %v716 = vpack.c.b16 %v516, %v508
    %v717 = vpack.c.b16 %v517, %v509
    %v718 = vpack.c.b16 %v518, %v510
    %v719 = vpack.c.b16 %v519, %v511
    %v720 = vpack.c.b16 %v528, %v520
    %v721 = vpack.c.b16 %v529, %v521
    %v722 = vpack.c.b16 %v530, %v522
    %v723 = vpack.c.b16 %v531, %v523
    %v724 = vpack.c.b16 %v532, %v524
    %v725 = vpack.c.b16 %v533, %v525
    %v726 = vpack.c.b16 %v534, %v526
    %v727 = vpack.c.b16 %v535, %v527
    %v728 = vpack.c.b16 %v544, %v536
    %v729 = vpack.c.b16 %v545, %v537
    %v730 = vpack.c.b16 %v546, %v538
    %v731 = vpack.c.b16 %v547, %v539
    %v732 = vpack.c.b16 %v548, %v540
    %v733 = vpack.c.b16 %v549, %v541
    %v734 = vpack.c.b16 %v550, %v542
    %v735 = vpack.c.b16 %v551, %v543
    %v736 = vpack.c.b16 %v560, %v552
    %v737 = vpack.c.b16 %v561, %v553
    %v738 = vpack.c.b16 %v562, %v554
    %v739 = vpack.c.b16 %v563, %v555
    %v740 = vpack.c.b16 %v564, %v556
    %v741 = vpack.c.b16 %v565, %v557
    %v742 = vpack.c.b16 %v566, %v558
    %v743 = vpack.c.b16 %v567, %v559
    %v744 = vpack.c.b16 %v576, %v568
    %v745 = vpack.c.b16 %v577, %v569
    %v746 = vpack.c.b16 %v578, %v570
    %v747 = vpack.c.b16 %v579, %v571
    %v748 = vpack.c.b16 %v580, %v572
    %v749 = vpack.c.b16 %v581, %v573
    %v750 = vpack.c.b16 %v582, %v574
    %v751 = vpack.c.b16 %v583, %v575
    %v752 = vpack.c.b16 %v592, %v584
    %v753 = vpack.c.b16 %v593, %v585
    %v754 = vpack.c.b16 %v594, %v586
    %v755 = vpack.c.b16 %v595, %v587
    %v756 = vpack.c.b16 %v596, %v588
    %v757 = vpack.c.b16 %v597, %v589
    %v758 = vpack.c.b16 %v598, %v590
    %v759 = vpack.c.b16 %v599, %v591
    %v760 = vpack.c.b16 %v608, %v600
    %v761 = vpack.c.b16 %v609, %v601
    %v762 = vpack.c.b16 %v610, %v602
    %v763 = vpack.c.b16 %v611, %v603
    %v764 = vpack.c.b16 %v612, %v604
    %v765 = vpack.c.b16 %v613, %v605
    %v766 = vpack.c.b16 %v614, %v606
    %v767 = vpack.c.b16 %v615, %v607
    %v768 = vpack.c.b16 %v624, %v616
    %v769 = vpack.c.b16 %v625, %v617
    %v770 = vpack.c.b16 %v626, %v618
    %v771 = vpack.c.b16 %v627, %v619
    %v772 = vpack.c.b16 %v628, %v620
    %v773 = vpack.c.b16 %v629, %v621
    %v774 = vpack.c.b16 %v630, %v622
    %v775 = vpack.c.b16 %v631, %v623
    %v776 = vpack.c.b16 %v640, %v632
    %v777 = vpack.c.b16 %v641, %v633
    %v778 = vpack.c.b16 %v642, %v634
    %v779 = vpack.c.b16 %v643, %v635
    %v780 = vpack.c.b16 %v644, %v636
    %v781 = vpack.c.b16 %v645, %v637
    %v782 = vpack.c.b16 %v646, %v638
    %v783 = vpack.c.b16 %v647, %v639
    %v784 = vpack.c.b16 %v656, %v648
    %v785 = vpack.c.b16 %v657, %v649
    %v786 = vpack.c.b16 %v658, %v650
    %v787 = vpack.c.b16 %v659, %v651
    %v788 = vpack.c.b16 %v660, %v652
    %v789 = vpack.c.b16 %v661, %v653
    %v790 = vpack.c.b16 %v662, %v654
    %v791 = vpack.c.b16 %v663, %v655
    %920 = vmatprep.subr.bf16.mxu0 %v665
    %921 = vmatpush1.bf16.msra.mxu0 %v664
    %922 = vmatprep.subr.bf16.mxu0 %v673
    %923 = vmatpush1.bf16.msra.mxu0 %v672
    %924 = vmatprep.subr.bf16.mxu0 %v681
    %925 = vmatpush1.bf16.msra.mxu0 %v680
    %926 = vmatprep.subr.bf16.mxu0 %v689
    %927 = vmatpush1.bf16.msra.mxu0 %v688
    %928 = vmatprep.subr.bf16.mxu0 %v697
    %929 = vmatpush1.bf16.msra.mxu0 %v696
    %930 = vmatprep.subr.bf16.mxu0 %v705
    %931 = vmatpush1.bf16.msra.mxu0 %v704
    %932 = vmatprep.subr.bf16.mxu0 %v713
    %933 = vmatpush1.bf16.msra.mxu0 %v712
    %934 = vmatprep.subr.bf16.mxu0 %v721
    %935 = vmatpush1.bf16.msra.mxu0 %v720
    %936 = vmatprep.subr.bf16.mxu0 %v729
    %937 = vmatpush1.bf16.msra.mxu0 %v728
    %938 = vmatprep.subr.bf16.mxu0 %v737
    %939 = vmatpush1.bf16.msra.mxu0 %v736
    %940 = vmatprep.subr.bf16.mxu0 %v745
    %941 = vmatpush1.bf16.msra.mxu0 %v744
    %942 = vmatprep.subr.bf16.mxu0 %v753
    %943 = vmatpush1.bf16.msra.mxu0 %v752
    %944 = vmatprep.subr.bf16.mxu0 %v761
    %945 = vmatpush1.bf16.msra.mxu0 %v760
    %946 = vmatprep.subr.bf16.mxu0 %v769
    %947 = vmatpush1.bf16.msra.mxu0 %v768
    %948 = vmatprep.subr.bf16.mxu0 %v777
    %949 = vmatpush1.bf16.msra.mxu0 %v776
    %950 = vmatprep.subr.bf16.mxu0 %v785
    %951 = vmatpush1.bf16.msra.mxu0 %v784
    %952 = vmatprep.mubr.bf16.mxu0 %v279
    %953 = vmatmul.mubr.bf16.gmra.mrb[0].mxu0 %v278
    %v954 = vpop.f32.mrb[0].mxu0
    %v955 = vadd.f32 0.0, %v954
    %v956 = vpop.f32.mrb[0].mxu0
    %v957 = vadd.f32 0.0, %v956
    %v958 = vpop.f32.mrb[0].mxu0
    %v959 = vpop.f32.mrb[0].mxu0
    %960 = vdwg.mxu0
    %961 = vmatprep.subr.bf16.mxu0 %v667
    %962 = vmatpush1.bf16.msra.mxu0 %v666
    %963 = vmatprep.subr.bf16.mxu0 %v675
    %964 = vmatpush1.bf16.msra.mxu0 %v674
    %965 = vmatprep.subr.bf16.mxu0 %v683
    %966 = vmatpush1.bf16.msra.mxu0 %v682
    %967 = vmatprep.subr.bf16.mxu0 %v691
    %968 = vmatpush1.bf16.msra.mxu0 %v690
    %969 = vmatprep.subr.bf16.mxu0 %v699
    %970 = vmatpush1.bf16.msra.mxu0 %v698
    %971 = vmatprep.subr.bf16.mxu0 %v707
    %972 = vmatpush1.bf16.msra.mxu0 %v706
    %973 = vmatprep.subr.bf16.mxu0 %v715
    %974 = vmatpush1.bf16.msra.mxu0 %v714
    %975 = vmatprep.subr.bf16.mxu0 %v723
    %976 = vmatpush1.bf16.msra.mxu0 %v722
    %977 = vmatprep.subr.bf16.mxu0 %v731
    %978 = vmatpush1.bf16.msra.mxu0 %v730
    %979 = vmatprep.subr.bf16.mxu0 %v739
    %980 = vmatpush1.bf16.msra.mxu0 %v738
    %981 = vmatprep.subr.bf16.mxu0 %v747
    %982 = vmatpush1.bf16.msra.mxu0 %v746
    %983 = vmatprep.subr.bf16.mxu0 %v755
    %984 = vmatpush1.bf16.msra.mxu0 %v754
    %985 = vmatprep.subr.bf16.mxu0 %v763
    %986 = vmatpush1.bf16.msra.mxu0 %v762
    %987 = vmatprep.subr.bf16.mxu0 %v771
    %988 = vmatpush1.bf16.msra.mxu0 %v770
    %989 = vmatprep.subr.bf16.mxu0 %v779
    %990 = vmatpush1.bf16.msra.mxu0 %v778
    %991 = vmatprep.subr.bf16.mxu0 %v787
    %992 = vmatpush1.bf16.msra.mxu0 %v786
    %993 = vmatprep.mubr.bf16.mxu0 %v279
    %994 = vmatmul.mubr.bf16.gmra.mrb[0].mxu0 %v278
    %v995 = vpop.f32.mrb[0].mxu0
    %v996 = vadd.f32 0.0, %v995
    %v997 = vpop.f32.mrb[0].mxu0
    %v998 = vadd.f32 0.0, %v997
    %v999 = vpop.f32.mrb[0].mxu0
    %v1000 = vpop.f32.mrb[0].mxu0
    %1001 = vdwg.mxu0
    %1002 = vmatprep.subr.bf16.mxu0 %v669
    %1003 = vmatpush1.bf16.msra.mxu0 %v668
    %1004 = vmatprep.subr.bf16.mxu0 %v677
    %1005 = vmatpush1.bf16.msra.mxu0 %v676
    %1006 = vmatprep.subr.bf16.mxu0 %v685
    %1007 = vmatpush1.bf16.msra.mxu0 %v684
    %1008 = vmatprep.subr.bf16.mxu0 %v693
    %1009 = vmatpush1.bf16.msra.mxu0 %v692
    %1010 = vmatprep.subr.bf16.mxu0 %v701
    %1011 = vmatpush1.bf16.msra.mxu0 %v700
    %1012 = vmatprep.subr.bf16.mxu0 %v709
    %1013 = vmatpush1.bf16.msra.mxu0 %v708
    %1014 = vmatprep.subr.bf16.mxu0 %v717
    %1015 = vmatpush1.bf16.msra.mxu0 %v716
    %1016 = vmatprep.subr.bf16.mxu0 %v725
    %1017 = vmatpush1.bf16.msra.mxu0 %v724
    %1018 = vmatprep.subr.bf16.mxu0 %v733
    %1019 = vmatpush1.bf16.msra.mxu0 %v732
    %1020 = vmatprep.subr.bf16.mxu0 %v741
    %1021 = vmatpush1.bf16.msra.mxu0 %v740
    %1022 = vmatprep.subr.bf16.mxu0 %v749
    %1023 = vmatpush1.bf16.msra.mxu0 %v748
    %1024 = vmatprep.subr.bf16.mxu0 %v757
    %1025 = vmatpush1.bf16.msra.mxu0 %v756
    %1026 = vmatprep.subr.bf16.mxu0 %v765
    %1027 = vmatpush1.bf16.msra.mxu0 %v764
    %1028 = vmatprep.subr.bf16.mxu0 %v773
    %1029 = vmatpush1.bf16.msra.mxu0 %v772
    %1030 = vmatprep.subr.bf16.mxu0 %v781
    %1031 = vmatpush1.bf16.msra.mxu0 %v780
    %1032 = vmatprep.subr.bf16.mxu0 %v789
    %1033 = vmatpush1.bf16.msra.mxu0 %v788
    %1034 = vmatprep.mubr.bf16.mxu0 %v279
    %1035 = vmatmul.mubr.bf16.gmra.mrb[0].mxu0 %v278
    %v1036 = vpop.f32.mrb[0].mxu0
    %v1037 = vadd.f32 0.0, %v1036
    %v1038 = vpop.f32.mrb[0].mxu0
    %v1039 = vadd.f32 0.0, %v1038
    %v1040 = vpop.f32.mrb[0].mxu0
    %v1041 = vpop.f32.mrb[0].mxu0
    %1042 = vdwg.mxu0
    %1043 = vmatprep.subr.bf16.mxu0 %v671
    %1044 = vmatpush1.bf16.msra.mxu0 %v670
    %1045 = vmatprep.subr.bf16.mxu0 %v679
    %1046 = vmatpush1.bf16.msra.mxu0 %v678
    %1047 = vmatprep.subr.bf16.mxu0 %v687
    %1048 = vmatpush1.bf16.msra.mxu0 %v686
    %1049 = vmatprep.subr.bf16.mxu0 %v695
    %1050 = vmatpush1.bf16.msra.mxu0 %v694
    %1051 = vmatprep.subr.bf16.mxu0 %v703
    %1052 = vmatpush1.bf16.msra.mxu0 %v702
    %1053 = vmatprep.subr.bf16.mxu0 %v711
    %1054 = vmatpush1.bf16.msra.mxu0 %v710
    %1055 = vmatprep.subr.bf16.mxu0 %v719
    %1056 = vmatpush1.bf16.msra.mxu0 %v718
    %1057 = vmatprep.subr.bf16.mxu0 %v727
    %1058 = vmatpush1.bf16.msra.mxu0 %v726
    %1059 = vmatprep.subr.bf16.mxu0 %v735
    %1060 = vmatpush1.bf16.msra.mxu0 %v734
    %1061 = vmatprep.subr.bf16.mxu0 %v743
    %1062 = vmatpush1.bf16.msra.mxu0 %v742
    %1063 = vmatprep.subr.bf16.mxu0 %v751
    %1064 = vmatpush1.bf16.msra.mxu0 %v750
    %1065 = vmatprep.subr.bf16.mxu0 %v759
    %1066 = vmatpush1.bf16.msra.mxu0 %v758
    %1067 = vmatprep.subr.bf16.mxu0 %v767
    %1068 = vmatpush1.bf16.msra.mxu0 %v766
    %1069 = vmatprep.subr.bf16.mxu0 %v775
    %1070 = vmatpush1.bf16.msra.mxu0 %v774
    %1071 = vmatprep.subr.bf16.mxu0 %v783
    %1072 = vmatpush1.bf16.msra.mxu0 %v782
    %1073 = vmatprep.subr.bf16.mxu0 %v791
    %1074 = vmatpush1.bf16.msra.mxu0 %v790
    %1075 = vmatprep.mubr.bf16.mxu0 %v279
    %1076 = vmatmul.mubr.bf16.gmra.mrb[0].mxu0 %v278
    %v1077 = vpop.f32.mrb[0].mxu0
    %v1078 = vadd.f32 0.0, %v1077
    %v1079 = vpop.f32.mrb[0].mxu0
    %v1080 = vadd.f32 0.0, %v1079
    %v1081 = vpop.f32.mrb[0].mxu0
    %v1082 = vpop.f32.mrb[0].mxu0
    %1083 = vdwg.mxu0
    %v1084 = vld [vmem:[#allocation4] sm:$0xff]
    %v1085 = vld [vmem:[#allocation4 + $0x8] sm:$0xff]
    %v1086 = vunpack.c.l.bf16 %v1084
    %v1087 = vunpack.c.h.bf16 %v1084
    %v1088 = vunpack.c.l.bf16 %v1085
    %v1089 = vunpack.c.h.bf16 %v1085
    %v1090 = vadd.f32 %v1086, %v955
    %v1091 = vadd.f32 %v1087, %v957
    %v1092 = vadd.f32 %v1088, %v996
    %v1093 = vadd.f32 %v1089, %v998
    %v1094 = vxor.u32 %v1090, 2147483648
    %v1095 = vmul.f32 %v1094, 1.442695
    %v1096 = vpow.pop %v1095
    %v1097 = vadd.f32 %v1096, 1.0
    %v1098 = vrcp.pop %v1097
    %v1099 = vmul.f32 1.0, %v1098
    %v1100 = vxor.u32 %v1091, 2147483648
    %v1101 = vmul.f32 %v1100, 1.442695
    %v1102 = vpow.pop %v1101
    %v1103 = vadd.f32 %v1102, 1.0
    %v1104 = vrcp.pop %v1103
    %v1105 = vmul.f32 1.0, %v1104
    %v1106 = vtanh.pop %v1092
    %v1107 = vxor.u32 %v1093, 2147483648
    %v1108 = vmul.f32 %v1107, 1.442695
    %v1109 = vpow.pop %v1108
    %v1110 = vadd.f32 %v1109, 1.0
    %v1111 = vrcp.pop %v1110
    %v1112 = vmul.f32 1.0, %v1111
    %v1113 = vmul.f32 %v1105, %v273
    %v1114 = vmul.f32 %v1099, %v1106
    %v1115 = vadd.f32 %v1113, %v1114
    %v1116 = vtanh.pop %v1115
    %v1117 = vmul.f32 %v1112, %v1116
    %v1118 = vpack.c.bf16 %v1117, %v1117
    %1119 = vst [vmem:[%s3] sm:$0xf] %v1118
    %s1120 = scalar_lea.vmem [#allocation5], 112
    %v1121 = vld [vmem:[%s1120] sm:$0xff]
    %v1122 = vld [vmem:[%s1120 + $0x8] sm:$0xff]
    %v1123 = vunpack.c.l.bf16 %v1121
    %v1124 = vunpack.c.h.bf16 %v1121
    %v1125 = vunpack.c.l.bf16 %v1122
    %v1126 = vunpack.c.h.bf16 %v1122
    %v1127 = vadd.f32 %v1123, %v1037
    %v1128 = vadd.f32 %v1124, %v1039
    %v1129 = vadd.f32 %v1125, %v1078
    %v1130 = vadd.f32 %v1126, %v1080
    %v1131 = vxor.u32 %v1127, 2147483648
    %v1132 = vmul.f32 %v1131, 1.442695
    %v1133 = vpow.pop %v1132
    %v1134 = vadd.f32 %v1133, 1.0
    %v1135 = vrcp.pop %v1134
    %v1136 = vmul.f32 1.0, %v1135
    %v1137 = vxor.u32 %v1128, 2147483648
    %v1138 = vmul.f32 %v1137, 1.442695
    %v1139 = vpow.pop %v1138
    %v1140 = vadd.f32 %v1139, 1.0
    %v1141 = vrcp.pop %v1140
    %v1142 = vmul.f32 1.0, %v1141
    %v1143 = vtanh.pop %v1129
    %v1144 = vxor.u32 %v1130, 2147483648
    %v1145 = vmul.f32 %v1144, 1.442695
    %v1146 = vpow.pop %v1145
    %v1147 = vadd.f32 %v1146, 1.0
    %v1148 = vrcp.pop %v1147
    %v1149 = vmul.f32 1.0, %v1148
    %v1150 = vmul.f32 %v1142, %v277
    %v1151 = vmul.f32 %v1136, %v1143
    %v1152 = vadd.f32 %v1150, %v1151
    %v1153 = vtanh.pop %v1152
    %v1154 = vmul.f32 %v1149, %v1153
    %v1155 = vpack.c.bf16 %v1154, %v1154
    %s1156 = scalar_lea.vmem %s133, 28
    %1157 = vst [vmem:[%s1156] sm:$0xf] %v1155
    %1158 = vmatprep.subr.bf16.mxu0 %v665
    %1159 = vmatpush1.bf16.msra.mxu0 %v664
    %1160 = vmatprep.subr.bf16.mxu0 %v673
    %1161 = vmatpush1.bf16.msra.mxu0 %v672
    %1162 = vmatprep.subr.bf16.mxu0 %v681
    %1163 = vmatpush1.bf16.msra.mxu0 %v680
    %1164 = vmatprep.subr.bf16.mxu0 %v689
    %1165 = vmatpush1.bf16.msra.mxu0 %v688
    %1166 = vmatprep.subr.bf16.mxu0 %v697
    %1167 = vmatpush1.bf16.msra.mxu0 %v696
    %1168 = vmatprep.subr.bf16.mxu0 %v705
    %1169 = vmatpush1.bf16.msra.mxu0 %v704
    %1170 = vmatprep.subr.bf16.mxu0 %v713
    %1171 = vmatpush1.bf16.msra.mxu0 %v712
    %1172 = vmatprep.subr.bf16.mxu0 %v721
    %1173 = vmatpush1.bf16.msra.mxu0 %v720
    %1174 = vmatprep.subr.bf16.mxu0 %v729
    %1175 = vmatpush1.bf16.msra.mxu0 %v728
    %1176 = vmatprep.subr.bf16.mxu0 %v737
    %1177 = vmatpush1.bf16.msra.mxu0 %v736
    %1178 = vmatprep.subr.bf16.mxu0 %v745
    %1179 = vmatpush1.bf16.msra.mxu0 %v744
    %1180 = vmatprep.subr.bf16.mxu0 %v753
    %1181 = vmatpush1.bf16.msra.mxu0 %v752
    %1182 = vmatprep.subr.bf16.mxu0 %v761
    %1183 = vmatpush1.bf16.msra.mxu0 %v760
    %1184 = vmatprep.subr.bf16.mxu0 %v769
    %1185 = vmatpush1.bf16.msra.mxu0 %v768
    %1186 = vmatprep.subr.bf16.mxu0 %v777
    %1187 = vmatpush1.bf16.msra.mxu0 %v776
    %1188 = vmatprep.subr.bf16.mxu0 %v785
    %1189 = vmatpush1.bf16.msra.mxu0 %v784
    %1190 = vmatprep.mubr.bf16.mxu0 %v1155
    %1191 = vmatmul.mubr.bf16.gmra.mrb[0].mxu0 %v1118
    %v1192 = vpop.f32.mrb[0].mxu0
    %v1193 = vadd.f32 0.0, %v1192
    %v1194 = vpop.f32.mrb[0].mxu0
    %v1195 = vadd.f32 0.0, %v1194
    %v1196 = vpop.f32.mrb[0].mxu0
    %v1197 = vpop.f32.mrb[0].mxu0
    %1198 = vdwg.mxu0
    %1199 = vmatprep.subr.bf16.mxu0 %v667
    %1200 = vmatpush1.bf16.msra.mxu0 %v666
    %1201 = vmatprep.subr.bf16.mxu0 %v675
    %1202 = vmatpush1.bf16.msra.mxu0 %v674
    %1203 = vmatprep.subr.bf16.mxu0 %v683
    %1204 = vmatpush1.bf16.msra.mxu0 %v682
    %1205 = vmatprep.subr.bf16.mxu0 %v691
    %1206 = vmatpush1.bf16.msra.mxu0 %v690
    %1207 = vmatprep.subr.bf16.mxu0 %v699
    %1208 = vmatpush1.bf16.msra.mxu0 %v698
    %1209 = vmatprep.subr.bf16.mxu0 %v707
    %1210 = vmatpush1.bf16.msra.mxu0 %v706
    %1211 = vmatprep.subr.bf16.mxu0 %v715
    %1212 = vmatpush1.bf16.msra.mxu0 %v714
    %1213 = vmatprep.subr.bf16.mxu0 %v723
    %1214 = vmatpush1.bf16.msra.mxu0 %v722
    %1215 = vmatprep.subr.bf16.mxu0 %v731
    %1216 = vmatpush1.bf16.msra.mxu0 %v730
    %1217 = vmatprep.subr.bf16.mxu0 %v739
    %1218 = vmatpush1.bf16.msra.mxu0 %v738
    %1219 = vmatprep.subr.bf16.mxu0 %v747
    %1220 = vmatpush1.bf16.msra.mxu0 %v746
    %1221 = vmatprep.subr.bf16.mxu0 %v755
    %1222 = vmatpush1.bf16.msra.mxu0 %v754
    %1223 = vmatprep.subr.bf16.mxu0 %v763
    %1224 = vmatpush1.bf16.msra.mxu0 %v762
    %1225 = vmatprep.subr.bf16.mxu0 %v771
    %1226 = vmatpush1.bf16.msra.mxu0 %v770
    %1227 = vmatprep.subr.bf16.mxu0 %v779
    %1228 = vmatpush1.bf16.msra.mxu0 %v778
    %1229 = vmatprep.subr.bf16.mxu0 %v787
    %1230 = vmatpush1.bf16.msra.mxu0 %v786
    %1231 = vmatprep.mubr.bf16.mxu0 %v1155
    %1232 = vmatmul.mubr.bf16.gmra.mrb[0].mxu0 %v1118
    %v1233 = vpop.f32.mrb[0].mxu0
    %v1234 = vadd.f32 0.0, %v1233
    %v1235 = vpop.f32.mrb[0].mxu0
    %v1236 = vadd.f32 0.0, %v1235
    %v1237 = vpop.f32.mrb[0].mxu0
    %v1238 = vpop.f32.mrb[0].mxu0
    %1239 = vdwg.mxu0
    %1240 = vmatprep.subr.bf16.mxu0 %v669
    %1241 = vmatpush1.bf16.msra.mxu0 %v668
    %1242 = vmatprep.subr.bf16.mxu0 %v677
    %1243 = vmatpush1.bf16.msra.mxu0 %v676
    %1244 = vmatprep.subr.bf16.mxu0 %v685
    %1245 = vmatpush1.bf16.msra.mxu0 %v684
    %1246 = vmatprep.subr.bf16.mxu0 %v693
    %1247 = vmatpush1.bf16.msra.mxu0 %v692
    %1248 = vmatprep.subr.bf16.mxu0 %v701
    %1249 = vmatpush1.bf16.msra.mxu0 %v700
    %1250 = vmatprep.subr.bf16.mxu0 %v709
    %1251 = vmatpush1.bf16.msra.mxu0 %v708
    %1252 = vmatprep.subr.bf16.mxu0 %v717
    %1253 = vmatpush1.bf16.msra.mxu0 %v716
    %1254 = vmatprep.subr.bf16.mxu0 %v725
    %1255 = vmatpush1.bf16.msra.mxu0 %v724
    %1256 = vmatprep.subr.bf16.mxu0 %v733
    %1257 = vmatpush1.bf16.msra.mxu0 %v732
    %1258 = vmatprep.subr.bf16.mxu0 %v741
    %1259 = vmatpush1.bf16.msra.mxu0 %v740
    %1260 = vmatprep.subr.bf16.mxu0 %v749
    %1261 = vmatpush1.bf16.msra.mxu0 %v748
    %1262 = vmatprep.subr.bf16.mxu0 %v757
    %1263 = vmatpush1.bf16.msra.mxu0 %v756
    %1264 = vmatprep.subr.bf16.mxu0 %v765
    %1265 = vmatpush1.bf16.msra.mxu0 %v764
    %1266 = vmatprep.subr.bf16.mxu0 %v773
    %1267 = vmatpush1.bf16.msra.mxu0 %v772
    %1268 = vmatprep.subr.bf16.mxu0 %v781
    %1269 = vmatpush1.bf16.msra.mxu0 %v780
    %1270 = vmatprep.subr.bf16.mxu0 %v789
    %1271 = vmatpush1.bf16.msra.mxu0 %v788
    %1272 = vmatprep.mubr.bf16.mxu0 %v1155
    %1273 = vmatmul.mubr.bf16.gmra.mrb[0].mxu0 %v1118
    %v1274 = vpop.f32.mrb[0].mxu0
    %v1275 = vadd.f32 0.0, %v1274
    %v1276 = vpop.f32.mrb[0].mxu0
    %v1277 = vadd.f32 0.0, %v1276
    %v1278 = vpop.f32.mrb[0].mxu0
    %v1279 = vpop.f32.mrb[0].mxu0
    %1280 = vdwg.mxu0
    %1281 = vmatprep.subr.bf16.mxu0 %v671
    %1282 = vmatpush1.bf16.msra.mxu0 %v670
    %1283 = vmatprep.subr.bf16.mxu0 %v679
    %1284 = vmatpush1.bf16.msra.mxu0 %v678
    %1285 = vmatprep.subr.bf16.mxu0 %v687
    %1286 = vmatpush1.bf16.msra.mxu0 %v686
    %1287 = vmatprep.subr.bf16.mxu0 %v695
    %1288 = vmatpush1.bf16.msra.mxu0 %v694
    %1289 = vmatprep.subr.bf16.mxu0 %v703
    %1290 = vmatpush1.bf16.msra.mxu0 %v702
    %1291 = vmatprep.subr.bf16.mxu0 %v711
    %1292 = vmatpush1.bf16.msra.mxu0 %v710
    %1293 = vmatprep.subr.bf16.mxu0 %v719
    %1294 = vmatpush1.bf16.msra.mxu0 %v718
    %1295 = vmatprep.subr.bf16.mxu0 %v727
    %1296 = vmatpush1.bf16.msra.mxu0 %v726
    %1297 = vmatprep.subr.bf16.mxu0 %v735
    %1298 = vmatpush1.bf16.msra.mxu0 %v734
    %1299 = vmatprep.subr.bf16.mxu0 %v743
    %1300 = vmatpush1.bf16.msra.mxu0 %v742
    %1301 = vmatprep.subr.bf16.mxu0 %v751
    %1302 = vmatpush1.bf16.msra.mxu0 %v750
    %1303 = vmatprep.subr.bf16.mxu0 %v759
    %1304 = vmatpush1.bf16.msra.mxu0 %v758
    %1305 = vmatprep.subr.bf16.mxu0 %v767
    %1306 = vmatpush1.bf16.msra.mxu0 %v766
    %1307 = vmatprep.subr.bf16.mxu0 %v775
    %1308 = vmatpush1.bf16.msra.mxu0 %v774
    %1309 = vmatprep.subr.bf16.mxu0 %v783
    %1310 = vmatpush1.bf16.msra.mxu0 %v782
    %1311 = vmatprep.subr.bf16.mxu0 %v791
    %1312 = vmatpush1.bf16.msra.mxu0 %v790
    %1313 = vmatprep.mubr.bf16.mxu0 %v1155
    %1314 = vmatmul.mubr.bf16.gmra.mrb[0].mxu0 %v1118
    %v1315 = vpop.f32.mrb[0].mxu0
    %v1316 = vadd.f32 0.0, %v1315
    %v1317 = vpop.f32.mrb[0].mxu0
    %v1318 = vadd.f32 0.0, %v1317
    %v1319 = vpop.f32.mrb[0].mxu0
    %v1320 = vpop.f32.mrb[0].mxu0
    %1321 = vdwg.mxu0
    %s1322 = scalar_lea.vmem [#allocation4], 16
    %v1323 = vld [vmem:[%s1322] sm:$0xff]
    %v1324 = vld [vmem:[%s1322 + $0x8] sm:$0xff]
    %v1325 = vunpack.c.l.bf16 %v1323
    %v1326 = vunpack.c.h.bf16 %v1323
    %v1327 = vunpack.c.l.bf16 %v1324
    %v1328 = vunpack.c.h.bf16 %v1324
    %v1329 = vadd.f32 %v1325, %v1193
    %v1330 = vadd.f32 %v1326, %v1195
    %v1331 = vadd.f32 %v1327, %v1234
    %v1332 = vadd.f32 %v1328, %v1236
    %v1333 = vxor.u32 %v1329, 2147483648
    %v1334 = vmul.f32 %v1333, 1.442695
    %v1335 = vpow.pop %v1334
    %v1336 = vadd.f32 %v1335, 1.0
    %v1337 = vrcp.pop %v1336
    %v1338 = vmul.f32 1.0, %v1337
    %v1339 = vxor.u32 %v1330, 2147483648
    %v1340 = vmul.f32 %v1339, 1.442695
    %v1341 = vpow.pop %v1340
    %v1342 = vadd.f32 %v1341, 1.0
    %v1343 = vrcp.pop %v1342
    %v1344 = vmul.f32 1.0, %v1343
    %v1345 = vtanh.pop %v1331
    %v1346 = vxor.u32 %v1332, 2147483648
    %v1347 = vmul.f32 %v1346, 1.442695
    %v1348 = vpow.pop %v1347
    %v1349 = vadd.f32 %v1348, 1.0
    %v1350 = vrcp.pop %v1349
    %v1351 = vmul.f32 1.0, %v1350
    %v1352 = vmul.f32 %v1344, %v1115
    %v1353 = vmul.f32 %v1338, %v1345
    %v1354 = vadd.f32 %v1352, %v1353
    %v1355 = vtanh.pop %v1354
    %v1356 = vmul.f32 %v1351, %v1355
    %v1357 = vpack.c.bf16 %v1356, %v1356
    %s1358 = scalar_lea.vmem %s3, 4
    %1359 = vst [vmem:[%s1358] sm:$0xf] %v1357
    %s1360 = scalar_lea.vmem [#allocation5], 96
    %v1361 = vld [vmem:[%s1360] sm:$0xff]
    %v1362 = vld [vmem:[%s1360 + $0x8] sm:$0xff]
    %v1363 = vunpack.c.l.bf16 %v1361
    %v1364 = vunpack.c.h.bf16 %v1361
    %v1365 = vunpack.c.l.bf16 %v1362
    %v1366 = vunpack.c.h.bf16 %v1362
    %v1367 = vadd.f32 %v1363, %v1275
    %v1368 = vadd.f32 %v1364, %v1277
    %v1369 = vadd.f32 %v1365, %v1316
    %v1370 = vadd.f32 %v1366, %v1318
    %v1371 = vxor.u32 %v1367, 2147483648
    %v1372 = vmul.f32 %v1371, 1.442695
    %v1373 = vpow.pop %v1372
    %v1374 = vadd.f32 %v1373, 1.0
    %v1375 = vrcp.pop %v1374
    %v1376 = vmul.f32 1.0, %v1375
    %v1377 = vxor.u32 %v1368, 2147483648
    %v1378 = vmul.f32 %v1377, 1.442695
    %v1379 = vpow.pop %v1378
    %v1380 = vadd.f32 %v1379, 1.0
    %v1381 = vrcp.pop %v1380
    %v1382 = vmul.f32 1.0, %v1381
    %v1383 = vtanh.pop %v1369
    %v1384 = vxor.u32 %v1370, 2147483648
    %v1385 = vmul.f32 %v1384, 1.442695
    %v1386 = vpow.pop %v1385
    %v1387 = vadd.f32 %v1386, 1.0
    %v1388 = vrcp.pop %v1387
    %v1389 = vmul.f32 1.0, %v1388
    %v1390 = vmul.f32 %v1382, %v1152
    %v1391 = vmul.f32 %v1376, %v1383
    %v1392 = vadd.f32 %v1390, %v1391
    %v1393 = vtanh.pop %v1392
    %v1394 = vmul.f32 %v1389, %v1393
    %v1395 = vpack.c.bf16 %v1394, %v1394
    %s1396 = scalar_lea.vmem %s133, 24
    %1397 = vst [vmem:[%s1396] sm:$0xf] %v1395
    %1398 = vmatprep.subr.bf16.mxu0 %v665
    %1399 = vmatpush1.bf16.msra.mxu0 %v664
    %1400 = vmatprep.subr.bf16.mxu0 %v673
    %1401 = vmatpush1.bf16.msra.mxu0 %v672
    %1402 = vmatprep.subr.bf16.mxu0 %v681
    %1403 = vmatpush1.bf16.msra.mxu0 %v680
    %1404 = vmatprep.subr.bf16.mxu0 %v689
    %1405 = vmatpush1.bf16.msra.mxu0 %v688
    %1406 = vmatprep.subr.bf16.mxu0 %v697
    %1407 = vmatpush1.bf16.msra.mxu0 %v696
    %1408 = vmatprep.subr.bf16.mxu0 %v705
    %1409 = vmatpush1.bf16.msra.mxu0 %v704
    %1410 = vmatprep.subr.bf16.mxu0 %v713
    %1411 = vmatpush1.bf16.msra.mxu0 %v712
    %1412 = vmatprep.subr.bf16.mxu0 %v721
    %1413 = vmatpush1.bf16.msra.mxu0 %v720
    %1414 = vmatprep.subr.bf16.mxu0 %v729
    %1415 = vmatpush1.bf16.msra.mxu0 %v728
    %1416 = vmatprep.subr.bf16.mxu0 %v737
    %1417 = vmatpush1.bf16.msra.mxu0 %v736
    %1418 = vmatprep.subr.bf16.mxu0 %v745
    %1419 = vmatpush1.bf16.msra.mxu0 %v744
    %1420 = vmatprep.subr.bf16.mxu0 %v753
    %1421 = vmatpush1.bf16.msra.mxu0 %v752
    %1422 = vmatprep.subr.bf16.mxu0 %v761
    %1423 = vmatpush1.bf16.msra.mxu0 %v760
    %1424 = vmatprep.subr.bf16.mxu0 %v769
    %1425 = vmatpush1.bf16.msra.mxu0 %v768
    %1426 = vmatprep.subr.bf16.mxu0 %v777
    %1427 = vmatpush1.bf16.msra.mxu0 %v776
    %1428 = vmatprep.subr.bf16.mxu0 %v785
    %1429 = vmatpush1.bf16.msra.mxu0 %v784
    %1430 = vmatprep.mubr.bf16.mxu0 %v1395
    %1431 = vmatmul.mubr.bf16.gmra.mrb[0].mxu0 %v1357
    %v1432 = vpop.f32.mrb[0].mxu0
    %v1433 = vadd.f32 0.0, %v1432
    %v1434 = vpop.f32.mrb[0].mxu0
    %v1435 = vadd.f32 0.0, %v1434
    %v1436 = vpop.f32.mrb[0].mxu0
    %v1437 = vpop.f32.mrb[0].mxu0
    %1438 = vdwg.mxu0
    %1439 = vmatprep.subr.bf16.mxu0 %v667
    %1440 = vmatpush1.bf16.msra.mxu0 %v666
    %1441 = vmatprep.subr.bf16.mxu0 %v675
    %1442 = vmatpush1.bf16.msra.mxu0 %v674
    %1443 = vmatprep.subr.bf16.mxu0 %v683
    %1444 = vmatpush1.bf16.msra.mxu0 %v682
    %1445 = vmatprep.subr.bf16.mxu0 %v691
    %1446 = vmatpush1.bf16.msra.mxu0 %v690
    %1447 = vmatprep.subr.bf16.mxu0 %v699
    %1448 = vmatpush1.bf16.msra.mxu0 %v698
    %1449 = vmatprep.subr.bf16.mxu0 %v707
    %1450 = vmatpush1.bf16.msra.mxu0 %v706
    %1451 = vmatprep.subr.bf16.mxu0 %v715
    %1452 = vmatpush1.bf16.msra.mxu0 %v714
    %1453 = vmatprep.subr.bf16.mxu0 %v723
    %1454 = vmatpush1.bf16.msra.mxu0 %v722
    %1455 = vmatprep.subr.bf16.mxu0 %v731
    %1456 = vmatpush1.bf16.msra.mxu0 %v730
    %1457 = vmatprep.subr.bf16.mxu0 %v739
    %1458 = vmatpush1.bf16.msra.mxu0 %v738
    %1459 = vmatprep.subr.bf16.mxu0 %v747
    %1460 = vmatpush1.bf16.msra.mxu0 %v746
    %1461 = vmatprep.subr.bf16.mxu0 %v755
    %1462 = vmatpush1.bf16.msra.mxu0 %v754
    %1463 = vmatprep.subr.bf16.mxu0 %v763
    %1464 = vmatpush1.bf16.msra.mxu0 %v762
    %1465 = vmatprep.subr.bf16.mxu0 %v771
    %1466 = vmatpush1.bf16.msra.mxu0 %v770
    %1467 = vmatprep.subr.bf16.mxu0 %v779
    %1468 = vmatpush1.bf16.msra.mxu0 %v778
    %1469 = vmatprep.subr.bf16.mxu0 %v787
    %1470 = vmatpush1.bf16.msra.mxu0 %v786
    %1471 = vmatprep.mubr.bf16.mxu0 %v1395
    %1472 = vmatmul.mubr.bf16.gmra.mrb[0].mxu0 %v1357
    %v1473 = vpop.f32.mrb[0].mxu0
    %v1474 = vadd.f32 0.0, %v1473
    %v1475 = vpop.f32.mrb[0].mxu0
    %v1476 = vadd.f32 0.0, %v1475
    %v1477 = vpop.f32.mrb[0].mxu0
    %v1478 = vpop.f32.mrb[0].mxu0
    %1479 = vdwg.mxu0
    %1480 = vmatprep.subr.bf16.mxu0 %v669
    %1481 = vmatpush1.bf16.msra.mxu0 %v668
    %1482 = vmatprep.subr.bf16.mxu0 %v677
    %1483 = vmatpush1.bf16.msra.mxu0 %v676
    %1484 = vmatprep.subr.bf16.mxu0 %v685
    %1485 = vmatpush1.bf16.msra.mxu0 %v684
    %1486 = vmatprep.subr.bf16.mxu0 %v693
    %1487 = vmatpush1.bf16.msra.mxu0 %v692
    %1488 = vmatprep.subr.bf16.mxu0 %v701
    %1489 = vmatpush1.bf16.msra.mxu0 %v700
    %1490 = vmatprep.subr.bf16.mxu0 %v709
    %1491 = vmatpush1.bf16.msra.mxu0 %v708
    %1492 = vmatprep.subr.bf16.mxu0 %v717
    %1493 = vmatpush1.bf16.msra.mxu0 %v716
    %1494 = vmatprep.subr.bf16.mxu0 %v725
    %1495 = vmatpush1.bf16.msra.mxu0 %v724
    %1496 = vmatprep.subr.bf16.mxu0 %v733
    %1497 = vmatpush1.bf16.msra.mxu0 %v732
    %1498 = vmatprep.subr.bf16.mxu0 %v741
    %1499 = vmatpush1.bf16.msra.mxu0 %v740
    %1500 = vmatprep.subr.bf16.mxu0 %v749
    %1501 = vmatpush1.bf16.msra.mxu0 %v748
    %1502 = vmatprep.subr.bf16.mxu0 %v757
    %1503 = vmatpush1.bf16.msra.mxu0 %v756
    %1504 = vmatprep.subr.bf16.mxu0 %v765
    %1505 = vmatpush1.bf16.msra.mxu0 %v764
    %1506 = vmatprep.subr.bf16.mxu0 %v773
    %1507 = vmatpush1.bf16.msra.mxu0 %v772
    %1508 = vmatprep.subr.bf16.mxu0 %v781
    %1509 = vmatpush1.bf16.msra.mxu0 %v780
    %1510 = vmatprep.subr.bf16.mxu0 %v789
    %1511 = vmatpush1.bf16.msra.mxu0 %v788
    %1512 = vmatprep.mubr.bf16.mxu0 %v1395
    %1513 = vmatmul.mubr.bf16.gmra.mrb[0].mxu0 %v1357
    %v1514 = vpop.f32.mrb[0].mxu0
    %v1515 = vadd.f32 0.0, %v1514
    %v1516 = vpop.f32.mrb[0].mxu0
    %v1517 = vadd.f32 0.0, %v1516
    %v1518 = vpop.f32.mrb[0].mxu0
    %v1519 = vpop.f32.mrb[0].mxu0
    %1520 = vdwg.mxu0
    %1521 = vmatprep.subr.bf16.mxu0 %v671
    %1522 = vmatpush1.bf16.msra.mxu0 %v670
    %1523 = vmatprep.subr.bf16.mxu0 %v679
    %1524 = vmatpush1.bf16.msra.mxu0 %v678
    %1525 = vmatprep.subr.bf16.mxu0 %v687
    %1526 = vmatpush1.bf16.msra.mxu0 %v686
    %1527 = vmatprep.subr.bf16.mxu0 %v695
    %1528 = vmatpush1.bf16.msra.mxu0 %v694
    %1529 = vmatprep.subr.bf16.mxu0 %v703
    %1530 = vmatpush1.bf16.msra.mxu0 %v702
    %1531 = vmatprep.subr.bf16.mxu0 %v711
    %1532 = vmatpush1.bf16.msra.mxu0 %v710
    %1533 = vmatprep.subr.bf16.mxu0 %v719
    %1534 = vmatpush1.bf16.msra.mxu0 %v718
    %1535 = vmatprep.subr.bf16.mxu0 %v727
    %1536 = vmatpush1.bf16.msra.mxu0 %v726
    %1537 = vmatprep.subr.bf16.mxu0 %v735
    %1538 = vmatpush1.bf16.msra.mxu0 %v734
    %1539 = vmatprep.subr.bf16.mxu0 %v743
    %1540 = vmatpush1.bf16.msra.mxu0 %v742
    %1541 = vmatprep.subr.bf16.mxu0 %v751
    %1542 = vmatpush1.bf16.msra.mxu0 %v750
    %1543 = vmatprep.subr.bf16.mxu0 %v759
    %1544 = vmatpush1.bf16.msra.mxu0 %v758
    %1545 = vmatprep.subr.bf16.mxu0 %v767
    %1546 = vmatpush1.bf16.msra.mxu0 %v766
    %1547 = vmatprep.subr.bf16.mxu0 %v775
    %1548 = vmatpush1.bf16.msra.mxu0 %v774
    %1549 = vmatprep.subr.bf16.mxu0 %v783
    %1550 = vmatpush1.bf16.msra.mxu0 %v782
    %1551 = vmatprep.subr.bf16.mxu0 %v791
    %1552 = vmatpush1.bf16.msra.mxu0 %v790
    %1553 = vmatprep.mubr.bf16.mxu0 %v1395
    %1554 = vmatmul.mubr.bf16.gmra.mrb[0].mxu0 %v1357
    %v1555 = vpop.f32.mrb[0].mxu0
    %v1556 = vadd.f32 0.0, %v1555
    %v1557 = vpop.f32.mrb[0].mxu0
    %v1558 = vadd.f32 0.0, %v1557
    %v1559 = vpop.f32.mrb[0].mxu0
    %v1560 = vpop.f32.mrb[0].mxu0
    %1561 = vdwg.mxu0
    %s1562 = scalar_lea.vmem [#allocation4], 32
    %v1563 = vld [vmem:[%s1562] sm:$0xff]
    %v1564 = vld [vmem:[%s1562 + $0x8] sm:$0xff]
    %v1565 = vunpack.c.l.bf16 %v1563
    %v1566 = vunpack.c.h.bf16 %v1563
    %v1567 = vunpack.c.l.bf16 %v1564
    %v1568 = vunpack.c.h.bf16 %v1564
    %v1569 = vadd.f32 %v1565, %v1433
    %v1570 = vadd.f32 %v1566, %v1435
    %v1571 = vadd.f32 %v1567, %v1474
    %v1572 = vadd.f32 %v1568, %v1476
    %v1573 = vxor.u32 %v1569, 2147483648
    %v1574 = vmul.f32 %v1573, 1.442695
    %v1575 = vpow.pop %v1574
    %v1576 = vadd.f32 %v1575, 1.0
    %v1577 = vrcp.pop %v1576
    %v1578 = vmul.f32 1.0, %v1577
    %v1579 = vxor.u32 %v1570, 2147483648
    %v1580 = vmul.f32 %v1579, 1.442695
    %v1581 = vpow.pop %v1580
    %v1582 = vadd.f32 %v1581, 1.0
    %v1583 = vrcp.pop %v1582
    %v1584 = vmul.f32 1.0, %v1583
    %v1585 = vtanh.pop %v1571
    %v1586 = vxor.u32 %v1572, 2147483648
    %v1587 = vmul.f32 %v1586, 1.442695
    %v1588 = vpow.pop %v1587
    %v1589 = vadd.f32 %v1588, 1.0
    %v1590 = vrcp.pop %v1589
    %v1591 = vmul.f32 1.0, %v1590
    %v1592 = vmul.f32 %v1584, %v1354
    %v1593 = vmul.f32 %v1578, %v1585
    %v1594 = vadd.f32 %v1592, %v1593
    %v1595 = vtanh.pop %v1594
    %v1596 = vmul.f32 %v1591, %v1595
    %v1597 = vpack.c.bf16 %v1596, %v1596
    %s1598 = scalar_lea.vmem %s3, 8
    %1599 = vst [vmem:[%s1598] sm:$0xf] %v1597
    %s1600 = scalar_lea.vmem [#allocation5], 80
    %v1601 = vld [vmem:[%s1600] sm:$0xff]
    %v1602 = vld [vmem:[%s1600 + $0x8] sm:$0xff]
    %v1603 = vunpack.c.l.bf16 %v1601
    %v1604 = vunpack.c.h.bf16 %v1601
    %v1605 = vunpack.c.l.bf16 %v1602
    %v1606 = vunpack.c.h.bf16 %v1602
    %v1607 = vadd.f32 %v1603, %v1515
    %v1608 = vadd.f32 %v1604, %v1517
    %v1609 = vadd.f32 %v1605, %v1556
    %v1610 = vadd.f32 %v1606, %v1558
    %v1611 = vxor.u32 %v1607, 2147483648
    %v1612 = vmul.f32 %v1611, 1.442695
    %v1613 = vpow.pop %v1612
    %v1614 = vadd.f32 %v1613, 1.0
    %v1615 = vrcp.pop %v1614
    %v1616 = vmul.f32 1.0, %v1615
    %v1617 = vxor.u32 %v1608, 2147483648
    %v1618 = vmul.f32 %v1617, 1.442695
    %v1619 = vpow.pop %v1618
    %v1620 = vadd.f32 %v1619, 1.0
    %v1621 = vrcp.pop %v1620
    %v1622 = vmul.f32 1.0, %v1621
    %v1623 = vtanh.pop %v1609
    %v1624 = vxor.u32 %v1610, 2147483648
    %v1625 = vmul.f32 %v1624, 1.442695
    %v1626 = vpow.pop %v1625
    %v1627 = vadd.f32 %v1626, 1.0
    %v1628 = vrcp.pop %v1627
    %v1629 = vmul.f32 1.0, %v1628
    %v1630 = vmul.f32 %v1622, %v1392
    %v1631 = vmul.f32 %v1616, %v1623
    %v1632 = vadd.f32 %v1630, %v1631
    %v1633 = vtanh.pop %v1632
    %v1634 = vmul.f32 %v1629, %v1633
    %v1635 = vpack.c.bf16 %v1634, %v1634
    %s1636 = scalar_lea.vmem %s133, 20
    %1637 = vst [vmem:[%s1636] sm:$0xf] %v1635
    %1638 = vmatprep.subr.bf16.mxu0 %v665
    %1639 = vmatpush1.bf16.msra.mxu0 %v664
    %1640 = vmatprep.subr.bf16.mxu0 %v673
    %1641 = vmatpush1.bf16.msra.mxu0 %v672
    %1642 = vmatprep.subr.bf16.mxu0 %v681
    %1643 = vmatpush1.bf16.msra.mxu0 %v680
    %1644 = vmatprep.subr.bf16.mxu0 %v689
    %1645 = vmatpush1.bf16.msra.mxu0 %v688
    %1646 = vmatprep.subr.bf16.mxu0 %v697
    %1647 = vmatpush1.bf16.msra.mxu0 %v696
    %1648 = vmatprep.subr.bf16.mxu0 %v705
    %1649 = vmatpush1.bf16.msra.mxu0 %v704
    %1650 = vmatprep.subr.bf16.mxu0 %v713
    %1651 = vmatpush1.bf16.msra.mxu0 %v712
    %1652 = vmatprep.subr.bf16.mxu0 %v721
    %1653 = vmatpush1.bf16.msra.mxu0 %v720
    %1654 = vmatprep.subr.bf16.mxu0 %v729
    %1655 = vmatpush1.bf16.msra.mxu0 %v728
    %1656 = vmatprep.subr.bf16.mxu0 %v737
    %1657 = vmatpush1.bf16.msra.mxu0 %v736
    %1658 = vmatprep.subr.bf16.mxu0 %v745
    %1659 = vmatpush1.bf16.msra.mxu0 %v744
    %1660 = vmatprep.subr.bf16.mxu0 %v753
    %1661 = vmatpush1.bf16.msra.mxu0 %v752
    %1662 = vmatprep.subr.bf16.mxu0 %v761
    %1663 = vmatpush1.bf16.msra.mxu0 %v760
    %1664 = vmatprep.subr.bf16.mxu0 %v769
    %1665 = vmatpush1.bf16.msra.mxu0 %v768
    %1666 = vmatprep.subr.bf16.mxu0 %v777
    %1667 = vmatpush1.bf16.msra.mxu0 %v776
    %1668 = vmatprep.subr.bf16.mxu0 %v785
    %1669 = vmatpush1.bf16.msra.mxu0 %v784
    %1670 = vmatprep.mubr.bf16.mxu0 %v1635
    %1671 = vmatmul.mubr.bf16.gmra.mrb[0].mxu0 %v1597
    %v1672 = vpop.f32.mrb[0].mxu0
    %v1673 = vadd.f32 0.0, %v1672
    %v1674 = vpop.f32.mrb[0].mxu0
    %v1675 = vadd.f32 0.0, %v1674
    %v1676 = vpop.f32.mrb[0].mxu0
    %v1677 = vpop.f32.mrb[0].mxu0
    %1678 = vdwg.mxu0
    %1679 = vmatprep.subr.bf16.mxu0 %v667
    %1680 = vmatpush1.bf16.msra.mxu0 %v666
    %1681 = vmatprep.subr.bf16.mxu0 %v675
    %1682 = vmatpush1.bf16.msra.mxu0 %v674
    %1683 = vmatprep.subr.bf16.mxu0 %v683
    %1684 = vmatpush1.bf16.msra.mxu0 %v682
    %1685 = vmatprep.subr.bf16.mxu0 %v691
    %1686 = vmatpush1.bf16.msra.mxu0 %v690
    %1687 = vmatprep.subr.bf16.mxu0 %v699
    %1688 = vmatpush1.bf16.msra.mxu0 %v698
    %1689 = vmatprep.subr.bf16.mxu0 %v707
    %1690 = vmatpush1.bf16.msra.mxu0 %v706
    %1691 = vmatprep.subr.bf16.mxu0 %v715
    %1692 = vmatpush1.bf16.msra.mxu0 %v714
    %1693 = vmatprep.subr.bf16.mxu0 %v723
    %1694 = vmatpush1.bf16.msra.mxu0 %v722
    %1695 = vmatprep.subr.bf16.mxu0 %v731
    %1696 = vmatpush1.bf16.msra.mxu0 %v730
    %1697 = vmatprep.subr.bf16.mxu0 %v739
    %1698 = vmatpush1.bf16.msra.mxu0 %v738
    %1699 = vmatprep.subr.bf16.mxu0 %v747
    %1700 = vmatpush1.bf16.msra.mxu0 %v746
    %1701 = vmatprep.subr.bf16.mxu0 %v755
    %1702 = vmatpush1.bf16.msra.mxu0 %v754
    %1703 = vmatprep.subr.bf16.mxu0 %v763
    %1704 = vmatpush1.bf16.msra.mxu0 %v762
    %1705 = vmatprep.subr.bf16.mxu0 %v771
    %1706 = vmatpush1.bf16.msra.mxu0 %v770
    %1707 = vmatprep.subr.bf16.mxu0 %v779
    %1708 = vmatpush1.bf16.msra.mxu0 %v778
    %1709 = vmatprep.subr.bf16.mxu0 %v787
    %1710 = vmatpush1.bf16.msra.mxu0 %v786
    %1711 = vmatprep.mubr.bf16.mxu0 %v1635
    %1712 = vmatmul.mubr.bf16.gmra.mrb[0].mxu0 %v1597
    %v1713 = vpop.f32.mrb[0].mxu0
    %v1714 = vadd.f32 0.0, %v1713
    %v1715 = vpop.f32.mrb[0].mxu0
    %v1716 = vadd.f32 0.0, %v1715
    %v1717 = vpop.f32.mrb[0].mxu0
    %v1718 = vpop.f32.mrb[0].mxu0
    %1719 = vdwg.mxu0
    %1720 = vmatprep.subr.bf16.mxu0 %v669
    %1721 = vmatpush1.bf16.msra.mxu0 %v668
    %1722 = vmatprep.subr.bf16.mxu0 %v677
    %1723 = vmatpush1.bf16.msra.mxu0 %v676
    %1724 = vmatprep.subr.bf16.mxu0 %v685
    %1725 = vmatpush1.bf16.msra.mxu0 %v684
    %1726 = vmatprep.subr.bf16.mxu0 %v693
    %1727 = vmatpush1.bf16.msra.mxu0 %v692
    %1728 = vmatprep.subr.bf16.mxu0 %v701
    %1729 = vmatpush1.bf16.msra.mxu0 %v700
    %1730 = vmatprep.subr.bf16.mxu0 %v709
    %1731 = vmatpush1.bf16.msra.mxu0 %v708
    %1732 = vmatprep.subr.bf16.mxu0 %v717
    %1733 = vmatpush1.bf16.msra.mxu0 %v716
    %1734 = vmatprep.subr.bf16.mxu0 %v725
    %1735 = vmatpush1.bf16.msra.mxu0 %v724
    %1736 = vmatprep.subr.bf16.mxu0 %v733
    %1737 = vmatpush1.bf16.msra.mxu0 %v732
    %1738 = vmatprep.subr.bf16.mxu0 %v741
    %1739 = vmatpush1.bf16.msra.mxu0 %v740
    %1740 = vmatprep.subr.bf16.mxu0 %v749
    %1741 = vmatpush1.bf16.msra.mxu0 %v748
    %1742 = vmatprep.subr.bf16.mxu0 %v757
    %1743 = vmatpush1.bf16.msra.mxu0 %v756
    %1744 = vmatprep.subr.bf16.mxu0 %v765
    %1745 = vmatpush1.bf16.msra.mxu0 %v764
    %1746 = vmatprep.subr.bf16.mxu0 %v773
    %1747 = vmatpush1.bf16.msra.mxu0 %v772
    %1748 = vmatprep.subr.bf16.mxu0 %v781
    %1749 = vmatpush1.bf16.msra.mxu0 %v780
    %1750 = vmatprep.subr.bf16.mxu0 %v789
    %1751 = vmatpush1.bf16.msra.mxu0 %v788
    %1752 = vmatprep.mubr.bf16.mxu0 %v1635
    %1753 = vmatmul.mubr.bf16.gmra.mrb[0].mxu0 %v1597
    %v1754 = vpop.f32.mrb[0].mxu0
    %v1755 = vadd.f32 0.0, %v1754
    %v1756 = vpop.f32.mrb[0].mxu0
    %v1757 = vadd.f32 0.0, %v1756
    %v1758 = vpop.f32.mrb[0].mxu0
    %v1759 = vpop.f32.mrb[0].mxu0
    %1760 = vdwg.mxu0
    %1761 = vmatprep.subr.bf16.mxu0 %v671
    %1762 = vmatpush1.bf16.msra.mxu0 %v670
    %1763 = vmatprep.subr.bf16.mxu0 %v679
    %1764 = vmatpush1.bf16.msra.mxu0 %v678
    %1765 = vmatprep.subr.bf16.mxu0 %v687
    %1766 = vmatpush1.bf16.msra.mxu0 %v686
    %1767 = vmatprep.subr.bf16.mxu0 %v695
    %1768 = vmatpush1.bf16.msra.mxu0 %v694
    %1769 = vmatprep.subr.bf16.mxu0 %v703
    %1770 = vmatpush1.bf16.msra.mxu0 %v702
    %1771 = vmatprep.subr.bf16.mxu0 %v711
    %1772 = vmatpush1.bf16.msra.mxu0 %v710
    %1773 = vmatprep.subr.bf16.mxu0 %v719
    %1774 = vmatpush1.bf16.msra.mxu0 %v718
    %1775 = vmatprep.subr.bf16.mxu0 %v727
    %1776 = vmatpush1.bf16.msra.mxu0 %v726
    %1777 = vmatprep.subr.bf16.mxu0 %v735
    %1778 = vmatpush1.bf16.msra.mxu0 %v734
    %1779 = vmatprep.subr.bf16.mxu0 %v743
    %1780 = vmatpush1.bf16.msra.mxu0 %v742
    %1781 = vmatprep.subr.bf16.mxu0 %v751
    %1782 = vmatpush1.bf16.msra.mxu0 %v750
    %1783 = vmatprep.subr.bf16.mxu0 %v759
    %1784 = vmatpush1.bf16.msra.mxu0 %v758
    %1785 = vmatprep.subr.bf16.mxu0 %v767
    %1786 = vmatpush1.bf16.msra.mxu0 %v766
    %1787 = vmatprep.subr.bf16.mxu0 %v775
    %1788 = vmatpush1.bf16.msra.mxu0 %v774
    %1789 = vmatprep.subr.bf16.mxu0 %v783
    %1790 = vmatpush1.bf16.msra.mxu0 %v782
    %1791 = vmatprep.subr.bf16.mxu0 %v791
    %1792 = vmatpush1.bf16.msra.mxu0 %v790
    %1793 = vmatprep.mubr.bf16.mxu0 %v1635
    %1794 = vmatmul.mubr.bf16.gmra.mrb[0].mxu0 %v1597
    %v1795 = vpop.f32.mrb[0].mxu0
    %v1796 = vadd.f32 0.0, %v1795
    %v1797 = vpop.f32.mrb[0].mxu0
    %v1798 = vadd.f32 0.0, %v1797
    %v1799 = vpop.f32.mrb[0].mxu0
    %v1800 = vpop.f32.mrb[0].mxu0
    %1801 = vdwg.mxu0
    %s1802 = scalar_lea.vmem [#allocation4], 48
    %v1803 = vld [vmem:[%s1802] sm:$0xff]
    %v1804 = vld [vmem:[%s1802 + $0x8] sm:$0xff]
    %v1805 = vunpack.c.l.bf16 %v1803
    %v1806 = vunpack.c.h.bf16 %v1803
    %v1807 = vunpack.c.l.bf16 %v1804
    %v1808 = vunpack.c.h.bf16 %v1804
    %v1809 = vadd.f32 %v1805, %v1673
    %v1810 = vadd.f32 %v1806, %v1675
    %v1811 = vadd.f32 %v1807, %v1714
    %v1812 = vadd.f32 %v1808, %v1716
    %v1813 = vxor.u32 %v1809, 2147483648
    %v1814 = vmul.f32 %v1813, 1.442695
    %v1815 = vpow.pop %v1814
    %v1816 = vadd.f32 %v1815, 1.0
    %v1817 = vrcp.pop %v1816
    %v1818 = vmul.f32 1.0, %v1817
    %v1819 = vxor.u32 %v1810, 2147483648
    %v1820 = vmul.f32 %v1819, 1.442695
    %v1821 = vpow.pop %v1820
    %v1822 = vadd.f32 %v1821, 1.0
    %v1823 = vrcp.pop %v1822
    %v1824 = vmul.f32 1.0, %v1823
    %v1825 = vtanh.pop %v1811
    %v1826 = vxor.u32 %v1812, 2147483648
    %v1827 = vmul.f32 %v1826, 1.442695
    %v1828 = vpow.pop %v1827
    %v1829 = vadd.f32 %v1828, 1.0
    %v1830 = vrcp.pop %v1829
    %v1831 = vmul.f32 1.0, %v1830
    %v1832 = vmul.f32 %v1824, %v1594
    %v1833 = vmul.f32 %v1818, %v1825
    %v1834 = vadd.f32 %v1832, %v1833
    %v1835 = vtanh.pop %v1834
    %v1836 = vmul.f32 %v1831, %v1835
    %v1837 = vpack.c.bf16 %v1836, %v1836
    %s1838 = scalar_lea.vmem %s3, 12
    %1839 = vst [vmem:[%s1838] sm:$0xf] %v1837
    %s1840 = scalar_lea.vmem [#allocation5], 64
    %v1841 = vld [vmem:[%s1840] sm:$0xff]
    %v1842 = vld [vmem:[%s1840 + $0x8] sm:$0xff]
    %v1843 = vunpack.c.l.bf16 %v1841
    %v1844 = vunpack.c.h.bf16 %v1841
    %v1845 = vunpack.c.l.bf16 %v1842
    %v1846 = vunpack.c.h.bf16 %v1842
    %v1847 = vadd.f32 %v1843, %v1755
    %v1848 = vadd.f32 %v1844, %v1757
    %v1849 = vadd.f32 %v1845, %v1796
    %v1850 = vadd.f32 %v1846, %v1798
    %v1851 = vxor.u32 %v1847, 2147483648
    %v1852 = vmul.f32 %v1851, 1.442695
    %v1853 = vpow.pop %v1852
    %v1854 = vadd.f32 %v1853, 1.0
    %v1855 = vrcp.pop %v1854
    %v1856 = vmul.f32 1.0, %v1855
    %v1857 = vxor.u32 %v1848, 2147483648
    %v1858 = vmul.f32 %v1857, 1.442695
    %v1859 = vpow.pop %v1858
    %v1860 = vadd.f32 %v1859, 1.0
    %v1861 = vrcp.pop %v1860
    %v1862 = vmul.f32 1.0, %v1861
    %v1863 = vtanh.pop %v1849
    %v1864 = vxor.u32 %v1850, 2147483648
    %v1865 = vmul.f32 %v1864, 1.442695
    %v1866 = vpow.pop %v1865
    %v1867 = vadd.f32 %v1866, 1.0
    %v1868 = vrcp.pop %v1867
    %v1869 = vmul.f32 1.0, %v1868
    %v1870 = vmul.f32 %v1862, %v1632
    %v1871 = vmul.f32 %v1856, %v1863
    %v1872 = vadd.f32 %v1870, %v1871
    %v1873 = vtanh.pop %v1872
    %v1874 = vmul.f32 %v1869, %v1873
    %v1875 = vpack.c.bf16 %v1874, %v1874
    %s1876 = scalar_lea.vmem %s133, 16
    %1877 = vst [vmem:[%s1876] sm:$0xf] %v1875
    %1878 = vmatprep.subr.bf16.mxu0 %v665
    %1879 = vmatpush1.bf16.msra.mxu0 %v664
    %1880 = vmatprep.subr.bf16.mxu0 %v673
    %1881 = vmatpush1.bf16.msra.mxu0 %v672
    %1882 = vmatprep.subr.bf16.mxu0 %v681
    %1883 = vmatpush1.bf16.msra.mxu0 %v680
    %1884 = vmatprep.subr.bf16.mxu0 %v689
    %1885 = vmatpush1.bf16.msra.mxu0 %v688
    %1886 = vmatprep.subr.bf16.mxu0 %v697
    %1887 = vmatpush1.bf16.msra.mxu0 %v696
    %1888 = vmatprep.subr.bf16.mxu0 %v705
    %1889 = vmatpush1.bf16.msra.mxu0 %v704
    %1890 = vmatprep.subr.bf16.mxu0 %v713
    %1891 = vmatpush1.bf16.msra.mxu0 %v712
    %1892 = vmatprep.subr.bf16.mxu0 %v721
    %1893 = vmatpush1.bf16.msra.mxu0 %v720
    %1894 = vmatprep.subr.bf16.mxu0 %v729
    %1895 = vmatpush1.bf16.msra.mxu0 %v728
    %1896 = vmatprep.subr.bf16.mxu0 %v737
    %1897 = vmatpush1.bf16.msra.mxu0 %v736
    %1898 = vmatprep.subr.bf16.mxu0 %v745
    %1899 = vmatpush1.bf16.msra.mxu0 %v744
    %1900 = vmatprep.subr.bf16.mxu0 %v753
    %1901 = vmatpush1.bf16.msra.mxu0 %v752
    %1902 = vmatprep.subr.bf16.mxu0 %v761
    %1903 = vmatpush1.bf16.msra.mxu0 %v760
    %1904 = vmatprep.subr.bf16.mxu0 %v769
    %1905 = vmatpush1.bf16.msra.mxu0 %v768
    %1906 = vmatprep.subr.bf16.mxu0 %v777
    %1907 = vmatpush1.bf16.msra.mxu0 %v776
    %1908 = vmatprep.subr.bf16.mxu0 %v785
    %1909 = vmatpush1.bf16.msra.mxu0 %v784
    %1910 = vmatprep.mubr.bf16.mxu0 %v1875
    %1911 = vmatmul.mubr.bf16.gmra.mrb[0].mxu0 %v1837
    %v1912 = vpop.f32.mrb[0].mxu0
    %v1913 = vadd.f32 0.0, %v1912
    %v1914 = vpop.f32.mrb[0].mxu0
    %v1915 = vadd.f32 0.0, %v1914
    %v1916 = vpop.f32.mrb[0].mxu0
    %v1917 = vpop.f32.mrb[0].mxu0
    %1918 = vdwg.mxu0
    %1919 = vmatprep.subr.bf16.mxu0 %v667
    %1920 = vmatpush1.bf16.msra.mxu0 %v666
    %1921 = vmatprep.subr.bf16.mxu0 %v675
    %1922 = vmatpush1.bf16.msra.mxu0 %v674
    %1923 = vmatprep.subr.bf16.mxu0 %v683
    %1924 = vmatpush1.bf16.msra.mxu0 %v682
    %1925 = vmatprep.subr.bf16.mxu0 %v691
    %1926 = vmatpush1.bf16.msra.mxu0 %v690
    %1927 = vmatprep.subr.bf16.mxu0 %v699
    %1928 = vmatpush1.bf16.msra.mxu0 %v698
    %1929 = vmatprep.subr.bf16.mxu0 %v707
    %1930 = vmatpush1.bf16.msra.mxu0 %v706
    %1931 = vmatprep.subr.bf16.mxu0 %v715
    %1932 = vmatpush1.bf16.msra.mxu0 %v714
    %1933 = vmatprep.subr.bf16.mxu0 %v723
    %1934 = vmatpush1.bf16.msra.mxu0 %v722
    %1935 = vmatprep.subr.bf16.mxu0 %v731
    %1936 = vmatpush1.bf16.msra.mxu0 %v730
    %1937 = vmatprep.subr.bf16.mxu0 %v739
    %1938 = vmatpush1.bf16.msra.mxu0 %v738
    %1939 = vmatprep.subr.bf16.mxu0 %v747
    %1940 = vmatpush1.bf16.msra.mxu0 %v746
    %1941 = vmatprep.subr.bf16.mxu0 %v755
    %1942 = vmatpush1.bf16.msra.mxu0 %v754
    %1943 = vmatprep.subr.bf16.mxu0 %v763
    %1944 = vmatpush1.bf16.msra.mxu0 %v762
    %1945 = vmatprep.subr.bf16.mxu0 %v771
    %1946 = vmatpush1.bf16.msra.mxu0 %v770
    %1947 = vmatprep.subr.bf16.mxu0 %v779
    %1948 = vmatpush1.bf16.msra.mxu0 %v778
    %1949 = vmatprep.subr.bf16.mxu0 %v787
    %1950 = vmatpush1.bf16.msra.mxu0 %v786
    %1951 = vmatprep.mubr.bf16.mxu0 %v1875
    %1952 = vmatmul.mubr.bf16.gmra.mrb[0].mxu0 %v1837
    %v1953 = vpop.f32.mrb[0].mxu0
    %v1954 = vadd.f32 0.0, %v1953
    %v1955 = vpop.f32.mrb[0].mxu0
    %v1956 = vadd.f32 0.0, %v1955
    %v1957 = vpop.f32.mrb[0].mxu0
    %v1958 = vpop.f32.mrb[0].mxu0
    %1959 = vdwg.mxu0
    %1960 = vmatprep.subr.bf16.mxu0 %v669
    %1961 = vmatpush1.bf16.msra.mxu0 %v668
    %1962 = vmatprep.subr.bf16.mxu0 %v677
    %1963 = vmatpush1.bf16.msra.mxu0 %v676
    %1964 = vmatprep.subr.bf16.mxu0 %v685
    %1965 = vmatpush1.bf16.msra.mxu0 %v684
    %1966 = vmatprep.subr.bf16.mxu0 %v693
    %1967 = vmatpush1.bf16.msra.mxu0 %v692
    %1968 = vmatprep.subr.bf16.mxu0 %v701
    %1969 = vmatpush1.bf16.msra.mxu0 %v700
    %1970 = vmatprep.subr.bf16.mxu0 %v709
    %1971 = vmatpush1.bf16.msra.mxu0 %v708
    %1972 = vmatprep.subr.bf16.mxu0 %v717
    %1973 = vmatpush1.bf16.msra.mxu0 %v716
    %1974 = vmatprep.subr.bf16.mxu0 %v725
    %1975 = vmatpush1.bf16.msra.mxu0 %v724
    %1976 = vmatprep.subr.bf16.mxu0 %v733
    %1977 = vmatpush1.bf16.msra.mxu0 %v732
    %1978 = vmatprep.subr.bf16.mxu0 %v741
    %1979 = vmatpush1.bf16.msra.mxu0 %v740
    %1980 = vmatprep.subr.bf16.mxu0 %v749
    %1981 = vmatpush1.bf16.msra.mxu0 %v748
    %1982 = vmatprep.subr.bf16.mxu0 %v757
    %1983 = vmatpush1.bf16.msra.mxu0 %v756
    %1984 = vmatprep.subr.bf16.mxu0 %v765
    %1985 = vmatpush1.bf16.msra.mxu0 %v764
    %1986 = vmatprep.subr.bf16.mxu0 %v773
    %1987 = vmatpush1.bf16.msra.mxu0 %v772
    %1988 = vmatprep.subr.bf16.mxu0 %v781
    %1989 = vmatpush1.bf16.msra.mxu0 %v780
    %1990 = vmatprep.subr.bf16.mxu0 %v789
    %1991 = vmatpush1.bf16.msra.mxu0 %v788
    %1992 = vmatprep.mubr.bf16.mxu0 %v1875
    %1993 = vmatmul.mubr.bf16.gmra.mrb[0].mxu0 %v1837
    %v1994 = vpop.f32.mrb[0].mxu0
    %v1995 = vadd.f32 0.0, %v1994
    %v1996 = vpop.f32.mrb[0].mxu0
    %v1997 = vadd.f32 0.0, %v1996
    %v1998 = vpop.f32.mrb[0].mxu0
    %v1999 = vpop.f32.mrb[0].mxu0
    %2000 = vdwg.mxu0
    %2001 = vmatprep.subr.bf16.mxu0 %v671
    %2002 = vmatpush1.bf16.msra.mxu0 %v670
    %2003 = vmatprep.subr.bf16.mxu0 %v679
    %2004 = vmatpush1.bf16.msra.mxu0 %v678
    %2005 = vmatprep.subr.bf16.mxu0 %v687
    %2006 = vmatpush1.bf16.msra.mxu0 %v686
    %2007 = vmatprep.subr.bf16.mxu0 %v695
    %2008 = vmatpush1.bf16.msra.mxu0 %v694
    %2009 = vmatprep.subr.bf16.mxu0 %v703
    %2010 = vmatpush1.bf16.msra.mxu0 %v702
    %2011 = vmatprep.subr.bf16.mxu0 %v711
    %2012 = vmatpush1.bf16.msra.mxu0 %v710
    %2013 = vmatprep.subr.bf16.mxu0 %v719
    %2014 = vmatpush1.bf16.msra.mxu0 %v718
    %2015 = vmatprep.subr.bf16.mxu0 %v727
    %2016 = vmatpush1.bf16.msra.mxu0 %v726
    %2017 = vmatprep.subr.bf16.mxu0 %v735
    %2018 = vmatpush1.bf16.msra.mxu0 %v734
    %2019 = vmatprep.subr.bf16.mxu0 %v743
    %2020 = vmatpush1.bf16.msra.mxu0 %v742
    %2021 = vmatprep.subr.bf16.mxu0 %v751
    %2022 = vmatpush1.bf16.msra.mxu0 %v750
    %2023 = vmatprep.subr.bf16.mxu0 %v759
    %2024 = vmatpush1.bf16.msra.mxu0 %v758
    %2025 = vmatprep.subr.bf16.mxu0 %v767
    %2026 = vmatpush1.bf16.msra.mxu0 %v766
    %2027 = vmatprep.subr.bf16.mxu0 %v775
    %2028 = vmatpush1.bf16.msra.mxu0 %v774
    %2029 = vmatprep.subr.bf16.mxu0 %v783
    %2030 = vmatpush1.bf16.msra.mxu0 %v782
    %2031 = vmatprep.subr.bf16.mxu0 %v791
    %2032 = vmatpush1.bf16.msra.mxu0 %v790
    %2033 = vmatprep.mubr.bf16.mxu0 %v1875
    %2034 = vmatmul.mubr.bf16.gmra.mrb[0].mxu0 %v1837
    %v2035 = vpop.f32.mrb[0].mxu0
    %v2036 = vadd.f32 0.0, %v2035
    %v2037 = vpop.f32.mrb[0].mxu0
    %v2038 = vadd.f32 0.0, %v2037
    %v2039 = vpop.f32.mrb[0].mxu0
    %v2040 = vpop.f32.mrb[0].mxu0
    %2041 = vdwg.mxu0
    %s2042 = scalar_lea.vmem [#allocation4], 64
    %v2043 = vld [vmem:[%s2042] sm:$0xff]
    %v2044 = vld [vmem:[%s2042 + $0x8] sm:$0xff]
    %v2045 = vunpack.c.l.bf16 %v2043
    %v2046 = vunpack.c.h.bf16 %v2043
    %v2047 = vunpack.c.l.bf16 %v2044
    %v2048 = vunpack.c.h.bf16 %v2044
    %v2049 = vadd.f32 %v2045, %v1913
    %v2050 = vadd.f32 %v2046, %v1915
    %v2051 = vadd.f32 %v2047, %v1954
    %v2052 = vadd.f32 %v2048, %v1956
    %v2053 = vxor.u32 %v2049, 2147483648
    %v2054 = vmul.f32 %v2053, 1.442695
    %v2055 = vpow.pop %v2054
    %v2056 = vadd.f32 %v2055, 1.0
    %v2057 = vrcp.pop %v2056
    %v2058 = vmul.f32 1.0, %v2057
    %v2059 = vxor.u32 %v2050, 2147483648
    %v2060 = vmul.f32 %v2059, 1.442695
    %v2061 = vpow.pop %v2060
    %v2062 = vadd.f32 %v2061, 1.0
    %v2063 = vrcp.pop %v2062
    %v2064 = vmul.f32 1.0, %v2063
    %v2065 = vtanh.pop %v2051
    %v2066 = vxor.u32 %v2052, 2147483648
    %v2067 = vmul.f32 %v2066, 1.442695
    %v2068 = vpow.pop %v2067
    %v2069 = vadd.f32 %v2068, 1.0
    %v2070 = vrcp.pop %v2069
    %v2071 = vmul.f32 1.0, %v2070
    %v2072 = vmul.f32 %v2064, %v1834
    %v2073 = vmul.f32 %v2058, %v2065
    %v2074 = vadd.f32 %v2072, %v2073
    %v2075 = vtanh.pop %v2074
    %v2076 = vmul.f32 %v2071, %v2075
    %v2077 = vpack.c.bf16 %v2076, %v2076
    %s2078 = scalar_lea.vmem %s3, 16
    %2079 = vst [vmem:[%s2078] sm:$0xf] %v2077
    %s2080 = scalar_lea.vmem [#allocation5], 48
    %v2081 = vld [vmem:[%s2080] sm:$0xff]
    %v2082 = vld [vmem:[%s2080 + $0x8] sm:$0xff]
    %v2083 = vunpack.c.l.bf16 %v2081
    %v2084 = vunpack.c.h.bf16 %v2081
    %v2085 = vunpack.c.l.bf16 %v2082
    %v2086 = vunpack.c.h.bf16 %v2082
    %v2087 = vadd.f32 %v2083, %v1995
    %v2088 = vadd.f32 %v2084, %v1997
    %v2089 = vadd.f32 %v2085, %v2036
    %v2090 = vadd.f32 %v2086, %v2038
    %v2091 = vxor.u32 %v2087, 2147483648
    %v2092 = vmul.f32 %v2091, 1.442695
    %v2093 = vpow.pop %v2092
    %v2094 = vadd.f32 %v2093, 1.0
    %v2095 = vrcp.pop %v2094
    %v2096 = vmul.f32 1.0, %v2095
    %v2097 = vxor.u32 %v2088, 2147483648
    %v2098 = vmul.f32 %v2097, 1.442695
    %v2099 = vpow.pop %v2098
    %v2100 = vadd.f32 %v2099, 1.0
    %v2101 = vrcp.pop %v2100
    %v2102 = vmul.f32 1.0, %v2101
    %v2103 = vtanh.pop %v2089
    %v2104 = vxor.u32 %v2090, 2147483648
    %v2105 = vmul.f32 %v2104, 1.442695
    %v2106 = vpow.pop %v2105
    %v2107 = vadd.f32 %v2106, 1.0
    %v2108 = vrcp.pop %v2107
    %v2109 = vmul.f32 1.0, %v2108
    %v2110 = vmul.f32 %v2102, %v1872
    %v2111 = vmul.f32 %v2096, %v2103
    %v2112 = vadd.f32 %v2110, %v2111
    %v2113 = vtanh.pop %v2112
    %v2114 = vmul.f32 %v2109, %v2113
    %v2115 = vpack.c.bf16 %v2114, %v2114
    %s2116 = scalar_lea.vmem %s133, 12
    %2117 = vst [vmem:[%s2116] sm:$0xf] %v2115
    %2118 = vmatprep.subr.bf16.mxu0 %v665
    %2119 = vmatpush1.bf16.msra.mxu0 %v664
    %2120 = vmatprep.subr.bf16.mxu0 %v673
    %2121 = vmatpush1.bf16.msra.mxu0 %v672
    %2122 = vmatprep.subr.bf16.mxu0 %v681
    %2123 = vmatpush1.bf16.msra.mxu0 %v680
    %2124 = vmatprep.subr.bf16.mxu0 %v689
    %2125 = vmatpush1.bf16.msra.mxu0 %v688
    %2126 = vmatprep.subr.bf16.mxu0 %v697
    %2127 = vmatpush1.bf16.msra.mxu0 %v696
    %2128 = vmatprep.subr.bf16.mxu0 %v705
    %2129 = vmatpush1.bf16.msra.mxu0 %v704
    %2130 = vmatprep.subr.bf16.mxu0 %v713
    %2131 = vmatpush1.bf16.msra.mxu0 %v712
    %2132 = vmatprep.subr.bf16.mxu0 %v721
    %2133 = vmatpush1.bf16.msra.mxu0 %v720
    %2134 = vmatprep.subr.bf16.mxu0 %v729
    %2135 = vmatpush1.bf16.msra.mxu0 %v728
    %2136 = vmatprep.subr.bf16.mxu0 %v737
    %2137 = vmatpush1.bf16.msra.mxu0 %v736
    %2138 = vmatprep.subr.bf16.mxu0 %v745
    %2139 = vmatpush1.bf16.msra.mxu0 %v744
    %2140 = vmatprep.subr.bf16.mxu0 %v753
    %2141 = vmatpush1.bf16.msra.mxu0 %v752
    %2142 = vmatprep.subr.bf16.mxu0 %v761
    %2143 = vmatpush1.bf16.msra.mxu0 %v760
    %2144 = vmatprep.subr.bf16.mxu0 %v769
    %2145 = vmatpush1.bf16.msra.mxu0 %v768
    %2146 = vmatprep.subr.bf16.mxu0 %v777
    %2147 = vmatpush1.bf16.msra.mxu0 %v776
    %2148 = vmatprep.subr.bf16.mxu0 %v785
    %2149 = vmatpush1.bf16.msra.mxu0 %v784
    %2150 = vmatprep.mubr.bf16.mxu0 %v2115
    %2151 = vmatmul.mubr.bf16.gmra.mrb[0].mxu0 %v2077
    %v2152 = vpop.f32.mrb[0].mxu0
    %v2153 = vadd.f32 0.0, %v2152
    %v2154 = vpop.f32.mrb[0].mxu0
    %v2155 = vadd.f32 0.0, %v2154
    %v2156 = vpop.f32.mrb[0].mxu0
    %v2157 = vpop.f32.mrb[0].mxu0
    %2158 = vdwg.mxu0
    %2159 = vmatprep.subr.bf16.mxu0 %v667
    %2160 = vmatpush1.bf16.msra.mxu0 %v666
    %2161 = vmatprep.subr.bf16.mxu0 %v675
    %2162 = vmatpush1.bf16.msra.mxu0 %v674
    %2163 = vmatprep.subr.bf16.mxu0 %v683
    %2164 = vmatpush1.bf16.msra.mxu0 %v682
    %2165 = vmatprep.subr.bf16.mxu0 %v691
    %2166 = vmatpush1.bf16.msra.mxu0 %v690
    %2167 = vmatprep.subr.bf16.mxu0 %v699
    %2168 = vmatpush1.bf16.msra.mxu0 %v698
    %2169 = vmatprep.subr.bf16.mxu0 %v707
    %2170 = vmatpush1.bf16.msra.mxu0 %v706
    %2171 = vmatprep.subr.bf16.mxu0 %v715
    %2172 = vmatpush1.bf16.msra.mxu0 %v714
    %2173 = vmatprep.subr.bf16.mxu0 %v723
    %2174 = vmatpush1.bf16.msra.mxu0 %v722
    %2175 = vmatprep.subr.bf16.mxu0 %v731
    %2176 = vmatpush1.bf16.msra.mxu0 %v730
    %2177 = vmatprep.subr.bf16.mxu0 %v739
    %2178 = vmatpush1.bf16.msra.mxu0 %v738
    %2179 = vmatprep.subr.bf16.mxu0 %v747
    %2180 = vmatpush1.bf16.msra.mxu0 %v746
    %2181 = vmatprep.subr.bf16.mxu0 %v755
    %2182 = vmatpush1.bf16.msra.mxu0 %v754
    %2183 = vmatprep.subr.bf16.mxu0 %v763
    %2184 = vmatpush1.bf16.msra.mxu0 %v762
    %2185 = vmatprep.subr.bf16.mxu0 %v771
    %2186 = vmatpush1.bf16.msra.mxu0 %v770
    %2187 = vmatprep.subr.bf16.mxu0 %v779
    %2188 = vmatpush1.bf16.msra.mxu0 %v778
    %2189 = vmatprep.subr.bf16.mxu0 %v787
    %2190 = vmatpush1.bf16.msra.mxu0 %v786
    %2191 = vmatprep.mubr.bf16.mxu0 %v2115
    %2192 = vmatmul.mubr.bf16.gmra.mrb[0].mxu0 %v2077
    %v2193 = vpop.f32.mrb[0].mxu0
    %v2194 = vadd.f32 0.0, %v2193
    %v2195 = vpop.f32.mrb[0].mxu0
    %v2196 = vadd.f32 0.0, %v2195
    %v2197 = vpop.f32.mrb[0].mxu0
    %v2198 = vpop.f32.mrb[0].mxu0
    %2199 = vdwg.mxu0
    %2200 = vmatprep.subr.bf16.mxu0 %v669
    %2201 = vmatpush1.bf16.msra.mxu0 %v668
    %2202 = vmatprep.subr.bf16.mxu0 %v677
    %2203 = vmatpush1.bf16.msra.mxu0 %v676
    %2204 = vmatprep.subr.bf16.mxu0 %v685
    %2205 = vmatpush1.bf16.msra.mxu0 %v684
    %2206 = vmatprep.subr.bf16.mxu0 %v693
    %2207 = vmatpush1.bf16.msra.mxu0 %v692
    %2208 = vmatprep.subr.bf16.mxu0 %v701
    %2209 = vmatpush1.bf16.msra.mxu0 %v700
    %2210 = vmatprep.subr.bf16.mxu0 %v709
    %2211 = vmatpush1.bf16.msra.mxu0 %v708
    %2212 = vmatprep.subr.bf16.mxu0 %v717
    %2213 = vmatpush1.bf16.msra.mxu0 %v716
    %2214 = vmatprep.subr.bf16.mxu0 %v725
    %2215 = vmatpush1.bf16.msra.mxu0 %v724
    %2216 = vmatprep.subr.bf16.mxu0 %v733
    %2217 = vmatpush1.bf16.msra.mxu0 %v732
    %2218 = vmatprep.subr.bf16.mxu0 %v741
    %2219 = vmatpush1.bf16.msra.mxu0 %v740
    %2220 = vmatprep.subr.bf16.mxu0 %v749
    %2221 = vmatpush1.bf16.msra.mxu0 %v748
    %2222 = vmatprep.subr.bf16.mxu0 %v757
    %2223 = vmatpush1.bf16.msra.mxu0 %v756
    %2224 = vmatprep.subr.bf16.mxu0 %v765
    %2225 = vmatpush1.bf16.msra.mxu0 %v764
    %2226 = vmatprep.subr.bf16.mxu0 %v773
    %2227 = vmatpush1.bf16.msra.mxu0 %v772
    %2228 = vmatprep.subr.bf16.mxu0 %v781
    %2229 = vmatpush1.bf16.msra.mxu0 %v780
    %2230 = vmatprep.subr.bf16.mxu0 %v789
    %2231 = vmatpush1.bf16.msra.mxu0 %v788
    %2232 = vmatprep.mubr.bf16.mxu0 %v2115
    %2233 = vmatmul.mubr.bf16.gmra.mrb[0].mxu0 %v2077
    %v2234 = vpop.f32.mrb[0].mxu0
    %v2235 = vadd.f32 0.0, %v2234
    %v2236 = vpop.f32.mrb[0].mxu0
    %v2237 = vadd.f32 0.0, %v2236
    %v2238 = vpop.f32.mrb[0].mxu0
    %v2239 = vpop.f32.mrb[0].mxu0
    %2240 = vdwg.mxu0
    %2241 = vmatprep.subr.bf16.mxu0 %v671
    %2242 = vmatpush1.bf16.msra.mxu0 %v670
    %2243 = vmatprep.subr.bf16.mxu0 %v679
    %2244 = vmatpush1.bf16.msra.mxu0 %v678
    %2245 = vmatprep.subr.bf16.mxu0 %v687
    %2246 = vmatpush1.bf16.msra.mxu0 %v686
    %2247 = vmatprep.subr.bf16.mxu0 %v695
    %2248 = vmatpush1.bf16.msra.mxu0 %v694
    %2249 = vmatprep.subr.bf16.mxu0 %v703
    %2250 = vmatpush1.bf16.msra.mxu0 %v702
    %2251 = vmatprep.subr.bf16.mxu0 %v711
    %2252 = vmatpush1.bf16.msra.mxu0 %v710
    %2253 = vmatprep.subr.bf16.mxu0 %v719
    %2254 = vmatpush1.bf16.msra.mxu0 %v718
    %2255 = vmatprep.subr.bf16.mxu0 %v727
    %2256 = vmatpush1.bf16.msra.mxu0 %v726
    %2257 = vmatprep.subr.bf16.mxu0 %v735
    %2258 = vmatpush1.bf16.msra.mxu0 %v734
    %2259 = vmatprep.subr.bf16.mxu0 %v743
    %2260 = vmatpush1.bf16.msra.mxu0 %v742
    %2261 = vmatprep.subr.bf16.mxu0 %v751
    %2262 = vmatpush1.bf16.msra.mxu0 %v750
    %2263 = vmatprep.subr.bf16.mxu0 %v759
    %2264 = vmatpush1.bf16.msra.mxu0 %v758
    %2265 = vmatprep.subr.bf16.mxu0 %v767
    %2266 = vmatpush1.bf16.msra.mxu0 %v766
    %2267 = vmatprep.subr.bf16.mxu0 %v775
    %2268 = vmatpush1.bf16.msra.mxu0 %v774
    %2269 = vmatprep.subr.bf16.mxu0 %v783
    %2270 = vmatpush1.bf16.msra.mxu0 %v782
    %2271 = vmatprep.subr.bf16.mxu0 %v791
    %2272 = vmatpush1.bf16.msra.mxu0 %v790
    %2273 = vmatprep.mubr.bf16.mxu0 %v2115
    %2274 = vmatmul.mubr.bf16.gmra.mrb[0].mxu0 %v2077
    %v2275 = vpop.f32.mrb[0].mxu0
    %v2276 = vadd.f32 0.0, %v2275
    %v2277 = vpop.f32.mrb[0].mxu0
    %v2278 = vadd.f32 0.0, %v2277
    %v2279 = vpop.f32.mrb[0].mxu0
    %v2280 = vpop.f32.mrb[0].mxu0
    %2281 = vdwg.mxu0
    %s2282 = scalar_lea.vmem [#allocation4], 80
    %v2283 = vld [vmem:[%s2282] sm:$0xff]
    %v2284 = vld [vmem:[%s2282 + $0x8] sm:$0xff]
    %v2285 = vunpack.c.l.bf16 %v2283
    %v2286 = vunpack.c.h.bf16 %v2283
    %v2287 = vunpack.c.l.bf16 %v2284
    %v2288 = vunpack.c.h.bf16 %v2284
    %v2289 = vadd.f32 %v2285, %v2153
    %v2290 = vadd.f32 %v2286, %v2155
    %v2291 = vadd.f32 %v2287, %v2194
    %v2292 = vadd.f32 %v2288, %v2196
    %v2293 = vxor.u32 %v2289, 2147483648
    %v2294 = vmul.f32 %v2293, 1.442695
    %v2295 = vpow.pop %v2294
    %v2296 = vadd.f32 %v2295, 1.0
    %v2297 = vrcp.pop %v2296
    %v2298 = vmul.f32 1.0, %v2297
    %v2299 = vxor.u32 %v2290, 2147483648
    %v2300 = vmul.f32 %v2299, 1.442695
    %v2301 = vpow.pop %v2300
    %v2302 = vadd.f32 %v2301, 1.0
    %v2303 = vrcp.pop %v2302
    %v2304 = vmul.f32 1.0, %v2303
    %v2305 = vtanh.pop %v2291
    %v2306 = vxor.u32 %v2292, 2147483648
    %v2307 = vmul.f32 %v2306, 1.442695
    %v2308 = vpow.pop %v2307
    %v2309 = vadd.f32 %v2308, 1.0
    %v2310 = vrcp.pop %v2309
    %v2311 = vmul.f32 1.0, %v2310
    %v2312 = vmul.f32 %v2304, %v2074
    %v2313 = vmul.f32 %v2298, %v2305
    %v2314 = vadd.f32 %v2312, %v2313
    %v2315 = vtanh.pop %v2314
    %v2316 = vmul.f32 %v2311, %v2315
    %v2317 = vpack.c.bf16 %v2316, %v2316
    %s2318 = scalar_lea.vmem %s3, 20
    %2319 = vst [vmem:[%s2318] sm:$0xf] %v2317
    %s2320 = scalar_lea.vmem [#allocation5], 32
    %v2321 = vld [vmem:[%s2320] sm:$0xff]
    %v2322 = vld [vmem:[%s2320 + $0x8] sm:$0xff]
    %v2323 = vunpack.c.l.bf16 %v2321
    %v2324 = vunpack.c.h.bf16 %v2321
    %v2325 = vunpack.c.l.bf16 %v2322
    %v2326 = vunpack.c.h.bf16 %v2322
    %v2327 = vadd.f32 %v2323, %v2235
    %v2328 = vadd.f32 %v2324, %v2237
    %v2329 = vadd.f32 %v2325, %v2276
    %v2330 = vadd.f32 %v2326, %v2278
    %v2331 = vxor.u32 %v2327, 2147483648
    %v2332 = vmul.f32 %v2331, 1.442695
    %v2333 = vpow.pop %v2332
    %v2334 = vadd.f32 %v2333, 1.0
    %v2335 = vrcp.pop %v2334
    %v2336 = vmul.f32 1.0, %v2335
    %v2337 = vxor.u32 %v2328, 2147483648
    %v2338 = vmul.f32 %v2337, 1.442695
    %v2339 = vpow.pop %v2338
    %v2340 = vadd.f32 %v2339, 1.0
    %v2341 = vrcp.pop %v2340
    %v2342 = vmul.f32 1.0, %v2341
    %v2343 = vtanh.pop %v2329
    %v2344 = vxor.u32 %v2330, 2147483648
    %v2345 = vmul.f32 %v2344, 1.442695
    %v2346 = vpow.pop %v2345
    %v2347 = vadd.f32 %v2346, 1.0
    %v2348 = vrcp.pop %v2347
    %v2349 = vmul.f32 1.0, %v2348
    %v2350 = vmul.f32 %v2342, %v2112
    %v2351 = vmul.f32 %v2336, %v2343
    %v2352 = vadd.f32 %v2350, %v2351
    %v2353 = vtanh.pop %v2352
    %v2354 = vmul.f32 %v2349, %v2353
    %v2355 = vpack.c.bf16 %v2354, %v2354
    %s2356 = scalar_lea.vmem %s133, 8
    %2357 = vst [vmem:[%s2356] sm:$0xf] %v2355
    %2358 = vmatprep.subr.bf16.mxu0 %v665
    %2359 = vmatpush1.bf16.msra.mxu0 %v664
    %2360 = vmatprep.subr.bf16.mxu0 %v673
    %2361 = vmatpush1.bf16.msra.mxu0 %v672
    %2362 = vmatprep.subr.bf16.mxu0 %v681
    %2363 = vmatpush1.bf16.msra.mxu0 %v680
    %2364 = vmatprep.subr.bf16.mxu0 %v689
    %2365 = vmatpush1.bf16.msra.mxu0 %v688
    %2366 = vmatprep.subr.bf16.mxu0 %v697
    %2367 = vmatpush1.bf16.msra.mxu0 %v696
    %2368 = vmatprep.subr.bf16.mxu0 %v705
    %2369 = vmatpush1.bf16.msra.mxu0 %v704
    %2370 = vmatprep.subr.bf16.mxu0 %v713
    %2371 = vmatpush1.bf16.msra.mxu0 %v712
    %2372 = vmatprep.subr.bf16.mxu0 %v721
    %2373 = vmatpush1.bf16.msra.mxu0 %v720
    %2374 = vmatprep.subr.bf16.mxu0 %v729
    %2375 = vmatpush1.bf16.msra.mxu0 %v728
    %2376 = vmatprep.subr.bf16.mxu0 %v737
    %2377 = vmatpush1.bf16.msra.mxu0 %v736
    %2378 = vmatprep.subr.bf16.mxu0 %v745
    %2379 = vmatpush1.bf16.msra.mxu0 %v744
    %2380 = vmatprep.subr.bf16.mxu0 %v753
    %2381 = vmatpush1.bf16.msra.mxu0 %v752
    %2382 = vmatprep.subr.bf16.mxu0 %v761
    %2383 = vmatpush1.bf16.msra.mxu0 %v760
    %2384 = vmatprep.subr.bf16.mxu0 %v769
    %2385 = vmatpush1.bf16.msra.mxu0 %v768
    %2386 = vmatprep.subr.bf16.mxu0 %v777
    %2387 = vmatpush1.bf16.msra.mxu0 %v776
    %2388 = vmatprep.subr.bf16.mxu0 %v785
    %2389 = vmatpush1.bf16.msra.mxu0 %v784
    %2390 = vmatprep.mubr.bf16.mxu0 %v2355
    %2391 = vmatmul.mubr.bf16.gmra.mrb[0].mxu0 %v2317
    %v2392 = vpop.f32.mrb[0].mxu0
    %v2393 = vadd.f32 0.0, %v2392
    %v2394 = vpop.f32.mrb[0].mxu0
    %v2395 = vadd.f32 0.0, %v2394
    %v2396 = vpop.f32.mrb[0].mxu0
    %v2397 = vpop.f32.mrb[0].mxu0
    %2398 = vdwg.mxu0
    %2399 = vmatprep.subr.bf16.mxu0 %v667
    %2400 = vmatpush1.bf16.msra.mxu0 %v666
    %2401 = vmatprep.subr.bf16.mxu0 %v675
    %2402 = vmatpush1.bf16.msra.mxu0 %v674
    %2403 = vmatprep.subr.bf16.mxu0 %v683
    %2404 = vmatpush1.bf16.msra.mxu0 %v682
    %2405 = vmatprep.subr.bf16.mxu0 %v691
    %2406 = vmatpush1.bf16.msra.mxu0 %v690
    %2407 = vmatprep.subr.bf16.mxu0 %v699
    %2408 = vmatpush1.bf16.msra.mxu0 %v698
    %2409 = vmatprep.subr.bf16.mxu0 %v707
    %2410 = vmatpush1.bf16.msra.mxu0 %v706
    %2411 = vmatprep.subr.bf16.mxu0 %v715
    %2412 = vmatpush1.bf16.msra.mxu0 %v714
    %2413 = vmatprep.subr.bf16.mxu0 %v723
    %2414 = vmatpush1.bf16.msra.mxu0 %v722
    %2415 = vmatprep.subr.bf16.mxu0 %v731
    %2416 = vmatpush1.bf16.msra.mxu0 %v730
    %2417 = vmatprep.subr.bf16.mxu0 %v739
    %2418 = vmatpush1.bf16.msra.mxu0 %v738
    %2419 = vmatprep.subr.bf16.mxu0 %v747
    %2420 = vmatpush1.bf16.msra.mxu0 %v746
    %2421 = vmatprep.subr.bf16.mxu0 %v755
    %2422 = vmatpush1.bf16.msra.mxu0 %v754
    %2423 = vmatprep.subr.bf16.mxu0 %v763
    %2424 = vmatpush1.bf16.msra.mxu0 %v762
    %2425 = vmatprep.subr.bf16.mxu0 %v771
    %2426 = vmatpush1.bf16.msra.mxu0 %v770
    %2427 = vmatprep.subr.bf16.mxu0 %v779
    %2428 = vmatpush1.bf16.msra.mxu0 %v778
    %2429 = vmatprep.subr.bf16.mxu0 %v787
    %2430 = vmatpush1.bf16.msra.mxu0 %v786
    %2431 = vmatprep.mubr.bf16.mxu0 %v2355
    %2432 = vmatmul.mubr.bf16.gmra.mrb[0].mxu0 %v2317
    %v2433 = vpop.f32.mrb[0].mxu0
    %v2434 = vadd.f32 0.0, %v2433
    %v2435 = vpop.f32.mrb[0].mxu0
    %v2436 = vadd.f32 0.0, %v2435
    %v2437 = vpop.f32.mrb[0].mxu0
    %v2438 = vpop.f32.mrb[0].mxu0
    %2439 = vdwg.mxu0
    %2440 = vmatprep.subr.bf16.mxu0 %v669
    %2441 = vmatpush1.bf16.msra.mxu0 %v668
    %2442 = vmatprep.subr.bf16.mxu0 %v677
    %2443 = vmatpush1.bf16.msra.mxu0 %v676
    %2444 = vmatprep.subr.bf16.mxu0 %v685
    %2445 = vmatpush1.bf16.msra.mxu0 %v684
    %2446 = vmatprep.subr.bf16.mxu0 %v693
    %2447 = vmatpush1.bf16.msra.mxu0 %v692
    %2448 = vmatprep.subr.bf16.mxu0 %v701
    %2449 = vmatpush1.bf16.msra.mxu0 %v700
    %2450 = vmatprep.subr.bf16.mxu0 %v709
    %2451 = vmatpush1.bf16.msra.mxu0 %v708
    %2452 = vmatprep.subr.bf16.mxu0 %v717
    %2453 = vmatpush1.bf16.msra.mxu0 %v716
    %2454 = vmatprep.subr.bf16.mxu0 %v725
    %2455 = vmatpush1.bf16.msra.mxu0 %v724
    %2456 = vmatprep.subr.bf16.mxu0 %v733
    %2457 = vmatpush1.bf16.msra.mxu0 %v732
    %2458 = vmatprep.subr.bf16.mxu0 %v741
    %2459 = vmatpush1.bf16.msra.mxu0 %v740
    %2460 = vmatprep.subr.bf16.mxu0 %v749
    %2461 = vmatpush1.bf16.msra.mxu0 %v748
    %2462 = vmatprep.subr.bf16.mxu0 %v757
    %2463 = vmatpush1.bf16.msra.mxu0 %v756
    %2464 = vmatprep.subr.bf16.mxu0 %v765
    %2465 = vmatpush1.bf16.msra.mxu0 %v764
    %2466 = vmatprep.subr.bf16.mxu0 %v773
    %2467 = vmatpush1.bf16.msra.mxu0 %v772
    %2468 = vmatprep.subr.bf16.mxu0 %v781
    %2469 = vmatpush1.bf16.msra.mxu0 %v780
    %2470 = vmatprep.subr.bf16.mxu0 %v789
    %2471 = vmatpush1.bf16.msra.mxu0 %v788
    %2472 = vmatprep.mubr.bf16.mxu0 %v2355
    %2473 = vmatmul.mubr.bf16.gmra.mrb[0].mxu0 %v2317
    %v2474 = vpop.f32.mrb[0].mxu0
    %v2475 = vadd.f32 0.0, %v2474
    %v2476 = vpop.f32.mrb[0].mxu0
    %v2477 = vadd.f32 0.0, %v2476
    %v2478 = vpop.f32.mrb[0].mxu0
    %v2479 = vpop.f32.mrb[0].mxu0
    %2480 = vdwg.mxu0
    %2481 = vmatprep.subr.bf16.mxu0 %v671
    %2482 = vmatpush1.bf16.msra.mxu0 %v670
    %2483 = vmatprep.subr.bf16.mxu0 %v679
    %2484 = vmatpush1.bf16.msra.mxu0 %v678
    %2485 = vmatprep.subr.bf16.mxu0 %v687
    %2486 = vmatpush1.bf16.msra.mxu0 %v686
    %2487 = vmatprep.subr.bf16.mxu0 %v695
    %2488 = vmatpush1.bf16.msra.mxu0 %v694
    %2489 = vmatprep.subr.bf16.mxu0 %v703
    %2490 = vmatpush1.bf16.msra.mxu0 %v702
    %2491 = vmatprep.subr.bf16.mxu0 %v711
    %2492 = vmatpush1.bf16.msra.mxu0 %v710
    %2493 = vmatprep.subr.bf16.mxu0 %v719
    %2494 = vmatpush1.bf16.msra.mxu0 %v718
    %2495 = vmatprep.subr.bf16.mxu0 %v727
    %2496 = vmatpush1.bf16.msra.mxu0 %v726
    %2497 = vmatprep.subr.bf16.mxu0 %v735
    %2498 = vmatpush1.bf16.msra.mxu0 %v734
    %2499 = vmatprep.subr.bf16.mxu0 %v743
    %2500 = vmatpush1.bf16.msra.mxu0 %v742
    %2501 = vmatprep.subr.bf16.mxu0 %v751
    %2502 = vmatpush1.bf16.msra.mxu0 %v750
    %2503 = vmatprep.subr.bf16.mxu0 %v759
    %2504 = vmatpush1.bf16.msra.mxu0 %v758
    %2505 = vmatprep.subr.bf16.mxu0 %v767
    %2506 = vmatpush1.bf16.msra.mxu0 %v766
    %2507 = vmatprep.subr.bf16.mxu0 %v775
    %2508 = vmatpush1.bf16.msra.mxu0 %v774
    %2509 = vmatprep.subr.bf16.mxu0 %v783
    %2510 = vmatpush1.bf16.msra.mxu0 %v782
    %2511 = vmatprep.subr.bf16.mxu0 %v791
    %2512 = vmatpush1.bf16.msra.mxu0 %v790
    %2513 = vmatprep.mubr.bf16.mxu0 %v2355
    %2514 = vmatmul.mubr.bf16.gmra.mrb[0].mxu0 %v2317
    %v2515 = vpop.f32.mrb[0].mxu0
    %v2516 = vadd.f32 0.0, %v2515
    %v2517 = vpop.f32.mrb[0].mxu0
    %v2518 = vadd.f32 0.0, %v2517
    %v2519 = vpop.f32.mrb[0].mxu0
    %v2520 = vpop.f32.mrb[0].mxu0
    %2521 = vdwg.mxu0
    %s2522 = scalar_lea.vmem [#allocation4], 96
    %v2523 = vld [vmem:[%s2522] sm:$0xff]
    %v2524 = vld [vmem:[%s2522 + $0x8] sm:$0xff]
    %v2525 = vunpack.c.l.bf16 %v2523
    %v2526 = vunpack.c.h.bf16 %v2523
    %v2527 = vunpack.c.l.bf16 %v2524
    %v2528 = vunpack.c.h.bf16 %v2524
    %v2529 = vadd.f32 %v2525, %v2393
    %v2530 = vadd.f32 %v2526, %v2395
    %v2531 = vadd.f32 %v2527, %v2434
    %v2532 = vadd.f32 %v2528, %v2436
    %v2533 = vxor.u32 %v2529, 2147483648
    %v2534 = vmul.f32 %v2533, 1.442695
    %v2535 = vpow.pop %v2534
    %v2536 = vadd.f32 %v2535, 1.0
    %v2537 = vrcp.pop %v2536
    %v2538 = vmul.f32 1.0, %v2537
    %v2539 = vxor.u32 %v2530, 2147483648
    %v2540 = vmul.f32 %v2539, 1.442695
    %v2541 = vpow.pop %v2540
    %v2542 = vadd.f32 %v2541, 1.0
    %v2543 = vrcp.pop %v2542
    %v2544 = vmul.f32 1.0, %v2543
    %v2545 = vtanh.pop %v2531
    %v2546 = vxor.u32 %v2532, 2147483648
    %v2547 = vmul.f32 %v2546, 1.442695
    %v2548 = vpow.pop %v2547
    %v2549 = vadd.f32 %v2548, 1.0
    %v2550 = vrcp.pop %v2549
    %v2551 = vmul.f32 1.0, %v2550
    %v2552 = vmul.f32 %v2544, %v2314
    %v2553 = vmul.f32 %v2538, %v2545
    %v2554 = vadd.f32 %v2552, %v2553
    %v2555 = vtanh.pop %v2554
    %v2556 = vmul.f32 %v2551, %v2555
    %v2557 = vpack.c.bf16 %v2556, %v2556
    %s2558 = scalar_lea.vmem %s3, 24
    %2559 = vst [vmem:[%s2558] sm:$0xf] %v2557
    %s2560 = scalar_lea.vmem [#allocation5], 16
    %v2561 = vld [vmem:[%s2560] sm:$0xff]
    %v2562 = vld [vmem:[%s2560 + $0x8] sm:$0xff]
    %v2563 = vunpack.c.l.bf16 %v2561
    %v2564 = vunpack.c.h.bf16 %v2561
    %v2565 = vunpack.c.l.bf16 %v2562
    %v2566 = vunpack.c.h.bf16 %v2562
    %v2567 = vadd.f32 %v2563, %v2475
    %v2568 = vadd.f32 %v2564, %v2477
    %v2569 = vadd.f32 %v2565, %v2516
    %v2570 = vadd.f32 %v2566, %v2518
    %v2571 = vxor.u32 %v2567, 2147483648
    %v2572 = vmul.f32 %v2571, 1.442695
    %v2573 = vpow.pop %v2572
    %v2574 = vadd.f32 %v2573, 1.0
    %v2575 = vrcp.pop %v2574
    %v2576 = vmul.f32 1.0, %v2575
    %v2577 = vxor.u32 %v2568, 2147483648
    %v2578 = vmul.f32 %v2577, 1.442695
    %v2579 = vpow.pop %v2578
    %v2580 = vadd.f32 %v2579, 1.0
    %v2581 = vrcp.pop %v2580
    %v2582 = vmul.f32 1.0, %v2581
    %v2583 = vtanh.pop %v2569
    %v2584 = vxor.u32 %v2570, 2147483648
    %v2585 = vmul.f32 %v2584, 1.442695
    %v2586 = vpow.pop %v2585
    %v2587 = vadd.f32 %v2586, 1.0
    %v2588 = vrcp.pop %v2587
    %v2589 = vmul.f32 1.0, %v2588
    %v2590 = vmul.f32 %v2582, %v2352
    %v2591 = vmul.f32 %v2576, %v2583
    %v2592 = vadd.f32 %v2590, %v2591
    %v2593 = vtanh.pop %v2592
    %v2594 = vmul.f32 %v2589, %v2593
    %v2595 = vpack.c.bf16 %v2594, %v2594
    %s2596 = scalar_lea.vmem %s133, 4
    %2597 = vst [vmem:[%s2596] sm:$0xf] %v2595
    %2598 = vmatprep.subr.bf16.mxu0 %v665
    %2599 = vmatpush1.bf16.msra.mxu0 %v664
    %2600 = vmatprep.subr.bf16.mxu0 %v673
    %2601 = vmatpush1.bf16.msra.mxu0 %v672
    %2602 = vmatprep.subr.bf16.mxu0 %v681
    %2603 = vmatpush1.bf16.msra.mxu0 %v680
    %2604 = vmatprep.subr.bf16.mxu0 %v689
    %2605 = vmatpush1.bf16.msra.mxu0 %v688
    %2606 = vmatprep.subr.bf16.mxu0 %v697
    %2607 = vmatpush1.bf16.msra.mxu0 %v696
    %2608 = vmatprep.subr.bf16.mxu0 %v705
    %2609 = vmatpush1.bf16.msra.mxu0 %v704
    %2610 = vmatprep.subr.bf16.mxu0 %v713
    %2611 = vmatpush1.bf16.msra.mxu0 %v712
    %2612 = vmatprep.subr.bf16.mxu0 %v721
    %2613 = vmatpush1.bf16.msra.mxu0 %v720
    %2614 = vmatprep.subr.bf16.mxu0 %v729
    %2615 = vmatpush1.bf16.msra.mxu0 %v728
    %2616 = vmatprep.subr.bf16.mxu0 %v737
    %2617 = vmatpush1.bf16.msra.mxu0 %v736
    %2618 = vmatprep.subr.bf16.mxu0 %v745
    %2619 = vmatpush1.bf16.msra.mxu0 %v744
    %2620 = vmatprep.subr.bf16.mxu0 %v753
    %2621 = vmatpush1.bf16.msra.mxu0 %v752
    %2622 = vmatprep.subr.bf16.mxu0 %v761
    %2623 = vmatpush1.bf16.msra.mxu0 %v760
    %2624 = vmatprep.subr.bf16.mxu0 %v769
    %2625 = vmatpush1.bf16.msra.mxu0 %v768
    %2626 = vmatprep.subr.bf16.mxu0 %v777
    %2627 = vmatpush1.bf16.msra.mxu0 %v776
    %2628 = vmatprep.subr.bf16.mxu0 %v785
    %2629 = vmatpush1.bf16.msra.mxu0 %v784
    %2630 = vmatprep.mubr.bf16.mxu0 %v2595
    %2631 = vmatmul.mubr.bf16.gmra.mrb[0].mxu0 %v2557
    %v2632 = vpop.f32.mrb[0].mxu0
    %v2633 = vadd.f32 0.0, %v2632
    %v2634 = vpop.f32.mrb[0].mxu0
    %v2635 = vadd.f32 0.0, %v2634
    %v2636 = vpop.f32.mrb[0].mxu0
    %v2637 = vpop.f32.mrb[0].mxu0
    %2638 = vdwg.mxu0
    %2639 = vmatprep.subr.bf16.mxu0 %v667
    %2640 = vmatpush1.bf16.msra.mxu0 %v666
    %2641 = vmatprep.subr.bf16.mxu0 %v675
    %2642 = vmatpush1.bf16.msra.mxu0 %v674
    %2643 = vmatprep.subr.bf16.mxu0 %v683
    %2644 = vmatpush1.bf16.msra.mxu0 %v682
    %2645 = vmatprep.subr.bf16.mxu0 %v691
    %2646 = vmatpush1.bf16.msra.mxu0 %v690
    %2647 = vmatprep.subr.bf16.mxu0 %v699
    %2648 = vmatpush1.bf16.msra.mxu0 %v698
    %2649 = vmatprep.subr.bf16.mxu0 %v707
    %2650 = vmatpush1.bf16.msra.mxu0 %v706
    %2651 = vmatprep.subr.bf16.mxu0 %v715
    %2652 = vmatpush1.bf16.msra.mxu0 %v714
    %2653 = vmatprep.subr.bf16.mxu0 %v723
    %2654 = vmatpush1.bf16.msra.mxu0 %v722
    %2655 = vmatprep.subr.bf16.mxu0 %v731
    %2656 = vmatpush1.bf16.msra.mxu0 %v730
    %2657 = vmatprep.subr.bf16.mxu0 %v739
    %2658 = vmatpush1.bf16.msra.mxu0 %v738
    %2659 = vmatprep.subr.bf16.mxu0 %v747
    %2660 = vmatpush1.bf16.msra.mxu0 %v746
    %2661 = vmatprep.subr.bf16.mxu0 %v755
    %2662 = vmatpush1.bf16.msra.mxu0 %v754
    %2663 = vmatprep.subr.bf16.mxu0 %v763
    %2664 = vmatpush1.bf16.msra.mxu0 %v762
    %2665 = vmatprep.subr.bf16.mxu0 %v771
    %2666 = vmatpush1.bf16.msra.mxu0 %v770
    %2667 = vmatprep.subr.bf16.mxu0 %v779
    %2668 = vmatpush1.bf16.msra.mxu0 %v778
    %2669 = vmatprep.subr.bf16.mxu0 %v787
    %2670 = vmatpush1.bf16.msra.mxu0 %v786
    %2671 = vmatprep.mubr.bf16.mxu0 %v2595
    %2672 = vmatmul.mubr.bf16.gmra.mrb[0].mxu0 %v2557
    %v2673 = vpop.f32.mrb[0].mxu0
    %v2674 = vadd.f32 0.0, %v2673
    %v2675 = vpop.f32.mrb[0].mxu0
    %v2676 = vadd.f32 0.0, %v2675
    %v2677 = vpop.f32.mrb[0].mxu0
    %v2678 = vpop.f32.mrb[0].mxu0
    %2679 = vdwg.mxu0
    %2680 = vmatprep.subr.bf16.mxu0 %v669
    %2681 = vmatpush1.bf16.msra.mxu0 %v668
    %2682 = vmatprep.subr.bf16.mxu0 %v677
    %2683 = vmatpush1.bf16.msra.mxu0 %v676
    %2684 = vmatprep.subr.bf16.mxu0 %v685
    %2685 = vmatpush1.bf16.msra.mxu0 %v684
    %2686 = vmatprep.subr.bf16.mxu0 %v693
    %2687 = vmatpush1.bf16.msra.mxu0 %v692
    %2688 = vmatprep.subr.bf16.mxu0 %v701
    %2689 = vmatpush1.bf16.msra.mxu0 %v700
    %2690 = vmatprep.subr.bf16.mxu0 %v709
    %2691 = vmatpush1.bf16.msra.mxu0 %v708
    %2692 = vmatprep.subr.bf16.mxu0 %v717
    %2693 = vmatpush1.bf16.msra.mxu0 %v716
    %2694 = vmatprep.subr.bf16.mxu0 %v725
    %2695 = vmatpush1.bf16.msra.mxu0 %v724
    %2696 = vmatprep.subr.bf16.mxu0 %v733
    %2697 = vmatpush1.bf16.msra.mxu0 %v732
    %2698 = vmatprep.subr.bf16.mxu0 %v741
    %2699 = vmatpush1.bf16.msra.mxu0 %v740
    %2700 = vmatprep.subr.bf16.mxu0 %v749
    %2701 = vmatpush1.bf16.msra.mxu0 %v748
    %2702 = vmatprep.subr.bf16.mxu0 %v757
    %2703 = vmatpush1.bf16.msra.mxu0 %v756
    %2704 = vmatprep.subr.bf16.mxu0 %v765
    %2705 = vmatpush1.bf16.msra.mxu0 %v764
    %2706 = vmatprep.subr.bf16.mxu0 %v773
    %2707 = vmatpush1.bf16.msra.mxu0 %v772
    %2708 = vmatprep.subr.bf16.mxu0 %v781
    %2709 = vmatpush1.bf16.msra.mxu0 %v780
    %2710 = vmatprep.subr.bf16.mxu0 %v789
    %2711 = vmatpush1.bf16.msra.mxu0 %v788
    %2712 = vmatprep.mubr.bf16.mxu0 %v2595
    %2713 = vmatmul.mubr.bf16.gmra.mrb[0].mxu0 %v2557
    %v2714 = vpop.f32.mrb[0].mxu0
    %v2715 = vadd.f32 0.0, %v2714
    %v2716 = vpop.f32.mrb[0].mxu0
    %v2717 = vadd.f32 0.0, %v2716
    %v2718 = vpop.f32.mrb[0].mxu0
    %v2719 = vpop.f32.mrb[0].mxu0
    %2720 = vdwg.mxu0
    %2721 = vmatprep.subr.bf16.mxu0 %v671
    %2722 = vmatpush1.bf16.msra.mxu0 %v670
    %2723 = vmatprep.subr.bf16.mxu0 %v679
    %2724 = vmatpush1.bf16.msra.mxu0 %v678
    %2725 = vmatprep.subr.bf16.mxu0 %v687
    %2726 = vmatpush1.bf16.msra.mxu0 %v686
    %2727 = vmatprep.subr.bf16.mxu0 %v695
    %2728 = vmatpush1.bf16.msra.mxu0 %v694
    %2729 = vmatprep.subr.bf16.mxu0 %v703
    %2730 = vmatpush1.bf16.msra.mxu0 %v702
    %2731 = vmatprep.subr.bf16.mxu0 %v711
    %2732 = vmatpush1.bf16.msra.mxu0 %v710
    %2733 = vmatprep.subr.bf16.mxu0 %v719
    %2734 = vmatpush1.bf16.msra.mxu0 %v718
    %2735 = vmatprep.subr.bf16.mxu0 %v727
    %2736 = vmatpush1.bf16.msra.mxu0 %v726
    %2737 = vmatprep.subr.bf16.mxu0 %v735
    %2738 = vmatpush1.bf16.msra.mxu0 %v734
    %2739 = vmatprep.subr.bf16.mxu0 %v743
    %2740 = vmatpush1.bf16.msra.mxu0 %v742
    %2741 = vmatprep.subr.bf16.mxu0 %v751
    %2742 = vmatpush1.bf16.msra.mxu0 %v750
    %2743 = vmatprep.subr.bf16.mxu0 %v759
    %2744 = vmatpush1.bf16.msra.mxu0 %v758
    %2745 = vmatprep.subr.bf16.mxu0 %v767
    %2746 = vmatpush1.bf16.msra.mxu0 %v766
    %2747 = vmatprep.subr.bf16.mxu0 %v775
    %2748 = vmatpush1.bf16.msra.mxu0 %v774
    %2749 = vmatprep.subr.bf16.mxu0 %v783
    %2750 = vmatpush1.bf16.msra.mxu0 %v782
    %2751 = vmatprep.subr.bf16.mxu0 %v791
    %2752 = vmatpush1.bf16.msra.mxu0 %v790
    %2753 = vmatprep.mubr.bf16.mxu0 %v2595
    %2754 = vmatmul.mubr.bf16.gmra.mrb[0].mxu0 %v2557
    %v2755 = vpop.f32.mrb[0].mxu0
    %v2756 = vadd.f32 0.0, %v2755
    %v2757 = vpop.f32.mrb[0].mxu0
    %v2758 = vadd.f32 0.0, %v2757
    %v2759 = vpop.f32.mrb[0].mxu0
    %v2760 = vpop.f32.mrb[0].mxu0
    %2761 = vdwg.mxu0
    %s2762 = scalar_lea.vmem [#allocation4], 112
    %v2763 = vld [vmem:[%s2762] sm:$0xff]
    %v2764 = vld [vmem:[%s2762 + $0x8] sm:$0xff]
    %v2765 = vunpack.c.l.bf16 %v2763
    %v2766 = vunpack.c.h.bf16 %v2763
    %v2767 = vunpack.c.l.bf16 %v2764
    %v2768 = vunpack.c.h.bf16 %v2764
    %v2769 = vadd.f32 %v2765, %v2633
    %v2770 = vadd.f32 %v2766, %v2635
    %v2771 = vadd.f32 %v2767, %v2674
    %v2772 = vadd.f32 %v2768, %v2676
    %v2773 = vxor.u32 %v2769, 2147483648
    %v2774 = vmul.f32 %v2773, 1.442695
    %v2775 = vpow.pop %v2774
    %v2776 = vadd.f32 %v2775, 1.0
    %v2777 = vrcp.pop %v2776
    %v2778 = vmul.f32 1.0, %v2777
    %v2779 = vxor.u32 %v2770, 2147483648
    %v2780 = vmul.f32 %v2779, 1.442695
    %v2781 = vpow.pop %v2780
    %v2782 = vadd.f32 %v2781, 1.0
    %v2783 = vrcp.pop %v2782
    %v2784 = vmul.f32 1.0, %v2783
    %v2785 = vtanh.pop %v2771
    %v2786 = vxor.u32 %v2772, 2147483648
    %v2787 = vmul.f32 %v2786, 1.442695
    %v2788 = vpow.pop %v2787
    %v2789 = vadd.f32 %v2788, 1.0
    %v2790 = vrcp.pop %v2789
    %v2791 = vmul.f32 1.0, %v2790
    %v2792 = vmul.f32 %v2784, %v2554
    %v2793 = vmul.f32 %v2778, %v2785
    %v2794 = vadd.f32 %v2792, %v2793
    %v2795 = vtanh.pop %v2794
    %v2796 = vmul.f32 %v2791, %v2795
    %v2797 = vpack.c.bf16 %v2796, %v2796
    %s2798 = scalar_lea.vmem %s3, 28
    %2799 = vst [vmem:[%s2798] sm:$0xf] %v2797
    %v2800 = vld [vmem:[#allocation5] sm:$0xff]
    %v2801 = vld [vmem:[#allocation5 + $0x8] sm:$0xff]
    %v2802 = vunpack.c.l.bf16 %v2800
    %v2803 = vunpack.c.h.bf16 %v2800
    %v2804 = vunpack.c.l.bf16 %v2801
    %v2805 = vunpack.c.h.bf16 %v2801
    %v2806 = vadd.f32 %v2802, %v2715
    %v2807 = vadd.f32 %v2803, %v2717
    %v2808 = vadd.f32 %v2804, %v2756
    %v2809 = vadd.f32 %v2805, %v2758
    %v2810 = vxor.u32 %v2806, 2147483648
    %v2811 = vmul.f32 %v2810, 1.442695
    %v2812 = vpow.pop %v2811
    %v2813 = vadd.f32 %v2812, 1.0
    %v2814 = vrcp.pop %v2813
    %v2815 = vmul.f32 1.0, %v2814
    %v2816 = vxor.u32 %v2807, 2147483648
    %v2817 = vmul.f32 %v2816, 1.442695
    %v2818 = vpow.pop %v2817
    %v2819 = vadd.f32 %v2818, 1.0
    %v2820 = vrcp.pop %v2819
    %v2821 = vmul.f32 1.0, %v2820
    %v2822 = vtanh.pop %v2808
    %v2823 = vxor.u32 %v2809, 2147483648
    %v2824 = vmul.f32 %v2823, 1.442695
    %v2825 = vpow.pop %v2824
    %v2826 = vadd.f32 %v2825, 1.0
    %v2827 = vrcp.pop %v2826
    %v2828 = vmul.f32 1.0, %v2827
    %v2829 = vmul.f32 %v2821, %v2592
    %v2830 = vmul.f32 %v2815, %v2822
    %v2831 = vadd.f32 %v2829, %v2830
    %v2832 = vtanh.pop %v2831
    %v2833 = vmul.f32 %v2828, %v2832
    %v2834 = vpack.c.bf16 %v2833, %v2833
    %2835 = vst [vmem:[%s133] sm:$0xf] %v2834
    %2836 = vst [vmem:[#allocation2] sm:$0xff] %v2796
    %2837 = vst [vmem:[#allocation3] sm:$0xff] %v2794
    %2838 = vst [vmem:[%s274] sm:$0xff] %v2833
    %2839 = vst [vmem:[%s276] sm:$0xff] %v2831
    %s2840 = ssub.s32 0, 0
    %s2841 = smul.u32 8, %s2840
    %p2842 = scmp.lt.s32.totalorder %s2841, 7
    %s2843 = scalar_select %p2842, %s2841, 7
    %s2844 = smul.addr %s2843, 4
    %s2845 = scalar_lea.vmem %s4, %s2844
    // Predicated region
    $region64: #{lstm_feature_extractor.8} parent=1 // pred_check
      _
    $region65: #{lstm_feature_extractor.8} parent=1 // pred_check_branch
      %2847 = sbr.rel (0) target = $region67
    $region66: #{lstm_feature_extractor.8} parent=1 // pred_region
      _
    $region67: #{lstm_feature_extractor.8} parent=1 // pred_fallthru
      _
    // Predicated region
    $region68: #{lstm_feature_extractor.8} parent=1 // pred_check
      _
    $region69: #{lstm_feature_extractor.8} parent=1 // pred_check_branch
      %2849 = sbr.rel (0) target = $region71
    $region70: #{lstm_feature_extractor.8} parent=1 // pred_region
      %s2850 = ssub.s32 0, 0
      %s2851 = smul.u32 8, %s2850
    $region71: #{lstm_feature_extractor.8} parent=1 // pred_fallthru
      _
    // Predicated region
    $region72: #{lstm_feature_extractor.8} parent=1 // pred_check
      _
    $region73: #{lstm_feature_extractor.8} parent=1 // pred_check_branch
      %2853 = sbr.rel (0) target = $region75
    $region74: #{lstm_feature_extractor.8} parent=1 // pred_region
      _
    $region75: #{lstm_feature_extractor.8} parent=1 // pred_fallthru
      _
    // Predicated region
    $region76: #{lstm_feature_extractor.8} parent=1 // pred_check
      _
    $region77: #{lstm_feature_extractor.8} parent=1 // pred_check_branch
      %2855 = sbr.rel (0) target = $region79
    $region78: #{lstm_feature_extractor.8} parent=1 // pred_region
      %s2856 = ssub.s32 0, 0
      %s2857 = smul.u32 8, %s2856
      %p2858 = scmp.lt.s32.totalorder %s2857, 7
      %s2859 = scalar_select %p2858, %s2857, 7
      %s2860 = smul.addr %s2859, 4
      %s2861 = scalar_lea.vmem %s4, %s2860
    $region79: #{lstm_feature_extractor.8} parent=1 // pred_fallthru
      _

</llo_original>
